<compile_context>
chip_gen: v6e
topology: v6e:2x2x1
jax: 0.10.0
libtpu: 0.0.40
codegen_flags: <defaults>
</compile_context>

<pallas_src>
import math

import jax
import jax.numpy as jnp
from jax.experimental import pallas as pl
from jax.experimental.pallas import tpu as pltpu


_BN_EPS = 1e-5
# Fits inside v7x's 64 MiB/TensorCore VMEM while raising v5e's 16 MiB default.
_VMEM_LIMIT_BYTES = 48 * 1024 * 1024


def _compiler_params():
    return pltpu.CompilerParams(
        dimension_semantics=("parallel",),   # batch axis -> both TCs on v7x
        vmem_limit_bytes=_VMEM_LIMIT_BYTES,
    )


def _full_spec(shape):
    """BlockSpec for a parameter loaded whole.  The block index is constant
    across the grid, so Pallas DMAs it only once."""
    nd = len(shape)
    return pl.BlockSpec(shape, lambda n, _nd=nd: (0,) * _nd)


# ----------------------------------------------------------------------------
# In-kernel helpers
# ----------------------------------------------------------------------------
def _conv3x3_same(pad_ref, h_img, w_ref, H, W):
    """3x3 stride-1 'same' conv of h_img (H, W, Cin) with w_ref (3,3,Cin,Cout).

    Zero padding lives in the VMEM scratch `pad_ref` (border zeroed once per
    kernel invocation, never written).  The nine shifted taps are contracted
    against the weights with a single batched MXU einsum and a major-axis sum
    (one fused contraction instead of nine dot+accumulate round trips).
    Returns (H*W, Cout) in f32.
    """
    cin = h_img.shape[-1]
    cout = w_ref.shape[-1]
    M = H * W
    pad_ref[1:H + 1, 1:W + 1, :cin] = h_img
    taps = jnp.stack(
        [pad_ref[dy:dy + H, dx:dx + W, :cin].reshape(M, cin)
         for dy in range(3) for dx in range(3)],
        axis=0)                                           # (9, M, Cin)
    w9 = w_ref[...].reshape(9, cin, cout)                 # (9, Cin, Cout)
    out = jnp.einsum("tmk,tkn->tmn", taps, w9,
                     preferred_element_type=jnp.float32)  # batched MXU matmul
    return jnp.sum(out, axis=0)                           # (M, Cout)


# ----------------------------------------------------------------------------
# Kernel: first 3x3 conv of the network (no BN)
# ----------------------------------------------------------------------------
def _input_conv3x3_kernel(x_ref, w_ref, o_ref, pad_ref):
    # x_ref: (1, H, W, Cin); w_ref: (3, 3, Cin, Cout); o_ref: (1, H, W, Cout)
    _, H, W, _ = x_ref.shape
    cout = o_ref.shape[-1]
    pad_ref[...] = jnp.zeros(pad_ref.shape, pad_ref.dtype)
    out = _conv3x3_same(pad_ref, x_ref[0].astype(jnp.float32), w_ref, H, W)
    o_ref[...] = out.reshape(1, H, W, cout).astype(o_ref.dtype)


def input_conv3x3(x, w):
    """conv1 of the network, gridded over the batch dimension."""
    N, H, W, cin = x.shape
    cout = w.shape[-1]
    return pl.pallas_call(
        _input_conv3x3_kernel,
        out_shape=jax.ShapeDtypeStruct((N, H, W, cout), x.dtype),
        grid=(N,),
        in_specs=[pl.BlockSpec((1, H, W, cin), lambda n: (n, 0, 0, 0)),
                  _full_spec(w.shape)],
        out_specs=pl.BlockSpec((1, H, W, cout), lambda n: (n, 0, 0, 0)),
        scratch_shapes=[pltpu.VMEM((H + 2, W + 2, cin), jnp.float32)],
        compiler_params=_compiler_params(),
    )(x, w)


# ----------------------------------------------------------------------------
# Kernel: one full dense block (+ Transition or fc), fully fused
# ----------------------------------------------------------------------------
def _make_dense_block_kernel(plan, epilogue, H, W):
    """plan     : tuple of ("bottleneck"|"single", n_groups) per layer, where
                  n_groups = number of channel groups feeding that layer
                  (block input + one group per preceding layer).
       epilogue : "trans" (BN+ReLU+1x1 conv) or "fc" (1x1 conv + bias,
                  evaluated as a lane reduction since Cout == 1).
    """
    n_ep_groups = len(plan) + 1

    def kernel(*refs):
        pos = 0
        x_ref = refs[pos]; pos += 1

        layer_refs = []
        for kind, n_groups in plan:
            n = 3 * n_groups + (3 if kind == "bottleneck" else 0)
            layer_refs.append(refs[pos:pos + n])
            pos += n

        n_ep = 3 * n_ep_groups if epilogue == "trans" else n_ep_groups + 1
        ep_refs = refs[pos:pos + n_ep]; pos += n_ep

        o_ref = refs[pos]; pos += 1
        pad_ref = refs[pos]

        M = H * W
        cout = o_ref.shape[-1]

        # Zero the conv-padding scratch once; its border is never written, so
        # it stays zero for every 3x3 conv in the block.
        pad_ref[...] = jnp.zeros(pad_ref.shape, pad_ref.dtype)

        # The DenseNet concatenation is *virtual*: `groups` holds the channel
        # groups [block input, layer-0 output, layer-1 output, ...] in VMEM.
        groups = [x_ref[0].reshape(M, x_ref.shape[-1]).astype(jnp.float32)]

        for (kind, n_groups), lrefs in zip(plan, layer_refs):
            if kind == "bottleneck":
                s2_ref, b2_ref, w2_ref = lrefs[3 * n_groups:]
                # BN1 + ReLU + 1x1 conv over the virtual concat: exact
                # per-group decomposition (weights pre-split in the wrapper).
                h = None
                for g in range(n_groups):
                    s_ref, b_ref, w_ref = lrefs[3 * g:3 * g + 3]
                    a = jnp.maximum(groups[g] * s_ref[...] + b_ref[...], 0.0)
                    p = jnp.dot(a, w_ref[...],
                                preferred_element_type=jnp.float32)
                    h = p if h is None else h + p
                # BN2 + ReLU, fused (intermediate never leaves VMEM)
                h = jnp.maximum(h * s2_ref[...] + b2_ref[...], 0.0)
                # 3x3 conv with in-VMEM zero padding
                new = _conv3x3_same(pad_ref, h.reshape(H, W, h.shape[-1]),
                                    w2_ref, H, W)
            else:  # SingleLayer: BN + ReLU + 3x3 conv, split by channel group
                new = None
                for g in range(n_groups):
                    s_ref, b_ref, w_ref = lrefs[3 * g:3 * g + 3]
                    a = jnp.maximum(groups[g] * s_ref[...] + b_ref[...], 0.0)
                    p = _conv3x3_same(pad_ref, a.reshape(H, W, a.shape[-1]),
                                      w_ref, H, W)
                    new = p if new is None else new + p
            groups.append(new)        # torch.cat((x, out), 1), kept virtual

        if epilogue == "trans":       # Transition: BN + ReLU + 1x1 conv
            out = None
            for g in range(n_ep_groups):
                s_ref, b_ref, w_ref = ep_refs[3 * g:3 * g + 3]
                a = jnp.maximum(groups[g] * s_ref[...] + b_ref[...], 0.0)
                p = jnp.dot(a, w_ref[...], preferred_element_type=jnp.float32)
                out = p if out is None else out + p
        else:                         # fc: Cout=1 1x1 conv + bias as a
            b_ref = ep_refs[-1]       # VPU multiply + lane-sum reduction
            out = None
            for g in range(n_ep_groups):
                w_ref = ep_refs[g]    # (1, Cg)
                p = jnp.sum(groups[g] * w_ref[...], axis=-1, keepdims=True)
                out = p if out is None else out + p
            out = out + b_ref[...]

        o_ref[...] = out.reshape(1, H, W, cout).astype(o_ref.dtype)

    return kernel


def _split(arr, widths, axis):
    parts, off = [], 0
    for w in widths:
        idx = [slice(None)] * arr.ndim
        idx[axis] = slice(off, off + w)
        parts.append(arr[tuple(idx)])
        off += w
    return parts


def dense_block_forward(x, layers, epilogue_kind, epilogue_params):
    """One DenseNet dense block + its Transition (or the final fc) as a single
    fused pallas_call, gridded over the batch dimension."""
    N, H, W, c_in = x.shape

    inputs = [x]
    in_specs = [pl.BlockSpec((1, H, W, c_in), lambda n: (n, 0, 0, 0))]

    def add(arr):
        inputs.append(arr)
        in_specs.append(_full_spec(arr.shape))

    plan = []
    widths = [c_in]                   # channel widths of the virtual concat
    max_conv_cin = 1
    for p in layers:
        n_groups = len(widths)
        if p["type"] == "bottleneck":
            plan.append(("bottleneck", n_groups))
            growth = p["conv2"].shape[-1]
            for s, b, w in zip(_split(p["bn1_scale"], widths, 1),
                               _split(p["bn1_shift"], widths, 1),
                               _split(p["conv1"], widths, 0)):
                add(s); add(b); add(w)
            add(p["bn2_scale"]); add(p["bn2_shift"]); add(p["conv2"])
            max_conv_cin = max(max_conv_cin, p["conv1"].shape[-1])
        else:
            plan.append(("single", n_groups))
            growth = p["conv1"].shape[-1]
            for s, b, w in zip(_split(p["bn1_scale"], widths, 1),
                               _split(p["bn1_shift"], widths, 1),
                               _split(p["conv1"], widths, 2)):
                add(s); add(b); add(w)
            max_conv_cin = max(max_conv_cin, max(widths))
        widths.append(growth)

    if epilogue_kind == "trans":
        for s, b, w in zip(_split(epilogue_params["bn_scale"], widths, 1),
                           _split(epilogue_params["bn_shift"], widths, 1),
                           _split(epilogue_params["conv"], widths, 0)):
            add(s); add(b); add(w)
        c_out = epilogue_params["conv"].shape[-1]
    else:  # "fc"
        fc_w, fc_b = epilogue_params           # fc_w: (1, C), fc_b: (1, 1)
        for w in _split(fc_w, widths, 1):
            add(w)
        add(fc_b)
        c_out = 1

    kernel = _make_dense_block_kernel(tuple(plan), epilogue_kind, H, W)

    return pl.pallas_call(
        kernel,
        out_shape=jax.ShapeDtypeStruct((N, H, W, c_out), x.dtype),
        grid=(N,),
        in_specs=in_specs,
        out_specs=pl.BlockSpec((1, H, W, c_out), lambda n: (n, 0, 0, 0)),
        scratch_shapes=[pltpu.VMEM((H + 2, W + 2, max_conv_cin), jnp.float32)],
        compiler_params=_compiler_params(),
    )(*inputs)


# ----------------------------------------------------------------------------
# Parameter construction (deterministic, mirrors the PyTorch __init__)
# ----------------------------------------------------------------------------
def _bn_params(c):
    # eval-mode BN (gamma=1, beta=0, running_mean=0, running_var=1) folded
    # into a per-channel affine (scale, shift), stored as (1, C).
    scale = jnp.full((1, c), 1.0 / math.sqrt(1.0 + _BN_EPS), jnp.float32)
    shift = jnp.zeros((1, c), jnp.float32)
    return scale, shift


def _conv_init(key, kh, kw, cin, cout):
    # PyTorch init in the module: normal(0, sqrt(2 / (k*k*out_channels)))
    std = math.sqrt(2.0 / (kh * kw * cout))
    return std * jax.random.normal(key, (kh, kw, cin, cout), jnp.float32)


def make_densenet_params(key, growthRate=12, depth=40, reduction=0.8,
                         bottleneck=True, ini_channel=200):
    nDenseBlocks = (depth - 4) // 3
    if bottleneck:
        nDenseBlocks //= 2
    nChannels = 2 * growthRate + ini_channel

    keys = iter(jax.random.split(key, 256))
    params = {}

    params["conv1"] = _conv_init(next(keys), 3, 3, ini_channel, nChannels)

    def make_dense(nC):
        layers = []
        for _ in range(int(nDenseBlocks)):
            if bottleneck:
                inter = 4 * growthRate
                s1, b1 = _bn_params(nC)
                s2, b2 = _bn_params(inter)
                layers.append({
                    "type": "bottleneck",
                    "bn1_scale": s1, "bn1_shift": b1,
                    "conv1": _conv_init(next(keys), 1, 1, nC, inter)[0, 0],
                    "bn2_scale": s2, "bn2_shift": b2,
                    "conv2": _conv_init(next(keys), 3, 3, inter, growthRate),
                })
            else:
                s1, b1 = _bn_params(nC)
                layers.append({
                    "type": "single",
                    "bn1_scale": s1, "bn1_shift": b1,
                    "conv1": _conv_init(next(keys), 3, 3, nC, growthRate),
                })
            nC += growthRate
        return layers, nC

    def make_trans(nC):
        nOut = int(math.floor(nC * reduction))
        s, b = _bn_params(nC)
        return {"bn_scale": s, "bn_shift": b,
                "conv": _conv_init(next(keys), 1, 1, nC, nOut)[0, 0]}, nOut

    params["dense1"], nChannels = make_dense(nChannels)
    params["trans1"], nChannels = make_trans(nChannels)
    params["dense2"], nChannels = make_dense(nChannels)
    params["trans2"], nChannels = make_trans(nChannels)
    params["dense3"], nChannels = make_dense(nChannels)

    # fc: 1x1 conv, Cout=1, with bias.  Stored transposed as (1, C) so the
    # kernel can evaluate it as a lane reduction (no 1-wide MXU column).
    params["fc_w"] = jnp.transpose(
        _conv_init(next(keys), 1, 1, nChannels, 1)[0, 0])
    # nn.Conv2d default bias init: U(-1/sqrt(fan_in), 1/sqrt(fan_in))
    bound = 1.0 / math.sqrt(nChannels)
    params["fc_b"] = jax.random.uniform(next(keys), (1, 1), jnp.float32,
                                        minval=-bound, maxval=bound)
    return params


# ----------------------------------------------------------------------------
# Forward pass (mirrors DenseNet.forward)
# ----------------------------------------------------------------------------
def densenet_forward(params, x_nchw):
    # TODO(synk): BP_generator is not defined in the reference source; the
    # input is assumed to already carry ini_channel (=200) channels.
    x = jnp.transpose(x_nchw, (0, 2, 3, 1))            # NCHW -> NHWC

    out = input_conv3x3(x, params["conv1"])
    out = dense_block_forward(out, params["dense1"], "trans", params["trans1"])
    out = dense_block_forward(out, params["dense2"], "trans", params["trans2"])
    out = dense_block_forward(out, params["dense3"], "fc",
                              (params["fc_w"], params["fc_b"]))

    return jnp.transpose(out, (0, 3, 1, 2))            # NHWC -> NCHW


# ----------------------------------------------------------------------------
if __name__ == "__main__":
    key = jax.random.PRNGKey(0)
    pkey, xkey = jax.random.split(key)

    # Small-but-faithful configuration of the same architecture formula:
    #   nDenseBlocks = ((depth-4)//3)//2 = 1 bottleneck per dense block.
    growthRate, depth, reduction, use_bottleneck = 6, 10, 0.8, True
    params = make_densenet_params(pkey, growthRate, depth, reduction,
                                  use_bottleneck, ini_channel=200)

    # Input in PyTorch NCHW layout with the hard-coded 200 "BP" channels.
    x = jax.random.normal(xkey, (2, 200, 8, 8), jnp.float32)

    fwd = jax.jit(lambda a: densenet_forward(params, a))
    out = fwd(x)
    jax.block_until_ready(out)

    assert out.shape == (2, 1, 8, 8), out.shape
    assert bool(jnp.all(jnp.isfinite(out)))
    print("KERNEL_OK")
</pallas_src>

<mosaic_0001>
module attributes {stable_mosaic.version = 11 : i64} {
  func.func @_input_conv3x3_kernel(%arg0: i32, %arg1: memref<1x8x8x200xf32, #tpu.memory_space<vmem>>, %arg2: memref<3x3x200x212xf32, #tpu.memory_space<vmem>>, %arg3: memref<1x8x8x212xf32, #tpu.memory_space<vmem>>, %arg4: memref<10x10x200xf32, #tpu.memory_space<vmem>>) attributes {dimension_semantics = [#tpu.dimension_semantics<parallel>], iteration_bounds = array<i64: 2>, scalar_prefetch = 0 : i64, scratch_operands = 1 : i64, tpu.core_type = #tpu.core_type<tc>, window_params = [{transform_indices = @transform_0, window_bounds = array<i64: 1, 8, 8, 200>}, {pipeline_mode = #tpu.pipeline_mode<synchronous>, transform_indices = @transform_1, window_bounds = array<i64: 3, 3, 200, 212>}, {transform_indices = @transform_2, window_bounds = array<i64: 1, 8, 8, 212>}]} {
    %cst = arith.constant 0.000000e+00 : f32
    %0 = vector.broadcast %cst : f32 to vector<10x10x200xf32>
    %c0 = arith.constant 0 : index
    %c0_0 = arith.constant 0 : index
    %c0_1 = arith.constant 0 : index
    %1 = vector.load %arg4[%c0, %c0_0, %c0_1] : memref<10x10x200xf32, #tpu.memory_space<vmem>>, vector<10x10x200xf32>
    tpu.vector_store %arg4[%c0, %c0_0, %c0_1], %0 {strides = array<i32>} : memref<10x10x200xf32, #tpu.memory_space<vmem>>, vector<10x10x200xf32>,
    %c0_2 = arith.constant 0 : index
    %c0_3 = arith.constant 0 : index
    %c0_4 = arith.constant 0 : index
    %c0_5 = arith.constant 0 : index
    %2 = vector.load %arg1[%c0_2, %c0_3, %c0_4, %c0_5] : memref<1x8x8x200xf32, #tpu.memory_space<vmem>>, vector<1x8x8x200xf32>
    %3 = vector.shape_cast %2 : vector<1x8x8x200xf32> to vector<8x8x200xf32>
    %c1 = arith.constant 1 : index
    %c1_6 = arith.constant 1 : index
    %c0_7 = arith.constant 0 : index
    %4 = vector.load %arg4[%c1, %c1_6, %c0_7] : memref<10x10x200xf32, #tpu.memory_space<vmem>>, vector<8x8x200xf32>
    tpu.vector_store %arg4[%c1, %c1_6, %c0_7], %3 {strides = array<i32>} : memref<10x10x200xf32, #tpu.memory_space<vmem>>, vector<8x8x200xf32>,
    %c0_8 = arith.constant 0 : index
    %c0_9 = arith.constant 0 : index
    %c0_10 = arith.constant 0 : index
    %5 = vector.load %arg4[%c0_8, %c0_9, %c0_10] : memref<10x10x200xf32, #tpu.memory_space<vmem>>, vector<8x8x200xf32>
    %6 = vector.shape_cast %5 : vector<8x8x200xf32> to vector<64x200xf32>
    %c0_11 = arith.constant 0 : index
    %c1_12 = arith.constant 1 : index
    %c0_13 = arith.constant 0 : index
    %7 = vector.load %arg4[%c0_11, %c1_12, %c0_13] : memref<10x10x200xf32, #tpu.memory_space<vmem>>, vector<8x8x200xf32>
    %8 = vector.shape_cast %7 : vector<8x8x200xf32> to vector<64x200xf32>
    %c0_14 = arith.constant 0 : index
    %c2 = arith.constant 2 : index
    %c0_15 = arith.constant 0 : index
    %9 = vector.load %arg4[%c0_14, %c2, %c0_15] : memref<10x10x200xf32, #tpu.memory_space<vmem>>, vector<8x8x200xf32>
    %10 = vector.shape_cast %9 : vector<8x8x200xf32> to vector<64x200xf32>
    %c1_16 = arith.constant 1 : index
    %c0_17 = arith.constant 0 : index
    %c0_18 = arith.constant 0 : index
    %11 = vector.load %arg4[%c1_16, %c0_17, %c0_18] : memref<10x10x200xf32, #tpu.memory_space<vmem>>, vector<8x8x200xf32>
    %12 = vector.shape_cast %11 : vector<8x8x200xf32> to vector<64x200xf32>
    %c1_19 = arith.constant 1 : index
    %c1_20 = arith.constant 1 : index
    %c0_21 = arith.constant 0 : index
    %13 = vector.load %arg4[%c1_19, %c1_20, %c0_21] : memref<10x10x200xf32, #tpu.memory_space<vmem>>, vector<8x8x200xf32>
    %14 = vector.shape_cast %13 : vector<8x8x200xf32> to vector<64x200xf32>
    %c1_22 = arith.constant 1 : index
    %c2_23 = arith.constant 2 : index
    %c0_24 = arith.constant 0 : index
    %15 = vector.load %arg4[%c1_22, %c2_23, %c0_24] : memref<10x10x200xf32, #tpu.memory_space<vmem>>, vector<8x8x200xf32>
    %16 = vector.shape_cast %15 : vector<8x8x200xf32> to vector<64x200xf32>
    %c2_25 = arith.constant 2 : index
    %c0_26 = arith.constant 0 : index
    %c0_27 = arith.constant 0 : index
    %17 = vector.load %arg4[%c2_25, %c0_26, %c0_27] : memref<10x10x200xf32, #tpu.memory_space<vmem>>, vector<8x8x200xf32>
    %18 = vector.shape_cast %17 : vector<8x8x200xf32> to vector<64x200xf32>
    %c2_28 = arith.constant 2 : index
    %c1_29 = arith.constant 1 : index
    %c0_30 = arith.constant 0 : index
    %19 = vector.load %arg4[%c2_28, %c1_29, %c0_30] : memref<10x10x200xf32, #tpu.memory_space<vmem>>, vector<8x8x200xf32>
    %20 = vector.shape_cast %19 : vector<8x8x200xf32> to vector<64x200xf32>
    %c2_31 = arith.constant 2 : index
    %c2_32 = arith.constant 2 : index
    %c0_33 = arith.constant 0 : index
    %21 = vector.load %arg4[%c2_31, %c2_32, %c0_33] : memref<10x10x200xf32, #tpu.memory_space<vmem>>, vector<8x8x200xf32>
    %22 = vector.shape_cast %21 : vector<8x8x200xf32> to vector<64x200xf32>
    %23 = vector.shape_cast %6 : vector<64x200xf32> to vector<1x64x200xf32>
    %24 = vector.shape_cast %8 : vector<64x200xf32> to vector<1x64x200xf32>
    %25 = vector.shape_cast %10 : vector<64x200xf32> to vector<1x64x200xf32>
    %26 = vector.shape_cast %12 : vector<64x200xf32> to vector<1x64x200xf32>
    %27 = vector.shape_cast %14 : vector<64x200xf32> to vector<1x64x200xf32>
    %28 = vector.shape_cast %16 : vector<64x200xf32> to vector<1x64x200xf32>
    %29 = vector.shape_cast %18 : vector<64x200xf32> to vector<1x64x200xf32>
    %30 = vector.shape_cast %20 : vector<64x200xf32> to vector<1x64x200xf32>
    %31 = vector.shape_cast %22 : vector<64x200xf32> to vector<1x64x200xf32>
    %32 = tpu.concatenate %23, %24, %25, %26, %27, %28, %29, %30, %31 in 0 : vector<1x64x200xf32>, vector<1x64x200xf32>, vector<1x64x200xf32>, vector<1x64x200xf32>, vector<1x64x200xf32>, vector<1x64x200xf32>, vector<1x64x200xf32>, vector<1x64x200xf32>, vector<1x64x200xf32> -> vector<9x64x200xf32>
    %c0_34 = arith.constant 0 : index
    %c0_35 = arith.constant 0 : index
    %c0_36 = arith.constant 0 : index
    %c0_37 = arith.constant 0 : index
    %33 = vector.load %arg2[%c0_34, %c0_35, %c0_36, %c0_37] : memref<3x3x200x212xf32, #tpu.memory_space<vmem>>, vector<3x3x200x212xf32>
    %34 = vector.shape_cast %33 : vector<3x3x200x212xf32> to vector<9x200x212xf32>
    "tpu.trace_start"() <{level = 10 : i32, message = "tmk,tkn->tmn"}> : () -> ()
    %cst_38 = arith.constant dense<0.000000e+00> : vector<9x64x212xf32>
    %35 = tpu.matmul %32, %34, %cst_38 {dimension_numbers = #tpu.dot_dimension_numbers<[2], [1], [1], [2], [0, 0, 0, 1, 1, 2], [0], [0]>} : vector<9x64x200xf32>, vector<9x200x212xf32>, vector<9x64x212xf32> -> vector<9x64x212xf32>
    "tpu.trace_stop"() : () -> ()
    %cst_39 = arith.constant dense<0.000000e+00> : vector<64x212xf32>
    %36 = vector.multi_reduction <add>, %35, %cst_39 [0] : vector<9x64x212xf32> to vector<64x212xf32>
    %37 = vector.shape_cast %36 : vector<64x212xf32> to vector<1x8x8x212xf32>
    %c0_40 = arith.constant 0 : index
    %c0_41 = arith.constant 0 : index
    %c0_42 = arith.constant 0 : index
    %c0_43 = arith.constant 0 : index
    %38 = vector.load %arg3[%c0_40, %c0_41, %c0_42, %c0_43] : memref<1x8x8x212xf32, #tpu.memory_space<vmem>>, vector<1x8x8x212xf32>
    tpu.vector_store %arg3[%c0_40, %c0_41, %c0_42, %c0_43], %37 {strides = array<i32>} : memref<1x8x8x212xf32, #tpu.memory_space<vmem>>, vector<1x8x8x212xf32>,
    return
  }
  func.func @transform_0(%arg0: i32) -> (i32, i32, i32, i32) {
    %c0_i32 = arith.constant 0 : i32
    %c0_i32_0 = arith.constant 0 : i32
    %c0_i32_1 = arith.constant 0 : i32
    %c0_i32_2 = arith.constant 0 : i32
    return %arg0, %c0_i32, %c0_i32_0, %c0_i32_1 : i32, i32, i32, i32
  }
  func.func @transform_1(%arg0: i32) -> (i32, i32, i32, i32) {
    %c0_i32 = arith.constant 0 : i32
    %c0_i32_0 = arith.constant 0 : i32
    %c0_i32_1 = arith.constant 0 : i32
    %c0_i32_2 = arith.constant 0 : i32
    %c0_i32_3 = arith.constant 0 : i32
    return %c0_i32, %c0_i32_0, %c0_i32_1, %c0_i32_2 : i32, i32, i32, i32
  }
  func.func @transform_2(%arg0: i32) -> (i32, i32, i32, i32) {
    %c0_i32 = arith.constant 0 : i32
    %c0_i32_0 = arith.constant 0 : i32
    %c0_i32_1 = arith.constant 0 : i32
    %c0_i32_2 = arith.constant 0 : i32
    return %arg0, %c0_i32, %c0_i32_0, %c0_i32_1 : i32, i32, i32, i32
  }
}

module attributes {stable_mosaic.version = 11 : i64} {
  func.func @kernel(%arg0: i32, %arg1: memref<1x8x8x212xf32, #tpu.memory_space<vmem>>, %arg2: memref<1x212xf32, #tpu.memory_space<vmem>>, %arg3: memref<1x212xf32, #tpu.memory_space<vmem>>, %arg4: memref<212x24xf32, #tpu.memory_space<vmem>>, %arg5: memref<1x24xf32, #tpu.memory_space<vmem>>, %arg6: memref<1x24xf32, #tpu.memory_space<vmem>>, %arg7: memref<3x3x24x6xf32, #tpu.memory_space<vmem>>, %arg8: memref<1x212xf32, #tpu.memory_space<vmem>>, %arg9: memref<1x212xf32, #tpu.memory_space<vmem>>, %arg10: memref<212x174xf32, #tpu.memory_space<vmem>>, %arg11: memref<1x6xf32, #tpu.memory_space<vmem>>, %arg12: memref<1x6xf32, #tpu.memory_space<vmem>>, %arg13: memref<6x174xf32, #tpu.memory_space<vmem>>, %arg14: memref<1x8x8x174xf32, #tpu.memory_space<vmem>>, %arg15: memref<10x10x24xf32, #tpu.memory_space<vmem>>) attributes {dimension_semantics = [#tpu.dimension_semantics<parallel>], iteration_bounds = array<i64: 2>, scalar_prefetch = 0 : i64, scratch_operands = 1 : i64, tpu.core_type = #tpu.core_type<tc>, window_params = [{transform_indices = @transform_0, window_bounds = array<i64: 1, 8, 8, 212>}, {pipeline_mode = #tpu.pipeline_mode<synchronous>, transform_indices = @transform_1, window_bounds = array<i64: 1, 212>}, {pipeline_mode = #tpu.pipeline_mode<synchronous>, transform_indices = @transform_2, window_bounds = array<i64: 1, 212>}, {pipeline_mode = #tpu.pipeline_mode<synchronous>, transform_indices = @transform_3, window_bounds = array<i64: 212, 24>}, {pipeline_mode = #tpu.pipeline_mode<synchronous>, transform_indices = @transform_4, window_bounds = array<i64: 1, 24>}, {pipeline_mode = #tpu.pipeline_mode<synchronous>, transform_indices = @transform_5, window_bounds = array<i64: 1, 24>}, {pipeline_mode = #tpu.pipeline_mode<synchronous>, transform_indices = @transform_6, window_bounds = array<i64: 3, 3, 24, 6>}, {pipeline_mode = #tpu.pipeline_mode<synchronous>, transform_indices = @transform_7, window_bounds = array<i64: 1, 212>}, {pipeline_mode = #tpu.pipeline_mode<synchronous>, transform_indices = @transform_8, window_bounds = array<i64: 1, 212>}, {pipeline_mode = #tpu.pipeline_mode<synchronous>, transform_indices = @transform_9, window_bounds = array<i64: 212, 174>}, {pipeline_mode = #tpu.pipeline_mode<synchronous>, transform_indices = @transform_10, window_bounds = array<i64: 1, 6>}, {pipeline_mode = #tpu.pipeline_mode<synchronous>, transform_indices = @transform_11, window_bounds = array<i64: 1, 6>}, {pipeline_mode = #tpu.pipeline_mode<synchronous>, transform_indices = @transform_12, window_bounds = array<i64: 6, 174>}, {transform_indices = @transform_13, window_bounds = array<i64: 1, 8, 8, 174>}]} {
    %cst = arith.constant 0.000000e+00 : f32
    %0 = vector.broadcast %cst : f32 to vector<10x10x24xf32>
    %c0 = arith.constant 0 : index
    %c0_0 = arith.constant 0 : index
    %c0_1 = arith.constant 0 : index
    %1 = vector.load %arg15[%c0, %c0_0, %c0_1] : memref<10x10x24xf32, #tpu.memory_space<vmem>>, vector<10x10x24xf32>
    tpu.vector_store %arg15[%c0, %c0_0, %c0_1], %0 {strides = array<i32>} : memref<10x10x24xf32, #tpu.memory_space<vmem>>, vector<10x10x24xf32>,
    %c0_2 = arith.constant 0 : index
    %c0_3 = arith.constant 0 : index
    %c0_4 = arith.constant 0 : index
    %c0_5 = arith.constant 0 : index
    %2 = vector.load %arg1[%c0_2, %c0_3, %c0_4, %c0_5] : memref<1x8x8x212xf32, #tpu.memory_space<vmem>>, vector<1x8x8x212xf32>
    %3 = vector.shape_cast %2 : vector<1x8x8x212xf32> to vector<8x8x212xf32>
    %4 = vector.shape_cast %3 : vector<8x8x212xf32> to vector<64x212xf32>
    %c0_6 = arith.constant 0 : index
    %c0_7 = arith.constant 0 : index
    %5 = vector.load %arg2[%c0_6, %c0_7] : memref<1x212xf32, #tpu.memory_space<vmem>>, vector<1x212xf32>
    %6 = vector.broadcast %5 : vector<1x212xf32> to vector<64x212xf32>
    %7 = arith.mulf %4, %6 : vector<64x212xf32>
    %c0_8 = arith.constant 0 : index
    %c0_9 = arith.constant 0 : index
    %8 = vector.load %arg3[%c0_8, %c0_9] : memref<1x212xf32, #tpu.memory_space<vmem>>, vector<1x212xf32>
    %9 = vector.broadcast %8 : vector<1x212xf32> to vector<64x212xf32>
    %10 = arith.addf %7, %9 : vector<64x212xf32>
    %cst_10 = arith.constant 0.000000e+00 : f32
    %11 = vector.broadcast %cst_10 : f32 to vector<64x212xf32>
    %12 = arith.maximumf %10, %11 : vector<64x212xf32>
    %c0_11 = arith.constant 0 : index
    %c0_12 = arith.constant 0 : index
    %13 = vector.load %arg4[%c0_11, %c0_12] : memref<212x24xf32, #tpu.memory_space<vmem>>, vector<212x24xf32>
    %cst_13 = arith.constant dense<0.000000e+00> : vector<64x24xf32>
    %14 = tpu.matmul %12, %13, %cst_13 {dimension_numbers = #tpu.dot_dimension_numbers<[1], [0], [0], [1], [0, 0, 1, 1], [], []>} : vector<64x212xf32>, vector<212x24xf32>, vector<64x24xf32> -> vector<64x24xf32>
    %c0_14 = arith.constant 0 : index
    %c0_15 = arith.constant 0 : index
    %15 = vector.load %arg5[%c0_14, %c0_15] : memref<1x24xf32, #tpu.memory_space<vmem>>, vector<1x24xf32>
    %16 = vector.broadcast %15 : vector<1x24xf32> to vector<64x24xf32>
    %17 = arith.mulf %14, %16 : vector<64x24xf32>
    %c0_16 = arith.constant 0 : index
    %c0_17 = arith.constant 0 : index
    %18 = vector.load %arg6[%c0_16, %c0_17] : memref<1x24xf32, #tpu.memory_space<vmem>>, vector<1x24xf32>
    %19 = vector.broadcast %18 : vector<1x24xf32> to vector<64x24xf32>
    %20 = arith.addf %17, %19 : vector<64x24xf32>
    %cst_18 = arith.constant 0.000000e+00 : f32
    %21 = vector.broadcast %cst_18 : f32 to vector<64x24xf32>
    %22 = arith.maximumf %20, %21 : vector<64x24xf32>
    %23 = vector.shape_cast %22 : vector<64x24xf32> to vector<8x8x24xf32>
    %c1 = arith.constant 1 : index
    %c1_19 = arith.constant 1 : index
    %c0_20 = arith.constant 0 : index
    %24 = vector.load %arg15[%c1, %c1_19, %c0_20] : memref<10x10x24xf32, #tpu.memory_space<vmem>>, vector<8x8x24xf32>
    tpu.vector_store %arg15[%c1, %c1_19, %c0_20], %23 {strides = array<i32>} : memref<10x10x24xf32, #tpu.memory_space<vmem>>, vector<8x8x24xf32>,
    %c0_21 = arith.constant 0 : index
    %c0_22 = arith.constant 0 : index
    %c0_23 = arith.constant 0 : index
    %25 = vector.load %arg15[%c0_21, %c0_22, %c0_23] : memref<10x10x24xf32, #tpu.memory_space<vmem>>, vector<8x8x24xf32>
    %26 = vector.shape_cast %25 : vector<8x8x24xf32> to vector<64x24xf32>
    %c0_24 = arith.constant 0 : index
    %c1_25 = arith.constant 1 : index
    %c0_26 = arith.constant 0 : index
    %27 = vector.load %arg15[%c0_24, %c1_25, %c0_26] : memref<10x10x24xf32, #tpu.memory_space<vmem>>, vector<8x8x24xf32>
    %28 = vector.shape_cast %27 : vector<8x8x24xf32> to vector<64x24xf32>
    %c0_27 = arith.constant 0 : index
    %c2 = arith.constant 2 : index
    %c0_28 = arith.constant 0 : index
    %29 = vector.load %arg15[%c0_27, %c2, %c0_28] : memref<10x10x24xf32, #tpu.memory_space<vmem>>, vector<8x8x24xf32>
    %30 = vector.shape_cast %29 : vector<8x8x24xf32> to vector<64x24xf32>
    %c1_29 = arith.constant 1 : index
    %c0_30 = arith.constant 0 : index
    %c0_31 = arith.constant 0 : index
    %31 = vector.load %arg15[%c1_29, %c0_30, %c0_31] : memref<10x10x24xf32, #tpu.memory_space<vmem>>, vector<8x8x24xf32>
    %32 = vector.shape_cast %31 : vector<8x8x24xf32> to vector<64x24xf32>
    %c1_32 = arith.constant 1 : index
    %c1_33 = arith.constant 1 : index
    %c0_34 = arith.constant 0 : index
    %33 = vector.load %arg15[%c1_32, %c1_33, %c0_34] : memref<10x10x24xf32, #tpu.memory_space<vmem>>, vector<8x8x24xf32>
    %34 = vector.shape_cast %33 : vector<8x8x24xf32> to vector<64x24xf32>
    %c1_35 = arith.constant 1 : index
    %c2_36 = arith.constant 2 : index
    %c0_37 = arith.constant 0 : index
    %35 = vector.load %arg15[%c1_35, %c2_36, %c0_37] : memref<10x10x24xf32, #tpu.memory_space<vmem>>, vector<8x8x24xf32>
    %36 = vector.shape_cast %35 : vector<8x8x24xf32> to vector<64x24xf32>
    %c2_38 = arith.constant 2 : index
    %c0_39 = arith.constant 0 : index
    %c0_40 = arith.constant 0 : index
    %37 = vector.load %arg15[%c2_38, %c0_39, %c0_40] : memref<10x10x24xf32, #tpu.memory_space<vmem>>, vector<8x8x24xf32>
    %38 = vector.shape_cast %37 : vector<8x8x24xf32> to vector<64x24xf32>
    %c2_41 = arith.constant 2 : index
    %c1_42 = arith.constant 1 : index
    %c0_43 = arith.constant 0 : index
    %39 = vector.load %arg15[%c2_41, %c1_42, %c0_43] : memref<10x10x24xf32, #tpu.memory_space<vmem>>, vector<8x8x24xf32>
    %40 = vector.shape_cast %39 : vector<8x8x24xf32> to vector<64x24xf32>
    %c2_44 = arith.constant 2 : index
    %c2_45 = arith.constant 2 : index
    %c0_46 = arith.constant 0 : index
    %41 = vector.load %arg15[%c2_44, %c2_45, %c0_46] : memref<10x10x24xf32, #tpu.memory_space<vmem>>, vector<8x8x24xf32>
    %42 = vector.shape_cast %41 : vector<8x8x24xf32> to vector<64x24xf32>
    %43 = vector.shape_cast %26 : vector<64x24xf32> to vector<1x64x24xf32>
    %44 = vector.shape_cast %28 : vector<64x24xf32> to vector<1x64x24xf32>
    %45 = vector.shape_cast %30 : vector<64x24xf32> to vector<1x64x24xf32>
    %46 = vector.shape_cast %32 : vector<64x24xf32> to vector<1x64x24xf32>
    %47 = vector.shape_cast %34 : vector<64x24xf32> to vector<1x64x24xf32>
    %48 = vector.shape_cast %36 : vector<64x24xf32> to vector<1x64x24xf32>
    %49 = vector.shape_cast %38 : vector<64x24xf32> to vector<1x64x24xf32>
    %50 = vector.shape_cast %40 : vector<64x24xf32> to vector<1x64x24xf32>
    %51 = vector.shape_cast %42 : vector<64x24xf32> to vector<1x64x24xf32>
    %52 = tpu.concatenate %43, %44, %45, %46, %47, %48, %49, %50, %51 in 0 : vector<1x64x24xf32>, vector<1x64x24xf32>, vector<1x64x24xf32>, vector<1x64x24xf32>, vector<1x64x24xf32>, vector<1x64x24xf32>, vector<1x64x24xf32>, vector<1x64x24xf32>, vector<1x64x24xf32> -> vector<9x64x24xf32>
    %c0_47 = arith.constant 0 : index
    %c0_48 = arith.constant 0 : index
    %c0_49 = arith.constant 0 : index
    %c0_50 = arith.constant 0 : index
    %53 = vector.load %arg7[%c0_47, %c0_48, %c0_49, %c0_50] : memref<3x3x24x6xf32, #tpu.memory_space<vmem>>, vector<3x3x24x6xf32>
    %54 = vector.shape_cast %53 : vector<3x3x24x6xf32> to vector<9x24x6xf32>
    "tpu.trace_start"() <{level = 10 : i32, message = "tmk,tkn->tmn"}> : () -> ()
    %cst_51 = arith.constant dense<0.000000e+00> : vector<9x64x6xf32>
    %55 = tpu.matmul %52, %54, %cst_51 {dimension_numbers = #tpu.dot_dimension_numbers<[2], [1], [1], [2], [0, 0, 0, 1, 1, 2], [0], [0]>} : vector<9x64x24xf32>, vector<9x24x6xf32>, vector<9x64x6xf32> -> vector<9x64x6xf32>
    "tpu.trace_stop"() : () -> ()
    %cst_52 = arith.constant dense<0.000000e+00> : vector<64x6xf32>
    %56 = vector.multi_reduction <add>, %55, %cst_52 [0] : vector<9x64x6xf32> to vector<64x6xf32>
    %c0_53 = arith.constant 0 : index
    %c0_54 = arith.constant 0 : index
    %57 = vector.load %arg8[%c0_53, %c0_54] : memref<1x212xf32, #tpu.memory_space<vmem>>, vector<1x212xf32>
    %58 = vector.broadcast %57 : vector<1x212xf32> to vector<64x212xf32>
    %59 = arith.mulf %4, %58 : vector<64x212xf32>
    %c0_55 = arith.constant 0 : index
    %c0_56 = arith.constant 0 : index
    %60 = vector.load %arg9[%c0_55, %c0_56] : memref<1x212xf32, #tpu.memory_space<vmem>>, vector<1x212xf32>
    %61 = vector.broadcast %60 : vector<1x212xf32> to vector<64x212xf32>
    %62 = arith.addf %59, %61 : vector<64x212xf32>
    %cst_57 = arith.constant 0.000000e+00 : f32
    %63 = vector.broadcast %cst_57 : f32 to vector<64x212xf32>
    %64 = arith.maximumf %62, %63 : vector<64x212xf32>
    %c0_58 = arith.constant 0 : index
    %c0_59 = arith.constant 0 : index
    %65 = vector.load %arg10[%c0_58, %c0_59] : memref<212x174xf32, #tpu.memory_space<vmem>>, vector<212x174xf32>
    %cst_60 = arith.constant dense<0.000000e+00> : vector<64x174xf32>
    %66 = tpu.matmul %64, %65, %cst_60 {dimension_numbers = #tpu.dot_dimension_numbers<[1], [0], [0], [1], [0, 0, 1, 1], [], []>} : vector<64x212xf32>, vector<212x174xf32>, vector<64x174xf32> -> vector<64x174xf32>
    %c0_61 = arith.constant 0 : index
    %c0_62 = arith.constant 0 : index
    %67 = vector.load %arg11[%c0_61, %c0_62] : memref<1x6xf32, #tpu.memory_space<vmem>>, vector<1x6xf32>
    %68 = vector.broadcast %67 : vector<1x6xf32> to vector<64x6xf32>
    %69 = arith.mulf %56, %68 : vector<64x6xf32>
    %c0_63 = arith.constant 0 : index
    %c0_64 = arith.constant 0 : index
    %70 = vector.load %arg12[%c0_63, %c0_64] : memref<1x6xf32, #tpu.memory_space<vmem>>, vector<1x6xf32>
    %71 = vector.broadcast %70 : vector<1x6xf32> to vector<64x6xf32>
    %72 = arith.addf %69, %71 : vector<64x6xf32>
    %cst_65 = arith.constant 0.000000e+00 : f32
    %73 = vector.broadcast %cst_65 : f32 to vector<64x6xf32>
    %74 = arith.maximumf %72, %73 : vector<64x6xf32>
    %c0_66 = arith.constant 0 : index
    %c0_67 = arith.constant 0 : index
    %75 = vector.load %arg13[%c0_66, %c0_67] : memref<6x174xf32, #tpu.memory_space<vmem>>, vector<6x174xf32>
    %cst_68 = arith.constant dense<0.000000e+00> : vector<64x174xf32>
    %76 = tpu.matmul %74, %75, %cst_68 {dimension_numbers = #tpu.dot_dimension_numbers<[1], [0], [0], [1], [0, 0, 1, 1], [], []>} : vector<64x6xf32>, vector<6x174xf32>, vector<64x174xf32> -> vector<64x174xf32>
    %77 = arith.addf %66, %76 : vector<64x174xf32>
    %78 = vector.shape_cast %77 : vector<64x174xf32> to vector<1x8x8x174xf32>
    %c0_69 = arith.constant 0 : index
    %c0_70 = arith.constant 0 : index
    %c0_71 = arith.constant 0 : index
    %c0_72 = arith.constant 0 : index
    %79 = vector.load %arg14[%c0_69, %c0_70, %c0_71, %c0_72] : memref<1x8x8x174xf32, #tpu.memory_space<vmem>>, vector<1x8x8x174xf32>
    tpu.vector_store %arg14[%c0_69, %c0_70, %c0_71, %c0_72], %78 {strides = array<i32>} : memref<1x8x8x174xf32, #tpu.memory_space<vmem>>, vector<1x8x8x174xf32>,
    return
  }
  func.func @transform_0(%arg0: i32) -> (i32, i32, i32, i32) {
    %c0_i32 = arith.constant 0 : i32
    %c0_i32_0 = arith.constant 0 : i32
    %c0_i32_1 = arith.constant 0 : i32
    %c0_i32_2 = arith.constant 0 : i32
    return %arg0, %c0_i32, %c0_i32_0, %c0_i32_1 : i32, i32, i32, i32
  }
  func.func @transform_1(%arg0: i32) -> (i32, i32) {
    %c0_i32 = arith.constant 0 : i32
    %c0_i32_0 = arith.constant 0 : i32
    %c0_i32_1 = arith.constant 0 : i32
    return %c0_i32, %c0_i32_0 : i32, i32
  }
  func.func @transform_2(%arg0: i32) -> (i32, i32) {
    %c0_i32 = arith.constant 0 : i32
    %c0_i32_0 = arith.constant 0 : i32
    %c0_i32_1 = arith.constant 0 : i32
    return %c0_i32, %c0_i32_0 : i32, i32
  }
  func.func @transform_3(%arg0: i32) -> (i32, i32) {
    %c0_i32 = arith.constant 0 : i32
    %c0_i32_0 = arith.constant 0 : i32
    %c0_i32_1 = arith.constant 0 : i32
    return %c0_i32, %c0_i32_0 : i32, i32
  }
  func.func @transform_4(%arg0: i32) -> (i32, i32) {
    %c0_i32 = arith.constant 0 : i32
    %c0_i32_0 = arith.constant 0 : i32
    %c0_i32_1 = arith.constant 0 : i32
    return %c0_i32, %c0_i32_0 : i32, i32
  }
  func.func @transform_5(%arg0: i32) -> (i32, i32) {
    %c0_i32 = arith.constant 0 : i32
    %c0_i32_0 = arith.constant 0 : i32
    %c0_i32_1 = arith.constant 0 : i32
    return %c0_i32, %c0_i32_0 : i32, i32
  }
  func.func @transform_6(%arg0: i32) -> (i32, i32, i32, i32) {
    %c0_i32 = arith.constant 0 : i32
    %c0_i32_0 = arith.constant 0 : i32
    %c0_i32_1 = arith.constant 0 : i32
    %c0_i32_2 = arith.constant 0 : i32
    %c0_i32_3 = arith.constant 0 : i32
    return %c0_i32, %c0_i32_0, %c0_i32_1, %c0_i32_2 : i32, i32, i32, i32
  }
  func.func @transform_7(%arg0: i32) -> (i32, i32) {
    %c0_i32 = arith.constant 0 : i32
    %c0_i32_0 = arith.constant 0 : i32
    %c0_i32_1 = arith.constant 0 : i32
    return %c0_i32, %c0_i32_0 : i32, i32
  }
  func.func @transform_8(%arg0: i32) -> (i32, i32) {
    %c0_i32 = arith.constant 0 : i32
    %c0_i32_0 = arith.constant 0 : i32
    %c0_i32_1 = arith.constant 0 : i32
    return %c0_i32, %c0_i32_0 : i32, i32
  }
  func.func @transform_9(%arg0: i32) -> (i32, i32) {
    %c0_i32 = arith.constant 0 : i32
    %c0_i32_0 = arith.constant 0 : i32
    %c0_i32_1 = arith.constant 0 : i32
    return %c0_i32, %c0_i32_0 : i32, i32
  }
  func.func @transform_10(%arg0: i32) -> (i32, i32) {
    %c0_i32 = arith.constant 0 : i32
    %c0_i32_0 = arith.constant 0 : i32
    %c0_i32_1 = arith.constant 0 : i32
    return %c0_i32, %c0_i32_0 : i32, i32
  }
  func.func @transform_11(%arg0: i32) -> (i32, i32) {
    %c0_i32 = arith.constant 0 : i32
    %c0_i32_0 = arith.constant 0 : i32
    %c0_i32_1 = arith.constant 0 : i32
    return %c0_i32, %c0_i32_0 : i32, i32
  }
  func.func @transform_12(%arg0: i32) -> (i32, i32) {
    %c0_i32 = arith.constant 0 : i32
    %c0_i32_0 = arith.constant 0 : i32
    %c0_i32_1 = arith.constant 0 : i32
    return %c0_i32, %c0_i32_0 : i32, i32
  }
  func.func @transform_13(%arg0: i32) -> (i32, i32, i32, i32) {
    %c0_i32 = arith.constant 0 : i32
    %c0_i32_0 = arith.constant 0 : i32
    %c0_i32_1 = arith.constant 0 : i32
    %c0_i32_2 = arith.constant 0 : i32
    return %arg0, %c0_i32, %c0_i32_0, %c0_i32_1 : i32, i32, i32, i32
  }
}

module attributes {stable_mosaic.version = 11 : i64} {
  func.func @kernel(%arg0: i32, %arg1: memref<1x8x8x144xf32, #tpu.memory_space<vmem>>, %arg2: memref<1x144xf32, #tpu.memory_space<vmem>>, %arg3: memref<1x144xf32, #tpu.memory_space<vmem>>, %arg4: memref<144x24xf32, #tpu.memory_space<vmem>>, %arg5: memref<1x24xf32, #tpu.memory_space<vmem>>, %arg6: memref<1x24xf32, #tpu.memory_space<vmem>>, %arg7: memref<3x3x24x6xf32, #tpu.memory_space<vmem>>, %arg8: memref<1x144xf32, #tpu.memory_space<vmem>>, %arg9: memref<1x6xf32, #tpu.memory_space<vmem>>, %arg10: memref<1x1xf32, #tpu.memory_space<vmem>>, %arg11: memref<1x8x8x1xf32, #tpu.memory_space<vmem>>, %arg12: memref<10x10x24xf32, #tpu.memory_space<vmem>>) attributes {dimension_semantics = [#tpu.dimension_semantics<parallel>], iteration_bounds = array<i64: 2>, scalar_prefetch = 0 : i64, scratch_operands = 1 : i64, tpu.core_type = #tpu.core_type<tc>, window_params = [{transform_indices = @transform_0, window_bounds = array<i64: 1, 8, 8, 144>}, {pipeline_mode = #tpu.pipeline_mode<synchronous>, transform_indices = @transform_1, window_bounds = array<i64: 1, 144>}, {pipeline_mode = #tpu.pipeline_mode<synchronous>, transform_indices = @transform_2, window_bounds = array<i64: 1, 144>}, {pipeline_mode = #tpu.pipeline_mode<synchronous>, transform_indices = @transform_3, window_bounds = array<i64: 144, 24>}, {pipeline_mode = #tpu.pipeline_mode<synchronous>, transform_indices = @transform_4, window_bounds = array<i64: 1, 24>}, {pipeline_mode = #tpu.pipeline_mode<synchronous>, transform_indices = @transform_5, window_bounds = array<i64: 1, 24>}, {pipeline_mode = #tpu.pipeline_mode<synchronous>, transform_indices = @transform_6, window_bounds = array<i64: 3, 3, 24, 6>}, {pipeline_mode = #tpu.pipeline_mode<synchronous>, transform_indices = @transform_7, window_bounds = array<i64: 1, 144>}, {pipeline_mode = #tpu.pipeline_mode<synchronous>, transform_indices = @transform_8, window_bounds = array<i64: 1, 6>}, {pipeline_mode = #tpu.pipeline_mode<synchronous>, transform_indices = @transform_9, window_bounds = array<i64: 1, 1>}, {transform_indices = @transform_10, window_bounds = array<i64: 1, 8, 8, 1>}]} {
    %cst = arith.constant 0.000000e+00 : f32
    %0 = vector.broadcast %cst : f32 to vector<10x10x24xf32>
    %c0 = arith.constant 0 : index
    %c0_0 = arith.constant 0 : index
    %c0_1 = arith.constant 0 : index
    %1 = vector.load %arg12[%c0, %c0_0, %c0_1] : memref<10x10x24xf32, #tpu.memory_space<vmem>>, vector<10x10x24xf32>
    tpu.vector_store %arg12[%c0, %c0_0, %c0_1], %0 {strides = array<i32>} : memref<10x10x24xf32, #tpu.memory_space<vmem>>, vector<10x10x24xf32>,
    %c0_2 = arith.constant 0 : index
    %c0_3 = arith.constant 0 : index
    %c0_4 = arith.constant 0 : index
    %c0_5 = arith.constant 0 : index
    %2 = vector.load %arg1[%c0_2, %c0_3, %c0_4, %c0_5] : memref<1x8x8x144xf32, #tpu.memory_space<vmem>>, vector<1x8x8x144xf32>
    %3 = vector.shape_cast %2 : vector<1x8x8x144xf32> to vector<8x8x144xf32>
    %4 = vector.shape_cast %3 : vector<8x8x144xf32> to vector<64x144xf32>
    %c0_6 = arith.constant 0 : index
    %c0_7 = arith.constant 0 : index
    %5 = vector.load %arg2[%c0_6, %c0_7] : memref<1x144xf32, #tpu.memory_space<vmem>>, vector<1x144xf32>
    %6 = vector.broadcast %5 : vector<1x144xf32> to vector<64x144xf32>
    %7 = arith.mulf %4, %6 : vector<64x144xf32>
    %c0_8 = arith.constant 0 : index
    %c0_9 = arith.constant 0 : index
    %8 = vector.load %arg3[%c0_8, %c0_9] : memref<1x144xf32, #tpu.memory_space<vmem>>, vector<1x144xf32>
    %9 = vector.broadcast %8 : vector<1x144xf32> to vector<64x144xf32>
    %10 = arith.addf %7, %9 : vector<64x144xf32>
    %cst_10 = arith.constant 0.000000e+00 : f32
    %11 = vector.broadcast %cst_10 : f32 to vector<64x144xf32>
    %12 = arith.maximumf %10, %11 : vector<64x144xf32>
    %c0_11 = arith.constant 0 : index
    %c0_12 = arith.constant 0 : index
    %13 = vector.load %arg4[%c0_11, %c0_12] : memref<144x24xf32, #tpu.memory_space<vmem>>, vector<144x24xf32>
    %cst_13 = arith.constant dense<0.000000e+00> : vector<64x24xf32>
    %14 = tpu.matmul %12, %13, %cst_13 {dimension_numbers = #tpu.dot_dimension_numbers<[1], [0], [0], [1], [0, 0, 1, 1], [], []>} : vector<64x144xf32>, vector<144x24xf32>, vector<64x24xf32> -> vector<64x24xf32>
    %c0_14 = arith.constant 0 : index
    %c0_15 = arith.constant 0 : index
    %15 = vector.load %arg5[%c0_14, %c0_15] : memref<1x24xf32, #tpu.memory_space<vmem>>, vector<1x24xf32>
    %16 = vector.broadcast %15 : vector<1x24xf32> to vector<64x24xf32>
    %17 = arith.mulf %14, %16 : vector<64x24xf32>
    %c0_16 = arith.constant 0 : index
    %c0_17 = arith.constant 0 : index
    %18 = vector.load %arg6[%c0_16, %c0_17] : memref<1x24xf32, #tpu.memory_space<vmem>>, vector<1x24xf32>
    %19 = vector.broadcast %18 : vector<1x24xf32> to vector<64x24xf32>
    %20 = arith.addf %17, %19 : vector<64x24xf32>
    %cst_18 = arith.constant 0.000000e+00 : f32
    %21 = vector.broadcast %cst_18 : f32 to vector<64x24xf32>
    %22 = arith.maximumf %20, %21 : vector<64x24xf32>
    %23 = vector.shape_cast %22 : vector<64x24xf32> to vector<8x8x24xf32>
    %c1 = arith.constant 1 : index
    %c1_19 = arith.constant 1 : index
    %c0_20 = arith.constant 0 : index
    %24 = vector.load %arg12[%c1, %c1_19, %c0_20] : memref<10x10x24xf32, #tpu.memory_space<vmem>>, vector<8x8x24xf32>
    tpu.vector_store %arg12[%c1, %c1_19, %c0_20], %23 {strides = array<i32>} : memref<10x10x24xf32, #tpu.memory_space<vmem>>, vector<8x8x24xf32>,
    %c0_21 = arith.constant 0 : index
    %c0_22 = arith.constant 0 : index
    %c0_23 = arith.constant 0 : index
    %25 = vector.load %arg12[%c0_21, %c0_22, %c0_23] : memref<10x10x24xf32, #tpu.memory_space<vmem>>, vector<8x8x24xf32>
    %26 = vector.shape_cast %25 : vector<8x8x24xf32> to vector<64x24xf32>
    %c0_24 = arith.constant 0 : index
    %c1_25 = arith.constant 1 : index
    %c0_26 = arith.constant 0 : index
    %27 = vector.load %arg12[%c0_24, %c1_25, %c0_26] : memref<10x10x24xf32, #tpu.memory_space<vmem>>, vector<8x8x24xf32>
    %28 = vector.shape_cast %27 : vector<8x8x24xf32> to vector<64x24xf32>
    %c0_27 = arith.constant 0 : index
    %c2 = arith.constant 2 : index
    %c0_28 = arith.constant 0 : index
    %29 = vector.load %arg12[%c0_27, %c2, %c0_28] : memref<10x10x24xf32, #tpu.memory_space<vmem>>, vector<8x8x24xf32>
    %30 = vector.shape_cast %29 : vector<8x8x24xf32> to vector<64x24xf32>
    %c1_29 = arith.constant 1 : index
    %c0_30 = arith.constant 0 : index
    %c0_31 = arith.constant 0 : index
    %31 = vector.load %arg12[%c1_29, %c0_30, %c0_31] : memref<10x10x24xf32, #tpu.memory_space<vmem>>, vector<8x8x24xf32>
    %32 = vector.shape_cast %31 : vector<8x8x24xf32> to vector<64x24xf32>
    %c1_32 = arith.constant 1 : index
    %c1_33 = arith.constant 1 : index
    %c0_34 = arith.constant 0 : index
    %33 = vector.load %arg12[%c1_32, %c1_33, %c0_34] : memref<10x10x24xf32, #tpu.memory_space<vmem>>, vector<8x8x24xf32>
    %34 = vector.shape_cast %33 : vector<8x8x24xf32> to vector<64x24xf32>
    %c1_35 = arith.constant 1 : index
    %c2_36 = arith.constant 2 : index
    %c0_37 = arith.constant 0 : index
    %35 = vector.load %arg12[%c1_35, %c2_36, %c0_37] : memref<10x10x24xf32, #tpu.memory_space<vmem>>, vector<8x8x24xf32>
    %36 = vector.shape_cast %35 : vector<8x8x24xf32> to vector<64x24xf32>
    %c2_38 = arith.constant 2 : index
    %c0_39 = arith.constant 0 : index
    %c0_40 = arith.constant 0 : index
    %37 = vector.load %arg12[%c2_38, %c0_39, %c0_40] : memref<10x10x24xf32, #tpu.memory_space<vmem>>, vector<8x8x24xf32>
    %38 = vector.shape_cast %37 : vector<8x8x24xf32> to vector<64x24xf32>
    %c2_41 = arith.constant 2 : index
    %c1_42 = arith.constant 1 : index
    %c0_43 = arith.constant 0 : index
    %39 = vector.load %arg12[%c2_41, %c1_42, %c0_43] : memref<10x10x24xf32, #tpu.memory_space<vmem>>, vector<8x8x24xf32>
    %40 = vector.shape_cast %39 : vector<8x8x24xf32> to vector<64x24xf32>
    %c2_44 = arith.constant 2 : index
    %c2_45 = arith.constant 2 : index
    %c0_46 = arith.constant 0 : index
    %41 = vector.load %arg12[%c2_44, %c2_45, %c0_46] : memref<10x10x24xf32, #tpu.memory_space<vmem>>, vector<8x8x24xf32>
    %42 = vector.shape_cast %41 : vector<8x8x24xf32> to vector<64x24xf32>
    %43 = vector.shape_cast %26 : vector<64x24xf32> to vector<1x64x24xf32>
    %44 = vector.shape_cast %28 : vector<64x24xf32> to vector<1x64x24xf32>
    %45 = vector.shape_cast %30 : vector<64x24xf32> to vector<1x64x24xf32>
    %46 = vector.shape_cast %32 : vector<64x24xf32> to vector<1x64x24xf32>
    %47 = vector.shape_cast %34 : vector<64x24xf32> to vector<1x64x24xf32>
    %48 = vector.shape_cast %36 : vector<64x24xf32> to vector<1x64x24xf32>
    %49 = vector.shape_cast %38 : vector<64x24xf32> to vector<1x64x24xf32>
    %50 = vector.shape_cast %40 : vector<64x24xf32> to vector<1x64x24xf32>
    %51 = vector.shape_cast %42 : vector<64x24xf32> to vector<1x64x24xf32>
    %52 = tpu.concatenate %43, %44, %45, %46, %47, %48, %49, %50, %51 in 0 : vector<1x64x24xf32>, vector<1x64x24xf32>, vector<1x64x24xf32>, vector<1x64x24xf32>, vector<1x64x24xf32>, vector<1x64x24xf32>, vector<1x64x24xf32>, vector<1x64x24xf32>, vector<1x64x24xf32> -> vector<9x64x24xf32>
    %c0_47 = arith.constant 0 : index
    %c0_48 = arith.constant 0 : index
    %c0_49 = arith.constant 0 : index
    %c0_50 = arith.constant 0 : index
    %53 = vector.load %arg7[%c0_47, %c0_48, %c0_49, %c0_50] : memref<3x3x24x6xf32, #tpu.memory_space<vmem>>, vector<3x3x24x6xf32>
    %54 = vector.shape_cast %53 : vector<3x3x24x6xf32> to vector<9x24x6xf32>
    "tpu.trace_start"() <{level = 10 : i32, message = "tmk,tkn->tmn"}> : () -> ()
    %cst_51 = arith.constant dense<0.000000e+00> : vector<9x64x6xf32>
    %55 = tpu.matmul %52, %54, %cst_51 {dimension_numbers = #tpu.dot_dimension_numbers<[2], [1], [1], [2], [0, 0, 0, 1, 1, 2], [0], [0]>} : vector<9x64x24xf32>, vector<9x24x6xf32>, vector<9x64x6xf32> -> vector<9x64x6xf32>
    "tpu.trace_stop"() : () -> ()
    %cst_52 = arith.constant dense<0.000000e+00> : vector<64x6xf32>
    %56 = vector.multi_reduction <add>, %55, %cst_52 [0] : vector<9x64x6xf32> to vector<64x6xf32>
    %c0_53 = arith.constant 0 : index
    %c0_54 = arith.constant 0 : index
    %57 = vector.load %arg8[%c0_53, %c0_54] : memref<1x144xf32, #tpu.memory_space<vmem>>, vector<1x144xf32>
    %58 = vector.broadcast %57 : vector<1x144xf32> to vector<64x144xf32>
    %59 = arith.mulf %4, %58 : vector<64x144xf32>
    %cst_55 = arith.constant dense<0.000000e+00> : vector<64xf32>
    %60 = vector.multi_reduction <add>, %59, %cst_55 [1] : vector<64x144xf32> to vector<64xf32>
    %61 = vector.shape_cast %60 : vector<64xf32> to vector<64x1xf32>
    %c0_56 = arith.constant 0 : index
    %c0_57 = arith.constant 0 : index
    %62 = vector.load %arg9[%c0_56, %c0_57] : memref<1x6xf32, #tpu.memory_space<vmem>>, vector<1x6xf32>
    %63 = vector.broadcast %62 : vector<1x6xf32> to vector<64x6xf32>
    %64 = arith.mulf %56, %63 : vector<64x6xf32>
    %cst_58 = arith.constant dense<0.000000e+00> : vector<64xf32>
    %65 = vector.multi_reduction <add>, %64, %cst_58 [1] : vector<64x6xf32> to vector<64xf32>
    %66 = vector.shape_cast %65 : vector<64xf32> to vector<64x1xf32>
    %67 = arith.addf %61, %66 : vector<64x1xf32>
    %c0_59 = arith.constant 0 : index
    %c0_60 = arith.constant 0 : index
    %68 = vector.load %arg10[%c0_59, %c0_60] : memref<1x1xf32, #tpu.memory_space<vmem>>, vector<1x1xf32>
    %69 = vector.broadcast %68 : vector<1x1xf32> to vector<64x1xf32>
    %70 = arith.addf %67, %69 : vector<64x1xf32>
    %71 = vector.shape_cast %70 : vector<64x1xf32> to vector<1x8x8x1xf32>
    %c0_61 = arith.constant 0 : index
    %c0_62 = arith.constant 0 : index
    %c0_63 = arith.constant 0 : index
    %c0_64 = arith.constant 0 : index
    %72 = vector.load %arg11[%c0_61, %c0_62, %c0_63, %c0_64] : memref<1x8x8x1xf32, #tpu.memory_space<vmem>>, vector<1x8x8x1xf32>
    tpu.vector_store %arg11[%c0_61, %c0_62, %c0_63, %c0_64], %71 {strides = array<i32>} : memref<1x8x8x1xf32, #tpu.memory_space<vmem>>, vector<1x8x8x1xf32>,
    return
  }
  func.func @transform_0(%arg0: i32) -> (i32, i32, i32, i32) {
    %c0_i32 = arith.constant 0 : i32
    %c0_i32_0 = arith.constant 0 : i32
    %c0_i32_1 = arith.constant 0 : i32
    %c0_i32_2 = arith.constant 0 : i32
    return %arg0, %c0_i32, %c0_i32_0, %c0_i32_1 : i32, i32, i32, i32
  }
  func.func @transform_1(%arg0: i32) -> (i32, i32) {
    %c0_i32 = arith.constant 0 : i32
    %c0_i32_0 = arith.constant 0 : i32
    %c0_i32_1 = arith.constant 0 : i32
    return %c0_i32, %c0_i32_0 : i32, i32
  }
  func.func @transform_2(%arg0: i32) -> (i32, i32) {
    %c0_i32 = arith.constant 0 : i32
    %c0_i32_0 = arith.constant 0 : i32
    %c0_i32_1 = arith.constant 0 : i32
    return %c0_i32, %c0_i32_0 : i32, i32
  }
  func.func @transform_3(%arg0: i32) -> (i32, i32) {
    %c0_i32 = arith.constant 0 : i32
    %c0_i32_0 = arith.constant 0 : i32
    %c0_i32_1 = arith.constant 0 : i32
    return %c0_i32, %c0_i32_0 : i32, i32
  }
  func.func @transform_4(%arg0: i32) -> (i32, i32) {
    %c0_i32 = arith.constant 0 : i32
    %c0_i32_0 = arith.constant 0 : i32
    %c0_i32_1 = arith.constant 0 : i32
    return %c0_i32, %c0_i32_0 : i32, i32
  }
  func.func @transform_5(%arg0: i32) -> (i32, i32) {
    %c0_i32 = arith.constant 0 : i32
    %c0_i32_0 = arith.constant 0 : i32
    %c0_i32_1 = arith.constant 0 : i32
    return %c0_i32, %c0_i32_0 : i32, i32
  }
  func.func @transform_6(%arg0: i32) -> (i32, i32, i32, i32) {
    %c0_i32 = arith.constant 0 : i32
    %c0_i32_0 = arith.constant 0 : i32
    %c0_i32_1 = arith.constant 0 : i32
    %c0_i32_2 = arith.constant 0 : i32
    %c0_i32_3 = arith.constant 0 : i32
    return %c0_i32, %c0_i32_0, %c0_i32_1, %c0_i32_2 : i32, i32, i32, i32
  }
  func.func @transform_7(%arg0: i32) -> (i32, i32) {
    %c0_i32 = arith.constant 0 : i32
    %c0_i32_0 = arith.constant 0 : i32
    %c0_i32_1 = arith.constant 0 : i32
    return %c0_i32, %c0_i32_0 : i32, i32
  }
  func.func @transform_8(%arg0: i32) -> (i32, i32) {
    %c0_i32 = arith.constant 0 : i32
    %c0_i32_0 = arith.constant 0 : i32
    %c0_i32_1 = arith.constant 0 : i32
    return %c0_i32, %c0_i32_0 : i32, i32
  }
  func.func @transform_9(%arg0: i32) -> (i32, i32) {
    %c0_i32 = arith.constant 0 : i32
    %c0_i32_0 = arith.constant 0 : i32
    %c0_i32_1 = arith.constant 0 : i32
    return %c0_i32, %c0_i32_0 : i32, i32
  }
  func.func @transform_10(%arg0: i32) -> (i32, i32, i32, i32) {
    %c0_i32 = arith.constant 0 : i32
    %c0_i32_0 = arith.constant 0 : i32
    %c0_i32_1 = arith.constant 0 : i32
    %c0_i32_2 = arith.constant 0 : i32
    return %arg0, %c0_i32, %c0_i32_0, %c0_i32_1 : i32, i32, i32, i32
  }
}

module attributes {stable_mosaic.version = 11 : i64} {
  func.func @kernel(%arg0: i32, %arg1: memref<1x8x8x174xf32, #tpu.memory_space<vmem>>, %arg2: memref<1x174xf32, #tpu.memory_space<vmem>>, %arg3: memref<1x174xf32, #tpu.memory_space<vmem>>, %arg4: memref<174x24xf32, #tpu.memory_space<vmem>>, %arg5: memref<1x24xf32, #tpu.memory_space<vmem>>, %arg6: memref<1x24xf32, #tpu.memory_space<vmem>>, %arg7: memref<3x3x24x6xf32, #tpu.memory_space<vmem>>, %arg8: memref<1x174xf32, #tpu.memory_space<vmem>>, %arg9: memref<1x174xf32, #tpu.memory_space<vmem>>, %arg10: memref<174x144xf32, #tpu.memory_space<vmem>>, %arg11: memref<1x6xf32, #tpu.memory_space<vmem>>, %arg12: memref<1x6xf32, #tpu.memory_space<vmem>>, %arg13: memref<6x144xf32, #tpu.memory_space<vmem>>, %arg14: memref<1x8x8x144xf32, #tpu.memory_space<vmem>>, %arg15: memref<10x10x24xf32, #tpu.memory_space<vmem>>) attributes {dimension_semantics = [#tpu.dimension_semantics<parallel>], iteration_bounds = array<i64: 2>, scalar_prefetch = 0 : i64, scratch_operands = 1 : i64, tpu.core_type = #tpu.core_type<tc>, window_params = [{transform_indices = @transform_0, window_bounds = array<i64: 1, 8, 8, 174>}, {pipeline_mode = #tpu.pipeline_mode<synchronous>, transform_indices = @transform_1, window_bounds = array<i64: 1, 174>}, {pipeline_mode = #tpu.pipeline_mode<synchronous>, transform_indices = @transform_2, window_bounds = array<i64: 1, 174>}, {pipeline_mode = #tpu.pipeline_mode<synchronous>, transform_indices = @transform_3, window_bounds = array<i64: 174, 24>}, {pipeline_mode = #tpu.pipeline_mode<synchronous>, transform_indices = @transform_4, window_bounds = array<i64: 1, 24>}, {pipeline_mode = #tpu.pipeline_mode<synchronous>, transform_indices = @transform_5, window_bounds = array<i64: 1, 24>}, {pipeline_mode = #tpu.pipeline_mode<synchronous>, transform_indices = @transform_6, window_bounds = array<i64: 3, 3, 24, 6>}, {pipeline_mode = #tpu.pipeline_mode<synchronous>, transform_indices = @transform_7, window_bounds = array<i64: 1, 174>}, {pipeline_mode = #tpu.pipeline_mode<synchronous>, transform_indices = @transform_8, window_bounds = array<i64: 1, 174>}, {pipeline_mode = #tpu.pipeline_mode<synchronous>, transform_indices = @transform_9, window_bounds = array<i64: 174, 144>}, {pipeline_mode = #tpu.pipeline_mode<synchronous>, transform_indices = @transform_10, window_bounds = array<i64: 1, 6>}, {pipeline_mode = #tpu.pipeline_mode<synchronous>, transform_indices = @transform_11, window_bounds = array<i64: 1, 6>}, {pipeline_mode = #tpu.pipeline_mode<synchronous>, transform_indices = @transform_12, window_bounds = array<i64: 6, 144>}, {transform_indices = @transform_13, window_bounds = array<i64: 1, 8, 8, 144>}]} {
    %cst = arith.constant 0.000000e+00 : f32
    %0 = vector.broadcast %cst : f32 to vector<10x10x24xf32>
    %c0 = arith.constant 0 : index
    %c0_0 = arith.constant 0 : index
    %c0_1 = arith.constant 0 : index
    %1 = vector.load %arg15[%c0, %c0_0, %c0_1] : memref<10x10x24xf32, #tpu.memory_space<vmem>>, vector<10x10x24xf32>
    tpu.vector_store %arg15[%c0, %c0_0, %c0_1], %0 {strides = array<i32>} : memref<10x10x24xf32, #tpu.memory_space<vmem>>, vector<10x10x24xf32>,
    %c0_2 = arith.constant 0 : index
    %c0_3 = arith.constant 0 : index
    %c0_4 = arith.constant 0 : index
    %c0_5 = arith.constant 0 : index
    %2 = vector.load %arg1[%c0_2, %c0_3, %c0_4, %c0_5] : memref<1x8x8x174xf32, #tpu.memory_space<vmem>>, vector<1x8x8x174xf32>
    %3 = vector.shape_cast %2 : vector<1x8x8x174xf32> to vector<8x8x174xf32>
    %4 = vector.shape_cast %3 : vector<8x8x174xf32> to vector<64x174xf32>
    %c0_6 = arith.constant 0 : index
    %c0_7 = arith.constant 0 : index
    %5 = vector.load %arg2[%c0_6, %c0_7] : memref<1x174xf32, #tpu.memory_space<vmem>>, vector<1x174xf32>
    %6 = vector.broadcast %5 : vector<1x174xf32> to vector<64x174xf32>
    %7 = arith.mulf %4, %6 : vector<64x174xf32>
    %c0_8 = arith.constant 0 : index
    %c0_9 = arith.constant 0 : index
    %8 = vector.load %arg3[%c0_8, %c0_9] : memref<1x174xf32, #tpu.memory_space<vmem>>, vector<1x174xf32>
    %9 = vector.broadcast %8 : vector<1x174xf32> to vector<64x174xf32>
    %10 = arith.addf %7, %9 : vector<64x174xf32>
    %cst_10 = arith.constant 0.000000e+00 : f32
    %11 = vector.broadcast %cst_10 : f32 to vector<64x174xf32>
    %12 = arith.maximumf %10, %11 : vector<64x174xf32>
    %c0_11 = arith.constant 0 : index
    %c0_12 = arith.constant 0 : index
    %13 = vector.load %arg4[%c0_11, %c0_12] : memref<174x24xf32, #tpu.memory_space<vmem>>, vector<174x24xf32>
    %cst_13 = arith.constant dense<0.000000e+00> : vector<64x24xf32>
    %14 = tpu.matmul %12, %13, %cst_13 {dimension_numbers = #tpu.dot_dimension_numbers<[1], [0], [0], [1], [0, 0, 1, 1], [], []>} : vector<64x174xf32>, vector<174x24xf32>, vector<64x24xf32> -> vector<64x24xf32>
    %c0_14 = arith.constant 0 : index
    %c0_15 = arith.constant 0 : index
    %15 = vector.load %arg5[%c0_14, %c0_15] : memref<1x24xf32, #tpu.memory_space<vmem>>, vector<1x24xf32>
    %16 = vector.broadcast %15 : vector<1x24xf32> to vector<64x24xf32>
    %17 = arith.mulf %14, %16 : vector<64x24xf32>
    %c0_16 = arith.constant 0 : index
    %c0_17 = arith.constant 0 : index
    %18 = vector.load %arg6[%c0_16, %c0_17] : memref<1x24xf32, #tpu.memory_space<vmem>>, vector<1x24xf32>
    %19 = vector.broadcast %18 : vector<1x24xf32> to vector<64x24xf32>
    %20 = arith.addf %17, %19 : vector<64x24xf32>
    %cst_18 = arith.constant 0.000000e+00 : f32
    %21 = vector.broadcast %cst_18 : f32 to vector<64x24xf32>
    %22 = arith.maximumf %20, %21 : vector<64x24xf32>
    %23 = vector.shape_cast %22 : vector<64x24xf32> to vector<8x8x24xf32>
    %c1 = arith.constant 1 : index
    %c1_19 = arith.constant 1 : index
    %c0_20 = arith.constant 0 : index
    %24 = vector.load %arg15[%c1, %c1_19, %c0_20] : memref<10x10x24xf32, #tpu.memory_space<vmem>>, vector<8x8x24xf32>
    tpu.vector_store %arg15[%c1, %c1_19, %c0_20], %23 {strides = array<i32>} : memref<10x10x24xf32, #tpu.memory_space<vmem>>, vector<8x8x24xf32>,
    %c0_21 = arith.constant 0 : index
    %c0_22 = arith.constant 0 : index
    %c0_23 = arith.constant 0 : index
    %25 = vector.load %arg15[%c0_21, %c0_22, %c0_23] : memref<10x10x24xf32, #tpu.memory_space<vmem>>, vector<8x8x24xf32>
    %26 = vector.shape_cast %25 : vector<8x8x24xf32> to vector<64x24xf32>
    %c0_24 = arith.constant 0 : index
    %c1_25 = arith.constant 1 : index
    %c0_26 = arith.constant 0 : index
    %27 = vector.load %arg15[%c0_24, %c1_25, %c0_26] : memref<10x10x24xf32, #tpu.memory_space<vmem>>, vector<8x8x24xf32>
    %28 = vector.shape_cast %27 : vector<8x8x24xf32> to vector<64x24xf32>
    %c0_27 = arith.constant 0 : index
    %c2 = arith.constant 2 : index
    %c0_28 = arith.constant 0 : index
    %29 = vector.load %arg15[%c0_27, %c2, %c0_28] : memref<10x10x24xf32, #tpu.memory_space<vmem>>, vector<8x8x24xf32>
    %30 = vector.shape_cast %29 : vector<8x8x24xf32> to vector<64x24xf32>
    %c1_29 = arith.constant 1 : index
    %c0_30 = arith.constant 0 : index
    %c0_31 = arith.constant 0 : index
    %31 = vector.load %arg15[%c1_29, %c0_30, %c0_31] : memref<10x10x24xf32, #tpu.memory_space<vmem>>, vector<8x8x24xf32>
    %32 = vector.shape_cast %31 : vector<8x8x24xf32> to vector<64x24xf32>
    %c1_32 = arith.constant 1 : index
    %c1_33 = arith.constant 1 : index
    %c0_34 = arith.constant 0 : index
    %33 = vector.load %arg15[%c1_32, %c1_33, %c0_34] : memref<10x10x24xf32, #tpu.memory_space<vmem>>, vector<8x8x24xf32>
    %34 = vector.shape_cast %33 : vector<8x8x24xf32> to vector<64x24xf32>
    %c1_35 = arith.constant 1 : index
    %c2_36 = arith.constant 2 : index
    %c0_37 = arith.constant 0 : index
    %35 = vector.load %arg15[%c1_35, %c2_36, %c0_37] : memref<10x10x24xf32, #tpu.memory_space<vmem>>, vector<8x8x24xf32>
    %36 = vector.shape_cast %35 : vector<8x8x24xf32> to vector<64x24xf32>
    %c2_38 = arith.constant 2 : index
    %c0_39 = arith.constant 0 : index
    %c0_40 = arith.constant 0 : index
    %37 = vector.load %arg15[%c2_38, %c0_39, %c0_40] : memref<10x10x24xf32, #tpu.memory_space<vmem>>, vector<8x8x24xf32>
    %38 = vector.shape_cast %37 : vector<8x8x24xf32> to vector<64x24xf32>
    %c2_41 = arith.constant 2 : index
    %c1_42 = arith.constant 1 : index
    %c0_43 = arith.constant 0 : index
    %39 = vector.load %arg15[%c2_41, %c1_42, %c0_43] : memref<10x10x24xf32, #tpu.memory_space<vmem>>, vector<8x8x24xf32>
    %40 = vector.shape_cast %39 : vector<8x8x24xf32> to vector<64x24xf32>
    %c2_44 = arith.constant 2 : index
    %c2_45 = arith.constant 2 : index
    %c0_46 = arith.constant 0 : index
    %41 = vector.load %arg15[%c2_44, %c2_45, %c0_46] : memref<10x10x24xf32, #tpu.memory_space<vmem>>, vector<8x8x24xf32>
    %42 = vector.shape_cast %41 : vector<8x8x24xf32> to vector<64x24xf32>
    %43 = vector.shape_cast %26 : vector<64x24xf32> to vector<1x64x24xf32>
    %44 = vector.shape_cast %28 : vector<64x24xf32> to vector<1x64x24xf32>
    %45 = vector.shape_cast %30 : vector<64x24xf32> to vector<1x64x24xf32>
    %46 = vector.shape_cast %32 : vector<64x24xf32> to vector<1x64x24xf32>
    %47 = vector.shape_cast %34 : vector<64x24xf32> to vector<1x64x24xf32>
    %48 = vector.shape_cast %36 : vector<64x24xf32> to vector<1x64x24xf32>
    %49 = vector.shape_cast %38 : vector<64x24xf32> to vector<1x64x24xf32>
    %50 = vector.shape_cast %40 : vector<64x24xf32> to vector<1x64x24xf32>
    %51 = vector.shape_cast %42 : vector<64x24xf32> to vector<1x64x24xf32>
    %52 = tpu.concatenate %43, %44, %45, %46, %47, %48, %49, %50, %51 in 0 : vector<1x64x24xf32>, vector<1x64x24xf32>, vector<1x64x24xf32>, vector<1x64x24xf32>, vector<1x64x24xf32>, vector<1x64x24xf32>, vector<1x64x24xf32>, vector<1x64x24xf32>, vector<1x64x24xf32> -> vector<9x64x24xf32>
    %c0_47 = arith.constant 0 : index
    %c0_48 = arith.constant 0 : index
    %c0_49 = arith.constant 0 : index
    %c0_50 = arith.constant 0 : index
    %53 = vector.load %arg7[%c0_47, %c0_48, %c0_49, %c0_50] : memref<3x3x24x6xf32, #tpu.memory_space<vmem>>, vector<3x3x24x6xf32>
    %54 = vector.shape_cast %53 : vector<3x3x24x6xf32> to vector<9x24x6xf32>
    "tpu.trace_start"() <{level = 10 : i32, message = "tmk,tkn->tmn"}> : () -> ()
    %cst_51 = arith.constant dense<0.000000e+00> : vector<9x64x6xf32>
    %55 = tpu.matmul %52, %54, %cst_51 {dimension_numbers = #tpu.dot_dimension_numbers<[2], [1], [1], [2], [0, 0, 0, 1, 1, 2], [0], [0]>} : vector<9x64x24xf32>, vector<9x24x6xf32>, vector<9x64x6xf32> -> vector<9x64x6xf32>
    "tpu.trace_stop"() : () -> ()
    %cst_52 = arith.constant dense<0.000000e+00> : vector<64x6xf32>
    %56 = vector.multi_reduction <add>, %55, %cst_52 [0] : vector<9x64x6xf32> to vector<64x6xf32>
    %c0_53 = arith.constant 0 : index
    %c0_54 = arith.constant 0 : index
    %57 = vector.load %arg8[%c0_53, %c0_54] : memref<1x174xf32, #tpu.memory_space<vmem>>, vector<1x174xf32>
    %58 = vector.broadcast %57 : vector<1x174xf32> to vector<64x174xf32>
    %59 = arith.mulf %4, %58 : vector<64x174xf32>
    %c0_55 = arith.constant 0 : index
    %c0_56 = arith.constant 0 : index
    %60 = vector.load %arg9[%c0_55, %c0_56] : memref<1x174xf32, #tpu.memory_space<vmem>>, vector<1x174xf32>
    %61 = vector.broadcast %60 : vector<1x174xf32> to vector<64x174xf32>
    %62 = arith.addf %59, %61 : vector<64x174xf32>
    %cst_57 = arith.constant 0.000000e+00 : f32
    %63 = vector.broadcast %cst_57 : f32 to vector<64x174xf32>
    %64 = arith.maximumf %62, %63 : vector<64x174xf32>
    %c0_58 = arith.constant 0 : index
    %c0_59 = arith.constant 0 : index
    %65 = vector.load %arg10[%c0_58, %c0_59] : memref<174x144xf32, #tpu.memory_space<vmem>>, vector<174x144xf32>
    %cst_60 = arith.constant dense<0.000000e+00> : vector<64x144xf32>
    %66 = tpu.matmul %64, %65, %cst_60 {dimension_numbers = #tpu.dot_dimension_numbers<[1], [0], [0], [1], [0, 0, 1, 1], [], []>} : vector<64x174xf32>, vector<174x144xf32>, vector<64x144xf32> -> vector<64x144xf32>
    %c0_61 = arith.constant 0 : index
    %c0_62 = arith.constant 0 : index
    %67 = vector.load %arg11[%c0_61, %c0_62] : memref<1x6xf32, #tpu.memory_space<vmem>>, vector<1x6xf32>
    %68 = vector.broadcast %67 : vector<1x6xf32> to vector<64x6xf32>
    %69 = arith.mulf %56, %68 : vector<64x6xf32>
    %c0_63 = arith.constant 0 : index
    %c0_64 = arith.constant 0 : index
    %70 = vector.load %arg12[%c0_63, %c0_64] : memref<1x6xf32, #tpu.memory_space<vmem>>, vector<1x6xf32>
    %71 = vector.broadcast %70 : vector<1x6xf32> to vector<64x6xf32>
    %72 = arith.addf %69, %71 : vector<64x6xf32>
    %cst_65 = arith.constant 0.000000e+00 : f32
    %73 = vector.broadcast %cst_65 : f32 to vector<64x6xf32>
    %74 = arith.maximumf %72, %73 : vector<64x6xf32>
    %c0_66 = arith.constant 0 : index
    %c0_67 = arith.constant 0 : index
    %75 = vector.load %arg13[%c0_66, %c0_67] : memref<6x144xf32, #tpu.memory_space<vmem>>, vector<6x144xf32>
    %cst_68 = arith.constant dense<0.000000e+00> : vector<64x144xf32>
    %76 = tpu.matmul %74, %75, %cst_68 {dimension_numbers = #tpu.dot_dimension_numbers<[1], [0], [0], [1], [0, 0, 1, 1], [], []>} : vector<64x6xf32>, vector<6x144xf32>, vector<64x144xf32> -> vector<64x144xf32>
    %77 = arith.addf %66, %76 : vector<64x144xf32>
    %78 = vector.shape_cast %77 : vector<64x144xf32> to vector<1x8x8x144xf32>
    %c0_69 = arith.constant 0 : index
    %c0_70 = arith.constant 0 : index
    %c0_71 = arith.constant 0 : index
    %c0_72 = arith.constant 0 : index
    %79 = vector.load %arg14[%c0_69, %c0_70, %c0_71, %c0_72] : memref<1x8x8x144xf32, #tpu.memory_space<vmem>>, vector<1x8x8x144xf32>
    tpu.vector_store %arg14[%c0_69, %c0_70, %c0_71, %c0_72], %78 {strides = array<i32>} : memref<1x8x8x144xf32, #tpu.memory_space<vmem>>, vector<1x8x8x144xf32>,
    return
  }
  func.func @transform_0(%arg0: i32) -> (i32, i32, i32, i32) {
    %c0_i32 = arith.constant 0 : i32
    %c0_i32_0 = arith.constant 0 : i32
    %c0_i32_1 = arith.constant 0 : i32
    %c0_i32_2 = arith.constant 0 : i32
    return %arg0, %c0_i32, %c0_i32_0, %c0_i32_1 : i32, i32, i32, i32
  }
  func.func @transform_1(%arg0: i32) -> (i32, i32) {
    %c0_i32 = arith.constant 0 : i32
    %c0_i32_0 = arith.constant 0 : i32
    %c0_i32_1 = arith.constant 0 : i32
    return %c0_i32, %c0_i32_0 : i32, i32
  }
  func.func @transform_2(%arg0: i32) -> (i32, i32) {
    %c0_i32 = arith.constant 0 : i32
    %c0_i32_0 = arith.constant 0 : i32
    %c0_i32_1 = arith.constant 0 : i32
    return %c0_i32, %c0_i32_0 : i32, i32
  }
  func.func @transform_3(%arg0: i32) -> (i32, i32) {
    %c0_i32 = arith.constant 0 : i32
    %c0_i32_0 = arith.constant 0 : i32
    %c0_i32_1 = arith.constant 0 : i32
    return %c0_i32, %c0_i32_0 : i32, i32
  }
  func.func @transform_4(%arg0: i32) -> (i32, i32) {
    %c0_i32 = arith.constant 0 : i32
    %c0_i32_0 = arith.constant 0 : i32
    %c0_i32_1 = arith.constant 0 : i32
    return %c0_i32, %c0_i32_0 : i32, i32
  }
  func.func @transform_5(%arg0: i32) -> (i32, i32) {
    %c0_i32 = arith.constant 0 : i32
    %c0_i32_0 = arith.constant 0 : i32
    %c0_i32_1 = arith.constant 0 : i32
    return %c0_i32, %c0_i32_0 : i32, i32
  }
  func.func @transform_6(%arg0: i32) -> (i32, i32, i32, i32) {
    %c0_i32 = arith.constant 0 : i32
    %c0_i32_0 = arith.constant 0 : i32
    %c0_i32_1 = arith.constant 0 : i32
    %c0_i32_2 = arith.constant 0 : i32
    %c0_i32_3 = arith.constant 0 : i32
    return %c0_i32, %c0_i32_0, %c0_i32_1, %c0_i32_2 : i32, i32, i32, i32
  }
  func.func @transform_7(%arg0: i32) -> (i32, i32) {
    %c0_i32 = arith.constant 0 : i32
    %c0_i32_0 = arith.constant 0 : i32
    %c0_i32_1 = arith.constant 0 : i32
    return %c0_i32, %c0_i32_0 : i32, i32
  }
  func.func @transform_8(%arg0: i32) -> (i32, i32) {
    %c0_i32 = arith.constant 0 : i32
    %c0_i32_0 = arith.constant 0 : i32
    %c0_i32_1 = arith.constant 0 : i32
    return %c0_i32, %c0_i32_0 : i32, i32
  }
  func.func @transform_9(%arg0: i32) -> (i32, i32) {
    %c0_i32 = arith.constant 0 : i32
    %c0_i32_0 = arith.constant 0 : i32
    %c0_i32_1 = arith.constant 0 : i32
    return %c0_i32, %c0_i32_0 : i32, i32
  }
  func.func @transform_10(%arg0: i32) -> (i32, i32) {
    %c0_i32 = arith.constant 0 : i32
    %c0_i32_0 = arith.constant 0 : i32
    %c0_i32_1 = arith.constant 0 : i32
    return %c0_i32, %c0_i32_0 : i32, i32
  }
  func.func @transform_11(%arg0: i32) -> (i32, i32) {
    %c0_i32 = arith.constant 0 : i32
    %c0_i32_0 = arith.constant 0 : i32
    %c0_i32_1 = arith.constant 0 : i32
    return %c0_i32, %c0_i32_0 : i32, i32
  }
  func.func @transform_12(%arg0: i32) -> (i32, i32) {
    %c0_i32 = arith.constant 0 : i32
    %c0_i32_0 = arith.constant 0 : i32
    %c0_i32_1 = arith.constant 0 : i32
    return %c0_i32, %c0_i32_0 : i32, i32
  }
  func.func @transform_13(%arg0: i32) -> (i32, i32, i32, i32) {
    %c0_i32 = arith.constant 0 : i32
    %c0_i32_0 = arith.constant 0 : i32
    %c0_i32_1 = arith.constant 0 : i32
    %c0_i32_2 = arith.constant 0 : i32
    return %arg0, %c0_i32, %c0_i32_0, %c0_i32_1 : i32, i32, i32, i32
  }
}

</mosaic_0001>

<llo_original>
// kernel: _lambda_.7
$region0: #{_lambda_.7}
  #allocation0 [shape = 'u32[]', space=smem, size = 0x4, offset = 0x4, fixed_abs, tag = 'smem constant byte address 0x4 - core index']
  #allocation1 [shape = 'u32[144,128]{1,0:T(1,128)}', space=vmem, size = 0x12000, scoped, tag = 'internal scratch']
  #allocation2 [shape = 'f32[10,10,24]{2,1,0:T(8,128)}', space=vmem, size = 0x14000, scoped, tag = 'scratch operand']
  #allocation3 [shape = 'f32[1,1]{1,0:T(1,128)S(1)}', space=vmem, size = 0x200, scoped, tag = 'scoped memory for _lambda_.7']
  %s0 = inlined_call_operand.vmem [shape: f32[2,8,8,144], index: 0, kind: input, shape index: {}]
  %s1 = inlined_call_operand.vmem [shape: f32[1,144], index: 1, kind: input, shape index: {}]
  %s2 = inlined_call_operand.vmem [shape: f32[1,144], index: 2, kind: input, shape index: {}]
  %s3 = inlined_call_operand.vmem [shape: f32[144,24], index: 3, kind: input, shape index: {}]
  %s4 = inlined_call_operand.vmem [shape: f32[1,24], index: 4, kind: input, shape index: {}]
  %s5 = inlined_call_operand.vmem [shape: f32[1,24], index: 5, kind: input, shape index: {}]
  %s6 = inlined_call_operand.vmem [shape: f32[3,3,24,6], index: 6, kind: input, shape index: {}]
  %s7 = inlined_call_operand.vmem [shape: f32[1,144], index: 7, kind: input, shape index: {}]
  %s8 = inlined_call_operand.vmem [shape: f32[1,6], index: 8, kind: input, shape index: {}]
  %s9 = inlined_call_operand.<no memory space> [shape: f32[1,1], index: 9, kind: input, shape index: {}]
  %s10 = inlined_call_operand.vmem [shape: f32[2,8,8,1], index: 10, kind: output, shape index: {}]
  %s11 = sld [smem:[#allocation0]]
  $region73: #{_lambda_.7} parent=0
    _
  %s13 = ssub.s32 1, %s11
  %s14 = scalar_select 0, %s13, %s11
  %v15 = vstv %s9
  %16 = vst [vmem:[#allocation3] sm:$0x1] %v15
  loop: start=0, step=1, limit=4
  $region2: #{_lambda_.7} parent=0 // loop_pre_header
    _
  $region3: #{_lambda_.7} parent=0 // loop_header
    %s18 = sphi 0, %s22
    %p19 = scmp.ge.s32.totalorder %s18, 4
    %s28 = sphi 0, %s30
    %s31 = sphi 0, %s28
    %s32 = sphi 0, %s31
    %s48 = sphi 0, %s32
    %s52 = sphi 0, %s52
    %s54 = sphi 0, %s52
    %s55 = sphi 0, %s54
    %s69 = sphi 0, %s55
    %s73 = sphi 0, %s73
    %s75 = sphi 0, %s73
    %s76 = sphi 0, %s75
    %s90 = sphi 0, %s76
    %s94 = sphi 0, %s94
    %s96 = sphi 0, %s94
    %s97 = sphi 0, %s96
    %s111 = sphi 0, %s97
    %s115 = sphi 0, %s115
    %s117 = sphi 0, %s115
    %s118 = sphi 0, %s117
    %s132 = sphi 0, %s118
    %s136 = sphi 0, %s136
    %s138 = sphi 0, %s136
    %s139 = sphi 0, %s138
    %s153 = sphi 0, %s139
    %s157 = sphi 0, %s157
    %s159 = sphi 0, %s157
    %s160 = sphi 0, %s159
    %s174 = sphi 0, %s160
    %s178 = sphi 0, %s178
    %s180 = sphi 0, %s178
    %s181 = sphi 0, %s180
    %s195 = sphi 0, %s181
    %s199 = sphi 0, %s199
    %s201 = sphi 0, %s199
    %s202 = sphi 0, %s201
    %s216 = sphi 0, %s202
    %s220 = sphi 0, %s220
    %s222 = sphi 0, %s220
    %s223 = sphi 0, %s222
    %s237 = sphi 0, %s223
    %s243 = sphi 0, %s245
    %s246 = sphi 0, %s243
    %s247 = sphi 0, %s246
    %s263 = sphi 0, %s247
  $region4: #{_lambda_.7} parent=0 // loop_header_branch
    %21 = sbr.rel (%p19) target = $region8
  $region5: #{_lambda_.7} parent=0 // loop_body
    %s23 = ssub.s32 %s18, 1
    %s24 = ssub.s32 %s18, 2
    %s25 = sadd.s32 %s18, 1
    %s26 = ssub.s32 %s18, %s25
    %p27 = scmp.eq.s32.totalorder %s26, 0
    %s29 = sadd.s32 %s28, 1
    %s30 = scalar_select %p27, %s28, %s29
    %p33 = pneg %p27
    %p34 = scmp.eq.s32.totalorder %s18, 1
    %p35 = por %p33, %p34
    %p36 = scmp.ne.s32.totalorder %s28, %s31
    %p37 = scmp.eq.s32.totalorder %s18, 0
    %p38 = por %p36, %p37
    %p39 = scmp.ne.s32.totalorder %s28, %s31
    %p40 = scmp.eq.s32.totalorder %s23, 1
    %p41 = por %p39, %p40
    %p42 = scmp.ne.s32.totalorder %s31, %s32
    %p43 = scmp.eq.s32.totalorder %s23, 0
    %p44 = por %p42, %p43
    %p45 = scmp.ne.s32.totalorder %s31, %s32
    %p46 = scmp.eq.s32.totalorder %s24, 1
    %p47 = por %p45, %p46
    %p49 = scmp.ne.s32.totalorder %s32, %s48
    %p50 = scmp.eq.s32.totalorder %s24, 0
    %p51 = por %p49, %p50
    %s53 = sadd.s32 %s52, 1
    %p56 = scmp.eq.s32.totalorder %s18, 1
    %p57 = scmp.ne.s32.totalorder %s52, %s54
    %p58 = scmp.eq.s32.totalorder %s18, 0
    %p59 = por %p57, %p58
    %p60 = scmp.ne.s32.totalorder %s52, %s54
    %p61 = scmp.eq.s32.totalorder %s23, 1
    %p62 = por %p60, %p61
    %p63 = scmp.ne.s32.totalorder %s54, %s55
    %p64 = scmp.eq.s32.totalorder %s23, 0
    %p65 = por %p63, %p64
    %p66 = scmp.ne.s32.totalorder %s54, %s55
    %p67 = scmp.eq.s32.totalorder %s24, 1
    %p68 = por %p66, %p67
    %p70 = scmp.ne.s32.totalorder %s55, %s69
    %p71 = scmp.eq.s32.totalorder %s24, 0
    %p72 = por %p70, %p71
    %s74 = sadd.s32 %s73, 1
    %p77 = scmp.eq.s32.totalorder %s18, 1
    %p78 = scmp.ne.s32.totalorder %s73, %s75
    %p79 = scmp.eq.s32.totalorder %s18, 0
    %p80 = por %p78, %p79
    %p81 = scmp.ne.s32.totalorder %s73, %s75
    %p82 = scmp.eq.s32.totalorder %s23, 1
    %p83 = por %p81, %p82
    %p84 = scmp.ne.s32.totalorder %s75, %s76
    %p85 = scmp.eq.s32.totalorder %s23, 0
    %p86 = por %p84, %p85
    %p87 = scmp.ne.s32.totalorder %s75, %s76
    %p88 = scmp.eq.s32.totalorder %s24, 1
    %p89 = por %p87, %p88
    %p91 = scmp.ne.s32.totalorder %s76, %s90
    %p92 = scmp.eq.s32.totalorder %s24, 0
    %p93 = por %p91, %p92
    %s95 = sadd.s32 %s94, 1
    %p98 = scmp.eq.s32.totalorder %s18, 1
    %p99 = scmp.ne.s32.totalorder %s94, %s96
    %p100 = scmp.eq.s32.totalorder %s18, 0
    %p101 = por %p99, %p100
    %p102 = scmp.ne.s32.totalorder %s94, %s96
    %p103 = scmp.eq.s32.totalorder %s23, 1
    %p104 = por %p102, %p103
    %p105 = scmp.ne.s32.totalorder %s96, %s97
    %p106 = scmp.eq.s32.totalorder %s23, 0
    %p107 = por %p105, %p106
    %p108 = scmp.ne.s32.totalorder %s96, %s97
    %p109 = scmp.eq.s32.totalorder %s24, 1
    %p110 = por %p108, %p109
    %p112 = scmp.ne.s32.totalorder %s97, %s111
    %p113 = scmp.eq.s32.totalorder %s24, 0
    %p114 = por %p112, %p113
    %s116 = sadd.s32 %s115, 1
    %p119 = scmp.eq.s32.totalorder %s18, 1
    %p120 = scmp.ne.s32.totalorder %s115, %s117
    %p121 = scmp.eq.s32.totalorder %s18, 0
    %p122 = por %p120, %p121
    %p123 = scmp.ne.s32.totalorder %s115, %s117
    %p124 = scmp.eq.s32.totalorder %s23, 1
    %p125 = por %p123, %p124
    %p126 = scmp.ne.s32.totalorder %s117, %s118
    %p127 = scmp.eq.s32.totalorder %s23, 0
    %p128 = por %p126, %p127
    %p129 = scmp.ne.s32.totalorder %s117, %s118
    %p130 = scmp.eq.s32.totalorder %s24, 1
    %p131 = por %p129, %p130
    %p133 = scmp.ne.s32.totalorder %s118, %s132
    %p134 = scmp.eq.s32.totalorder %s24, 0
    %p135 = por %p133, %p134
    %s137 = sadd.s32 %s136, 1
    %p140 = scmp.eq.s32.totalorder %s18, 1
    %p141 = scmp.ne.s32.totalorder %s136, %s138
    %p142 = scmp.eq.s32.totalorder %s18, 0
    %p143 = por %p141, %p142
    %p144 = scmp.ne.s32.totalorder %s136, %s138
    %p145 = scmp.eq.s32.totalorder %s23, 1
    %p146 = por %p144, %p145
    %p147 = scmp.ne.s32.totalorder %s138, %s139
    %p148 = scmp.eq.s32.totalorder %s23, 0
    %p149 = por %p147, %p148
    %p150 = scmp.ne.s32.totalorder %s138, %s139
    %p151 = scmp.eq.s32.totalorder %s24, 1
    %p152 = por %p150, %p151
    %p154 = scmp.ne.s32.totalorder %s139, %s153
    %p155 = scmp.eq.s32.totalorder %s24, 0
    %p156 = por %p154, %p155
    %s158 = sadd.s32 %s157, 1
    %p161 = scmp.eq.s32.totalorder %s18, 1
    %p162 = scmp.ne.s32.totalorder %s157, %s159
    %p163 = scmp.eq.s32.totalorder %s18, 0
    %p164 = por %p162, %p163
    %p165 = scmp.ne.s32.totalorder %s157, %s159
    %p166 = scmp.eq.s32.totalorder %s23, 1
    %p167 = por %p165, %p166
    %p168 = scmp.ne.s32.totalorder %s159, %s160
    %p169 = scmp.eq.s32.totalorder %s23, 0
    %p170 = por %p168, %p169
    %p171 = scmp.ne.s32.totalorder %s159, %s160
    %p172 = scmp.eq.s32.totalorder %s24, 1
    %p173 = por %p171, %p172
    %p175 = scmp.ne.s32.totalorder %s160, %s174
    %p176 = scmp.eq.s32.totalorder %s24, 0
    %p177 = por %p175, %p176
    %s179 = sadd.s32 %s178, 1
    %p182 = scmp.eq.s32.totalorder %s18, 1
    %p183 = scmp.ne.s32.totalorder %s178, %s180
    %p184 = scmp.eq.s32.totalorder %s18, 0
    %p185 = por %p183, %p184
    %p186 = scmp.ne.s32.totalorder %s178, %s180
    %p187 = scmp.eq.s32.totalorder %s23, 1
    %p188 = por %p186, %p187
    %p189 = scmp.ne.s32.totalorder %s180, %s181
    %p190 = scmp.eq.s32.totalorder %s23, 0
    %p191 = por %p189, %p190
    %p192 = scmp.ne.s32.totalorder %s180, %s181
    %p193 = scmp.eq.s32.totalorder %s24, 1
    %p194 = por %p192, %p193
    %p196 = scmp.ne.s32.totalorder %s181, %s195
    %p197 = scmp.eq.s32.totalorder %s24, 0
    %p198 = por %p196, %p197
    %s200 = sadd.s32 %s199, 1
    %p203 = scmp.eq.s32.totalorder %s18, 1
    %p204 = scmp.ne.s32.totalorder %s199, %s201
    %p205 = scmp.eq.s32.totalorder %s18, 0
    %p206 = por %p204, %p205
    %p207 = scmp.ne.s32.totalorder %s199, %s201
    %p208 = scmp.eq.s32.totalorder %s23, 1
    %p209 = por %p207, %p208
    %p210 = scmp.ne.s32.totalorder %s201, %s202
    %p211 = scmp.eq.s32.totalorder %s23, 0
    %p212 = por %p210, %p211
    %p213 = scmp.ne.s32.totalorder %s201, %s202
    %p214 = scmp.eq.s32.totalorder %s24, 1
    %p215 = por %p213, %p214
    %p217 = scmp.ne.s32.totalorder %s202, %s216
    %p218 = scmp.eq.s32.totalorder %s24, 0
    %p219 = por %p217, %p218
    %s221 = sadd.s32 %s220, 1
    %p224 = scmp.eq.s32.totalorder %s18, 1
    %p225 = scmp.ne.s32.totalorder %s220, %s222
    %p226 = scmp.eq.s32.totalorder %s18, 0
    %p227 = por %p225, %p226
    %p228 = scmp.ne.s32.totalorder %s220, %s222
    %p229 = scmp.eq.s32.totalorder %s23, 1
    %p230 = por %p228, %p229
    %p231 = scmp.ne.s32.totalorder %s222, %s223
    %p232 = scmp.eq.s32.totalorder %s23, 0
    %p233 = por %p231, %p232
    %p234 = scmp.ne.s32.totalorder %s222, %s223
    %p235 = scmp.eq.s32.totalorder %s24, 1
    %p236 = por %p234, %p235
    %p238 = scmp.ne.s32.totalorder %s223, %s237
    %p239 = scmp.eq.s32.totalorder %s24, 0
    %p240 = por %p238, %p239
    %s241 = ssub.s32 %s18, %s25
    %p242 = scmp.eq.s32.totalorder %s241, 0
    %s244 = sadd.s32 %s243, 1
    %s245 = scalar_select %p242, %s243, %s244
    %p248 = pneg %p242
    %p249 = scmp.eq.s32.totalorder %s18, 1
    %p250 = por %p248, %p249
    %p251 = scmp.ne.s32.totalorder %s243, %s246
    %p252 = scmp.eq.s32.totalorder %s18, 0
    %p253 = por %p251, %p252
    %p254 = scmp.ne.s32.totalorder %s243, %s246
    %p255 = scmp.eq.s32.totalorder %s23, 1
    %p256 = por %p254, %p255
    %p257 = scmp.ne.s32.totalorder %s246, %s247
    %p258 = scmp.eq.s32.totalorder %s23, 0
    %p259 = por %p257, %p258
    %p260 = scmp.ne.s32.totalorder %s246, %s247
    %p261 = scmp.eq.s32.totalorder %s24, 1
    %p262 = por %p260, %p261
    %p264 = scmp.ne.s32.totalorder %s247, %s263
    %p265 = scmp.eq.s32.totalorder %s24, 0
    %p266 = por %p264, %p265
    %p267 = scmp.le.s32.totalorder 1, %s18
    %p268 = scmp.lt.s32.totalorder %s18, 3
    %p269 = pnand %p267, %p268
    %p270 = pneg %p269
    // Predicated region
    $region9: #{_lambda_.7} parent=5 // pred_check
      _
    $region10: #{_lambda_.7} parent=5 // pred_check_branch
      %272 = sbr.rel (%p269) target = $region12
    $region11: #{_lambda_.7} parent=5 // pred_region
      %s273 = ssub.s32 %s18, 1
      // Predicated region
      $region13: #{_lambda_.7} parent=11 // pred_check
        %p274 = pneg %p65
      $region14: #{_lambda_.7} parent=11 // pred_check_branch
        %276 = sbr.rel (%p274) target = $region16
      $region15: #{_lambda_.7} parent=11 // pred_region
        _
      $region16: #{_lambda_.7} parent=11 // pred_fallthru
        _
      // Predicated region
      $region17: #{_lambda_.7} parent=11 // pred_check
        %p277 = pneg %p86
      $region18: #{_lambda_.7} parent=11 // pred_check_branch
        %279 = sbr.rel (%p277) target = $region20
      $region19: #{_lambda_.7} parent=11 // pred_region
        _
      $region20: #{_lambda_.7} parent=11 // pred_fallthru
        _
      // Predicated region
      $region21: #{_lambda_.7} parent=11 // pred_check
        %p280 = pneg %p107
      $region22: #{_lambda_.7} parent=11 // pred_check_branch
        %282 = sbr.rel (%p280) target = $region24
      $region23: #{_lambda_.7} parent=11 // pred_region
        _
      $region24: #{_lambda_.7} parent=11 // pred_fallthru
        _
      // Predicated region
      $region25: #{_lambda_.7} parent=11 // pred_check
        %p283 = pneg %p128
      $region26: #{_lambda_.7} parent=11 // pred_check_branch
        %285 = sbr.rel (%p283) target = $region28
      $region27: #{_lambda_.7} parent=11 // pred_region
        _
      $region28: #{_lambda_.7} parent=11 // pred_fallthru
        _
      // Predicated region
      $region29: #{_lambda_.7} parent=11 // pred_check
        %p286 = pneg %p149
      $region30: #{_lambda_.7} parent=11 // pred_check_branch
        %288 = sbr.rel (%p286) target = $region32
      $region31: #{_lambda_.7} parent=11 // pred_region
        _
      $region32: #{_lambda_.7} parent=11 // pred_fallthru
        _
      // Predicated region
      $region33: #{_lambda_.7} parent=11 // pred_check
        %p289 = pneg %p170
      $region34: #{_lambda_.7} parent=11 // pred_check_branch
        %291 = sbr.rel (%p289) target = $region36
      $region35: #{_lambda_.7} parent=11 // pred_region
        _
      $region36: #{_lambda_.7} parent=11 // pred_fallthru
        _
      // Predicated region
      $region37: #{_lambda_.7} parent=11 // pred_check
        %p292 = pneg %p191
      $region38: #{_lambda_.7} parent=11 // pred_check_branch
        %294 = sbr.rel (%p292) target = $region40
      $region39: #{_lambda_.7} parent=11 // pred_region
        _
      $region40: #{_lambda_.7} parent=11 // pred_fallthru
        _
      // Predicated region
      $region41: #{_lambda_.7} parent=11 // pred_check
        %p295 = pneg %p212
      $region42: #{_lambda_.7} parent=11 // pred_check_branch
        %297 = sbr.rel (%p295) target = $region44
      $region43: #{_lambda_.7} parent=11 // pred_region
        _
      $region44: #{_lambda_.7} parent=11 // pred_fallthru
        _
      // Predicated region
      $region45: #{_lambda_.7} parent=11 // pred_check
        %p298 = pneg %p233
      $region46: #{_lambda_.7} parent=11 // pred_check_branch
        %300 = sbr.rel (%p298) target = $region48
      $region47: #{_lambda_.7} parent=11 // pred_region
        _
      $region48: #{_lambda_.7} parent=11 // pred_fallthru
        _
    $region12: #{_lambda_.7} parent=5 // pred_fallthru
      _
    %p301 = scmp.lt.s32.totalorder %s18, 2
    // Predicated region
    $region49: #{_lambda_.7} parent=5 // pred_check
      %p302 = pneg %p301
    $region50: #{_lambda_.7} parent=5 // pred_check_branch
      %304 = sbr.rel (%p302) target = $region52
    $region51: #{_lambda_.7} parent=5 // pred_region
      // Predicated region
      $region53: #{_lambda_.7} parent=51 // pred_check
        %p305 = pneg %p38
      $region54: #{_lambda_.7} parent=51 // pred_check_branch
        %307 = sbr.rel (%p305) target = $region56
      $region55: #{_lambda_.7} parent=51 // pred_region
        %p308 = scmp.lt.s32.totalorder %s18, 1
        %s309 = scalar_select %p308, %s18, 1
        %s310 = smul.addr %s309, 16
        %s311 = smul.addr %s310, 8
        %s312 = scalar_lea.vmem %s0, %s311
      $region56: #{_lambda_.7} parent=51 // pred_fallthru
        _
    $region52: #{_lambda_.7} parent=5 // pred_fallthru
      _
    %p313 = scmp.le.s32.totalorder 1, %s18
    %p314 = scmp.lt.s32.totalorder %s18, 3
    %p315 = pnand %p313, %p314
    %p316 = pneg %p315
    // Predicated region
    $region57: #{_lambda_.7} parent=5 // pred_check
      _
    $region58: #{_lambda_.7} parent=5 // pred_check_branch
      %318 = sbr.rel (%p315) target = $region60
    $region59: #{_lambda_.7} parent=5 // pred_region
      %s319 = ssub.s32 %s18, 1
      %p320 = scmp.lt.s32.totalorder %s23, 1
      %s321 = scalar_select %p320, %s23, 1
      %s322 = smul.addr %s321, 16
      %s323 = smul.addr %s322, 8
      %s324 = scalar_lea.vmem %s0, %s323
      %p325 = pneg %p44
      %p326 = pneg %p41
      %p327 = pneg %p65
      %p328 = pneg %p62
      %p329 = pneg %p86
      %p330 = pneg %p83
      %p331 = pneg %p107
      %p332 = pneg %p104
      %p333 = pneg %p128
      %p334 = pneg %p125
      %p335 = pneg %p149
      %p336 = pneg %p146
      %p337 = pneg %p170
      %p338 = pneg %p167
      %p339 = pneg %p191
      %p340 = pneg %p188
      %p341 = pneg %p212
      %p342 = pneg %p209
      %p343 = pneg %p233
      %p344 = pneg %p230
      %p345 = pneg %p259
      %p346 = pneg %p256
      %p347 = scmp.lt.s32.totalorder %s23, 1
      %s348 = scalar_select %p347, %s23, 1
      %s349 = smul.addr %s348, 8
      %s350 = smul.addr %s349, 8
      %s351 = scalar_lea.vmem %s10, %s350
      %p352 = scmp.lt.s32.totalorder %s23, 1
      %s353 = scalar_select %p352, %s23, 1
      %s354 = smul.addr %s353, 16
      %s355 = smul.addr %s354, 8
      %s356 = scalar_lea.vmem %s0, %s355
      %p357 = scmp.lt.s32.totalorder %s23, 1
      %s358 = scalar_select %p357, %s23, 1
      %s359 = smul.addr %s358, 8
      %s360 = smul.addr %s359, 8
      %s361 = scalar_lea.vmem %s10, %s360
      %vm362 = vcmask 195584
      %363 = vst.msk [vmem:[#allocation2] sm:$0xff] %vm362, 0.0
      %vm364 = vcmask 189440
      %365 = vst.msk [vmem:[#allocation2 + $0x8] sm:$0x3] %vm364, 0.0
      %366 = vst.msk [vmem:[#allocation2 + $0x10] sm:$0xff] %vm362, 0.0
      %367 = vst.msk [vmem:[#allocation2 + $0x18] sm:$0x3] %vm364, 0.0
      %368 = vst.msk [vmem:[#allocation2 + $0x20] sm:$0xff] %vm362, 0.0
      %369 = vst.msk [vmem:[#allocation2 + $0x28] sm:$0x3] %vm364, 0.0
      %370 = vst.msk [vmem:[#allocation2 + $0x30] sm:$0xff] %vm362, 0.0
      %371 = vst.msk [vmem:[#allocation2 + $0x38] sm:$0x3] %vm364, 0.0
      %372 = vst.msk [vmem:[#allocation2 + $0x40] sm:$0xff] %vm362, 0.0
      %373 = vst.msk [vmem:[#allocation2 + $0x48] sm:$0x3] %vm364, 0.0
      %374 = vst.msk [vmem:[#allocation2 + $0x50] sm:$0xff] %vm362, 0.0
      %375 = vst.msk [vmem:[#allocation2 + $0x58] sm:$0x3] %vm364, 0.0
      %376 = vst.msk [vmem:[#allocation2 + $0x60] sm:$0xff] %vm362, 0.0
      %377 = vst.msk [vmem:[#allocation2 + $0x68] sm:$0x3] %vm364, 0.0
      %378 = vst.msk [vmem:[#allocation2 + $0x70] sm:$0xff] %vm362, 0.0
      %379 = vst.msk [vmem:[#allocation2 + $0x78] sm:$0x3] %vm364, 0.0
      %380 = vst.msk [vmem:[#allocation2 + $0x80] sm:$0xff] %vm362, 0.0
      %381 = vst.msk [vmem:[#allocation2 + $0x88] sm:$0x3] %vm364, 0.0
      %382 = vst.msk [vmem:[#allocation2 + $0x90] sm:$0xff] %vm362, 0.0
      %383 = vst.msk [vmem:[#allocation2 + $0x98] sm:$0x3] %vm364, 0.0
      %v384 = vld [vmem:[%s356] sm:$0xff]
      %v385 = vld [vmem:[%s356 + $0x8] sm:$0xff]
      %v386 = vld [vmem:[%s356 + $0x10] sm:$0xff]
      %v387 = vld [vmem:[%s356 + $0x18] sm:$0xff]
      %v388 = vld [vmem:[%s356 + $0x20] sm:$0xff]
      %v389 = vld [vmem:[%s356 + $0x28] sm:$0xff]
      %v390 = vld [vmem:[%s356 + $0x30] sm:$0xff]
      %v391 = vld [vmem:[%s356 + $0x38] sm:$0xff]
      %v392 = vld [vmem:[%s356 + $0x40] sm:$0xff]
      %v393 = vld [vmem:[%s356 + $0x48] sm:$0xff]
      %v394 = vld [vmem:[%s356 + $0x50] sm:$0xff]
      %v395 = vld [vmem:[%s356 + $0x58] sm:$0xff]
      %v396 = vld [vmem:[%s356 + $0x60] sm:$0xff]
      %v397 = vld [vmem:[%s356 + $0x68] sm:$0xff]
      %v398 = vld [vmem:[%s356 + $0x70] sm:$0xff]
      %v399 = vld [vmem:[%s356 + $0x78] sm:$0xff]
      %v400 = vld [vmem:[%s1] sm:$0x3]
      %v402 = vlaneseq
      %v403 = vshrl.u32 %v402, 7
      %v404 = vsub.s32 0, %v403
      %v405 = vrot.slane %v400, %v404
      %v406 = vlaneseq
      %v407 = vshrl.u32 %v406, 7
      %v408 = vsub.s32 1, %v407
      %v409 = vrot.slane %v400, %v408
      %v412 = vmul.f32 %v384, %v405
      %v413 = vmul.f32 %v385, %v409
      %v414 = vmul.f32 %v386, %v405
      %v415 = vmul.f32 %v387, %v409
      %v416 = vmul.f32 %v388, %v405
      %v417 = vmul.f32 %v389, %v409
      %v418 = vmul.f32 %v390, %v405
      %v419 = vmul.f32 %v391, %v409
      %v420 = vmul.f32 %v392, %v405
      %v421 = vmul.f32 %v393, %v409
      %v422 = vmul.f32 %v394, %v405
      %v423 = vmul.f32 %v395, %v409
      %v424 = vmul.f32 %v396, %v405
      %v425 = vmul.f32 %v397, %v409
      %v426 = vmul.f32 %v398, %v405
      %v427 = vmul.f32 %v399, %v409
      %v428 = vld [vmem:[%s2] sm:$0x3]
      %v430 = vlaneseq
      %v431 = vshrl.u32 %v430, 7
      %v432 = vsub.s32 0, %v431
      %v433 = vrot.slane %v428, %v432
      %v434 = vlaneseq
      %v435 = vshrl.u32 %v434, 7
      %v436 = vsub.s32 1, %v435
      %v437 = vrot.slane %v428, %v436
      %v440 = vadd.f32 %v412, %v433
      %v441 = vadd.f32 %v413, %v437
      %v442 = vadd.f32 %v414, %v433
      %v443 = vadd.f32 %v415, %v437
      %v444 = vadd.f32 %v416, %v433
      %v445 = vadd.f32 %v417, %v437
      %v446 = vadd.f32 %v418, %v433
      %v447 = vadd.f32 %v419, %v437
      %v448 = vadd.f32 %v420, %v433
      %v449 = vadd.f32 %v421, %v437
      %v450 = vadd.f32 %v422, %v433
      %v451 = vadd.f32 %v423, %v437
      %v452 = vadd.f32 %v424, %v433
      %v453 = vadd.f32 %v425, %v437
      %v454 = vadd.f32 %v426, %v433
      %v455 = vadd.f32 %v427, %v437
      %v456 = vmax.f32 %v440, 0.0
      %v457 = vmax.f32 %v441, 0.0
      %v458 = vmax.f32 %v442, 0.0
      %v459 = vmax.f32 %v443, 0.0
      %v460 = vmax.f32 %v444, 0.0
      %v461 = vmax.f32 %v445, 0.0
      %v462 = vmax.f32 %v446, 0.0
      %v463 = vmax.f32 %v447, 0.0
      %v464 = vmax.f32 %v448, 0.0
      %v465 = vmax.f32 %v449, 0.0
      %v466 = vmax.f32 %v450, 0.0
      %v467 = vmax.f32 %v451, 0.0
      %v468 = vmax.f32 %v452, 0.0
      %v469 = vmax.f32 %v453, 0.0
      %v470 = vmax.f32 %v454, 0.0
      %v471 = vmax.f32 %v455, 0.0
      %v472 = vld [vmem:[%s3] sm:$0xff]
      %v473 = vld [vmem:[%s3 + $0x8] sm:$0xff]
      %v474 = vld [vmem:[%s3 + $0x10] sm:$0xff]
      %v475 = vld [vmem:[%s3 + $0x18] sm:$0xff]
      %v476 = vld [vmem:[%s3 + $0x20] sm:$0xff]
      %v477 = vld [vmem:[%s3 + $0x28] sm:$0xff]
      %v478 = vld [vmem:[%s3 + $0x30] sm:$0xff]
      %v479 = vld [vmem:[%s3 + $0x38] sm:$0xff]
      %v480 = vld [vmem:[%s3 + $0x40] sm:$0xff]
      %v481 = vld [vmem:[%s3 + $0x48] sm:$0xff]
      %v482 = vld [vmem:[%s3 + $0x50] sm:$0xff]
      %v483 = vld [vmem:[%s3 + $0x58] sm:$0xff]
      %v484 = vld [vmem:[%s3 + $0x60] sm:$0xff]
      %v485 = vld [vmem:[%s3 + $0x68] sm:$0xff]
      %v486 = vld [vmem:[%s3 + $0x70] sm:$0xff]
      %v487 = vld [vmem:[%s3 + $0x78] sm:$0xff]
      %v488 = vld [vmem:[%s3 + $0x80] sm:$0xff]
      %v489 = vld [vmem:[%s3 + $0x88] sm:$0xff]
      %vm490 = vcmask 130048
      %v492 = vsel %vm490, %v457, 0
      %v495 = vsel %vm490, %v459, 0
      %v498 = vsel %vm490, %v461, 0
      %v501 = vsel %vm490, %v463, 0
      %v504 = vsel %vm490, %v465, 0
      %v507 = vsel %vm490, %v467, 0
      %v510 = vsel %vm490, %v469, 0
      %v513 = vsel %vm490, %v471, 0
      %515 = vmatprep.subr.mxu0 0.0
      %516 = vmatpush1.msra.mxu0 %v487
      %517 = vmatprep.subr.mxu0 0.0
      %518 = vmatpush1.msra.mxu0 %v486
      %519 = vmatprep.subr.mxu0 0.0
      %520 = vmatpush1.msra.mxu0 %v485
      %521 = vmatprep.subr.mxu0 0.0
      %522 = vmatpush1.msra.mxu0 %v484
      %523 = vmatprep.subr.mxu0 0.0
      %524 = vmatpush1.msra.mxu0 %v483
      %525 = vmatprep.subr.mxu0 0.0
      %526 = vmatpush1.msra.mxu0 %v482
      %527 = vmatprep.subr.mxu0 0.0
      %528 = vmatpush1.msra.mxu0 %v481
      %529 = vmatprep.subr.mxu0 0.0
      %530 = vmatpush1.msra.mxu0 %v480
      %531 = vmatprep.subr.mxu0 0.0
      %532 = vmatpush1.msra.mxu0 %v479
      %533 = vmatprep.subr.mxu0 0.0
      %534 = vmatpush1.msra.mxu0 %v478
      %535 = vmatprep.subr.mxu0 0.0
      %536 = vmatpush1.msra.mxu0 %v477
      %537 = vmatprep.subr.mxu0 0.0
      %538 = vmatpush1.msra.mxu0 %v476
      %539 = vmatprep.subr.mxu0 0.0
      %540 = vmatpush1.msra.mxu0 %v475
      %541 = vmatprep.subr.mxu0 0.0
      %542 = vmatpush1.msra.mxu0 %v474
      %543 = vmatprep.subr.mxu0 0.0
      %544 = vmatpush1.msra.mxu0 %v473
      %545 = vmatprep.subr.mxu0 0.0
      %546 = vmatpush1.msra.mxu0 %v472
      %547 = vmatprep.subr.mxu0 0.0
      %548 = vmatpush2.msra.mxu0 0.0
      %549 = vmatprep.subr.mxu0 0.0
      %550 = vmatpush2.msra.mxu0 0.0
      %551 = vmatprep.subr.mxu0 0.0
      %552 = vmatpush2.msra.mxu0 0.0
      %553 = vmatprep.subr.mxu0 0.0
      %554 = vmatpush2.msra.mxu0 0.0
      %555 = vmatprep.subr.mxu0 0.0
      %556 = vmatpush2.msra.mxu0 0.0
      %557 = vmatprep.subr.mxu0 0.0
      %558 = vmatpush2.msra.mxu0 0.0
      %559 = vmatprep.subr.mxu0 0.0
      %560 = vmatpush2.msra.mxu0 0.0
      %561 = vmatprep.subr.mxu0 0.0
      %562 = vmatpush2.msra.mxu0 0.0
      %563 = vmatprep.subr.mxu0 0.0
      %564 = vmatpush2.msra.mxu0 0.0
      %565 = vmatprep.subr.mxu0 0.0
      %566 = vmatpush2.msra.mxu0 0.0
      %567 = vmatprep.subr.mxu0 0.0
      %568 = vmatpush2.msra.mxu0 0.0
      %569 = vmatprep.subr.mxu0 0.0
      %570 = vmatpush2.msra.mxu0 0.0
      %571 = vmatprep.subr.mxu0 0.0
      %572 = vmatpush2.msra.mxu0 0.0
      %573 = vmatprep.subr.mxu0 0.0
      %574 = vmatpush2.msra.mxu0 0.0
      %575 = vmatprep.subr.mxu0 0.0
      %576 = vmatpush2.msra.mxu0 %v489
      %577 = vmatprep.subr.mxu0 0.0
      %578 = vmatpush2.msra.mxu0 %v488
      %579 = vmatprep.mubr.f32.mxu0 %v492
      %580 = vmatmul.mubr.f32.gmra.mxu0 %v456
      %v581 = vpop.f32.mrf.mxu0
      %v582 = vadd.f32 0.0, %v581
      %v583 = vpop.f32.mrf.mxu0
      %584 = vmatprep.mubr.f32.mxu0 %v495
      %585 = vmatmul.mubr.f32.gmra.mxu0 %v458
      %v586 = vpop.f32.mrf.mxu0
      %v587 = vadd.f32 0.0, %v586
      %v588 = vpop.f32.mrf.mxu0
      %589 = vmatprep.mubr.f32.mxu0 %v498
      %590 = vmatmul.mubr.f32.gmra.mxu0 %v460
      %v591 = vpop.f32.mrf.mxu0
      %v592 = vadd.f32 0.0, %v591
      %v593 = vpop.f32.mrf.mxu0
      %594 = vmatprep.mubr.f32.mxu0 %v501
      %595 = vmatmul.mubr.f32.gmra.mxu0 %v462
      %v596 = vpop.f32.mrf.mxu0
      %v597 = vadd.f32 0.0, %v596
      %v598 = vpop.f32.mrf.mxu0
      %599 = vmatprep.mubr.f32.mxu0 %v504
      %600 = vmatmul.mubr.f32.gmra.mxu0 %v464
      %v601 = vpop.f32.mrf.mxu0
      %v602 = vadd.f32 0.0, %v601
      %v603 = vpop.f32.mrf.mxu0
      %604 = vmatprep.mubr.f32.mxu0 %v507
      %605 = vmatmul.mubr.f32.gmra.mxu0 %v466
      %v606 = vpop.f32.mrf.mxu0
      %v607 = vadd.f32 0.0, %v606
      %v608 = vpop.f32.mrf.mxu0
      %609 = vmatprep.mubr.f32.mxu0 %v510
      %610 = vmatmul.mubr.f32.gmra.mxu0 %v468
      %v611 = vpop.f32.mrf.mxu0
      %v612 = vadd.f32 0.0, %v611
      %v613 = vpop.f32.mrf.mxu0
      %614 = vmatprep.mubr.f32.mxu0 %v513
      %615 = vmatmul.mubr.f32.gmra.mxu0 %v470
      %v616 = vpop.f32.mrf.mxu0
      %v617 = vadd.f32 0.0, %v616
      %v618 = vpop.f32.mrf.mxu0
      %619 = vdwg.mxu0
      %v620 = vld [vmem:[%s4] sm:$0x1]
      %v622 = vlaneseq
      %v623 = vshrl.u32 %v622, 7
      %v624 = vsub.s32 0, %v623
      %v625 = vrot.slane %v620, %v624
      %v627 = vmul.f32 %v582, %v625
      %v628 = vmul.f32 %v587, %v625
      %v629 = vmul.f32 %v592, %v625
      %v630 = vmul.f32 %v597, %v625
      %v631 = vmul.f32 %v602, %v625
      %v632 = vmul.f32 %v607, %v625
      %v633 = vmul.f32 %v612, %v625
      %v634 = vmul.f32 %v617, %v625
      %v635 = vld [vmem:[%s5] sm:$0x1]
      %v637 = vlaneseq
      %v638 = vshrl.u32 %v637, 7
      %v639 = vsub.s32 0, %v638
      %v640 = vrot.slane %v635, %v639
      %v642 = vadd.f32 %v627, %v640
      %v643 = vadd.f32 %v628, %v640
      %v644 = vadd.f32 %v629, %v640
      %v645 = vadd.f32 %v630, %v640
      %v646 = vadd.f32 %v631, %v640
      %v647 = vadd.f32 %v632, %v640
      %v648 = vadd.f32 %v633, %v640
      %v649 = vadd.f32 %v634, %v640
      %v650 = vmax.f32 %v642, 0.0
      %v651 = vmax.f32 %v643, 0.0
      %v652 = vmax.f32 %v644, 0.0
      %v653 = vmax.f32 %v645, 0.0
      %v654 = vmax.f32 %v646, 0.0
      %v655 = vmax.f32 %v647, 0.0
      %v656 = vmax.f32 %v648, 0.0
      %v657 = vmax.f32 %v649, 0.0
      %s658 = scalar_lea.vmem [#allocation2], 16
      %659 = vst.msk [vmem:[%s658 + $0x1] sm:$0xff] %vm362, %v650
      %660 = vst.msk [vmem:[%s658 + $0x11] sm:$0xff] %vm362, %v651
      %661 = vst.msk [vmem:[%s658 + $0x21] sm:$0xff] %vm362, %v652
      %662 = vst.msk [vmem:[%s658 + $0x31] sm:$0xff] %vm362, %v653
      %663 = vst.msk [vmem:[%s658 + $0x41] sm:$0xff] %vm362, %v654
      %664 = vst.msk [vmem:[%s658 + $0x51] sm:$0xff] %vm362, %v655
      %665 = vst.msk [vmem:[%s658 + $0x61] sm:$0xff] %vm362, %v656
      %666 = vst.msk [vmem:[%s658 + $0x71] sm:$0xff] %vm362, %v657
      %v667 = vld [vmem:[#allocation2] sm:$0xff]
      %v668 = vld [vmem:[#allocation2 + $0x10] sm:$0xff]
      %v669 = vld [vmem:[#allocation2 + $0x20] sm:$0xff]
      %v670 = vld [vmem:[#allocation2 + $0x30] sm:$0xff]
      %v671 = vld [vmem:[#allocation2 + $0x40] sm:$0xff]
      %v672 = vld [vmem:[#allocation2 + $0x50] sm:$0xff]
      %v673 = vld [vmem:[#allocation2 + $0x60] sm:$0xff]
      %v674 = vld [vmem:[#allocation2 + $0x70] sm:$0xff]
      %v675 = vld [vmem:[#allocation2 + $0x1] sm:$0xff]
      %v676 = vld [vmem:[#allocation2 + $0x11] sm:$0xff]
      %v677 = vld [vmem:[#allocation2 + $0x21] sm:$0xff]
      %v678 = vld [vmem:[#allocation2 + $0x31] sm:$0xff]
      %v679 = vld [vmem:[#allocation2 + $0x41] sm:$0xff]
      %v680 = vld [vmem:[#allocation2 + $0x51] sm:$0xff]
      %v681 = vld [vmem:[#allocation2 + $0x61] sm:$0xff]
      %v682 = vld [vmem:[#allocation2 + $0x71] sm:$0xff]
      %v683 = vld [vmem:[#allocation2 + $0x2] sm:$0xff]
      %v684 = vld [vmem:[#allocation2 + $0x12] sm:$0xff]
      %v685 = vld [vmem:[#allocation2 + $0x22] sm:$0xff]
      %v686 = vld [vmem:[#allocation2 + $0x32] sm:$0xff]
      %v687 = vld [vmem:[#allocation2 + $0x42] sm:$0xff]
      %v688 = vld [vmem:[#allocation2 + $0x52] sm:$0xff]
      %v689 = vld [vmem:[#allocation2 + $0x62] sm:$0xff]
      %v690 = vld [vmem:[#allocation2 + $0x72] sm:$0xff]
      %v691 = vld [vmem:[%s658] sm:$0xff]
      %v692 = vld [vmem:[%s658 + $0x10] sm:$0xff]
      %v693 = vld [vmem:[%s658 + $0x20] sm:$0xff]
      %v694 = vld [vmem:[%s658 + $0x30] sm:$0xff]
      %v695 = vld [vmem:[%s658 + $0x40] sm:$0xff]
      %v696 = vld [vmem:[%s658 + $0x50] sm:$0xff]
      %v697 = vld [vmem:[%s658 + $0x60] sm:$0xff]
      %v698 = vld [vmem:[%s658 + $0x70] sm:$0xff]
      %v699 = vld [vmem:[%s658 + $0x1] sm:$0xff]
      %v700 = vld [vmem:[%s658 + $0x11] sm:$0xff]
      %v701 = vld [vmem:[%s658 + $0x21] sm:$0xff]
      %v702 = vld [vmem:[%s658 + $0x31] sm:$0xff]
      %v703 = vld [vmem:[%s658 + $0x41] sm:$0xff]
      %v704 = vld [vmem:[%s658 + $0x51] sm:$0xff]
      %v705 = vld [vmem:[%s658 + $0x61] sm:$0xff]
      %v706 = vld [vmem:[%s658 + $0x71] sm:$0xff]
      %v707 = vld [vmem:[%s658 + $0x2] sm:$0xff]
      %v708 = vld [vmem:[%s658 + $0x12] sm:$0xff]
      %v709 = vld [vmem:[%s658 + $0x22] sm:$0xff]
      %v710 = vld [vmem:[%s658 + $0x32] sm:$0xff]
      %v711 = vld [vmem:[%s658 + $0x42] sm:$0xff]
      %v712 = vld [vmem:[%s658 + $0x52] sm:$0xff]
      %v713 = vld [vmem:[%s658 + $0x62] sm:$0xff]
      %v714 = vld [vmem:[%s658 + $0x72] sm:$0xff]
      %s715 = scalar_lea.vmem [#allocation2], 32
      %v716 = vld [vmem:[%s715] sm:$0xff]
      %v717 = vld [vmem:[%s715 + $0x10] sm:$0xff]
      %v718 = vld [vmem:[%s715 + $0x20] sm:$0xff]
      %v719 = vld [vmem:[%s715 + $0x30] sm:$0xff]
      %v720 = vld [vmem:[%s715 + $0x40] sm:$0xff]
      %v721 = vld [vmem:[%s715 + $0x50] sm:$0xff]
      %v722 = vld [vmem:[%s715 + $0x60] sm:$0xff]
      %v723 = vld [vmem:[%s715 + $0x70] sm:$0xff]
      %v724 = vld [vmem:[%s715 + $0x1] sm:$0xff]
      %v725 = vld [vmem:[%s715 + $0x11] sm:$0xff]
      %v726 = vld [vmem:[%s715 + $0x21] sm:$0xff]
      %v727 = vld [vmem:[%s715 + $0x31] sm:$0xff]
      %v728 = vld [vmem:[%s715 + $0x41] sm:$0xff]
      %v729 = vld [vmem:[%s715 + $0x51] sm:$0xff]
      %v730 = vld [vmem:[%s715 + $0x61] sm:$0xff]
      %v731 = vld [vmem:[%s715 + $0x71] sm:$0xff]
      %v732 = vld [vmem:[%s715 + $0x2] sm:$0xff]
      %v733 = vld [vmem:[%s715 + $0x12] sm:$0xff]
      %v734 = vld [vmem:[%s715 + $0x22] sm:$0xff]
      %v735 = vld [vmem:[%s715 + $0x32] sm:$0xff]
      %v736 = vld [vmem:[%s715 + $0x42] sm:$0xff]
      %v737 = vld [vmem:[%s715 + $0x52] sm:$0xff]
      %v738 = vld [vmem:[%s715 + $0x62] sm:$0xff]
      %v739 = vld [vmem:[%s715 + $0x72] sm:$0xff]
      %v740 = vld [vmem:[%s6] sm:$0xff]
      %v741 = vld [vmem:[%s6 + $0x8] sm:$0xff]
      %v742 = vld [vmem:[%s6 + $0x10] sm:$0xff]
      %v743 = vld [vmem:[%s6 + $0x18] sm:$0xff]
      %v744 = vld [vmem:[%s6 + $0x20] sm:$0xff]
      %v745 = vld [vmem:[%s6 + $0x28] sm:$0xff]
      %v746 = vld [vmem:[%s6 + $0x30] sm:$0xff]
      %v747 = vld [vmem:[%s6 + $0x38] sm:$0xff]
      %v748 = vld [vmem:[%s6 + $0x40] sm:$0xff]
      %v749 = vld [vmem:[%s6 + $0x48] sm:$0xff]
      %v750 = vld [vmem:[%s6 + $0x50] sm:$0xff]
      %v751 = vld [vmem:[%s6 + $0x58] sm:$0xff]
      %v752 = vld [vmem:[%s6 + $0x60] sm:$0xff]
      %v753 = vld [vmem:[%s6 + $0x68] sm:$0xff]
      %v754 = vld [vmem:[%s6 + $0x70] sm:$0xff]
      %v755 = vld [vmem:[%s6 + $0x78] sm:$0xff]
      %v756 = vld [vmem:[%s6 + $0x80] sm:$0xff]
      %v757 = vld [vmem:[%s6 + $0x88] sm:$0xff]
      %v758 = vld [vmem:[%s6 + $0x90] sm:$0xff]
      %v759 = vld [vmem:[%s6 + $0x98] sm:$0xff]
      %v760 = vld [vmem:[%s6 + $0xa0] sm:$0xff]
      %v761 = vld [vmem:[%s6 + $0xa8] sm:$0xff]
      %v762 = vld [vmem:[%s6 + $0xb0] sm:$0xff]
      %v763 = vld [vmem:[%s6 + $0xb8] sm:$0xff]
      %v764 = vld [vmem:[%s6 + $0xc0] sm:$0xff]
      %v765 = vld [vmem:[%s6 + $0xc8] sm:$0xff]
      %v766 = vld [vmem:[%s6 + $0xd0] sm:$0xff]
      %v768 = vsel %vm362, %v667, 0
      %v771 = vsel %vm362, %v668, 0
      %v774 = vsel %vm362, %v669, 0
      %v777 = vsel %vm362, %v670, 0
      %v780 = vsel %vm362, %v671, 0
      %v783 = vsel %vm362, %v672, 0
      %v786 = vsel %vm362, %v673, 0
      %v789 = vsel %vm362, %v674, 0
      %791 = vmatprep.subr.mxu0 0.0
      %792 = vmatpush1.msra.mxu0 0.0
      %793 = vmatprep.subr.mxu0 0.0
      %794 = vmatpush1.msra.mxu0 0.0
      %795 = vmatprep.subr.mxu0 0.0
      %796 = vmatpush1.msra.mxu0 0.0
      %797 = vmatprep.subr.mxu0 0.0
      %798 = vmatpush1.msra.mxu0 0.0
      %799 = vmatprep.subr.mxu0 0.0
      %800 = vmatpush1.msra.mxu0 0.0
      %801 = vmatprep.subr.mxu0 0.0
      %802 = vmatpush1.msra.mxu0 0.0
      %803 = vmatprep.subr.mxu0 0.0
      %804 = vmatpush1.msra.mxu0 0.0
      %805 = vmatprep.subr.mxu0 0.0
      %806 = vmatpush1.msra.mxu0 0.0
      %807 = vmatprep.subr.mxu0 0.0
      %808 = vmatpush1.msra.mxu0 0.0
      %809 = vmatprep.subr.mxu0 0.0
      %810 = vmatpush1.msra.mxu0 0.0
      %811 = vmatprep.subr.mxu0 0.0
      %812 = vmatpush1.msra.mxu0 0.0
      %813 = vmatprep.subr.mxu0 0.0
      %814 = vmatpush1.msra.mxu0 0.0
      %815 = vmatprep.subr.mxu0 0.0
      %816 = vmatpush1.msra.mxu0 0.0
      %817 = vmatprep.subr.mxu0 0.0
      %818 = vmatpush1.msra.mxu0 %v742
      %819 = vmatprep.subr.mxu0 0.0
      %820 = vmatpush1.msra.mxu0 %v741
      %821 = vmatprep.subr.mxu0 0.0
      %822 = vmatpush1.msra.mxu0 %v740
      %823 = vmatprep.subr.mxu0 0.0
      %824 = vmatpush2.msra.mxu0 0.0
      %825 = vmatprep.subr.mxu0 0.0
      %826 = vmatpush2.msra.mxu0 0.0
      %827 = vmatprep.subr.mxu0 0.0
      %828 = vmatpush2.msra.mxu0 0.0
      %829 = vmatprep.subr.mxu0 0.0
      %830 = vmatpush2.msra.mxu0 0.0
      %831 = vmatprep.subr.mxu0 0.0
      %832 = vmatpush2.msra.mxu0 0.0
      %833 = vmatprep.subr.mxu0 0.0
      %834 = vmatpush2.msra.mxu0 0.0
      %835 = vmatprep.subr.mxu0 0.0
      %836 = vmatpush2.msra.mxu0 0.0
      %837 = vmatprep.subr.mxu0 0.0
      %838 = vmatpush2.msra.mxu0 0.0
      %839 = vmatprep.subr.mxu0 0.0
      %840 = vmatpush2.msra.mxu0 0.0
      %841 = vmatprep.subr.mxu0 0.0
      %842 = vmatpush2.msra.mxu0 0.0
      %843 = vmatprep.subr.mxu0 0.0
      %844 = vmatpush2.msra.mxu0 0.0
      %845 = vmatprep.subr.mxu0 0.0
      %846 = vmatpush2.msra.mxu0 0.0
      %847 = vmatprep.subr.mxu0 0.0
      %848 = vmatpush2.msra.mxu0 0.0
      %849 = vmatprep.subr.mxu0 0.0
      %850 = vmatpush2.msra.mxu0 0.0
      %851 = vmatprep.subr.mxu0 0.0
      %852 = vmatpush2.msra.mxu0 0.0
      %853 = vmatprep.subr.mxu0 0.0
      %854 = vmatpush2.msra.mxu0 0.0
      %855 = vmatprep.mubr.f32.mxu0 0.0
      %856 = vmatmul.mubr.f32.gmra.mxu0 %v768
      %v857 = vpop.f32.mrf.mxu0
      %v858 = vadd.f32 0.0, %v857
      %v859 = vpop.f32.mrf.mxu0
      %860 = vmatprep.mubr.f32.mxu0 0.0
      %861 = vmatmul.mubr.f32.gmra.mxu0 %v771
      %v862 = vpop.f32.mrf.mxu0
      %v863 = vadd.f32 0.0, %v862
      %v864 = vpop.f32.mrf.mxu0
      %865 = vmatprep.mubr.f32.mxu0 0.0
      %866 = vmatmul.mubr.f32.gmra.mxu0 %v774
      %v867 = vpop.f32.mrf.mxu0
      %v868 = vadd.f32 0.0, %v867
      %v869 = vpop.f32.mrf.mxu0
      %870 = vmatprep.mubr.f32.mxu0 0.0
      %871 = vmatmul.mubr.f32.gmra.mxu0 %v777
      %v872 = vpop.f32.mrf.mxu0
      %v873 = vadd.f32 0.0, %v872
      %v874 = vpop.f32.mrf.mxu0
      %875 = vmatprep.mubr.f32.mxu0 0.0
      %876 = vmatmul.mubr.f32.gmra.mxu0 %v780
      %v877 = vpop.f32.mrf.mxu0
      %v878 = vadd.f32 0.0, %v877
      %v879 = vpop.f32.mrf.mxu0
      %880 = vmatprep.mubr.f32.mxu0 0.0
      %881 = vmatmul.mubr.f32.gmra.mxu0 %v783
      %v882 = vpop.f32.mrf.mxu0
      %v883 = vadd.f32 0.0, %v882
      %v884 = vpop.f32.mrf.mxu0
      %885 = vmatprep.mubr.f32.mxu0 0.0
      %886 = vmatmul.mubr.f32.gmra.mxu0 %v786
      %v887 = vpop.f32.mrf.mxu0
      %v888 = vadd.f32 0.0, %v887
      %v889 = vpop.f32.mrf.mxu0
      %890 = vmatprep.mubr.f32.mxu0 0.0
      %891 = vmatmul.mubr.f32.gmra.mxu0 %v789
      %v892 = vpop.f32.mrf.mxu0
      %v893 = vadd.f32 0.0, %v892
      %v894 = vpop.f32.mrf.mxu0
      %895 = vdwg.mxu0
      %v897 = vsel %vm362, %v675, 0
      %v900 = vsel %vm362, %v676, 0
      %v903 = vsel %vm362, %v677, 0
      %v906 = vsel %vm362, %v678, 0
      %v909 = vsel %vm362, %v679, 0
      %v912 = vsel %vm362, %v680, 0
      %v915 = vsel %vm362, %v681, 0
      %v918 = vsel %vm362, %v682, 0
      %920 = vmatprep.subr.mxu0 0.0
      %921 = vmatpush1.msra.mxu0 0.0
      %922 = vmatprep.subr.mxu0 0.0
      %923 = vmatpush1.msra.mxu0 0.0
      %924 = vmatprep.subr.mxu0 0.0
      %925 = vmatpush1.msra.mxu0 0.0
      %926 = vmatprep.subr.mxu0 0.0
      %927 = vmatpush1.msra.mxu0 0.0
      %928 = vmatprep.subr.mxu0 0.0
      %929 = vmatpush1.msra.mxu0 0.0
      %930 = vmatprep.subr.mxu0 0.0
      %931 = vmatpush1.msra.mxu0 0.0
      %932 = vmatprep.subr.mxu0 0.0
      %933 = vmatpush1.msra.mxu0 0.0
      %934 = vmatprep.subr.mxu0 0.0
      %935 = vmatpush1.msra.mxu0 0.0
      %936 = vmatprep.subr.mxu0 0.0
      %937 = vmatpush1.msra.mxu0 0.0
      %938 = vmatprep.subr.mxu0 0.0
      %939 = vmatpush1.msra.mxu0 0.0
      %940 = vmatprep.subr.mxu0 0.0
      %941 = vmatpush1.msra.mxu0 0.0
      %942 = vmatprep.subr.mxu0 0.0
      %943 = vmatpush1.msra.mxu0 0.0
      %944 = vmatprep.subr.mxu0 0.0
      %945 = vmatpush1.msra.mxu0 0.0
      %946 = vmatprep.subr.mxu0 0.0
      %947 = vmatpush1.msra.mxu0 %v745
      %948 = vmatprep.subr.mxu0 0.0
      %949 = vmatpush1.msra.mxu0 %v744
      %950 = vmatprep.subr.mxu0 0.0
      %951 = vmatpush1.msra.mxu0 %v743
      %952 = vmatprep.subr.mxu0 0.0
      %953 = vmatpush2.msra.mxu0 0.0
      %954 = vmatprep.subr.mxu0 0.0
      %955 = vmatpush2.msra.mxu0 0.0
      %956 = vmatprep.subr.mxu0 0.0
      %957 = vmatpush2.msra.mxu0 0.0
      %958 = vmatprep.subr.mxu0 0.0
      %959 = vmatpush2.msra.mxu0 0.0
      %960 = vmatprep.subr.mxu0 0.0
      %961 = vmatpush2.msra.mxu0 0.0
      %962 = vmatprep.subr.mxu0 0.0
      %963 = vmatpush2.msra.mxu0 0.0
      %964 = vmatprep.subr.mxu0 0.0
      %965 = vmatpush2.msra.mxu0 0.0
      %966 = vmatprep.subr.mxu0 0.0
      %967 = vmatpush2.msra.mxu0 0.0
      %968 = vmatprep.subr.mxu0 0.0
      %969 = vmatpush2.msra.mxu0 0.0
      %970 = vmatprep.subr.mxu0 0.0
      %971 = vmatpush2.msra.mxu0 0.0
      %972 = vmatprep.subr.mxu0 0.0
      %973 = vmatpush2.msra.mxu0 0.0
      %974 = vmatprep.subr.mxu0 0.0
      %975 = vmatpush2.msra.mxu0 0.0
      %976 = vmatprep.subr.mxu0 0.0
      %977 = vmatpush2.msra.mxu0 0.0
      %978 = vmatprep.subr.mxu0 0.0
      %979 = vmatpush2.msra.mxu0 0.0
      %980 = vmatprep.subr.mxu0 0.0
      %981 = vmatpush2.msra.mxu0 0.0
      %982 = vmatprep.subr.mxu0 0.0
      %983 = vmatpush2.msra.mxu0 0.0
      %984 = vmatprep.mubr.f32.mxu0 0.0
      %985 = vmatmul.mubr.f32.gmra.mxu0 %v897
      %v986 = vpop.f32.mrf.mxu0
      %v987 = vadd.f32 0.0, %v986
      %v988 = vpop.f32.mrf.mxu0
      %989 = vmatprep.mubr.f32.mxu0 0.0
      %990 = vmatmul.mubr.f32.gmra.mxu0 %v900
      %v991 = vpop.f32.mrf.mxu0
      %v992 = vadd.f32 0.0, %v991
      %v993 = vpop.f32.mrf.mxu0
      %994 = vmatprep.mubr.f32.mxu0 0.0
      %995 = vmatmul.mubr.f32.gmra.mxu0 %v903
      %v996 = vpop.f32.mrf.mxu0
      %v997 = vadd.f32 0.0, %v996
      %v998 = vpop.f32.mrf.mxu0
      %999 = vmatprep.mubr.f32.mxu0 0.0
      %1000 = vmatmul.mubr.f32.gmra.mxu0 %v906
      %v1001 = vpop.f32.mrf.mxu0
      %v1002 = vadd.f32 0.0, %v1001
      %v1003 = vpop.f32.mrf.mxu0
      %1004 = vmatprep.mubr.f32.mxu0 0.0
      %1005 = vmatmul.mubr.f32.gmra.mxu0 %v909
      %v1006 = vpop.f32.mrf.mxu0
      %v1007 = vadd.f32 0.0, %v1006
      %v1008 = vpop.f32.mrf.mxu0
      %1009 = vmatprep.mubr.f32.mxu0 0.0
      %1010 = vmatmul.mubr.f32.gmra.mxu0 %v912
      %v1011 = vpop.f32.mrf.mxu0
      %v1012 = vadd.f32 0.0, %v1011
      %v1013 = vpop.f32.mrf.mxu0
      %1014 = vmatprep.mubr.f32.mxu0 0.0
      %1015 = vmatmul.mubr.f32.gmra.mxu0 %v915
      %v1016 = vpop.f32.mrf.mxu0
      %v1017 = vadd.f32 0.0, %v1016
      %v1018 = vpop.f32.mrf.mxu0
      %1019 = vmatprep.mubr.f32.mxu0 0.0
      %1020 = vmatmul.mubr.f32.gmra.mxu0 %v918
      %v1021 = vpop.f32.mrf.mxu0
      %v1022 = vadd.f32 0.0, %v1021
      %v1023 = vpop.f32.mrf.mxu0
      %1024 = vdwg.mxu0
      %v1026 = vsel %vm362, %v683, 0
      %v1029 = vsel %vm362, %v684, 0
      %v1032 = vsel %vm362, %v685, 0
      %v1035 = vsel %vm362, %v686, 0
      %v1038 = vsel %vm362, %v687, 0
      %v1041 = vsel %vm362, %v688, 0
      %v1044 = vsel %vm362, %v689, 0
      %v1047 = vsel %vm362, %v690, 0
      %1049 = vmatprep.subr.mxu0 0.0
      %1050 = vmatpush1.msra.mxu0 0.0
      %1051 = vmatprep.subr.mxu0 0.0
      %1052 = vmatpush1.msra.mxu0 0.0
      %1053 = vmatprep.subr.mxu0 0.0
      %1054 = vmatpush1.msra.mxu0 0.0
      %1055 = vmatprep.subr.mxu0 0.0
      %1056 = vmatpush1.msra.mxu0 0.0
      %1057 = vmatprep.subr.mxu0 0.0
      %1058 = vmatpush1.msra.mxu0 0.0
      %1059 = vmatprep.subr.mxu0 0.0
      %1060 = vmatpush1.msra.mxu0 0.0
      %1061 = vmatprep.subr.mxu0 0.0
      %1062 = vmatpush1.msra.mxu0 0.0
      %1063 = vmatprep.subr.mxu0 0.0
      %1064 = vmatpush1.msra.mxu0 0.0
      %1065 = vmatprep.subr.mxu0 0.0
      %1066 = vmatpush1.msra.mxu0 0.0
      %1067 = vmatprep.subr.mxu0 0.0
      %1068 = vmatpush1.msra.mxu0 0.0
      %1069 = vmatprep.subr.mxu0 0.0
      %1070 = vmatpush1.msra.mxu0 0.0
      %1071 = vmatprep.subr.mxu0 0.0
      %1072 = vmatpush1.msra.mxu0 0.0
      %1073 = vmatprep.subr.mxu0 0.0
      %1074 = vmatpush1.msra.mxu0 0.0
      %1075 = vmatprep.subr.mxu0 0.0
      %1076 = vmatpush1.msra.mxu0 %v748
      %1077 = vmatprep.subr.mxu0 0.0
      %1078 = vmatpush1.msra.mxu0 %v747
      %1079 = vmatprep.subr.mxu0 0.0
      %1080 = vmatpush1.msra.mxu0 %v746
      %1081 = vmatprep.subr.mxu0 0.0
      %1082 = vmatpush2.msra.mxu0 0.0
      %1083 = vmatprep.subr.mxu0 0.0
      %1084 = vmatpush2.msra.mxu0 0.0
      %1085 = vmatprep.subr.mxu0 0.0
      %1086 = vmatpush2.msra.mxu0 0.0
      %1087 = vmatprep.subr.mxu0 0.0
      %1088 = vmatpush2.msra.mxu0 0.0
      %1089 = vmatprep.subr.mxu0 0.0
      %1090 = vmatpush2.msra.mxu0 0.0
      %1091 = vmatprep.subr.mxu0 0.0
      %1092 = vmatpush2.msra.mxu0 0.0
      %1093 = vmatprep.subr.mxu0 0.0
      %1094 = vmatpush2.msra.mxu0 0.0
      %1095 = vmatprep.subr.mxu0 0.0
      %1096 = vmatpush2.msra.mxu0 0.0
      %1097 = vmatprep.subr.mxu0 0.0
      %1098 = vmatpush2.msra.mxu0 0.0
      %1099 = vmatprep.subr.mxu0 0.0
      %1100 = vmatpush2.msra.mxu0 0.0
      %1101 = vmatprep.subr.mxu0 0.0
      %1102 = vmatpush2.msra.mxu0 0.0
      %1103 = vmatprep.subr.mxu0 0.0
      %1104 = vmatpush2.msra.mxu0 0.0
      %1105 = vmatprep.subr.mxu0 0.0
      %1106 = vmatpush2.msra.mxu0 0.0
      %1107 = vmatprep.subr.mxu0 0.0
      %1108 = vmatpush2.msra.mxu0 0.0
      %1109 = vmatprep.subr.mxu0 0.0
      %1110 = vmatpush2.msra.mxu0 0.0
      %1111 = vmatprep.subr.mxu0 0.0
      %1112 = vmatpush2.msra.mxu0 0.0
      %1113 = vmatprep.mubr.f32.mxu0 0.0
      %1114 = vmatmul.mubr.f32.gmra.mxu0 %v1026
      %v1115 = vpop.f32.mrf.mxu0
      %v1116 = vadd.f32 0.0, %v1115
      %v1117 = vpop.f32.mrf.mxu0
      %1118 = vmatprep.mubr.f32.mxu0 0.0
      %1119 = vmatmul.mubr.f32.gmra.mxu0 %v1029
      %v1120 = vpop.f32.mrf.mxu0
      %v1121 = vadd.f32 0.0, %v1120
      %v1122 = vpop.f32.mrf.mxu0
      %1123 = vmatprep.mubr.f32.mxu0 0.0
      %1124 = vmatmul.mubr.f32.gmra.mxu0 %v1032
      %v1125 = vpop.f32.mrf.mxu0
      %v1126 = vadd.f32 0.0, %v1125
      %v1127 = vpop.f32.mrf.mxu0
      %1128 = vmatprep.mubr.f32.mxu0 0.0
      %1129 = vmatmul.mubr.f32.gmra.mxu0 %v1035
      %v1130 = vpop.f32.mrf.mxu0
      %v1131 = vadd.f32 0.0, %v1130
      %v1132 = vpop.f32.mrf.mxu0
      %1133 = vmatprep.mubr.f32.mxu0 0.0
      %1134 = vmatmul.mubr.f32.gmra.mxu0 %v1038
      %v1135 = vpop.f32.mrf.mxu0
      %v1136 = vadd.f32 0.0, %v1135
      %v1137 = vpop.f32.mrf.mxu0
      %1138 = vmatprep.mubr.f32.mxu0 0.0
      %1139 = vmatmul.mubr.f32.gmra.mxu0 %v1041
      %v1140 = vpop.f32.mrf.mxu0
      %v1141 = vadd.f32 0.0, %v1140
      %v1142 = vpop.f32.mrf.mxu0
      %1143 = vmatprep.mubr.f32.mxu0 0.0
      %1144 = vmatmul.mubr.f32.gmra.mxu0 %v1044
      %v1145 = vpop.f32.mrf.mxu0
      %v1146 = vadd.f32 0.0, %v1145
      %v1147 = vpop.f32.mrf.mxu0
      %1148 = vmatprep.mubr.f32.mxu0 0.0
      %1149 = vmatmul.mubr.f32.gmra.mxu0 %v1047
      %v1150 = vpop.f32.mrf.mxu0
      %v1151 = vadd.f32 0.0, %v1150
      %v1152 = vpop.f32.mrf.mxu0
      %1153 = vdwg.mxu0
      %v1155 = vsel %vm362, %v691, 0
      %v1158 = vsel %vm362, %v692, 0
      %v1161 = vsel %vm362, %v693, 0
      %v1164 = vsel %vm362, %v694, 0
      %v1167 = vsel %vm362, %v695, 0
      %v1170 = vsel %vm362, %v696, 0
      %v1173 = vsel %vm362, %v697, 0
      %v1176 = vsel %vm362, %v698, 0
      %1178 = vmatprep.subr.mxu0 0.0
      %1179 = vmatpush1.msra.mxu0 0.0
      %1180 = vmatprep.subr.mxu0 0.0
      %1181 = vmatpush1.msra.mxu0 0.0
      %1182 = vmatprep.subr.mxu0 0.0
      %1183 = vmatpush1.msra.mxu0 0.0
      %1184 = vmatprep.subr.mxu0 0.0
      %1185 = vmatpush1.msra.mxu0 0.0
      %1186 = vmatprep.subr.mxu0 0.0
      %1187 = vmatpush1.msra.mxu0 0.0
      %1188 = vmatprep.subr.mxu0 0.0
      %1189 = vmatpush1.msra.mxu0 0.0
      %1190 = vmatprep.subr.mxu0 0.0
      %1191 = vmatpush1.msra.mxu0 0.0
      %1192 = vmatprep.subr.mxu0 0.0
      %1193 = vmatpush1.msra.mxu0 0.0
      %1194 = vmatprep.subr.mxu0 0.0
      %1195 = vmatpush1.msra.mxu0 0.0
      %1196 = vmatprep.subr.mxu0 0.0
      %1197 = vmatpush1.msra.mxu0 0.0
      %1198 = vmatprep.subr.mxu0 0.0
      %1199 = vmatpush1.msra.mxu0 0.0
      %1200 = vmatprep.subr.mxu0 0.0
      %1201 = vmatpush1.msra.mxu0 0.0
      %1202 = vmatprep.subr.mxu0 0.0
      %1203 = vmatpush1.msra.mxu0 0.0
      %1204 = vmatprep.subr.mxu0 0.0
      %1205 = vmatpush1.msra.mxu0 %v751
      %1206 = vmatprep.subr.mxu0 0.0
      %1207 = vmatpush1.msra.mxu0 %v750
      %1208 = vmatprep.subr.mxu0 0.0
      %1209 = vmatpush1.msra.mxu0 %v749
      %1210 = vmatprep.subr.mxu0 0.0
      %1211 = vmatpush2.msra.mxu0 0.0
      %1212 = vmatprep.subr.mxu0 0.0
      %1213 = vmatpush2.msra.mxu0 0.0
      %1214 = vmatprep.subr.mxu0 0.0
      %1215 = vmatpush2.msra.mxu0 0.0
      %1216 = vmatprep.subr.mxu0 0.0
      %1217 = vmatpush2.msra.mxu0 0.0
      %1218 = vmatprep.subr.mxu0 0.0
      %1219 = vmatpush2.msra.mxu0 0.0
      %1220 = vmatprep.subr.mxu0 0.0
      %1221 = vmatpush2.msra.mxu0 0.0
      %1222 = vmatprep.subr.mxu0 0.0
      %1223 = vmatpush2.msra.mxu0 0.0
      %1224 = vmatprep.subr.mxu0 0.0
      %1225 = vmatpush2.msra.mxu0 0.0
      %1226 = vmatprep.subr.mxu0 0.0
      %1227 = vmatpush2.msra.mxu0 0.0
      %1228 = vmatprep.subr.mxu0 0.0
      %1229 = vmatpush2.msra.mxu0 0.0
      %1230 = vmatprep.subr.mxu0 0.0
      %1231 = vmatpush2.msra.mxu0 0.0
      %1232 = vmatprep.subr.mxu0 0.0
      %1233 = vmatpush2.msra.mxu0 0.0
      %1234 = vmatprep.subr.mxu0 0.0
      %1235 = vmatpush2.msra.mxu0 0.0
      %1236 = vmatprep.subr.mxu0 0.0
      %1237 = vmatpush2.msra.mxu0 0.0
      %1238 = vmatprep.subr.mxu0 0.0
      %1239 = vmatpush2.msra.mxu0 0.0
      %1240 = vmatprep.subr.mxu0 0.0
      %1241 = vmatpush2.msra.mxu0 0.0
      %1242 = vmatprep.mubr.f32.mxu0 0.0
      %1243 = vmatmul.mubr.f32.gmra.mxu0 %v1155
      %v1244 = vpop.f32.mrf.mxu0
      %v1245 = vadd.f32 0.0, %v1244
      %v1246 = vpop.f32.mrf.mxu0
      %1247 = vmatprep.mubr.f32.mxu0 0.0
      %1248 = vmatmul.mubr.f32.gmra.mxu0 %v1158
      %v1249 = vpop.f32.mrf.mxu0
      %v1250 = vadd.f32 0.0, %v1249
      %v1251 = vpop.f32.mrf.mxu0
      %1252 = vmatprep.mubr.f32.mxu0 0.0
      %1253 = vmatmul.mubr.f32.gmra.mxu0 %v1161
      %v1254 = vpop.f32.mrf.mxu0
      %v1255 = vadd.f32 0.0, %v1254
      %v1256 = vpop.f32.mrf.mxu0
      %1257 = vmatprep.mubr.f32.mxu0 0.0
      %1258 = vmatmul.mubr.f32.gmra.mxu0 %v1164
      %v1259 = vpop.f32.mrf.mxu0
      %v1260 = vadd.f32 0.0, %v1259
      %v1261 = vpop.f32.mrf.mxu0
      %1262 = vmatprep.mubr.f32.mxu0 0.0
      %1263 = vmatmul.mubr.f32.gmra.mxu0 %v1167
      %v1264 = vpop.f32.mrf.mxu0
      %v1265 = vadd.f32 0.0, %v1264
      %v1266 = vpop.f32.mrf.mxu0
      %1267 = vmatprep.mubr.f32.mxu0 0.0
      %1268 = vmatmul.mubr.f32.gmra.mxu0 %v1170
      %v1269 = vpop.f32.mrf.mxu0
      %v1270 = vadd.f32 0.0, %v1269
      %v1271 = vpop.f32.mrf.mxu0
      %1272 = vmatprep.mubr.f32.mxu0 0.0
      %1273 = vmatmul.mubr.f32.gmra.mxu0 %v1173
      %v1274 = vpop.f32.mrf.mxu0
      %v1275 = vadd.f32 0.0, %v1274
      %v1276 = vpop.f32.mrf.mxu0
      %1277 = vmatprep.mubr.f32.mxu0 0.0
      %1278 = vmatmul.mubr.f32.gmra.mxu0 %v1176
      %v1279 = vpop.f32.mrf.mxu0
      %v1280 = vadd.f32 0.0, %v1279
      %v1281 = vpop.f32.mrf.mxu0
      %1282 = vdwg.mxu0
      %v1284 = vsel %vm362, %v699, 0
      %v1287 = vsel %vm362, %v700, 0
      %v1290 = vsel %vm362, %v701, 0
      %v1293 = vsel %vm362, %v702, 0
      %v1296 = vsel %vm362, %v703, 0
      %v1299 = vsel %vm362, %v704, 0
      %v1302 = vsel %vm362, %v705, 0
      %v1305 = vsel %vm362, %v706, 0
      %1307 = vmatprep.subr.mxu0 0.0
      %1308 = vmatpush1.msra.mxu0 0.0
      %1309 = vmatprep.subr.mxu0 0.0
      %1310 = vmatpush1.msra.mxu0 0.0
      %1311 = vmatprep.subr.mxu0 0.0
      %1312 = vmatpush1.msra.mxu0 0.0
      %1313 = vmatprep.subr.mxu0 0.0
      %1314 = vmatpush1.msra.mxu0 0.0
      %1315 = vmatprep.subr.mxu0 0.0
      %1316 = vmatpush1.msra.mxu0 0.0
      %1317 = vmatprep.subr.mxu0 0.0
      %1318 = vmatpush1.msra.mxu0 0.0
      %1319 = vmatprep.subr.mxu0 0.0
      %1320 = vmatpush1.msra.mxu0 0.0
      %1321 = vmatprep.subr.mxu0 0.0
      %1322 = vmatpush1.msra.mxu0 0.0
      %1323 = vmatprep.subr.mxu0 0.0
      %1324 = vmatpush1.msra.mxu0 0.0
      %1325 = vmatprep.subr.mxu0 0.0
      %1326 = vmatpush1.msra.mxu0 0.0
      %1327 = vmatprep.subr.mxu0 0.0
      %1328 = vmatpush1.msra.mxu0 0.0
      %1329 = vmatprep.subr.mxu0 0.0
      %1330 = vmatpush1.msra.mxu0 0.0
      %1331 = vmatprep.subr.mxu0 0.0
      %1332 = vmatpush1.msra.mxu0 0.0
      %1333 = vmatprep.subr.mxu0 0.0
      %1334 = vmatpush1.msra.mxu0 %v754
      %1335 = vmatprep.subr.mxu0 0.0
      %1336 = vmatpush1.msra.mxu0 %v753
      %1337 = vmatprep.subr.mxu0 0.0
      %1338 = vmatpush1.msra.mxu0 %v752
      %1339 = vmatprep.subr.mxu0 0.0
      %1340 = vmatpush2.msra.mxu0 0.0
      %1341 = vmatprep.subr.mxu0 0.0
      %1342 = vmatpush2.msra.mxu0 0.0
      %1343 = vmatprep.subr.mxu0 0.0
      %1344 = vmatpush2.msra.mxu0 0.0
      %1345 = vmatprep.subr.mxu0 0.0
      %1346 = vmatpush2.msra.mxu0 0.0
      %1347 = vmatprep.subr.mxu0 0.0
      %1348 = vmatpush2.msra.mxu0 0.0
      %1349 = vmatprep.subr.mxu0 0.0
      %1350 = vmatpush2.msra.mxu0 0.0
      %1351 = vmatprep.subr.mxu0 0.0
      %1352 = vmatpush2.msra.mxu0 0.0
      %1353 = vmatprep.subr.mxu0 0.0
      %1354 = vmatpush2.msra.mxu0 0.0
      %1355 = vmatprep.subr.mxu0 0.0
      %1356 = vmatpush2.msra.mxu0 0.0
      %1357 = vmatprep.subr.mxu0 0.0
      %1358 = vmatpush2.msra.mxu0 0.0
      %1359 = vmatprep.subr.mxu0 0.0
      %1360 = vmatpush2.msra.mxu0 0.0
      %1361 = vmatprep.subr.mxu0 0.0
      %1362 = vmatpush2.msra.mxu0 0.0
      %1363 = vmatprep.subr.mxu0 0.0
      %1364 = vmatpush2.msra.mxu0 0.0
      %1365 = vmatprep.subr.mxu0 0.0
      %1366 = vmatpush2.msra.mxu0 0.0
      %1367 = vmatprep.subr.mxu0 0.0
      %1368 = vmatpush2.msra.mxu0 0.0
      %1369 = vmatprep.subr.mxu0 0.0
      %1370 = vmatpush2.msra.mxu0 0.0
      %1371 = vmatprep.mubr.f32.mxu0 0.0
      %1372 = vmatmul.mubr.f32.gmra.mxu0 %v1284
      %v1373 = vpop.f32.mrf.mxu0
      %v1374 = vadd.f32 0.0, %v1373
      %v1375 = vpop.f32.mrf.mxu0
      %1376 = vmatprep.mubr.f32.mxu0 0.0
      %1377 = vmatmul.mubr.f32.gmra.mxu0 %v1287
      %v1378 = vpop.f32.mrf.mxu0
      %v1379 = vadd.f32 0.0, %v1378
      %v1380 = vpop.f32.mrf.mxu0
      %1381 = vmatprep.mubr.f32.mxu0 0.0
      %1382 = vmatmul.mubr.f32.gmra.mxu0 %v1290
      %v1383 = vpop.f32.mrf.mxu0
      %v1384 = vadd.f32 0.0, %v1383
      %v1385 = vpop.f32.mrf.mxu0
      %1386 = vmatprep.mubr.f32.mxu0 0.0
      %1387 = vmatmul.mubr.f32.gmra.mxu0 %v1293
      %v1388 = vpop.f32.mrf.mxu0
      %v1389 = vadd.f32 0.0, %v1388
      %v1390 = vpop.f32.mrf.mxu0
      %1391 = vmatprep.mubr.f32.mxu0 0.0
      %1392 = vmatmul.mubr.f32.gmra.mxu0 %v1296
      %v1393 = vpop.f32.mrf.mxu0
      %v1394 = vadd.f32 0.0, %v1393
      %v1395 = vpop.f32.mrf.mxu0
      %1396 = vmatprep.mubr.f32.mxu0 0.0
      %1397 = vmatmul.mubr.f32.gmra.mxu0 %v1299
      %v1398 = vpop.f32.mrf.mxu0
      %v1399 = vadd.f32 0.0, %v1398
      %v1400 = vpop.f32.mrf.mxu0
      %1401 = vmatprep.mubr.f32.mxu0 0.0
      %1402 = vmatmul.mubr.f32.gmra.mxu0 %v1302
      %v1403 = vpop.f32.mrf.mxu0
      %v1404 = vadd.f32 0.0, %v1403
      %v1405 = vpop.f32.mrf.mxu0
      %1406 = vmatprep.mubr.f32.mxu0 0.0
      %1407 = vmatmul.mubr.f32.gmra.mxu0 %v1305
      %v1408 = vpop.f32.mrf.mxu0
      %v1409 = vadd.f32 0.0, %v1408
      %v1410 = vpop.f32.mrf.mxu0
      %1411 = vdwg.mxu0
      %v1413 = vsel %vm362, %v707, 0
      %v1416 = vsel %vm362, %v708, 0
      %v1419 = vsel %vm362, %v709, 0
      %v1422 = vsel %vm362, %v710, 0
      %v1425 = vsel %vm362, %v711, 0
      %v1428 = vsel %vm362, %v712, 0
      %v1431 = vsel %vm362, %v713, 0
      %v1434 = vsel %vm362, %v714, 0
      %1436 = vmatprep.subr.mxu0 0.0
      %1437 = vmatpush1.msra.mxu0 0.0
      %1438 = vmatprep.subr.mxu0 0.0
      %1439 = vmatpush1.msra.mxu0 0.0
      %1440 = vmatprep.subr.mxu0 0.0
      %1441 = vmatpush1.msra.mxu0 0.0
      %1442 = vmatprep.subr.mxu0 0.0
      %1443 = vmatpush1.msra.mxu0 0.0
      %1444 = vmatprep.subr.mxu0 0.0
      %1445 = vmatpush1.msra.mxu0 0.0
      %1446 = vmatprep.subr.mxu0 0.0
      %1447 = vmatpush1.msra.mxu0 0.0
      %1448 = vmatprep.subr.mxu0 0.0
      %1449 = vmatpush1.msra.mxu0 0.0
      %1450 = vmatprep.subr.mxu0 0.0
      %1451 = vmatpush1.msra.mxu0 0.0
      %1452 = vmatprep.subr.mxu0 0.0
      %1453 = vmatpush1.msra.mxu0 0.0
      %1454 = vmatprep.subr.mxu0 0.0
      %1455 = vmatpush1.msra.mxu0 0.0
      %1456 = vmatprep.subr.mxu0 0.0
      %1457 = vmatpush1.msra.mxu0 0.0
      %1458 = vmatprep.subr.mxu0 0.0
      %1459 = vmatpush1.msra.mxu0 0.0
      %1460 = vmatprep.subr.mxu0 0.0
      %1461 = vmatpush1.msra.mxu0 0.0
      %1462 = vmatprep.subr.mxu0 0.0
      %1463 = vmatpush1.msra.mxu0 %v757
      %1464 = vmatprep.subr.mxu0 0.0
      %1465 = vmatpush1.msra.mxu0 %v756
      %1466 = vmatprep.subr.mxu0 0.0
      %1467 = vmatpush1.msra.mxu0 %v755
      %1468 = vmatprep.subr.mxu0 0.0
      %1469 = vmatpush2.msra.mxu0 0.0
      %1470 = vmatprep.subr.mxu0 0.0
      %1471 = vmatpush2.msra.mxu0 0.0
      %1472 = vmatprep.subr.mxu0 0.0
      %1473 = vmatpush2.msra.mxu0 0.0
      %1474 = vmatprep.subr.mxu0 0.0
      %1475 = vmatpush2.msra.mxu0 0.0
      %1476 = vmatprep.subr.mxu0 0.0
      %1477 = vmatpush2.msra.mxu0 0.0
      %1478 = vmatprep.subr.mxu0 0.0
      %1479 = vmatpush2.msra.mxu0 0.0
      %1480 = vmatprep.subr.mxu0 0.0
      %1481 = vmatpush2.msra.mxu0 0.0
      %1482 = vmatprep.subr.mxu0 0.0
      %1483 = vmatpush2.msra.mxu0 0.0
      %1484 = vmatprep.subr.mxu0 0.0
      %1485 = vmatpush2.msra.mxu0 0.0
      %1486 = vmatprep.subr.mxu0 0.0
      %1487 = vmatpush2.msra.mxu0 0.0
      %1488 = vmatprep.subr.mxu0 0.0
      %1489 = vmatpush2.msra.mxu0 0.0
      %1490 = vmatprep.subr.mxu0 0.0
      %1491 = vmatpush2.msra.mxu0 0.0
      %1492 = vmatprep.subr.mxu0 0.0
      %1493 = vmatpush2.msra.mxu0 0.0
      %1494 = vmatprep.subr.mxu0 0.0
      %1495 = vmatpush2.msra.mxu0 0.0
      %1496 = vmatprep.subr.mxu0 0.0
      %1497 = vmatpush2.msra.mxu0 0.0
      %1498 = vmatprep.subr.mxu0 0.0
      %1499 = vmatpush2.msra.mxu0 0.0
      %1500 = vmatprep.mubr.f32.mxu0 0.0
      %1501 = vmatmul.mubr.f32.gmra.mxu0 %v1413
      %v1502 = vpop.f32.mrf.mxu0
      %v1503 = vadd.f32 0.0, %v1502
      %v1504 = vpop.f32.mrf.mxu0
      %1505 = vmatprep.mubr.f32.mxu0 0.0
      %1506 = vmatmul.mubr.f32.gmra.mxu0 %v1416
      %v1507 = vpop.f32.mrf.mxu0
      %v1508 = vadd.f32 0.0, %v1507
      %v1509 = vpop.f32.mrf.mxu0
      %1510 = vmatprep.mubr.f32.mxu0 0.0
      %1511 = vmatmul.mubr.f32.gmra.mxu0 %v1419
      %v1512 = vpop.f32.mrf.mxu0
      %v1513 = vadd.f32 0.0, %v1512
      %v1514 = vpop.f32.mrf.mxu0
      %1515 = vmatprep.mubr.f32.mxu0 0.0
      %1516 = vmatmul.mubr.f32.gmra.mxu0 %v1422
      %v1517 = vpop.f32.mrf.mxu0
      %v1518 = vadd.f32 0.0, %v1517
      %v1519 = vpop.f32.mrf.mxu0
      %1520 = vmatprep.mubr.f32.mxu0 0.0
      %1521 = vmatmul.mubr.f32.gmra.mxu0 %v1425
      %v1522 = vpop.f32.mrf.mxu0
      %v1523 = vadd.f32 0.0, %v1522
      %v1524 = vpop.f32.mrf.mxu0
      %1525 = vmatprep.mubr.f32.mxu0 0.0
      %1526 = vmatmul.mubr.f32.gmra.mxu0 %v1428
      %v1527 = vpop.f32.mrf.mxu0
      %v1528 = vadd.f32 0.0, %v1527
      %v1529 = vpop.f32.mrf.mxu0
      %1530 = vmatprep.mubr.f32.mxu0 0.0
      %1531 = vmatmul.mubr.f32.gmra.mxu0 %v1431
      %v1532 = vpop.f32.mrf.mxu0
      %v1533 = vadd.f32 0.0, %v1532
      %v1534 = vpop.f32.mrf.mxu0
      %1535 = vmatprep.mubr.f32.mxu0 0.0
      %1536 = vmatmul.mubr.f32.gmra.mxu0 %v1434
      %v1537 = vpop.f32.mrf.mxu0
      %v1538 = vadd.f32 0.0, %v1537
      %v1539 = vpop.f32.mrf.mxu0
      %1540 = vdwg.mxu0
      %v1542 = vsel %vm362, %v716, 0
      %v1545 = vsel %vm362, %v717, 0
      %v1548 = vsel %vm362, %v718, 0
      %v1551 = vsel %vm362, %v719, 0
      %v1554 = vsel %vm362, %v720, 0
      %v1557 = vsel %vm362, %v721, 0
      %v1560 = vsel %vm362, %v722, 0
      %v1563 = vsel %vm362, %v723, 0
      %1565 = vmatprep.subr.mxu0 0.0
      %1566 = vmatpush1.msra.mxu0 0.0
      %1567 = vmatprep.subr.mxu0 0.0
      %1568 = vmatpush1.msra.mxu0 0.0
      %1569 = vmatprep.subr.mxu0 0.0
      %1570 = vmatpush1.msra.mxu0 0.0
      %1571 = vmatprep.subr.mxu0 0.0
      %1572 = vmatpush1.msra.mxu0 0.0
      %1573 = vmatprep.subr.mxu0 0.0
      %1574 = vmatpush1.msra.mxu0 0.0
      %1575 = vmatprep.subr.mxu0 0.0
      %1576 = vmatpush1.msra.mxu0 0.0
      %1577 = vmatprep.subr.mxu0 0.0
      %1578 = vmatpush1.msra.mxu0 0.0
      %1579 = vmatprep.subr.mxu0 0.0
      %1580 = vmatpush1.msra.mxu0 0.0
      %1581 = vmatprep.subr.mxu0 0.0
      %1582 = vmatpush1.msra.mxu0 0.0
      %1583 = vmatprep.subr.mxu0 0.0
      %1584 = vmatpush1.msra.mxu0 0.0
      %1585 = vmatprep.subr.mxu0 0.0
      %1586 = vmatpush1.msra.mxu0 0.0
      %1587 = vmatprep.subr.mxu0 0.0
      %1588 = vmatpush1.msra.mxu0 0.0
      %1589 = vmatprep.subr.mxu0 0.0
      %1590 = vmatpush1.msra.mxu0 0.0
      %1591 = vmatprep.subr.mxu0 0.0
      %1592 = vmatpush1.msra.mxu0 %v760
      %1593 = vmatprep.subr.mxu0 0.0
      %1594 = vmatpush1.msra.mxu0 %v759
      %1595 = vmatprep.subr.mxu0 0.0
      %1596 = vmatpush1.msra.mxu0 %v758
      %1597 = vmatprep.subr.mxu0 0.0
      %1598 = vmatpush2.msra.mxu0 0.0
      %1599 = vmatprep.subr.mxu0 0.0
      %1600 = vmatpush2.msra.mxu0 0.0
      %1601 = vmatprep.subr.mxu0 0.0
      %1602 = vmatpush2.msra.mxu0 0.0
      %1603 = vmatprep.subr.mxu0 0.0
      %1604 = vmatpush2.msra.mxu0 0.0
      %1605 = vmatprep.subr.mxu0 0.0
      %1606 = vmatpush2.msra.mxu0 0.0
      %1607 = vmatprep.subr.mxu0 0.0
      %1608 = vmatpush2.msra.mxu0 0.0
      %1609 = vmatprep.subr.mxu0 0.0
      %1610 = vmatpush2.msra.mxu0 0.0
      %1611 = vmatprep.subr.mxu0 0.0
      %1612 = vmatpush2.msra.mxu0 0.0
      %1613 = vmatprep.subr.mxu0 0.0
      %1614 = vmatpush2.msra.mxu0 0.0
      %1615 = vmatprep.subr.mxu0 0.0
      %1616 = vmatpush2.msra.mxu0 0.0
      %1617 = vmatprep.subr.mxu0 0.0
      %1618 = vmatpush2.msra.mxu0 0.0
      %1619 = vmatprep.subr.mxu0 0.0
      %1620 = vmatpush2.msra.mxu0 0.0
      %1621 = vmatprep.subr.mxu0 0.0
      %1622 = vmatpush2.msra.mxu0 0.0
      %1623 = vmatprep.subr.mxu0 0.0
      %1624 = vmatpush2.msra.mxu0 0.0
      %1625 = vmatprep.subr.mxu0 0.0
      %1626 = vmatpush2.msra.mxu0 0.0
      %1627 = vmatprep.subr.mxu0 0.0
      %1628 = vmatpush2.msra.mxu0 0.0
      %1629 = vmatprep.mubr.f32.mxu0 0.0
      %1630 = vmatmul.mubr.f32.gmra.mxu0 %v1542
      %v1631 = vpop.f32.mrf.mxu0
      %v1632 = vadd.f32 0.0, %v1631
      %v1633 = vpop.f32.mrf.mxu0
      %1634 = vmatprep.mubr.f32.mxu0 0.0
      %1635 = vmatmul.mubr.f32.gmra.mxu0 %v1545
      %v1636 = vpop.f32.mrf.mxu0
      %v1637 = vadd.f32 0.0, %v1636
      %v1638 = vpop.f32.mrf.mxu0
      %1639 = vmatprep.mubr.f32.mxu0 0.0
      %1640 = vmatmul.mubr.f32.gmra.mxu0 %v1548
      %v1641 = vpop.f32.mrf.mxu0
      %v1642 = vadd.f32 0.0, %v1641
      %v1643 = vpop.f32.mrf.mxu0
      %1644 = vmatprep.mubr.f32.mxu0 0.0
      %1645 = vmatmul.mubr.f32.gmra.mxu0 %v1551
      %v1646 = vpop.f32.mrf.mxu0
      %v1647 = vadd.f32 0.0, %v1646
      %v1648 = vpop.f32.mrf.mxu0
      %1649 = vmatprep.mubr.f32.mxu0 0.0
      %1650 = vmatmul.mubr.f32.gmra.mxu0 %v1554
      %v1651 = vpop.f32.mrf.mxu0
      %v1652 = vadd.f32 0.0, %v1651
      %v1653 = vpop.f32.mrf.mxu0
      %1654 = vmatprep.mubr.f32.mxu0 0.0
      %1655 = vmatmul.mubr.f32.gmra.mxu0 %v1557
      %v1656 = vpop.f32.mrf.mxu0
      %v1657 = vadd.f32 0.0, %v1656
      %v1658 = vpop.f32.mrf.mxu0
      %1659 = vmatprep.mubr.f32.mxu0 0.0
      %1660 = vmatmul.mubr.f32.gmra.mxu0 %v1560
      %v1661 = vpop.f32.mrf.mxu0
      %v1662 = vadd.f32 0.0, %v1661
      %v1663 = vpop.f32.mrf.mxu0
      %1664 = vmatprep.mubr.f32.mxu0 0.0
      %1665 = vmatmul.mubr.f32.gmra.mxu0 %v1563
      %v1666 = vpop.f32.mrf.mxu0
      %v1667 = vadd.f32 0.0, %v1666
      %v1668 = vpop.f32.mrf.mxu0
      %1669 = vdwg.mxu0
      %v1671 = vsel %vm362, %v724, 0
      %v1674 = vsel %vm362, %v725, 0
      %v1677 = vsel %vm362, %v726, 0
      %v1680 = vsel %vm362, %v727, 0
      %v1683 = vsel %vm362, %v728, 0
      %v1686 = vsel %vm362, %v729, 0
      %v1689 = vsel %vm362, %v730, 0
      %v1692 = vsel %vm362, %v731, 0
      %1694 = vmatprep.subr.mxu0 0.0
      %1695 = vmatpush1.msra.mxu0 0.0
      %1696 = vmatprep.subr.mxu0 0.0
      %1697 = vmatpush1.msra.mxu0 0.0
      %1698 = vmatprep.subr.mxu0 0.0
      %1699 = vmatpush1.msra.mxu0 0.0
      %1700 = vmatprep.subr.mxu0 0.0
      %1701 = vmatpush1.msra.mxu0 0.0
      %1702 = vmatprep.subr.mxu0 0.0
      %1703 = vmatpush1.msra.mxu0 0.0
      %1704 = vmatprep.subr.mxu0 0.0
      %1705 = vmatpush1.msra.mxu0 0.0
      %1706 = vmatprep.subr.mxu0 0.0
      %1707 = vmatpush1.msra.mxu0 0.0
      %1708 = vmatprep.subr.mxu0 0.0
      %1709 = vmatpush1.msra.mxu0 0.0
      %1710 = vmatprep.subr.mxu0 0.0
      %1711 = vmatpush1.msra.mxu0 0.0
      %1712 = vmatprep.subr.mxu0 0.0
      %1713 = vmatpush1.msra.mxu0 0.0
      %1714 = vmatprep.subr.mxu0 0.0
      %1715 = vmatpush1.msra.mxu0 0.0
      %1716 = vmatprep.subr.mxu0 0.0
      %1717 = vmatpush1.msra.mxu0 0.0
      %1718 = vmatprep.subr.mxu0 0.0
      %1719 = vmatpush1.msra.mxu0 0.0
      %1720 = vmatprep.subr.mxu0 0.0
      %1721 = vmatpush1.msra.mxu0 %v763
      %1722 = vmatprep.subr.mxu0 0.0
      %1723 = vmatpush1.msra.mxu0 %v762
      %1724 = vmatprep.subr.mxu0 0.0
      %1725 = vmatpush1.msra.mxu0 %v761
      %1726 = vmatprep.subr.mxu0 0.0
      %1727 = vmatpush2.msra.mxu0 0.0
      %1728 = vmatprep.subr.mxu0 0.0
      %1729 = vmatpush2.msra.mxu0 0.0
      %1730 = vmatprep.subr.mxu0 0.0
      %1731 = vmatpush2.msra.mxu0 0.0
      %1732 = vmatprep.subr.mxu0 0.0
      %1733 = vmatpush2.msra.mxu0 0.0
      %1734 = vmatprep.subr.mxu0 0.0
      %1735 = vmatpush2.msra.mxu0 0.0
      %1736 = vmatprep.subr.mxu0 0.0
      %1737 = vmatpush2.msra.mxu0 0.0
      %1738 = vmatprep.subr.mxu0 0.0
      %1739 = vmatpush2.msra.mxu0 0.0
      %1740 = vmatprep.subr.mxu0 0.0
      %1741 = vmatpush2.msra.mxu0 0.0
      %1742 = vmatprep.subr.mxu0 0.0
      %1743 = vmatpush2.msra.mxu0 0.0
      %1744 = vmatprep.subr.mxu0 0.0
      %1745 = vmatpush2.msra.mxu0 0.0
      %1746 = vmatprep.subr.mxu0 0.0
      %1747 = vmatpush2.msra.mxu0 0.0
      %1748 = vmatprep.subr.mxu0 0.0
      %1749 = vmatpush2.msra.mxu0 0.0
      %1750 = vmatprep.subr.mxu0 0.0
      %1751 = vmatpush2.msra.mxu0 0.0
      %1752 = vmatprep.subr.mxu0 0.0
      %1753 = vmatpush2.msra.mxu0 0.0
      %1754 = vmatprep.subr.mxu0 0.0
      %1755 = vmatpush2.msra.mxu0 0.0
      %1756 = vmatprep.subr.mxu0 0.0
      %1757 = vmatpush2.msra.mxu0 0.0
      %1758 = vmatprep.mubr.f32.mxu0 0.0
      %1759 = vmatmul.mubr.f32.gmra.mxu0 %v1671
      %v1760 = vpop.f32.mrf.mxu0
      %v1761 = vadd.f32 0.0, %v1760
      %v1762 = vpop.f32.mrf.mxu0
      %1763 = vmatprep.mubr.f32.mxu0 0.0
      %1764 = vmatmul.mubr.f32.gmra.mxu0 %v1674
      %v1765 = vpop.f32.mrf.mxu0
      %v1766 = vadd.f32 0.0, %v1765
      %v1767 = vpop.f32.mrf.mxu0
      %1768 = vmatprep.mubr.f32.mxu0 0.0
      %1769 = vmatmul.mubr.f32.gmra.mxu0 %v1677
      %v1770 = vpop.f32.mrf.mxu0
      %v1771 = vadd.f32 0.0, %v1770
      %v1772 = vpop.f32.mrf.mxu0
      %1773 = vmatprep.mubr.f32.mxu0 0.0
      %1774 = vmatmul.mubr.f32.gmra.mxu0 %v1680
      %v1775 = vpop.f32.mrf.mxu0
      %v1776 = vadd.f32 0.0, %v1775
      %v1777 = vpop.f32.mrf.mxu0
      %1778 = vmatprep.mubr.f32.mxu0 0.0
      %1779 = vmatmul.mubr.f32.gmra.mxu0 %v1683
      %v1780 = vpop.f32.mrf.mxu0
      %v1781 = vadd.f32 0.0, %v1780
      %v1782 = vpop.f32.mrf.mxu0
      %1783 = vmatprep.mubr.f32.mxu0 0.0
      %1784 = vmatmul.mubr.f32.gmra.mxu0 %v1686
      %v1785 = vpop.f32.mrf.mxu0
      %v1786 = vadd.f32 0.0, %v1785
      %v1787 = vpop.f32.mrf.mxu0
      %1788 = vmatprep.mubr.f32.mxu0 0.0
      %1789 = vmatmul.mubr.f32.gmra.mxu0 %v1689
      %v1790 = vpop.f32.mrf.mxu0
      %v1791 = vadd.f32 0.0, %v1790
      %v1792 = vpop.f32.mrf.mxu0
      %1793 = vmatprep.mubr.f32.mxu0 0.0
      %1794 = vmatmul.mubr.f32.gmra.mxu0 %v1692
      %v1795 = vpop.f32.mrf.mxu0
      %v1796 = vadd.f32 0.0, %v1795
      %v1797 = vpop.f32.mrf.mxu0
      %1798 = vdwg.mxu0
      %v1800 = vsel %vm362, %v732, 0
      %v1803 = vsel %vm362, %v733, 0
      %v1806 = vsel %vm362, %v734, 0
      %v1809 = vsel %vm362, %v735, 0
      %v1812 = vsel %vm362, %v736, 0
      %v1815 = vsel %vm362, %v737, 0
      %v1818 = vsel %vm362, %v738, 0
      %v1821 = vsel %vm362, %v739, 0
      %1823 = vmatprep.subr.mxu0 0.0
      %1824 = vmatpush1.msra.mxu0 0.0
      %1825 = vmatprep.subr.mxu0 0.0
      %1826 = vmatpush1.msra.mxu0 0.0
      %1827 = vmatprep.subr.mxu0 0.0
      %1828 = vmatpush1.msra.mxu0 0.0
      %1829 = vmatprep.subr.mxu0 0.0
      %1830 = vmatpush1.msra.mxu0 0.0
      %1831 = vmatprep.subr.mxu0 0.0
      %1832 = vmatpush1.msra.mxu0 0.0
      %1833 = vmatprep.subr.mxu0 0.0
      %1834 = vmatpush1.msra.mxu0 0.0
      %1835 = vmatprep.subr.mxu0 0.0
      %1836 = vmatpush1.msra.mxu0 0.0
      %1837 = vmatprep.subr.mxu0 0.0
      %1838 = vmatpush1.msra.mxu0 0.0
      %1839 = vmatprep.subr.mxu0 0.0
      %1840 = vmatpush1.msra.mxu0 0.0
      %1841 = vmatprep.subr.mxu0 0.0
      %1842 = vmatpush1.msra.mxu0 0.0
      %1843 = vmatprep.subr.mxu0 0.0
      %1844 = vmatpush1.msra.mxu0 0.0
      %1845 = vmatprep.subr.mxu0 0.0
      %1846 = vmatpush1.msra.mxu0 0.0
      %1847 = vmatprep.subr.mxu0 0.0
      %1848 = vmatpush1.msra.mxu0 0.0
      %1849 = vmatprep.subr.mxu0 0.0
      %1850 = vmatpush1.msra.mxu0 %v766
      %1851 = vmatprep.subr.mxu0 0.0
      %1852 = vmatpush1.msra.mxu0 %v765
      %1853 = vmatprep.subr.mxu0 0.0
      %1854 = vmatpush1.msra.mxu0 %v764
      %1855 = vmatprep.subr.mxu0 0.0
      %1856 = vmatpush2.msra.mxu0 0.0
      %1857 = vmatprep.subr.mxu0 0.0
      %1858 = vmatpush2.msra.mxu0 0.0
      %1859 = vmatprep.subr.mxu0 0.0
      %1860 = vmatpush2.msra.mxu0 0.0
      %1861 = vmatprep.subr.mxu0 0.0
      %1862 = vmatpush2.msra.mxu0 0.0
      %1863 = vmatprep.subr.mxu0 0.0
      %1864 = vmatpush2.msra.mxu0 0.0
      %1865 = vmatprep.subr.mxu0 0.0
      %1866 = vmatpush2.msra.mxu0 0.0
      %1867 = vmatprep.subr.mxu0 0.0
      %1868 = vmatpush2.msra.mxu0 0.0
      %1869 = vmatprep.subr.mxu0 0.0
      %1870 = vmatpush2.msra.mxu0 0.0
      %1871 = vmatprep.subr.mxu0 0.0
      %1872 = vmatpush2.msra.mxu0 0.0
      %1873 = vmatprep.subr.mxu0 0.0
      %1874 = vmatpush2.msra.mxu0 0.0
      %1875 = vmatprep.subr.mxu0 0.0
      %1876 = vmatpush2.msra.mxu0 0.0
      %1877 = vmatprep.subr.mxu0 0.0
      %1878 = vmatpush2.msra.mxu0 0.0
      %1879 = vmatprep.subr.mxu0 0.0
      %1880 = vmatpush2.msra.mxu0 0.0
      %1881 = vmatprep.subr.mxu0 0.0
      %1882 = vmatpush2.msra.mxu0 0.0
      %1883 = vmatprep.subr.mxu0 0.0
      %1884 = vmatpush2.msra.mxu0 0.0
      %1885 = vmatprep.subr.mxu0 0.0
      %1886 = vmatpush2.msra.mxu0 0.0
      %1887 = vmatprep.mubr.f32.mxu0 0.0
      %1888 = vmatmul.mubr.f32.gmra.mxu0 %v1800
      %v1889 = vpop.f32.mrf.mxu0
      %v1890 = vadd.f32 0.0, %v1889
      %v1891 = vpop.f32.mrf.mxu0
      %1892 = vmatprep.mubr.f32.mxu0 0.0
      %1893 = vmatmul.mubr.f32.gmra.mxu0 %v1803
      %v1894 = vpop.f32.mrf.mxu0
      %v1895 = vadd.f32 0.0, %v1894
      %v1896 = vpop.f32.mrf.mxu0
      %1897 = vmatprep.mubr.f32.mxu0 0.0
      %1898 = vmatmul.mubr.f32.gmra.mxu0 %v1806
      %v1899 = vpop.f32.mrf.mxu0
      %v1900 = vadd.f32 0.0, %v1899
      %v1901 = vpop.f32.mrf.mxu0
      %1902 = vmatprep.mubr.f32.mxu0 0.0
      %1903 = vmatmul.mubr.f32.gmra.mxu0 %v1809
      %v1904 = vpop.f32.mrf.mxu0
      %v1905 = vadd.f32 0.0, %v1904
      %v1906 = vpop.f32.mrf.mxu0
      %1907 = vmatprep.mubr.f32.mxu0 0.0
      %1908 = vmatmul.mubr.f32.gmra.mxu0 %v1812
      %v1909 = vpop.f32.mrf.mxu0
      %v1910 = vadd.f32 0.0, %v1909
      %v1911 = vpop.f32.mrf.mxu0
      %1912 = vmatprep.mubr.f32.mxu0 0.0
      %1913 = vmatmul.mubr.f32.gmra.mxu0 %v1815
      %v1914 = vpop.f32.mrf.mxu0
      %v1915 = vadd.f32 0.0, %v1914
      %v1916 = vpop.f32.mrf.mxu0
      %1917 = vmatprep.mubr.f32.mxu0 0.0
      %1918 = vmatmul.mubr.f32.gmra.mxu0 %v1818
      %v1919 = vpop.f32.mrf.mxu0
      %v1920 = vadd.f32 0.0, %v1919
      %v1921 = vpop.f32.mrf.mxu0
      %1922 = vmatprep.mubr.f32.mxu0 0.0
      %1923 = vmatmul.mubr.f32.gmra.mxu0 %v1821
      %v1924 = vpop.f32.mrf.mxu0
      %v1925 = vadd.f32 0.0, %v1924
      %v1926 = vpop.f32.mrf.mxu0
      %1927 = vdwg.mxu0
      %vm1928 = vcmask 48128
      %v1929 = vsel %vm1928, %v858, 0.0
      %v1930 = vsel %vm1928, %v987, 0.0
      %v1931 = vadd.f32 %v1929, %v1930
      %v1932 = vsel %vm1928, %v1116, 0.0
      %v1933 = vadd.f32 %v1931, %v1932
      %v1934 = vsel %vm1928, %v1245, 0.0
      %v1935 = vadd.f32 %v1933, %v1934
      %v1936 = vsel %vm1928, %v1374, 0.0
      %v1937 = vadd.f32 %v1935, %v1936
      %v1938 = vsel %vm1928, %v1503, 0.0
      %v1939 = vadd.f32 %v1937, %v1938
      %v1940 = vsel %vm1928, %v1632, 0.0
      %v1941 = vadd.f32 %v1939, %v1940
      %v1942 = vsel %vm1928, %v1761, 0.0
      %v1943 = vadd.f32 %v1941, %v1942
      %v1944 = vsel %vm1928, %v1890, 0.0
      %v1945 = vadd.f32 %v1943, %v1944
      %v1946 = vsel %vm1928, %v863, 0.0
      %v1947 = vsel %vm1928, %v992, 0.0
      %v1948 = vadd.f32 %v1946, %v1947
      %v1949 = vsel %vm1928, %v1121, 0.0
      %v1950 = vadd.f32 %v1948, %v1949
      %v1951 = vsel %vm1928, %v1250, 0.0
      %v1952 = vadd.f32 %v1950, %v1951
      %v1953 = vsel %vm1928, %v1379, 0.0
      %v1954 = vadd.f32 %v1952, %v1953
      %v1955 = vsel %vm1928, %v1508, 0.0
      %v1956 = vadd.f32 %v1954, %v1955
      %v1957 = vsel %vm1928, %v1637, 0.0
      %v1958 = vadd.f32 %v1956, %v1957
      %v1959 = vsel %vm1928, %v1766, 0.0
      %v1960 = vadd.f32 %v1958, %v1959
      %v1961 = vsel %vm1928, %v1895, 0.0
      %v1962 = vadd.f32 %v1960, %v1961
      %v1963 = vsel %vm1928, %v868, 0.0
      %v1964 = vsel %vm1928, %v997, 0.0
      %v1965 = vadd.f32 %v1963, %v1964
      %v1966 = vsel %vm1928, %v1126, 0.0
      %v1967 = vadd.f32 %v1965, %v1966
      %v1968 = vsel %vm1928, %v1255, 0.0
      %v1969 = vadd.f32 %v1967, %v1968
      %v1970 = vsel %vm1928, %v1384, 0.0
      %v1971 = vadd.f32 %v1969, %v1970
      %v1972 = vsel %vm1928, %v1513, 0.0
      %v1973 = vadd.f32 %v1971, %v1972
      %v1974 = vsel %vm1928, %v1642, 0.0
      %v1975 = vadd.f32 %v1973, %v1974
      %v1976 = vsel %vm1928, %v1771, 0.0
      %v1977 = vadd.f32 %v1975, %v1976
      %v1978 = vsel %vm1928, %v1900, 0.0
      %v1979 = vadd.f32 %v1977, %v1978
      %v1980 = vsel %vm1928, %v873, 0.0
      %v1981 = vsel %vm1928, %v1002, 0.0
      %v1982 = vadd.f32 %v1980, %v1981
      %v1983 = vsel %vm1928, %v1131, 0.0
      %v1984 = vadd.f32 %v1982, %v1983
      %v1985 = vsel %vm1928, %v1260, 0.0
      %v1986 = vadd.f32 %v1984, %v1985
      %v1987 = vsel %vm1928, %v1389, 0.0
      %v1988 = vadd.f32 %v1986, %v1987
      %v1989 = vsel %vm1928, %v1518, 0.0
      %v1990 = vadd.f32 %v1988, %v1989
      %v1991 = vsel %vm1928, %v1647, 0.0
      %v1992 = vadd.f32 %v1990, %v1991
      %v1993 = vsel %vm1928, %v1776, 0.0
      %v1994 = vadd.f32 %v1992, %v1993
      %v1995 = vsel %vm1928, %v1905, 0.0
      %v1996 = vadd.f32 %v1994, %v1995
      %v1997 = vsel %vm1928, %v878, 0.0
      %v1998 = vsel %vm1928, %v1007, 0.0
      %v1999 = vadd.f32 %v1997, %v1998
      %v2000 = vsel %vm1928, %v1136, 0.0
      %v2001 = vadd.f32 %v1999, %v2000
      %v2002 = vsel %vm1928, %v1265, 0.0
      %v2003 = vadd.f32 %v2001, %v2002
      %v2004 = vsel %vm1928, %v1394, 0.0
      %v2005 = vadd.f32 %v2003, %v2004
      %v2006 = vsel %vm1928, %v1523, 0.0
      %v2007 = vadd.f32 %v2005, %v2006
      %v2008 = vsel %vm1928, %v1652, 0.0
      %v2009 = vadd.f32 %v2007, %v2008
      %v2010 = vsel %vm1928, %v1781, 0.0
      %v2011 = vadd.f32 %v2009, %v2010
      %v2012 = vsel %vm1928, %v1910, 0.0
      %v2013 = vadd.f32 %v2011, %v2012
      %v2014 = vsel %vm1928, %v883, 0.0
      %v2015 = vsel %vm1928, %v1012, 0.0
      %v2016 = vadd.f32 %v2014, %v2015
      %v2017 = vsel %vm1928, %v1141, 0.0
      %v2018 = vadd.f32 %v2016, %v2017
      %v2019 = vsel %vm1928, %v1270, 0.0
      %v2020 = vadd.f32 %v2018, %v2019
      %v2021 = vsel %vm1928, %v1399, 0.0
      %v2022 = vadd.f32 %v2020, %v2021
      %v2023 = vsel %vm1928, %v1528, 0.0
      %v2024 = vadd.f32 %v2022, %v2023
      %v2025 = vsel %vm1928, %v1657, 0.0
      %v2026 = vadd.f32 %v2024, %v2025
      %v2027 = vsel %vm1928, %v1786, 0.0
      %v2028 = vadd.f32 %v2026, %v2027
      %v2029 = vsel %vm1928, %v1915, 0.0
      %v2030 = vadd.f32 %v2028, %v2029
      %v2031 = vsel %vm1928, %v888, 0.0
      %v2032 = vsel %vm1928, %v1017, 0.0
      %v2033 = vadd.f32 %v2031, %v2032
      %v2034 = vsel %vm1928, %v1146, 0.0
      %v2035 = vadd.f32 %v2033, %v2034
      %v2036 = vsel %vm1928, %v1275, 0.0
      %v2037 = vadd.f32 %v2035, %v2036
      %v2038 = vsel %vm1928, %v1404, 0.0
      %v2039 = vadd.f32 %v2037, %v2038
      %v2040 = vsel %vm1928, %v1533, 0.0
      %v2041 = vadd.f32 %v2039, %v2040
      %v2042 = vsel %vm1928, %v1662, 0.0
      %v2043 = vadd.f32 %v2041, %v2042
      %v2044 = vsel %vm1928, %v1791, 0.0
      %v2045 = vadd.f32 %v2043, %v2044
      %v2046 = vsel %vm1928, %v1920, 0.0
      %v2047 = vadd.f32 %v2045, %v2046
      %v2048 = vsel %vm1928, %v893, 0.0
      %v2049 = vsel %vm1928, %v1022, 0.0
      %v2050 = vadd.f32 %v2048, %v2049
      %v2051 = vsel %vm1928, %v1151, 0.0
      %v2052 = vadd.f32 %v2050, %v2051
      %v2053 = vsel %vm1928, %v1280, 0.0
      %v2054 = vadd.f32 %v2052, %v2053
      %v2055 = vsel %vm1928, %v1409, 0.0
      %v2056 = vadd.f32 %v2054, %v2055
      %v2057 = vsel %vm1928, %v1538, 0.0
      %v2058 = vadd.f32 %v2056, %v2057
      %v2059 = vsel %vm1928, %v1667, 0.0
      %v2060 = vadd.f32 %v2058, %v2059
      %v2061 = vsel %vm1928, %v1796, 0.0
      %v2062 = vadd.f32 %v2060, %v2061
      %v2063 = vsel %vm1928, %v1925, 0.0
      %v2064 = vadd.f32 %v2062, %v2063
      %v2065 = vld [vmem:[%s7] sm:$0x3]
      %v2067 = vlaneseq
      %v2068 = vshrl.u32 %v2067, 7
      %v2069 = vsub.s32 0, %v2068
      %v2070 = vrot.slane %v2065, %v2069
      %v2071 = vlaneseq
      %v2072 = vshrl.u32 %v2071, 7
      %v2073 = vsub.s32 1, %v2072
      %v2074 = vrot.slane %v2065, %v2073
      %v2077 = vmul.f32 %v384, %v2070
      %v2078 = vmul.f32 %v385, %v2074
      %v2079 = vmul.f32 %v386, %v2070
      %v2080 = vmul.f32 %v387, %v2074
      %v2081 = vmul.f32 %v388, %v2070
      %v2082 = vmul.f32 %v389, %v2074
      %v2083 = vmul.f32 %v390, %v2070
      %v2084 = vmul.f32 %v391, %v2074
      %v2085 = vmul.f32 %v392, %v2070
      %v2086 = vmul.f32 %v393, %v2074
      %v2087 = vmul.f32 %v394, %v2070
      %v2088 = vmul.f32 %v395, %v2074
      %v2089 = vmul.f32 %v396, %v2070
      %v2090 = vmul.f32 %v397, %v2074
      %v2091 = vmul.f32 %v398, %v2070
      %v2092 = vmul.f32 %v399, %v2074
      %v2093 = vsel %vm490, %v2078, 0.0
      %v2094 = vadd.f32 %v2077, %v2093
      %2095 = vadd.xlane.f32.xlu0 %v2094
      %v2096 = vpop.xlane.xlu0 %2095
      %v2097 = vsel %vm490, %v2080, 0.0
      %v2098 = vadd.f32 %v2079, %v2097
      %2099 = vadd.xlane.f32.xlu0 %v2098
      %v2100 = vpop.xlane.xlu0 %2099
      %v2101 = vsel %vm490, %v2082, 0.0
      %v2102 = vadd.f32 %v2081, %v2101
      %2103 = vadd.xlane.f32.xlu0 %v2102
      %v2104 = vpop.xlane.xlu0 %2103
      %v2105 = vsel %vm490, %v2084, 0.0
      %v2106 = vadd.f32 %v2083, %v2105
      %2107 = vadd.xlane.f32.xlu0 %v2106
      %v2108 = vpop.xlane.xlu0 %2107
      %v2109 = vsel %vm490, %v2086, 0.0
      %v2110 = vadd.f32 %v2085, %v2109
      %2111 = vadd.xlane.f32.xlu0 %v2110
      %v2112 = vpop.xlane.xlu0 %2111
      %v2113 = vsel %vm490, %v2088, 0.0
      %v2114 = vadd.f32 %v2087, %v2113
      %2115 = vadd.xlane.f32.xlu0 %v2114
      %v2116 = vpop.xlane.xlu0 %2115
      %v2117 = vsel %vm490, %v2090, 0.0
      %v2118 = vadd.f32 %v2089, %v2117
      %2119 = vadd.xlane.f32.xlu0 %v2118
      %v2120 = vpop.xlane.xlu0 %2119
      %v2121 = vsel %vm490, %v2092, 0.0
      %v2122 = vadd.f32 %v2091, %v2121
      %2123 = vadd.xlane.f32.xlu0 %v2122
      %v2124 = vpop.xlane.xlu0 %2123
      %v2125 = vld [vmem:[%s8] sm:$0x1]
      %v2127 = vlaneseq
      %v2128 = vshrl.u32 %v2127, 7
      %v2129 = vsub.s32 0, %v2128
      %v2130 = vrot.slane %v2125, %v2129
      %v2132 = vmul.f32 %v1945, %v2130
      %v2133 = vmul.f32 %v1962, %v2130
      %v2134 = vmul.f32 %v1979, %v2130
      %v2135 = vmul.f32 %v1996, %v2130
      %v2136 = vmul.f32 %v2013, %v2130
      %v2137 = vmul.f32 %v2030, %v2130
      %v2138 = vmul.f32 %v2047, %v2130
      %v2139 = vmul.f32 %v2064, %v2130
      %v2140 = vsel %vm1928, %v2132, 0.0
      %2141 = vadd.xlane.f32.xlu0 %v2140
      %v2142 = vpop.xlane.xlu0 %2141
      %v2143 = vsel %vm1928, %v2133, 0.0
      %2144 = vadd.xlane.f32.xlu0 %v2143
      %v2145 = vpop.xlane.xlu0 %2144
      %v2146 = vsel %vm1928, %v2134, 0.0
      %2147 = vadd.xlane.f32.xlu0 %v2146
      %v2148 = vpop.xlane.xlu0 %2147
      %v2149 = vsel %vm1928, %v2135, 0.0
      %2150 = vadd.xlane.f32.xlu0 %v2149
      %v2151 = vpop.xlane.xlu0 %2150
      %v2152 = vsel %vm1928, %v2136, 0.0
      %2153 = vadd.xlane.f32.xlu0 %v2152
      %v2154 = vpop.xlane.xlu0 %2153
      %v2155 = vsel %vm1928, %v2137, 0.0
      %2156 = vadd.xlane.f32.xlu0 %v2155
      %v2157 = vpop.xlane.xlu0 %2156
      %v2158 = vsel %vm1928, %v2138, 0.0
      %2159 = vadd.xlane.f32.xlu0 %v2158
      %v2160 = vpop.xlane.xlu0 %2159
      %v2161 = vsel %vm1928, %v2139, 0.0
      %2162 = vadd.xlane.f32.xlu0 %v2161
      %v2163 = vpop.xlane.xlu0 %2162
      %v2164 = vadd.f32 %v2096, %v2142
      %v2165 = vadd.f32 %v2100, %v2145
      %v2166 = vadd.f32 %v2104, %v2148
      %v2167 = vadd.f32 %v2108, %v2151
      %v2168 = vadd.f32 %v2112, %v2154
      %v2169 = vadd.f32 %v2116, %v2157
      %v2170 = vadd.f32 %v2120, %v2160
      %v2171 = vadd.f32 %v2124, %v2163
      %v2172 = vld [vmem:[#allocation3] sm:$0x1]
      %v2174 = vlaneseq
      %v2175 = vshrl.u32 %v2174, 7
      %v2176 = vsub.s32 0, %v2175
      %v2177 = vrot.slane %v2172, %v2176
      %v2179 = vadd.f32 %v2164, %v2177
      %v2180 = vadd.f32 %v2165, %v2177
      %v2181 = vadd.f32 %v2166, %v2177
      %v2182 = vadd.f32 %v2167, %v2177
      %v2183 = vadd.f32 %v2168, %v2177
      %v2184 = vadd.f32 %v2169, %v2177
      %v2185 = vadd.f32 %v2170, %v2177
      %v2186 = vadd.f32 %v2171, %v2177
      %vm2187 = vcmask 7168
      %2188 = vst.msk [vmem:[%s361] sm:$0xff] %vm2187, %v2179
      %2189 = vst.msk [vmem:[%s361 + $0x8] sm:$0xff] %vm2187, %v2180
      %2190 = vst.msk [vmem:[%s361 + $0x10] sm:$0xff] %vm2187, %v2181
      %2191 = vst.msk [vmem:[%s361 + $0x18] sm:$0xff] %vm2187, %v2182
      %2192 = vst.msk [vmem:[%s361 + $0x20] sm:$0xff] %vm2187, %v2183
      %2193 = vst.msk [vmem:[%s361 + $0x28] sm:$0xff] %vm2187, %v2184
      %2194 = vst.msk [vmem:[%s361 + $0x30] sm:$0xff] %vm2187, %v2185
      %2195 = vst.msk [vmem:[%s361 + $0x38] sm:$0xff] %vm2187, %v2186
      %p2196 = scmp.lt.s32.totalorder %s23, 1
      %s2197 = scalar_select %p2196, %s23, 1
      %s2198 = smul.addr %s2197, 8
      %s2199 = smul.addr %s2198, 8
      %s2200 = scalar_lea.vmem %s10, %s2199
      // Predicated region
      $region61: #{_lambda_.7} parent=59 // pred_check
        %p2201 = pneg %p256
      $region62: #{_lambda_.7} parent=59 // pred_check_branch
        %2203 = sbr.rel (%p2201) target = $region64
      $region63: #{_lambda_.7} parent=59 // pred_region
        _
      $region64: #{_lambda_.7} parent=59 // pred_fallthru
        _
    $region60: #{_lambda_.7} parent=5 // pred_fallthru
      _
    %p2204 = scmp.le.s32.totalorder 2, %s18
    // Predicated region
    $region65: #{_lambda_.7} parent=5 // pred_check
      %p2205 = pneg %p2204
    $region66: #{_lambda_.7} parent=5 // pred_check_branch
      %2207 = sbr.rel (%p2205) target = $region68
    $region67: #{_lambda_.7} parent=5 // pred_region
      %s2208 = ssub.s32 %s18, 2
      // Predicated region
      $region69: #{_lambda_.7} parent=67 // pred_check
        %p2209 = pneg %p262
      $region70: #{_lambda_.7} parent=67 // pred_check_branch
        %2211 = sbr.rel (%p2209) target = $region72
      $region71: #{_lambda_.7} parent=67 // pred_region
        %p2212 = scmp.lt.s32.totalorder %s24, 1
        %s2213 = scalar_select %p2212, %s24, 1
        %s2214 = smul.addr %s2213, 8
        %s2215 = smul.addr %s2214, 8
        %s2216 = scalar_lea.vmem %s10, %s2215
      $region72: #{_lambda_.7} parent=67 // pred_fallthru
        _
    $region68: #{_lambda_.7} parent=5 // pred_fallthru
      _
  $region6: #{_lambda_.7} parent=0 // loop_footer
    %s22 = sadd.s32 1, %s18
  $region7: #{_lambda_.7} parent=0 // loop_footer_branch
    %17 = sbr.rel target = $region3
  $region8: #{_lambda_.7} parent=0 // loop_exit
    _

// kernel: _lambda_.6
$region0: #{_lambda_.6}
  #allocation0 [shape = 'u32[]', space=smem, size = 0x4, offset = 0x4, fixed_abs, tag = 'smem constant byte address 0x4 - core index']
  #allocation1 [shape = 'u32[144,128]{1,0:T(1,128)}', space=vmem, size = 0x12000, scoped, tag = 'internal scratch']
  #allocation2 [shape = 'f32[10,10,24]{2,1,0:T(8,128)}', space=vmem, size = 0x14000, scoped, tag = 'scratch operand']
  %s0 = inlined_call_operand.vmem [shape: f32[2,8,8,174], index: 0, kind: input, shape index: {}]
  %s1 = inlined_call_operand.vmem [shape: f32[1,174], index: 1, kind: input, shape index: {}, may-alias: {1,7}]
  %s2 = inlined_call_operand.vmem [shape: f32[1,174], index: 2, kind: input, shape index: {}, may-alias: {2,8}]
  %s3 = inlined_call_operand.vmem [shape: f32[174,24], index: 3, kind: input, shape index: {}]
  %s4 = inlined_call_operand.vmem [shape: f32[1,24], index: 4, kind: input, shape index: {}]
  %s5 = inlined_call_operand.vmem [shape: f32[1,24], index: 5, kind: input, shape index: {}]
  %s6 = inlined_call_operand.vmem [shape: f32[3,3,24,6], index: 6, kind: input, shape index: {}]
  %s7 = inlined_call_operand.vmem [shape: f32[1,174], index: 7, kind: input, shape index: {}, may-alias: {1,7}]
  %s8 = inlined_call_operand.vmem [shape: f32[1,174], index: 8, kind: input, shape index: {}, may-alias: {2,8}]
  %s9 = inlined_call_operand.vmem [shape: f32[174,144], index: 9, kind: input, shape index: {}]
  %s10 = inlined_call_operand.vmem [shape: f32[1,6], index: 10, kind: input, shape index: {}]
  %s11 = inlined_call_operand.vmem [shape: f32[1,6], index: 11, kind: input, shape index: {}]
  %s12 = inlined_call_operand.vmem [shape: f32[6,144], index: 12, kind: input, shape index: {}]
  %s13 = inlined_call_operand.vmem [shape: f32[2,8,8,144], index: 13, kind: output, shape index: {}]
  %s14 = sld [smem:[#allocation0]]
  $region85: #{_lambda_.6} parent=0
    _
  %s16 = ssub.s32 1, %s14
  %s17 = scalar_select 0, %s16, %s14
  loop: start=0, step=1, limit=4
  $region2: #{_lambda_.6} parent=0 // loop_pre_header
    _
  $region3: #{_lambda_.6} parent=0 // loop_header
    %s19 = sphi 0, %s23
    %p20 = scmp.ge.s32.totalorder %s19, 4
    %s29 = sphi 0, %s31
    %s32 = sphi 0, %s29
    %s33 = sphi 0, %s32
    %s49 = sphi 0, %s33
    %s53 = sphi 0, %s53
    %s55 = sphi 0, %s53
    %s56 = sphi 0, %s55
    %s70 = sphi 0, %s56
    %s74 = sphi 0, %s74
    %s76 = sphi 0, %s74
    %s77 = sphi 0, %s76
    %s91 = sphi 0, %s77
    %s95 = sphi 0, %s95
    %s97 = sphi 0, %s95
    %s98 = sphi 0, %s97
    %s112 = sphi 0, %s98
    %s116 = sphi 0, %s116
    %s118 = sphi 0, %s116
    %s119 = sphi 0, %s118
    %s133 = sphi 0, %s119
    %s137 = sphi 0, %s137
    %s139 = sphi 0, %s137
    %s140 = sphi 0, %s139
    %s154 = sphi 0, %s140
    %s158 = sphi 0, %s158
    %s160 = sphi 0, %s158
    %s161 = sphi 0, %s160
    %s175 = sphi 0, %s161
    %s179 = sphi 0, %s179
    %s181 = sphi 0, %s179
    %s182 = sphi 0, %s181
    %s196 = sphi 0, %s182
    %s200 = sphi 0, %s200
    %s202 = sphi 0, %s200
    %s203 = sphi 0, %s202
    %s217 = sphi 0, %s203
    %s221 = sphi 0, %s221
    %s223 = sphi 0, %s221
    %s224 = sphi 0, %s223
    %s238 = sphi 0, %s224
    %s242 = sphi 0, %s242
    %s244 = sphi 0, %s242
    %s245 = sphi 0, %s244
    %s259 = sphi 0, %s245
    %s263 = sphi 0, %s263
    %s265 = sphi 0, %s263
    %s266 = sphi 0, %s265
    %s280 = sphi 0, %s266
    %s284 = sphi 0, %s284
    %s286 = sphi 0, %s284
    %s287 = sphi 0, %s286
    %s301 = sphi 0, %s287
    %s307 = sphi 0, %s309
    %s310 = sphi 0, %s307
    %s311 = sphi 0, %s310
    %s327 = sphi 0, %s311
  $region4: #{_lambda_.6} parent=0 // loop_header_branch
    %22 = sbr.rel (%p20) target = $region8
  $region5: #{_lambda_.6} parent=0 // loop_body
    %s24 = ssub.s32 %s19, 1
    %s25 = ssub.s32 %s19, 2
    %s26 = sadd.s32 %s19, 1
    %s27 = ssub.s32 %s19, %s26
    %p28 = scmp.eq.s32.totalorder %s27, 0
    %s30 = sadd.s32 %s29, 1
    %s31 = scalar_select %p28, %s29, %s30
    %p34 = pneg %p28
    %p35 = scmp.eq.s32.totalorder %s19, 1
    %p36 = por %p34, %p35
    %p37 = scmp.ne.s32.totalorder %s29, %s32
    %p38 = scmp.eq.s32.totalorder %s19, 0
    %p39 = por %p37, %p38
    %p40 = scmp.ne.s32.totalorder %s29, %s32
    %p41 = scmp.eq.s32.totalorder %s24, 1
    %p42 = por %p40, %p41
    %p43 = scmp.ne.s32.totalorder %s32, %s33
    %p44 = scmp.eq.s32.totalorder %s24, 0
    %p45 = por %p43, %p44
    %p46 = scmp.ne.s32.totalorder %s32, %s33
    %p47 = scmp.eq.s32.totalorder %s25, 1
    %p48 = por %p46, %p47
    %p50 = scmp.ne.s32.totalorder %s33, %s49
    %p51 = scmp.eq.s32.totalorder %s25, 0
    %p52 = por %p50, %p51
    %s54 = sadd.s32 %s53, 1
    %p57 = scmp.eq.s32.totalorder %s19, 1
    %p58 = scmp.ne.s32.totalorder %s53, %s55
    %p59 = scmp.eq.s32.totalorder %s19, 0
    %p60 = por %p58, %p59
    %p61 = scmp.ne.s32.totalorder %s53, %s55
    %p62 = scmp.eq.s32.totalorder %s24, 1
    %p63 = por %p61, %p62
    %p64 = scmp.ne.s32.totalorder %s55, %s56
    %p65 = scmp.eq.s32.totalorder %s24, 0
    %p66 = por %p64, %p65
    %p67 = scmp.ne.s32.totalorder %s55, %s56
    %p68 = scmp.eq.s32.totalorder %s25, 1
    %p69 = por %p67, %p68
    %p71 = scmp.ne.s32.totalorder %s56, %s70
    %p72 = scmp.eq.s32.totalorder %s25, 0
    %p73 = por %p71, %p72
    %s75 = sadd.s32 %s74, 1
    %p78 = scmp.eq.s32.totalorder %s19, 1
    %p79 = scmp.ne.s32.totalorder %s74, %s76
    %p80 = scmp.eq.s32.totalorder %s19, 0
    %p81 = por %p79, %p80
    %p82 = scmp.ne.s32.totalorder %s74, %s76
    %p83 = scmp.eq.s32.totalorder %s24, 1
    %p84 = por %p82, %p83
    %p85 = scmp.ne.s32.totalorder %s76, %s77
    %p86 = scmp.eq.s32.totalorder %s24, 0
    %p87 = por %p85, %p86
    %p88 = scmp.ne.s32.totalorder %s76, %s77
    %p89 = scmp.eq.s32.totalorder %s25, 1
    %p90 = por %p88, %p89
    %p92 = scmp.ne.s32.totalorder %s77, %s91
    %p93 = scmp.eq.s32.totalorder %s25, 0
    %p94 = por %p92, %p93
    %s96 = sadd.s32 %s95, 1
    %p99 = scmp.eq.s32.totalorder %s19, 1
    %p100 = scmp.ne.s32.totalorder %s95, %s97
    %p101 = scmp.eq.s32.totalorder %s19, 0
    %p102 = por %p100, %p101
    %p103 = scmp.ne.s32.totalorder %s95, %s97
    %p104 = scmp.eq.s32.totalorder %s24, 1
    %p105 = por %p103, %p104
    %p106 = scmp.ne.s32.totalorder %s97, %s98
    %p107 = scmp.eq.s32.totalorder %s24, 0
    %p108 = por %p106, %p107
    %p109 = scmp.ne.s32.totalorder %s97, %s98
    %p110 = scmp.eq.s32.totalorder %s25, 1
    %p111 = por %p109, %p110
    %p113 = scmp.ne.s32.totalorder %s98, %s112
    %p114 = scmp.eq.s32.totalorder %s25, 0
    %p115 = por %p113, %p114
    %s117 = sadd.s32 %s116, 1
    %p120 = scmp.eq.s32.totalorder %s19, 1
    %p121 = scmp.ne.s32.totalorder %s116, %s118
    %p122 = scmp.eq.s32.totalorder %s19, 0
    %p123 = por %p121, %p122
    %p124 = scmp.ne.s32.totalorder %s116, %s118
    %p125 = scmp.eq.s32.totalorder %s24, 1
    %p126 = por %p124, %p125
    %p127 = scmp.ne.s32.totalorder %s118, %s119
    %p128 = scmp.eq.s32.totalorder %s24, 0
    %p129 = por %p127, %p128
    %p130 = scmp.ne.s32.totalorder %s118, %s119
    %p131 = scmp.eq.s32.totalorder %s25, 1
    %p132 = por %p130, %p131
    %p134 = scmp.ne.s32.totalorder %s119, %s133
    %p135 = scmp.eq.s32.totalorder %s25, 0
    %p136 = por %p134, %p135
    %s138 = sadd.s32 %s137, 1
    %p141 = scmp.eq.s32.totalorder %s19, 1
    %p142 = scmp.ne.s32.totalorder %s137, %s139
    %p143 = scmp.eq.s32.totalorder %s19, 0
    %p144 = por %p142, %p143
    %p145 = scmp.ne.s32.totalorder %s137, %s139
    %p146 = scmp.eq.s32.totalorder %s24, 1
    %p147 = por %p145, %p146
    %p148 = scmp.ne.s32.totalorder %s139, %s140
    %p149 = scmp.eq.s32.totalorder %s24, 0
    %p150 = por %p148, %p149
    %p151 = scmp.ne.s32.totalorder %s139, %s140
    %p152 = scmp.eq.s32.totalorder %s25, 1
    %p153 = por %p151, %p152
    %p155 = scmp.ne.s32.totalorder %s140, %s154
    %p156 = scmp.eq.s32.totalorder %s25, 0
    %p157 = por %p155, %p156
    %s159 = sadd.s32 %s158, 1
    %p162 = scmp.eq.s32.totalorder %s19, 1
    %p163 = scmp.ne.s32.totalorder %s158, %s160
    %p164 = scmp.eq.s32.totalorder %s19, 0
    %p165 = por %p163, %p164
    %p166 = scmp.ne.s32.totalorder %s158, %s160
    %p167 = scmp.eq.s32.totalorder %s24, 1
    %p168 = por %p166, %p167
    %p169 = scmp.ne.s32.totalorder %s160, %s161
    %p170 = scmp.eq.s32.totalorder %s24, 0
    %p171 = por %p169, %p170
    %p172 = scmp.ne.s32.totalorder %s160, %s161
    %p173 = scmp.eq.s32.totalorder %s25, 1
    %p174 = por %p172, %p173
    %p176 = scmp.ne.s32.totalorder %s161, %s175
    %p177 = scmp.eq.s32.totalorder %s25, 0
    %p178 = por %p176, %p177
    %s180 = sadd.s32 %s179, 1
    %p183 = scmp.eq.s32.totalorder %s19, 1
    %p184 = scmp.ne.s32.totalorder %s179, %s181
    %p185 = scmp.eq.s32.totalorder %s19, 0
    %p186 = por %p184, %p185
    %p187 = scmp.ne.s32.totalorder %s179, %s181
    %p188 = scmp.eq.s32.totalorder %s24, 1
    %p189 = por %p187, %p188
    %p190 = scmp.ne.s32.totalorder %s181, %s182
    %p191 = scmp.eq.s32.totalorder %s24, 0
    %p192 = por %p190, %p191
    %p193 = scmp.ne.s32.totalorder %s181, %s182
    %p194 = scmp.eq.s32.totalorder %s25, 1
    %p195 = por %p193, %p194
    %p197 = scmp.ne.s32.totalorder %s182, %s196
    %p198 = scmp.eq.s32.totalorder %s25, 0
    %p199 = por %p197, %p198
    %s201 = sadd.s32 %s200, 1
    %p204 = scmp.eq.s32.totalorder %s19, 1
    %p205 = scmp.ne.s32.totalorder %s200, %s202
    %p206 = scmp.eq.s32.totalorder %s19, 0
    %p207 = por %p205, %p206
    %p208 = scmp.ne.s32.totalorder %s200, %s202
    %p209 = scmp.eq.s32.totalorder %s24, 1
    %p210 = por %p208, %p209
    %p211 = scmp.ne.s32.totalorder %s202, %s203
    %p212 = scmp.eq.s32.totalorder %s24, 0
    %p213 = por %p211, %p212
    %p214 = scmp.ne.s32.totalorder %s202, %s203
    %p215 = scmp.eq.s32.totalorder %s25, 1
    %p216 = por %p214, %p215
    %p218 = scmp.ne.s32.totalorder %s203, %s217
    %p219 = scmp.eq.s32.totalorder %s25, 0
    %p220 = por %p218, %p219
    %s222 = sadd.s32 %s221, 1
    %p225 = scmp.eq.s32.totalorder %s19, 1
    %p226 = scmp.ne.s32.totalorder %s221, %s223
    %p227 = scmp.eq.s32.totalorder %s19, 0
    %p228 = por %p226, %p227
    %p229 = scmp.ne.s32.totalorder %s221, %s223
    %p230 = scmp.eq.s32.totalorder %s24, 1
    %p231 = por %p229, %p230
    %p232 = scmp.ne.s32.totalorder %s223, %s224
    %p233 = scmp.eq.s32.totalorder %s24, 0
    %p234 = por %p232, %p233
    %p235 = scmp.ne.s32.totalorder %s223, %s224
    %p236 = scmp.eq.s32.totalorder %s25, 1
    %p237 = por %p235, %p236
    %p239 = scmp.ne.s32.totalorder %s224, %s238
    %p240 = scmp.eq.s32.totalorder %s25, 0
    %p241 = por %p239, %p240
    %s243 = sadd.s32 %s242, 1
    %p246 = scmp.eq.s32.totalorder %s19, 1
    %p247 = scmp.ne.s32.totalorder %s242, %s244
    %p248 = scmp.eq.s32.totalorder %s19, 0
    %p249 = por %p247, %p248
    %p250 = scmp.ne.s32.totalorder %s242, %s244
    %p251 = scmp.eq.s32.totalorder %s24, 1
    %p252 = por %p250, %p251
    %p253 = scmp.ne.s32.totalorder %s244, %s245
    %p254 = scmp.eq.s32.totalorder %s24, 0
    %p255 = por %p253, %p254
    %p256 = scmp.ne.s32.totalorder %s244, %s245
    %p257 = scmp.eq.s32.totalorder %s25, 1
    %p258 = por %p256, %p257
    %p260 = scmp.ne.s32.totalorder %s245, %s259
    %p261 = scmp.eq.s32.totalorder %s25, 0
    %p262 = por %p260, %p261
    %s264 = sadd.s32 %s263, 1
    %p267 = scmp.eq.s32.totalorder %s19, 1
    %p268 = scmp.ne.s32.totalorder %s263, %s265
    %p269 = scmp.eq.s32.totalorder %s19, 0
    %p270 = por %p268, %p269
    %p271 = scmp.ne.s32.totalorder %s263, %s265
    %p272 = scmp.eq.s32.totalorder %s24, 1
    %p273 = por %p271, %p272
    %p274 = scmp.ne.s32.totalorder %s265, %s266
    %p275 = scmp.eq.s32.totalorder %s24, 0
    %p276 = por %p274, %p275
    %p277 = scmp.ne.s32.totalorder %s265, %s266
    %p278 = scmp.eq.s32.totalorder %s25, 1
    %p279 = por %p277, %p278
    %p281 = scmp.ne.s32.totalorder %s266, %s280
    %p282 = scmp.eq.s32.totalorder %s25, 0
    %p283 = por %p281, %p282
    %s285 = sadd.s32 %s284, 1
    %p288 = scmp.eq.s32.totalorder %s19, 1
    %p289 = scmp.ne.s32.totalorder %s284, %s286
    %p290 = scmp.eq.s32.totalorder %s19, 0
    %p291 = por %p289, %p290
    %p292 = scmp.ne.s32.totalorder %s284, %s286
    %p293 = scmp.eq.s32.totalorder %s24, 1
    %p294 = por %p292, %p293
    %p295 = scmp.ne.s32.totalorder %s286, %s287
    %p296 = scmp.eq.s32.totalorder %s24, 0
    %p297 = por %p295, %p296
    %p298 = scmp.ne.s32.totalorder %s286, %s287
    %p299 = scmp.eq.s32.totalorder %s25, 1
    %p300 = por %p298, %p299
    %p302 = scmp.ne.s32.totalorder %s287, %s301
    %p303 = scmp.eq.s32.totalorder %s25, 0
    %p304 = por %p302, %p303
    %s305 = ssub.s32 %s19, %s26
    %p306 = scmp.eq.s32.totalorder %s305, 0
    %s308 = sadd.s32 %s307, 1
    %s309 = scalar_select %p306, %s307, %s308
    %p312 = pneg %p306
    %p313 = scmp.eq.s32.totalorder %s19, 1
    %p314 = por %p312, %p313
    %p315 = scmp.ne.s32.totalorder %s307, %s310
    %p316 = scmp.eq.s32.totalorder %s19, 0
    %p317 = por %p315, %p316
    %p318 = scmp.ne.s32.totalorder %s307, %s310
    %p319 = scmp.eq.s32.totalorder %s24, 1
    %p320 = por %p318, %p319
    %p321 = scmp.ne.s32.totalorder %s310, %s311
    %p322 = scmp.eq.s32.totalorder %s24, 0
    %p323 = por %p321, %p322
    %p324 = scmp.ne.s32.totalorder %s310, %s311
    %p325 = scmp.eq.s32.totalorder %s25, 1
    %p326 = por %p324, %p325
    %p328 = scmp.ne.s32.totalorder %s311, %s327
    %p329 = scmp.eq.s32.totalorder %s25, 0
    %p330 = por %p328, %p329
    %p331 = scmp.le.s32.totalorder 1, %s19
    %p332 = scmp.lt.s32.totalorder %s19, 3
    %p333 = pnand %p331, %p332
    %p334 = pneg %p333
    // Predicated region
    $region9: #{_lambda_.6} parent=5 // pred_check
      _
    $region10: #{_lambda_.6} parent=5 // pred_check_branch
      %336 = sbr.rel (%p333) target = $region12
    $region11: #{_lambda_.6} parent=5 // pred_region
      %s337 = ssub.s32 %s19, 1
      // Predicated region
      $region13: #{_lambda_.6} parent=11 // pred_check
        %p338 = pneg %p66
      $region14: #{_lambda_.6} parent=11 // pred_check_branch
        %340 = sbr.rel (%p338) target = $region16
      $region15: #{_lambda_.6} parent=11 // pred_region
        _
      $region16: #{_lambda_.6} parent=11 // pred_fallthru
        _
      // Predicated region
      $region17: #{_lambda_.6} parent=11 // pred_check
        %p341 = pneg %p87
      $region18: #{_lambda_.6} parent=11 // pred_check_branch
        %343 = sbr.rel (%p341) target = $region20
      $region19: #{_lambda_.6} parent=11 // pred_region
        _
      $region20: #{_lambda_.6} parent=11 // pred_fallthru
        _
      // Predicated region
      $region21: #{_lambda_.6} parent=11 // pred_check
        %p344 = pneg %p108
      $region22: #{_lambda_.6} parent=11 // pred_check_branch
        %346 = sbr.rel (%p344) target = $region24
      $region23: #{_lambda_.6} parent=11 // pred_region
        _
      $region24: #{_lambda_.6} parent=11 // pred_fallthru
        _
      // Predicated region
      $region25: #{_lambda_.6} parent=11 // pred_check
        %p347 = pneg %p129
      $region26: #{_lambda_.6} parent=11 // pred_check_branch
        %349 = sbr.rel (%p347) target = $region28
      $region27: #{_lambda_.6} parent=11 // pred_region
        _
      $region28: #{_lambda_.6} parent=11 // pred_fallthru
        _
      // Predicated region
      $region29: #{_lambda_.6} parent=11 // pred_check
        %p350 = pneg %p150
      $region30: #{_lambda_.6} parent=11 // pred_check_branch
        %352 = sbr.rel (%p350) target = $region32
      $region31: #{_lambda_.6} parent=11 // pred_region
        _
      $region32: #{_lambda_.6} parent=11 // pred_fallthru
        _
      // Predicated region
      $region33: #{_lambda_.6} parent=11 // pred_check
        %p353 = pneg %p171
      $region34: #{_lambda_.6} parent=11 // pred_check_branch
        %355 = sbr.rel (%p353) target = $region36
      $region35: #{_lambda_.6} parent=11 // pred_region
        _
      $region36: #{_lambda_.6} parent=11 // pred_fallthru
        _
      // Predicated region
      $region37: #{_lambda_.6} parent=11 // pred_check
        %p356 = pneg %p192
      $region38: #{_lambda_.6} parent=11 // pred_check_branch
        %358 = sbr.rel (%p356) target = $region40
      $region39: #{_lambda_.6} parent=11 // pred_region
        _
      $region40: #{_lambda_.6} parent=11 // pred_fallthru
        _
      // Predicated region
      $region41: #{_lambda_.6} parent=11 // pred_check
        %p359 = pneg %p213
      $region42: #{_lambda_.6} parent=11 // pred_check_branch
        %361 = sbr.rel (%p359) target = $region44
      $region43: #{_lambda_.6} parent=11 // pred_region
        _
      $region44: #{_lambda_.6} parent=11 // pred_fallthru
        _
      // Predicated region
      $region45: #{_lambda_.6} parent=11 // pred_check
        %p362 = pneg %p234
      $region46: #{_lambda_.6} parent=11 // pred_check_branch
        %364 = sbr.rel (%p362) target = $region48
      $region47: #{_lambda_.6} parent=11 // pred_region
        _
      $region48: #{_lambda_.6} parent=11 // pred_fallthru
        _
      // Predicated region
      $region49: #{_lambda_.6} parent=11 // pred_check
        %p365 = pneg %p255
      $region50: #{_lambda_.6} parent=11 // pred_check_branch
        %367 = sbr.rel (%p365) target = $region52
      $region51: #{_lambda_.6} parent=11 // pred_region
        _
      $region52: #{_lambda_.6} parent=11 // pred_fallthru
        _
      // Predicated region
      $region53: #{_lambda_.6} parent=11 // pred_check
        %p368 = pneg %p276
      $region54: #{_lambda_.6} parent=11 // pred_check_branch
        %370 = sbr.rel (%p368) target = $region56
      $region55: #{_lambda_.6} parent=11 // pred_region
        _
      $region56: #{_lambda_.6} parent=11 // pred_fallthru
        _
      // Predicated region
      $region57: #{_lambda_.6} parent=11 // pred_check
        %p371 = pneg %p297
      $region58: #{_lambda_.6} parent=11 // pred_check_branch
        %373 = sbr.rel (%p371) target = $region60
      $region59: #{_lambda_.6} parent=11 // pred_region
        _
      $region60: #{_lambda_.6} parent=11 // pred_fallthru
        _
    $region12: #{_lambda_.6} parent=5 // pred_fallthru
      _
    %p374 = scmp.lt.s32.totalorder %s19, 2
    // Predicated region
    $region61: #{_lambda_.6} parent=5 // pred_check
      %p375 = pneg %p374
    $region62: #{_lambda_.6} parent=5 // pred_check_branch
      %377 = sbr.rel (%p375) target = $region64
    $region63: #{_lambda_.6} parent=5 // pred_region
      // Predicated region
      $region65: #{_lambda_.6} parent=63 // pred_check
        %p378 = pneg %p39
      $region66: #{_lambda_.6} parent=63 // pred_check_branch
        %380 = sbr.rel (%p378) target = $region68
      $region67: #{_lambda_.6} parent=63 // pred_region
        %p381 = scmp.lt.s32.totalorder %s19, 1
        %s382 = scalar_select %p381, %s19, 1
        %s383 = smul.addr %s382, 16
        %s384 = smul.addr %s383, 8
        %s385 = scalar_lea.vmem %s0, %s384
      $region68: #{_lambda_.6} parent=63 // pred_fallthru
        _
    $region64: #{_lambda_.6} parent=5 // pred_fallthru
      _
    %p386 = scmp.le.s32.totalorder 1, %s19
    %p387 = scmp.lt.s32.totalorder %s19, 3
    %p388 = pnand %p386, %p387
    %p389 = pneg %p388
    // Predicated region
    $region69: #{_lambda_.6} parent=5 // pred_check
      _
    $region70: #{_lambda_.6} parent=5 // pred_check_branch
      %391 = sbr.rel (%p388) target = $region72
    $region71: #{_lambda_.6} parent=5 // pred_region
      %s392 = ssub.s32 %s19, 1
      %p393 = scmp.lt.s32.totalorder %s24, 1
      %s394 = scalar_select %p393, %s24, 1
      %s395 = smul.addr %s394, 16
      %s396 = smul.addr %s395, 8
      %s397 = scalar_lea.vmem %s0, %s396
      %p398 = pneg %p45
      %p399 = pneg %p42
      %p400 = pneg %p66
      %p401 = pneg %p63
      %p402 = pneg %p87
      %p403 = pneg %p84
      %p404 = pneg %p108
      %p405 = pneg %p105
      %p406 = pneg %p129
      %p407 = pneg %p126
      %p408 = pneg %p150
      %p409 = pneg %p147
      %p410 = pneg %p171
      %p411 = pneg %p168
      %p412 = pneg %p192
      %p413 = pneg %p189
      %p414 = pneg %p213
      %p415 = pneg %p210
      %p416 = pneg %p234
      %p417 = pneg %p231
      %p418 = pneg %p255
      %p419 = pneg %p252
      %p420 = pneg %p276
      %p421 = pneg %p273
      %p422 = pneg %p297
      %p423 = pneg %p294
      %p424 = pneg %p323
      %p425 = pneg %p320
      %p426 = scmp.lt.s32.totalorder %s24, 1
      %s427 = scalar_select %p426, %s24, 1
      %s428 = smul.addr %s427, 16
      %s429 = smul.addr %s428, 8
      %s430 = scalar_lea.vmem %s13, %s429
      %p431 = scmp.lt.s32.totalorder %s24, 1
      %s432 = scalar_select %p431, %s24, 1
      %s433 = smul.addr %s432, 16
      %s434 = smul.addr %s433, 8
      %s435 = scalar_lea.vmem %s0, %s434
      %p436 = scmp.lt.s32.totalorder %s24, 1
      %s437 = scalar_select %p436, %s24, 1
      %s438 = smul.addr %s437, 16
      %s439 = smul.addr %s438, 8
      %s440 = scalar_lea.vmem %s13, %s439
      %vm441 = vcmask 195584
      %442 = vst.msk [vmem:[#allocation2] sm:$0xff] %vm441, 0.0
      %vm443 = vcmask 189440
      %444 = vst.msk [vmem:[#allocation2 + $0x8] sm:$0x3] %vm443, 0.0
      %445 = vst.msk [vmem:[#allocation2 + $0x10] sm:$0xff] %vm441, 0.0
      %446 = vst.msk [vmem:[#allocation2 + $0x18] sm:$0x3] %vm443, 0.0
      %447 = vst.msk [vmem:[#allocation2 + $0x20] sm:$0xff] %vm441, 0.0
      %448 = vst.msk [vmem:[#allocation2 + $0x28] sm:$0x3] %vm443, 0.0
      %449 = vst.msk [vmem:[#allocation2 + $0x30] sm:$0xff] %vm441, 0.0
      %450 = vst.msk [vmem:[#allocation2 + $0x38] sm:$0x3] %vm443, 0.0
      %451 = vst.msk [vmem:[#allocation2 + $0x40] sm:$0xff] %vm441, 0.0
      %452 = vst.msk [vmem:[#allocation2 + $0x48] sm:$0x3] %vm443, 0.0
      %453 = vst.msk [vmem:[#allocation2 + $0x50] sm:$0xff] %vm441, 0.0
      %454 = vst.msk [vmem:[#allocation2 + $0x58] sm:$0x3] %vm443, 0.0
      %455 = vst.msk [vmem:[#allocation2 + $0x60] sm:$0xff] %vm441, 0.0
      %456 = vst.msk [vmem:[#allocation2 + $0x68] sm:$0x3] %vm443, 0.0
      %457 = vst.msk [vmem:[#allocation2 + $0x70] sm:$0xff] %vm441, 0.0
      %458 = vst.msk [vmem:[#allocation2 + $0x78] sm:$0x3] %vm443, 0.0
      %459 = vst.msk [vmem:[#allocation2 + $0x80] sm:$0xff] %vm441, 0.0
      %460 = vst.msk [vmem:[#allocation2 + $0x88] sm:$0x3] %vm443, 0.0
      %461 = vst.msk [vmem:[#allocation2 + $0x90] sm:$0xff] %vm441, 0.0
      %462 = vst.msk [vmem:[#allocation2 + $0x98] sm:$0x3] %vm443, 0.0
      %v463 = vld [vmem:[%s435] sm:$0xff]
      %v464 = vld [vmem:[%s435 + $0x8] sm:$0xff]
      %v465 = vld [vmem:[%s435 + $0x10] sm:$0xff]
      %v466 = vld [vmem:[%s435 + $0x18] sm:$0xff]
      %v467 = vld [vmem:[%s435 + $0x20] sm:$0xff]
      %v468 = vld [vmem:[%s435 + $0x28] sm:$0xff]
      %v469 = vld [vmem:[%s435 + $0x30] sm:$0xff]
      %v470 = vld [vmem:[%s435 + $0x38] sm:$0xff]
      %v471 = vld [vmem:[%s435 + $0x40] sm:$0xff]
      %v472 = vld [vmem:[%s435 + $0x48] sm:$0xff]
      %v473 = vld [vmem:[%s435 + $0x50] sm:$0xff]
      %v474 = vld [vmem:[%s435 + $0x58] sm:$0xff]
      %v475 = vld [vmem:[%s435 + $0x60] sm:$0xff]
      %v476 = vld [vmem:[%s435 + $0x68] sm:$0xff]
      %v477 = vld [vmem:[%s435 + $0x70] sm:$0xff]
      %v478 = vld [vmem:[%s435 + $0x78] sm:$0xff]
      %v479 = vld [vmem:[%s1] sm:$0x3]
      %v481 = vlaneseq
      %v482 = vshrl.u32 %v481, 7
      %v483 = vsub.s32 0, %v482
      %v484 = vrot.slane %v479, %v483
      %v485 = vlaneseq
      %v486 = vshrl.u32 %v485, 7
      %v487 = vsub.s32 1, %v486
      %v488 = vrot.slane %v479, %v487
      %v491 = vmul.f32 %v463, %v484
      %v492 = vmul.f32 %v464, %v488
      %v493 = vmul.f32 %v465, %v484
      %v494 = vmul.f32 %v466, %v488
      %v495 = vmul.f32 %v467, %v484
      %v496 = vmul.f32 %v468, %v488
      %v497 = vmul.f32 %v469, %v484
      %v498 = vmul.f32 %v470, %v488
      %v499 = vmul.f32 %v471, %v484
      %v500 = vmul.f32 %v472, %v488
      %v501 = vmul.f32 %v473, %v484
      %v502 = vmul.f32 %v474, %v488
      %v503 = vmul.f32 %v475, %v484
      %v504 = vmul.f32 %v476, %v488
      %v505 = vmul.f32 %v477, %v484
      %v506 = vmul.f32 %v478, %v488
      %v507 = vld [vmem:[%s2] sm:$0x3]
      %v509 = vlaneseq
      %v510 = vshrl.u32 %v509, 7
      %v511 = vsub.s32 0, %v510
      %v512 = vrot.slane %v507, %v511
      %v513 = vlaneseq
      %v514 = vshrl.u32 %v513, 7
      %v515 = vsub.s32 1, %v514
      %v516 = vrot.slane %v507, %v515
      %v519 = vadd.f32 %v491, %v512
      %v520 = vadd.f32 %v492, %v516
      %v521 = vadd.f32 %v493, %v512
      %v522 = vadd.f32 %v494, %v516
      %v523 = vadd.f32 %v495, %v512
      %v524 = vadd.f32 %v496, %v516
      %v525 = vadd.f32 %v497, %v512
      %v526 = vadd.f32 %v498, %v516
      %v527 = vadd.f32 %v499, %v512
      %v528 = vadd.f32 %v500, %v516
      %v529 = vadd.f32 %v501, %v512
      %v530 = vadd.f32 %v502, %v516
      %v531 = vadd.f32 %v503, %v512
      %v532 = vadd.f32 %v504, %v516
      %v533 = vadd.f32 %v505, %v512
      %v534 = vadd.f32 %v506, %v516
      %v535 = vmax.f32 %v519, 0.0
      %v536 = vmax.f32 %v520, 0.0
      %v537 = vmax.f32 %v521, 0.0
      %v538 = vmax.f32 %v522, 0.0
      %v539 = vmax.f32 %v523, 0.0
      %v540 = vmax.f32 %v524, 0.0
      %v541 = vmax.f32 %v525, 0.0
      %v542 = vmax.f32 %v526, 0.0
      %v543 = vmax.f32 %v527, 0.0
      %v544 = vmax.f32 %v528, 0.0
      %v545 = vmax.f32 %v529, 0.0
      %v546 = vmax.f32 %v530, 0.0
      %v547 = vmax.f32 %v531, 0.0
      %v548 = vmax.f32 %v532, 0.0
      %v549 = vmax.f32 %v533, 0.0
      %v550 = vmax.f32 %v534, 0.0
      %v551 = vld [vmem:[%s3] sm:$0xff]
      %v552 = vld [vmem:[%s3 + $0x8] sm:$0xff]
      %v553 = vld [vmem:[%s3 + $0x10] sm:$0xff]
      %v554 = vld [vmem:[%s3 + $0x18] sm:$0xff]
      %v555 = vld [vmem:[%s3 + $0x20] sm:$0xff]
      %v556 = vld [vmem:[%s3 + $0x28] sm:$0xff]
      %v557 = vld [vmem:[%s3 + $0x30] sm:$0xff]
      %v558 = vld [vmem:[%s3 + $0x38] sm:$0xff]
      %v559 = vld [vmem:[%s3 + $0x40] sm:$0xff]
      %v560 = vld [vmem:[%s3 + $0x48] sm:$0xff]
      %v561 = vld [vmem:[%s3 + $0x50] sm:$0xff]
      %v562 = vld [vmem:[%s3 + $0x58] sm:$0xff]
      %v563 = vld [vmem:[%s3 + $0x60] sm:$0xff]
      %v564 = vld [vmem:[%s3 + $0x68] sm:$0xff]
      %v565 = vld [vmem:[%s3 + $0x70] sm:$0xff]
      %v566 = vld [vmem:[%s3 + $0x78] sm:$0xff]
      %v567 = vld [vmem:[%s3 + $0x80] sm:$0xff]
      %v568 = vld [vmem:[%s3 + $0x88] sm:$0xff]
      %v569 = vld [vmem:[%s3 + $0x90] sm:$0xff]
      %v570 = vld [vmem:[%s3 + $0x98] sm:$0xff]
      %v571 = vld [vmem:[%s3 + $0xa0] sm:$0xff]
      %v572 = vld [vmem:[%s3 + $0xa8] sm:$0x3f]
      %vm573 = vcmask 375808
      %v575 = vsel %vm573, %v536, 0
      %v578 = vsel %vm573, %v538, 0
      %v581 = vsel %vm573, %v540, 0
      %v584 = vsel %vm573, %v542, 0
      %v587 = vsel %vm573, %v544, 0
      %v590 = vsel %vm573, %v546, 0
      %v593 = vsel %vm573, %v548, 0
      %v596 = vsel %vm573, %v550, 0
      %vm598 = vcmask 1045504
      %v600 = vsel %vm598, %v572, 0
      %602 = vmatprep.subr.mxu0 0.0
      %603 = vmatpush1.msra.mxu0 %v566
      %604 = vmatprep.subr.mxu0 0.0
      %605 = vmatpush1.msra.mxu0 %v565
      %606 = vmatprep.subr.mxu0 0.0
      %607 = vmatpush1.msra.mxu0 %v564
      %608 = vmatprep.subr.mxu0 0.0
      %609 = vmatpush1.msra.mxu0 %v563
      %610 = vmatprep.subr.mxu0 0.0
      %611 = vmatpush1.msra.mxu0 %v562
      %612 = vmatprep.subr.mxu0 0.0
      %613 = vmatpush1.msra.mxu0 %v561
      %614 = vmatprep.subr.mxu0 0.0
      %615 = vmatpush1.msra.mxu0 %v560
      %616 = vmatprep.subr.mxu0 0.0
      %617 = vmatpush1.msra.mxu0 %v559
      %618 = vmatprep.subr.mxu0 0.0
      %619 = vmatpush1.msra.mxu0 %v558
      %620 = vmatprep.subr.mxu0 0.0
      %621 = vmatpush1.msra.mxu0 %v557
      %622 = vmatprep.subr.mxu0 0.0
      %623 = vmatpush1.msra.mxu0 %v556
      %624 = vmatprep.subr.mxu0 0.0
      %625 = vmatpush1.msra.mxu0 %v555
      %626 = vmatprep.subr.mxu0 0.0
      %627 = vmatpush1.msra.mxu0 %v554
      %628 = vmatprep.subr.mxu0 0.0
      %629 = vmatpush1.msra.mxu0 %v553
      %630 = vmatprep.subr.mxu0 0.0
      %631 = vmatpush1.msra.mxu0 %v552
      %632 = vmatprep.subr.mxu0 0.0
      %633 = vmatpush1.msra.mxu0 %v551
      %634 = vmatprep.subr.mxu0 0.0
      %635 = vmatpush2.msra.mxu0 0.0
      %636 = vmatprep.subr.mxu0 0.0
      %637 = vmatpush2.msra.mxu0 0.0
      %638 = vmatprep.subr.mxu0 0.0
      %639 = vmatpush2.msra.mxu0 0.0
      %640 = vmatprep.subr.mxu0 0.0
      %641 = vmatpush2.msra.mxu0 0.0
      %642 = vmatprep.subr.mxu0 0.0
      %643 = vmatpush2.msra.mxu0 0.0
      %644 = vmatprep.subr.mxu0 0.0
      %645 = vmatpush2.msra.mxu0 0.0
      %646 = vmatprep.subr.mxu0 0.0
      %647 = vmatpush2.msra.mxu0 0.0
      %648 = vmatprep.subr.mxu0 0.0
      %649 = vmatpush2.msra.mxu0 0.0
      %650 = vmatprep.subr.mxu0 0.0
      %651 = vmatpush2.msra.mxu0 0.0
      %652 = vmatprep.subr.mxu0 0.0
      %653 = vmatpush2.msra.mxu0 0.0
      %654 = vmatprep.subr.mxu0 0.0
      %655 = vmatpush2.msra.mxu0 %v600
      %656 = vmatprep.subr.mxu0 0.0
      %657 = vmatpush2.msra.mxu0 %v571
      %658 = vmatprep.subr.mxu0 0.0
      %659 = vmatpush2.msra.mxu0 %v570
      %660 = vmatprep.subr.mxu0 0.0
      %661 = vmatpush2.msra.mxu0 %v569
      %662 = vmatprep.subr.mxu0 0.0
      %663 = vmatpush2.msra.mxu0 %v568
      %664 = vmatprep.subr.mxu0 0.0
      %665 = vmatpush2.msra.mxu0 %v567
      %666 = vmatprep.mubr.f32.mxu0 %v575
      %667 = vmatmul.mubr.f32.gmra.mxu0 %v535
      %v668 = vpop.f32.mrf.mxu0
      %v669 = vadd.f32 0.0, %v668
      %v670 = vpop.f32.mrf.mxu0
      %671 = vmatprep.mubr.f32.mxu0 %v578
      %672 = vmatmul.mubr.f32.gmra.mxu0 %v537
      %v673 = vpop.f32.mrf.mxu0
      %v674 = vadd.f32 0.0, %v673
      %v675 = vpop.f32.mrf.mxu0
      %676 = vmatprep.mubr.f32.mxu0 %v581
      %677 = vmatmul.mubr.f32.gmra.mxu0 %v539
      %v678 = vpop.f32.mrf.mxu0
      %v679 = vadd.f32 0.0, %v678
      %v680 = vpop.f32.mrf.mxu0
      %681 = vmatprep.mubr.f32.mxu0 %v584
      %682 = vmatmul.mubr.f32.gmra.mxu0 %v541
      %v683 = vpop.f32.mrf.mxu0
      %v684 = vadd.f32 0.0, %v683
      %v685 = vpop.f32.mrf.mxu0
      %686 = vmatprep.mubr.f32.mxu0 %v587
      %687 = vmatmul.mubr.f32.gmra.mxu0 %v543
      %v688 = vpop.f32.mrf.mxu0
      %v689 = vadd.f32 0.0, %v688
      %v690 = vpop.f32.mrf.mxu0
      %691 = vmatprep.mubr.f32.mxu0 %v590
      %692 = vmatmul.mubr.f32.gmra.mxu0 %v545
      %v693 = vpop.f32.mrf.mxu0
      %v694 = vadd.f32 0.0, %v693
      %v695 = vpop.f32.mrf.mxu0
      %696 = vmatprep.mubr.f32.mxu0 %v593
      %697 = vmatmul.mubr.f32.gmra.mxu0 %v547
      %v698 = vpop.f32.mrf.mxu0
      %v699 = vadd.f32 0.0, %v698
      %v700 = vpop.f32.mrf.mxu0
      %701 = vmatprep.mubr.f32.mxu0 %v596
      %702 = vmatmul.mubr.f32.gmra.mxu0 %v549
      %v703 = vpop.f32.mrf.mxu0
      %v704 = vadd.f32 0.0, %v703
      %v705 = vpop.f32.mrf.mxu0
      %706 = vdwg.mxu0
      %v707 = vld [vmem:[%s4] sm:$0x1]
      %v709 = vlaneseq
      %v710 = vshrl.u32 %v709, 7
      %v711 = vsub.s32 0, %v710
      %v712 = vrot.slane %v707, %v711
      %v714 = vmul.f32 %v669, %v712
      %v715 = vmul.f32 %v674, %v712
      %v716 = vmul.f32 %v679, %v712
      %v717 = vmul.f32 %v684, %v712
      %v718 = vmul.f32 %v689, %v712
      %v719 = vmul.f32 %v694, %v712
      %v720 = vmul.f32 %v699, %v712
      %v721 = vmul.f32 %v704, %v712
      %v722 = vld [vmem:[%s5] sm:$0x1]
      %v724 = vlaneseq
      %v725 = vshrl.u32 %v724, 7
      %v726 = vsub.s32 0, %v725
      %v727 = vrot.slane %v722, %v726
      %v729 = vadd.f32 %v714, %v727
      %v730 = vadd.f32 %v715, %v727
      %v731 = vadd.f32 %v716, %v727
      %v732 = vadd.f32 %v717, %v727
      %v733 = vadd.f32 %v718, %v727
      %v734 = vadd.f32 %v719, %v727
      %v735 = vadd.f32 %v720, %v727
      %v736 = vadd.f32 %v721, %v727
      %v737 = vmax.f32 %v729, 0.0
      %v738 = vmax.f32 %v730, 0.0
      %v739 = vmax.f32 %v731, 0.0
      %v740 = vmax.f32 %v732, 0.0
      %v741 = vmax.f32 %v733, 0.0
      %v742 = vmax.f32 %v734, 0.0
      %v743 = vmax.f32 %v735, 0.0
      %v744 = vmax.f32 %v736, 0.0
      %s745 = scalar_lea.vmem [#allocation2], 16
      %746 = vst.msk [vmem:[%s745 + $0x1] sm:$0xff] %vm441, %v737
      %747 = vst.msk [vmem:[%s745 + $0x11] sm:$0xff] %vm441, %v738
      %748 = vst.msk [vmem:[%s745 + $0x21] sm:$0xff] %vm441, %v739
      %749 = vst.msk [vmem:[%s745 + $0x31] sm:$0xff] %vm441, %v740
      %750 = vst.msk [vmem:[%s745 + $0x41] sm:$0xff] %vm441, %v741
      %751 = vst.msk [vmem:[%s745 + $0x51] sm:$0xff] %vm441, %v742
      %752 = vst.msk [vmem:[%s745 + $0x61] sm:$0xff] %vm441, %v743
      %753 = vst.msk [vmem:[%s745 + $0x71] sm:$0xff] %vm441, %v744
      %v754 = vld [vmem:[#allocation2] sm:$0xff]
      %v755 = vld [vmem:[#allocation2 + $0x10] sm:$0xff]
      %v756 = vld [vmem:[#allocation2 + $0x20] sm:$0xff]
      %v757 = vld [vmem:[#allocation2 + $0x30] sm:$0xff]
      %v758 = vld [vmem:[#allocation2 + $0x40] sm:$0xff]
      %v759 = vld [vmem:[#allocation2 + $0x50] sm:$0xff]
      %v760 = vld [vmem:[#allocation2 + $0x60] sm:$0xff]
      %v761 = vld [vmem:[#allocation2 + $0x70] sm:$0xff]
      %v762 = vld [vmem:[#allocation2 + $0x1] sm:$0xff]
      %v763 = vld [vmem:[#allocation2 + $0x11] sm:$0xff]
      %v764 = vld [vmem:[#allocation2 + $0x21] sm:$0xff]
      %v765 = vld [vmem:[#allocation2 + $0x31] sm:$0xff]
      %v766 = vld [vmem:[#allocation2 + $0x41] sm:$0xff]
      %v767 = vld [vmem:[#allocation2 + $0x51] sm:$0xff]
      %v768 = vld [vmem:[#allocation2 + $0x61] sm:$0xff]
      %v769 = vld [vmem:[#allocation2 + $0x71] sm:$0xff]
      %v770 = vld [vmem:[#allocation2 + $0x2] sm:$0xff]
      %v771 = vld [vmem:[#allocation2 + $0x12] sm:$0xff]
      %v772 = vld [vmem:[#allocation2 + $0x22] sm:$0xff]
      %v773 = vld [vmem:[#allocation2 + $0x32] sm:$0xff]
      %v774 = vld [vmem:[#allocation2 + $0x42] sm:$0xff]
      %v775 = vld [vmem:[#allocation2 + $0x52] sm:$0xff]
      %v776 = vld [vmem:[#allocation2 + $0x62] sm:$0xff]
      %v777 = vld [vmem:[#allocation2 + $0x72] sm:$0xff]
      %v778 = vld [vmem:[%s745] sm:$0xff]
      %v779 = vld [vmem:[%s745 + $0x10] sm:$0xff]
      %v780 = vld [vmem:[%s745 + $0x20] sm:$0xff]
      %v781 = vld [vmem:[%s745 + $0x30] sm:$0xff]
      %v782 = vld [vmem:[%s745 + $0x40] sm:$0xff]
      %v783 = vld [vmem:[%s745 + $0x50] sm:$0xff]
      %v784 = vld [vmem:[%s745 + $0x60] sm:$0xff]
      %v785 = vld [vmem:[%s745 + $0x70] sm:$0xff]
      %v786 = vld [vmem:[%s745 + $0x1] sm:$0xff]
      %v787 = vld [vmem:[%s745 + $0x11] sm:$0xff]
      %v788 = vld [vmem:[%s745 + $0x21] sm:$0xff]
      %v789 = vld [vmem:[%s745 + $0x31] sm:$0xff]
      %v790 = vld [vmem:[%s745 + $0x41] sm:$0xff]
      %v791 = vld [vmem:[%s745 + $0x51] sm:$0xff]
      %v792 = vld [vmem:[%s745 + $0x61] sm:$0xff]
      %v793 = vld [vmem:[%s745 + $0x71] sm:$0xff]
      %v794 = vld [vmem:[%s745 + $0x2] sm:$0xff]
      %v795 = vld [vmem:[%s745 + $0x12] sm:$0xff]
      %v796 = vld [vmem:[%s745 + $0x22] sm:$0xff]
      %v797 = vld [vmem:[%s745 + $0x32] sm:$0xff]
      %v798 = vld [vmem:[%s745 + $0x42] sm:$0xff]
      %v799 = vld [vmem:[%s745 + $0x52] sm:$0xff]
      %v800 = vld [vmem:[%s745 + $0x62] sm:$0xff]
      %v801 = vld [vmem:[%s745 + $0x72] sm:$0xff]
      %s802 = scalar_lea.vmem [#allocation2], 32
      %v803 = vld [vmem:[%s802] sm:$0xff]
      %v804 = vld [vmem:[%s802 + $0x10] sm:$0xff]
      %v805 = vld [vmem:[%s802 + $0x20] sm:$0xff]
      %v806 = vld [vmem:[%s802 + $0x30] sm:$0xff]
      %v807 = vld [vmem:[%s802 + $0x40] sm:$0xff]
      %v808 = vld [vmem:[%s802 + $0x50] sm:$0xff]
      %v809 = vld [vmem:[%s802 + $0x60] sm:$0xff]
      %v810 = vld [vmem:[%s802 + $0x70] sm:$0xff]
      %v811 = vld [vmem:[%s802 + $0x1] sm:$0xff]
      %v812 = vld [vmem:[%s802 + $0x11] sm:$0xff]
      %v813 = vld [vmem:[%s802 + $0x21] sm:$0xff]
      %v814 = vld [vmem:[%s802 + $0x31] sm:$0xff]
      %v815 = vld [vmem:[%s802 + $0x41] sm:$0xff]
      %v816 = vld [vmem:[%s802 + $0x51] sm:$0xff]
      %v817 = vld [vmem:[%s802 + $0x61] sm:$0xff]
      %v818 = vld [vmem:[%s802 + $0x71] sm:$0xff]
      %v819 = vld [vmem:[%s802 + $0x2] sm:$0xff]
      %v820 = vld [vmem:[%s802 + $0x12] sm:$0xff]
      %v821 = vld [vmem:[%s802 + $0x22] sm:$0xff]
      %v822 = vld [vmem:[%s802 + $0x32] sm:$0xff]
      %v823 = vld [vmem:[%s802 + $0x42] sm:$0xff]
      %v824 = vld [vmem:[%s802 + $0x52] sm:$0xff]
      %v825 = vld [vmem:[%s802 + $0x62] sm:$0xff]
      %v826 = vld [vmem:[%s802 + $0x72] sm:$0xff]
      %v827 = vld [vmem:[%s6] sm:$0xff]
      %v828 = vld [vmem:[%s6 + $0x8] sm:$0xff]
      %v829 = vld [vmem:[%s6 + $0x10] sm:$0xff]
      %v830 = vld [vmem:[%s6 + $0x18] sm:$0xff]
      %v831 = vld [vmem:[%s6 + $0x20] sm:$0xff]
      %v832 = vld [vmem:[%s6 + $0x28] sm:$0xff]
      %v833 = vld [vmem:[%s6 + $0x30] sm:$0xff]
      %v834 = vld [vmem:[%s6 + $0x38] sm:$0xff]
      %v835 = vld [vmem:[%s6 + $0x40] sm:$0xff]
      %v836 = vld [vmem:[%s6 + $0x48] sm:$0xff]
      %v837 = vld [vmem:[%s6 + $0x50] sm:$0xff]
      %v838 = vld [vmem:[%s6 + $0x58] sm:$0xff]
      %v839 = vld [vmem:[%s6 + $0x60] sm:$0xff]
      %v840 = vld [vmem:[%s6 + $0x68] sm:$0xff]
      %v841 = vld [vmem:[%s6 + $0x70] sm:$0xff]
      %v842 = vld [vmem:[%s6 + $0x78] sm:$0xff]
      %v843 = vld [vmem:[%s6 + $0x80] sm:$0xff]
      %v844 = vld [vmem:[%s6 + $0x88] sm:$0xff]
      %v845 = vld [vmem:[%s6 + $0x90] sm:$0xff]
      %v846 = vld [vmem:[%s6 + $0x98] sm:$0xff]
      %v847 = vld [vmem:[%s6 + $0xa0] sm:$0xff]
      %v848 = vld [vmem:[%s6 + $0xa8] sm:$0xff]
      %v849 = vld [vmem:[%s6 + $0xb0] sm:$0xff]
      %v850 = vld [vmem:[%s6 + $0xb8] sm:$0xff]
      %v851 = vld [vmem:[%s6 + $0xc0] sm:$0xff]
      %v852 = vld [vmem:[%s6 + $0xc8] sm:$0xff]
      %v853 = vld [vmem:[%s6 + $0xd0] sm:$0xff]
      %v855 = vsel %vm441, %v754, 0
      %v858 = vsel %vm441, %v755, 0
      %v861 = vsel %vm441, %v756, 0
      %v864 = vsel %vm441, %v757, 0
      %v867 = vsel %vm441, %v758, 0
      %v870 = vsel %vm441, %v759, 0
      %v873 = vsel %vm441, %v760, 0
      %v876 = vsel %vm441, %v761, 0
      %878 = vmatprep.subr.mxu0 0.0
      %879 = vmatpush1.msra.mxu0 0.0
      %880 = vmatprep.subr.mxu0 0.0
      %881 = vmatpush1.msra.mxu0 0.0
      %882 = vmatprep.subr.mxu0 0.0
      %883 = vmatpush1.msra.mxu0 0.0
      %884 = vmatprep.subr.mxu0 0.0
      %885 = vmatpush1.msra.mxu0 0.0
      %886 = vmatprep.subr.mxu0 0.0
      %887 = vmatpush1.msra.mxu0 0.0
      %888 = vmatprep.subr.mxu0 0.0
      %889 = vmatpush1.msra.mxu0 0.0
      %890 = vmatprep.subr.mxu0 0.0
      %891 = vmatpush1.msra.mxu0 0.0
      %892 = vmatprep.subr.mxu0 0.0
      %893 = vmatpush1.msra.mxu0 0.0
      %894 = vmatprep.subr.mxu0 0.0
      %895 = vmatpush1.msra.mxu0 0.0
      %896 = vmatprep.subr.mxu0 0.0
      %897 = vmatpush1.msra.mxu0 0.0
      %898 = vmatprep.subr.mxu0 0.0
      %899 = vmatpush1.msra.mxu0 0.0
      %900 = vmatprep.subr.mxu0 0.0
      %901 = vmatpush1.msra.mxu0 0.0
      %902 = vmatprep.subr.mxu0 0.0
      %903 = vmatpush1.msra.mxu0 0.0
      %904 = vmatprep.subr.mxu0 0.0
      %905 = vmatpush1.msra.mxu0 %v829
      %906 = vmatprep.subr.mxu0 0.0
      %907 = vmatpush1.msra.mxu0 %v828
      %908 = vmatprep.subr.mxu0 0.0
      %909 = vmatpush1.msra.mxu0 %v827
      %910 = vmatprep.subr.mxu0 0.0
      %911 = vmatpush2.msra.mxu0 0.0
      %912 = vmatprep.subr.mxu0 0.0
      %913 = vmatpush2.msra.mxu0 0.0
      %914 = vmatprep.subr.mxu0 0.0
      %915 = vmatpush2.msra.mxu0 0.0
      %916 = vmatprep.subr.mxu0 0.0
      %917 = vmatpush2.msra.mxu0 0.0
      %918 = vmatprep.subr.mxu0 0.0
      %919 = vmatpush2.msra.mxu0 0.0
      %920 = vmatprep.subr.mxu0 0.0
      %921 = vmatpush2.msra.mxu0 0.0
      %922 = vmatprep.subr.mxu0 0.0
      %923 = vmatpush2.msra.mxu0 0.0
      %924 = vmatprep.subr.mxu0 0.0
      %925 = vmatpush2.msra.mxu0 0.0
      %926 = vmatprep.subr.mxu0 0.0
      %927 = vmatpush2.msra.mxu0 0.0
      %928 = vmatprep.subr.mxu0 0.0
      %929 = vmatpush2.msra.mxu0 0.0
      %930 = vmatprep.subr.mxu0 0.0
      %931 = vmatpush2.msra.mxu0 0.0
      %932 = vmatprep.subr.mxu0 0.0
      %933 = vmatpush2.msra.mxu0 0.0
      %934 = vmatprep.subr.mxu0 0.0
      %935 = vmatpush2.msra.mxu0 0.0
      %936 = vmatprep.subr.mxu0 0.0
      %937 = vmatpush2.msra.mxu0 0.0
      %938 = vmatprep.subr.mxu0 0.0
      %939 = vmatpush2.msra.mxu0 0.0
      %940 = vmatprep.subr.mxu0 0.0
      %941 = vmatpush2.msra.mxu0 0.0
      %942 = vmatprep.mubr.f32.mxu0 0.0
      %943 = vmatmul.mubr.f32.gmra.mxu0 %v855
      %v944 = vpop.f32.mrf.mxu0
      %v945 = vadd.f32 0.0, %v944
      %v946 = vpop.f32.mrf.mxu0
      %947 = vmatprep.mubr.f32.mxu0 0.0
      %948 = vmatmul.mubr.f32.gmra.mxu0 %v858
      %v949 = vpop.f32.mrf.mxu0
      %v950 = vadd.f32 0.0, %v949
      %v951 = vpop.f32.mrf.mxu0
      %952 = vmatprep.mubr.f32.mxu0 0.0
      %953 = vmatmul.mubr.f32.gmra.mxu0 %v861
      %v954 = vpop.f32.mrf.mxu0
      %v955 = vadd.f32 0.0, %v954
      %v956 = vpop.f32.mrf.mxu0
      %957 = vmatprep.mubr.f32.mxu0 0.0
      %958 = vmatmul.mubr.f32.gmra.mxu0 %v864
      %v959 = vpop.f32.mrf.mxu0
      %v960 = vadd.f32 0.0, %v959
      %v961 = vpop.f32.mrf.mxu0
      %962 = vmatprep.mubr.f32.mxu0 0.0
      %963 = vmatmul.mubr.f32.gmra.mxu0 %v867
      %v964 = vpop.f32.mrf.mxu0
      %v965 = vadd.f32 0.0, %v964
      %v966 = vpop.f32.mrf.mxu0
      %967 = vmatprep.mubr.f32.mxu0 0.0
      %968 = vmatmul.mubr.f32.gmra.mxu0 %v870
      %v969 = vpop.f32.mrf.mxu0
      %v970 = vadd.f32 0.0, %v969
      %v971 = vpop.f32.mrf.mxu0
      %972 = vmatprep.mubr.f32.mxu0 0.0
      %973 = vmatmul.mubr.f32.gmra.mxu0 %v873
      %v974 = vpop.f32.mrf.mxu0
      %v975 = vadd.f32 0.0, %v974
      %v976 = vpop.f32.mrf.mxu0
      %977 = vmatprep.mubr.f32.mxu0 0.0
      %978 = vmatmul.mubr.f32.gmra.mxu0 %v876
      %v979 = vpop.f32.mrf.mxu0
      %v980 = vadd.f32 0.0, %v979
      %v981 = vpop.f32.mrf.mxu0
      %982 = vdwg.mxu0
      %v984 = vsel %vm441, %v762, 0
      %v987 = vsel %vm441, %v763, 0
      %v990 = vsel %vm441, %v764, 0
      %v993 = vsel %vm441, %v765, 0
      %v996 = vsel %vm441, %v766, 0
      %v999 = vsel %vm441, %v767, 0
      %v1002 = vsel %vm441, %v768, 0
      %v1005 = vsel %vm441, %v769, 0
      %1007 = vmatprep.subr.mxu0 0.0
      %1008 = vmatpush1.msra.mxu0 0.0
      %1009 = vmatprep.subr.mxu0 0.0
      %1010 = vmatpush1.msra.mxu0 0.0
      %1011 = vmatprep.subr.mxu0 0.0
      %1012 = vmatpush1.msra.mxu0 0.0
      %1013 = vmatprep.subr.mxu0 0.0
      %1014 = vmatpush1.msra.mxu0 0.0
      %1015 = vmatprep.subr.mxu0 0.0
      %1016 = vmatpush1.msra.mxu0 0.0
      %1017 = vmatprep.subr.mxu0 0.0
      %1018 = vmatpush1.msra.mxu0 0.0
      %1019 = vmatprep.subr.mxu0 0.0
      %1020 = vmatpush1.msra.mxu0 0.0
      %1021 = vmatprep.subr.mxu0 0.0
      %1022 = vmatpush1.msra.mxu0 0.0
      %1023 = vmatprep.subr.mxu0 0.0
      %1024 = vmatpush1.msra.mxu0 0.0
      %1025 = vmatprep.subr.mxu0 0.0
      %1026 = vmatpush1.msra.mxu0 0.0
      %1027 = vmatprep.subr.mxu0 0.0
      %1028 = vmatpush1.msra.mxu0 0.0
      %1029 = vmatprep.subr.mxu0 0.0
      %1030 = vmatpush1.msra.mxu0 0.0
      %1031 = vmatprep.subr.mxu0 0.0
      %1032 = vmatpush1.msra.mxu0 0.0
      %1033 = vmatprep.subr.mxu0 0.0
      %1034 = vmatpush1.msra.mxu0 %v832
      %1035 = vmatprep.subr.mxu0 0.0
      %1036 = vmatpush1.msra.mxu0 %v831
      %1037 = vmatprep.subr.mxu0 0.0
      %1038 = vmatpush1.msra.mxu0 %v830
      %1039 = vmatprep.subr.mxu0 0.0
      %1040 = vmatpush2.msra.mxu0 0.0
      %1041 = vmatprep.subr.mxu0 0.0
      %1042 = vmatpush2.msra.mxu0 0.0
      %1043 = vmatprep.subr.mxu0 0.0
      %1044 = vmatpush2.msra.mxu0 0.0
      %1045 = vmatprep.subr.mxu0 0.0
      %1046 = vmatpush2.msra.mxu0 0.0
      %1047 = vmatprep.subr.mxu0 0.0
      %1048 = vmatpush2.msra.mxu0 0.0
      %1049 = vmatprep.subr.mxu0 0.0
      %1050 = vmatpush2.msra.mxu0 0.0
      %1051 = vmatprep.subr.mxu0 0.0
      %1052 = vmatpush2.msra.mxu0 0.0
      %1053 = vmatprep.subr.mxu0 0.0
      %1054 = vmatpush2.msra.mxu0 0.0
      %1055 = vmatprep.subr.mxu0 0.0
      %1056 = vmatpush2.msra.mxu0 0.0
      %1057 = vmatprep.subr.mxu0 0.0
      %1058 = vmatpush2.msra.mxu0 0.0
      %1059 = vmatprep.subr.mxu0 0.0
      %1060 = vmatpush2.msra.mxu0 0.0
      %1061 = vmatprep.subr.mxu0 0.0
      %1062 = vmatpush2.msra.mxu0 0.0
      %1063 = vmatprep.subr.mxu0 0.0
      %1064 = vmatpush2.msra.mxu0 0.0
      %1065 = vmatprep.subr.mxu0 0.0
      %1066 = vmatpush2.msra.mxu0 0.0
      %1067 = vmatprep.subr.mxu0 0.0
      %1068 = vmatpush2.msra.mxu0 0.0
      %1069 = vmatprep.subr.mxu0 0.0
      %1070 = vmatpush2.msra.mxu0 0.0
      %1071 = vmatprep.mubr.f32.mxu0 0.0
      %1072 = vmatmul.mubr.f32.gmra.mxu0 %v984
      %v1073 = vpop.f32.mrf.mxu0
      %v1074 = vadd.f32 0.0, %v1073
      %v1075 = vpop.f32.mrf.mxu0
      %1076 = vmatprep.mubr.f32.mxu0 0.0
      %1077 = vmatmul.mubr.f32.gmra.mxu0 %v987
      %v1078 = vpop.f32.mrf.mxu0
      %v1079 = vadd.f32 0.0, %v1078
      %v1080 = vpop.f32.mrf.mxu0
      %1081 = vmatprep.mubr.f32.mxu0 0.0
      %1082 = vmatmul.mubr.f32.gmra.mxu0 %v990
      %v1083 = vpop.f32.mrf.mxu0
      %v1084 = vadd.f32 0.0, %v1083
      %v1085 = vpop.f32.mrf.mxu0
      %1086 = vmatprep.mubr.f32.mxu0 0.0
      %1087 = vmatmul.mubr.f32.gmra.mxu0 %v993
      %v1088 = vpop.f32.mrf.mxu0
      %v1089 = vadd.f32 0.0, %v1088
      %v1090 = vpop.f32.mrf.mxu0
      %1091 = vmatprep.mubr.f32.mxu0 0.0
      %1092 = vmatmul.mubr.f32.gmra.mxu0 %v996
      %v1093 = vpop.f32.mrf.mxu0
      %v1094 = vadd.f32 0.0, %v1093
      %v1095 = vpop.f32.mrf.mxu0
      %1096 = vmatprep.mubr.f32.mxu0 0.0
      %1097 = vmatmul.mubr.f32.gmra.mxu0 %v999
      %v1098 = vpop.f32.mrf.mxu0
      %v1099 = vadd.f32 0.0, %v1098
      %v1100 = vpop.f32.mrf.mxu0
      %1101 = vmatprep.mubr.f32.mxu0 0.0
      %1102 = vmatmul.mubr.f32.gmra.mxu0 %v1002
      %v1103 = vpop.f32.mrf.mxu0
      %v1104 = vadd.f32 0.0, %v1103
      %v1105 = vpop.f32.mrf.mxu0
      %1106 = vmatprep.mubr.f32.mxu0 0.0
      %1107 = vmatmul.mubr.f32.gmra.mxu0 %v1005
      %v1108 = vpop.f32.mrf.mxu0
      %v1109 = vadd.f32 0.0, %v1108
      %v1110 = vpop.f32.mrf.mxu0
      %1111 = vdwg.mxu0
      %v1113 = vsel %vm441, %v770, 0
      %v1116 = vsel %vm441, %v771, 0
      %v1119 = vsel %vm441, %v772, 0
      %v1122 = vsel %vm441, %v773, 0
      %v1125 = vsel %vm441, %v774, 0
      %v1128 = vsel %vm441, %v775, 0
      %v1131 = vsel %vm441, %v776, 0
      %v1134 = vsel %vm441, %v777, 0
      %1136 = vmatprep.subr.mxu0 0.0
      %1137 = vmatpush1.msra.mxu0 0.0
      %1138 = vmatprep.subr.mxu0 0.0
      %1139 = vmatpush1.msra.mxu0 0.0
      %1140 = vmatprep.subr.mxu0 0.0
      %1141 = vmatpush1.msra.mxu0 0.0
      %1142 = vmatprep.subr.mxu0 0.0
      %1143 = vmatpush1.msra.mxu0 0.0
      %1144 = vmatprep.subr.mxu0 0.0
      %1145 = vmatpush1.msra.mxu0 0.0
      %1146 = vmatprep.subr.mxu0 0.0
      %1147 = vmatpush1.msra.mxu0 0.0
      %1148 = vmatprep.subr.mxu0 0.0
      %1149 = vmatpush1.msra.mxu0 0.0
      %1150 = vmatprep.subr.mxu0 0.0
      %1151 = vmatpush1.msra.mxu0 0.0
      %1152 = vmatprep.subr.mxu0 0.0
      %1153 = vmatpush1.msra.mxu0 0.0
      %1154 = vmatprep.subr.mxu0 0.0
      %1155 = vmatpush1.msra.mxu0 0.0
      %1156 = vmatprep.subr.mxu0 0.0
      %1157 = vmatpush1.msra.mxu0 0.0
      %1158 = vmatprep.subr.mxu0 0.0
      %1159 = vmatpush1.msra.mxu0 0.0
      %1160 = vmatprep.subr.mxu0 0.0
      %1161 = vmatpush1.msra.mxu0 0.0
      %1162 = vmatprep.subr.mxu0 0.0
      %1163 = vmatpush1.msra.mxu0 %v835
      %1164 = vmatprep.subr.mxu0 0.0
      %1165 = vmatpush1.msra.mxu0 %v834
      %1166 = vmatprep.subr.mxu0 0.0
      %1167 = vmatpush1.msra.mxu0 %v833
      %1168 = vmatprep.subr.mxu0 0.0
      %1169 = vmatpush2.msra.mxu0 0.0
      %1170 = vmatprep.subr.mxu0 0.0
      %1171 = vmatpush2.msra.mxu0 0.0
      %1172 = vmatprep.subr.mxu0 0.0
      %1173 = vmatpush2.msra.mxu0 0.0
      %1174 = vmatprep.subr.mxu0 0.0
      %1175 = vmatpush2.msra.mxu0 0.0
      %1176 = vmatprep.subr.mxu0 0.0
      %1177 = vmatpush2.msra.mxu0 0.0
      %1178 = vmatprep.subr.mxu0 0.0
      %1179 = vmatpush2.msra.mxu0 0.0
      %1180 = vmatprep.subr.mxu0 0.0
      %1181 = vmatpush2.msra.mxu0 0.0
      %1182 = vmatprep.subr.mxu0 0.0
      %1183 = vmatpush2.msra.mxu0 0.0
      %1184 = vmatprep.subr.mxu0 0.0
      %1185 = vmatpush2.msra.mxu0 0.0
      %1186 = vmatprep.subr.mxu0 0.0
      %1187 = vmatpush2.msra.mxu0 0.0
      %1188 = vmatprep.subr.mxu0 0.0
      %1189 = vmatpush2.msra.mxu0 0.0
      %1190 = vmatprep.subr.mxu0 0.0
      %1191 = vmatpush2.msra.mxu0 0.0
      %1192 = vmatprep.subr.mxu0 0.0
      %1193 = vmatpush2.msra.mxu0 0.0
      %1194 = vmatprep.subr.mxu0 0.0
      %1195 = vmatpush2.msra.mxu0 0.0
      %1196 = vmatprep.subr.mxu0 0.0
      %1197 = vmatpush2.msra.mxu0 0.0
      %1198 = vmatprep.subr.mxu0 0.0
      %1199 = vmatpush2.msra.mxu0 0.0
      %1200 = vmatprep.mubr.f32.mxu0 0.0
      %1201 = vmatmul.mubr.f32.gmra.mxu0 %v1113
      %v1202 = vpop.f32.mrf.mxu0
      %v1203 = vadd.f32 0.0, %v1202
      %v1204 = vpop.f32.mrf.mxu0
      %1205 = vmatprep.mubr.f32.mxu0 0.0
      %1206 = vmatmul.mubr.f32.gmra.mxu0 %v1116
      %v1207 = vpop.f32.mrf.mxu0
      %v1208 = vadd.f32 0.0, %v1207
      %v1209 = vpop.f32.mrf.mxu0
      %1210 = vmatprep.mubr.f32.mxu0 0.0
      %1211 = vmatmul.mubr.f32.gmra.mxu0 %v1119
      %v1212 = vpop.f32.mrf.mxu0
      %v1213 = vadd.f32 0.0, %v1212
      %v1214 = vpop.f32.mrf.mxu0
      %1215 = vmatprep.mubr.f32.mxu0 0.0
      %1216 = vmatmul.mubr.f32.gmra.mxu0 %v1122
      %v1217 = vpop.f32.mrf.mxu0
      %v1218 = vadd.f32 0.0, %v1217
      %v1219 = vpop.f32.mrf.mxu0
      %1220 = vmatprep.mubr.f32.mxu0 0.0
      %1221 = vmatmul.mubr.f32.gmra.mxu0 %v1125
      %v1222 = vpop.f32.mrf.mxu0
      %v1223 = vadd.f32 0.0, %v1222
      %v1224 = vpop.f32.mrf.mxu0
      %1225 = vmatprep.mubr.f32.mxu0 0.0
      %1226 = vmatmul.mubr.f32.gmra.mxu0 %v1128
      %v1227 = vpop.f32.mrf.mxu0
      %v1228 = vadd.f32 0.0, %v1227
      %v1229 = vpop.f32.mrf.mxu0
      %1230 = vmatprep.mubr.f32.mxu0 0.0
      %1231 = vmatmul.mubr.f32.gmra.mxu0 %v1131
      %v1232 = vpop.f32.mrf.mxu0
      %v1233 = vadd.f32 0.0, %v1232
      %v1234 = vpop.f32.mrf.mxu0
      %1235 = vmatprep.mubr.f32.mxu0 0.0
      %1236 = vmatmul.mubr.f32.gmra.mxu0 %v1134
      %v1237 = vpop.f32.mrf.mxu0
      %v1238 = vadd.f32 0.0, %v1237
      %v1239 = vpop.f32.mrf.mxu0
      %1240 = vdwg.mxu0
      %v1242 = vsel %vm441, %v778, 0
      %v1245 = vsel %vm441, %v779, 0
      %v1248 = vsel %vm441, %v780, 0
      %v1251 = vsel %vm441, %v781, 0
      %v1254 = vsel %vm441, %v782, 0
      %v1257 = vsel %vm441, %v783, 0
      %v1260 = vsel %vm441, %v784, 0
      %v1263 = vsel %vm441, %v785, 0
      %1265 = vmatprep.subr.mxu0 0.0
      %1266 = vmatpush1.msra.mxu0 0.0
      %1267 = vmatprep.subr.mxu0 0.0
      %1268 = vmatpush1.msra.mxu0 0.0
      %1269 = vmatprep.subr.mxu0 0.0
      %1270 = vmatpush1.msra.mxu0 0.0
      %1271 = vmatprep.subr.mxu0 0.0
      %1272 = vmatpush1.msra.mxu0 0.0
      %1273 = vmatprep.subr.mxu0 0.0
      %1274 = vmatpush1.msra.mxu0 0.0
      %1275 = vmatprep.subr.mxu0 0.0
      %1276 = vmatpush1.msra.mxu0 0.0
      %1277 = vmatprep.subr.mxu0 0.0
      %1278 = vmatpush1.msra.mxu0 0.0
      %1279 = vmatprep.subr.mxu0 0.0
      %1280 = vmatpush1.msra.mxu0 0.0
      %1281 = vmatprep.subr.mxu0 0.0
      %1282 = vmatpush1.msra.mxu0 0.0
      %1283 = vmatprep.subr.mxu0 0.0
      %1284 = vmatpush1.msra.mxu0 0.0
      %1285 = vmatprep.subr.mxu0 0.0
      %1286 = vmatpush1.msra.mxu0 0.0
      %1287 = vmatprep.subr.mxu0 0.0
      %1288 = vmatpush1.msra.mxu0 0.0
      %1289 = vmatprep.subr.mxu0 0.0
      %1290 = vmatpush1.msra.mxu0 0.0
      %1291 = vmatprep.subr.mxu0 0.0
      %1292 = vmatpush1.msra.mxu0 %v838
      %1293 = vmatprep.subr.mxu0 0.0
      %1294 = vmatpush1.msra.mxu0 %v837
      %1295 = vmatprep.subr.mxu0 0.0
      %1296 = vmatpush1.msra.mxu0 %v836
      %1297 = vmatprep.subr.mxu0 0.0
      %1298 = vmatpush2.msra.mxu0 0.0
      %1299 = vmatprep.subr.mxu0 0.0
      %1300 = vmatpush2.msra.mxu0 0.0
      %1301 = vmatprep.subr.mxu0 0.0
      %1302 = vmatpush2.msra.mxu0 0.0
      %1303 = vmatprep.subr.mxu0 0.0
      %1304 = vmatpush2.msra.mxu0 0.0
      %1305 = vmatprep.subr.mxu0 0.0
      %1306 = vmatpush2.msra.mxu0 0.0
      %1307 = vmatprep.subr.mxu0 0.0
      %1308 = vmatpush2.msra.mxu0 0.0
      %1309 = vmatprep.subr.mxu0 0.0
      %1310 = vmatpush2.msra.mxu0 0.0
      %1311 = vmatprep.subr.mxu0 0.0
      %1312 = vmatpush2.msra.mxu0 0.0
      %1313 = vmatprep.subr.mxu0 0.0
      %1314 = vmatpush2.msra.mxu0 0.0
      %1315 = vmatprep.subr.mxu0 0.0
      %1316 = vmatpush2.msra.mxu0 0.0
      %1317 = vmatprep.subr.mxu0 0.0
      %1318 = vmatpush2.msra.mxu0 0.0
      %1319 = vmatprep.subr.mxu0 0.0
      %1320 = vmatpush2.msra.mxu0 0.0
      %1321 = vmatprep.subr.mxu0 0.0
      %1322 = vmatpush2.msra.mxu0 0.0
      %1323 = vmatprep.subr.mxu0 0.0
      %1324 = vmatpush2.msra.mxu0 0.0
      %1325 = vmatprep.subr.mxu0 0.0
      %1326 = vmatpush2.msra.mxu0 0.0
      %1327 = vmatprep.subr.mxu0 0.0
      %1328 = vmatpush2.msra.mxu0 0.0
      %1329 = vmatprep.mubr.f32.mxu0 0.0
      %1330 = vmatmul.mubr.f32.gmra.mxu0 %v1242
      %v1331 = vpop.f32.mrf.mxu0
      %v1332 = vadd.f32 0.0, %v1331
      %v1333 = vpop.f32.mrf.mxu0
      %1334 = vmatprep.mubr.f32.mxu0 0.0
      %1335 = vmatmul.mubr.f32.gmra.mxu0 %v1245
      %v1336 = vpop.f32.mrf.mxu0
      %v1337 = vadd.f32 0.0, %v1336
      %v1338 = vpop.f32.mrf.mxu0
      %1339 = vmatprep.mubr.f32.mxu0 0.0
      %1340 = vmatmul.mubr.f32.gmra.mxu0 %v1248
      %v1341 = vpop.f32.mrf.mxu0
      %v1342 = vadd.f32 0.0, %v1341
      %v1343 = vpop.f32.mrf.mxu0
      %1344 = vmatprep.mubr.f32.mxu0 0.0
      %1345 = vmatmul.mubr.f32.gmra.mxu0 %v1251
      %v1346 = vpop.f32.mrf.mxu0
      %v1347 = vadd.f32 0.0, %v1346
      %v1348 = vpop.f32.mrf.mxu0
      %1349 = vmatprep.mubr.f32.mxu0 0.0
      %1350 = vmatmul.mubr.f32.gmra.mxu0 %v1254
      %v1351 = vpop.f32.mrf.mxu0
      %v1352 = vadd.f32 0.0, %v1351
      %v1353 = vpop.f32.mrf.mxu0
      %1354 = vmatprep.mubr.f32.mxu0 0.0
      %1355 = vmatmul.mubr.f32.gmra.mxu0 %v1257
      %v1356 = vpop.f32.mrf.mxu0
      %v1357 = vadd.f32 0.0, %v1356
      %v1358 = vpop.f32.mrf.mxu0
      %1359 = vmatprep.mubr.f32.mxu0 0.0
      %1360 = vmatmul.mubr.f32.gmra.mxu0 %v1260
      %v1361 = vpop.f32.mrf.mxu0
      %v1362 = vadd.f32 0.0, %v1361
      %v1363 = vpop.f32.mrf.mxu0
      %1364 = vmatprep.mubr.f32.mxu0 0.0
      %1365 = vmatmul.mubr.f32.gmra.mxu0 %v1263
      %v1366 = vpop.f32.mrf.mxu0
      %v1367 = vadd.f32 0.0, %v1366
      %v1368 = vpop.f32.mrf.mxu0
      %1369 = vdwg.mxu0
      %v1371 = vsel %vm441, %v786, 0
      %v1374 = vsel %vm441, %v787, 0
      %v1377 = vsel %vm441, %v788, 0
      %v1380 = vsel %vm441, %v789, 0
      %v1383 = vsel %vm441, %v790, 0
      %v1386 = vsel %vm441, %v791, 0
      %v1389 = vsel %vm441, %v792, 0
      %v1392 = vsel %vm441, %v793, 0
      %1394 = vmatprep.subr.mxu0 0.0
      %1395 = vmatpush1.msra.mxu0 0.0
      %1396 = vmatprep.subr.mxu0 0.0
      %1397 = vmatpush1.msra.mxu0 0.0
      %1398 = vmatprep.subr.mxu0 0.0
      %1399 = vmatpush1.msra.mxu0 0.0
      %1400 = vmatprep.subr.mxu0 0.0
      %1401 = vmatpush1.msra.mxu0 0.0
      %1402 = vmatprep.subr.mxu0 0.0
      %1403 = vmatpush1.msra.mxu0 0.0
      %1404 = vmatprep.subr.mxu0 0.0
      %1405 = vmatpush1.msra.mxu0 0.0
      %1406 = vmatprep.subr.mxu0 0.0
      %1407 = vmatpush1.msra.mxu0 0.0
      %1408 = vmatprep.subr.mxu0 0.0
      %1409 = vmatpush1.msra.mxu0 0.0
      %1410 = vmatprep.subr.mxu0 0.0
      %1411 = vmatpush1.msra.mxu0 0.0
      %1412 = vmatprep.subr.mxu0 0.0
      %1413 = vmatpush1.msra.mxu0 0.0
      %1414 = vmatprep.subr.mxu0 0.0
      %1415 = vmatpush1.msra.mxu0 0.0
      %1416 = vmatprep.subr.mxu0 0.0
      %1417 = vmatpush1.msra.mxu0 0.0
      %1418 = vmatprep.subr.mxu0 0.0
      %1419 = vmatpush1.msra.mxu0 0.0
      %1420 = vmatprep.subr.mxu0 0.0
      %1421 = vmatpush1.msra.mxu0 %v841
      %1422 = vmatprep.subr.mxu0 0.0
      %1423 = vmatpush1.msra.mxu0 %v840
      %1424 = vmatprep.subr.mxu0 0.0
      %1425 = vmatpush1.msra.mxu0 %v839
      %1426 = vmatprep.subr.mxu0 0.0
      %1427 = vmatpush2.msra.mxu0 0.0
      %1428 = vmatprep.subr.mxu0 0.0
      %1429 = vmatpush2.msra.mxu0 0.0
      %1430 = vmatprep.subr.mxu0 0.0
      %1431 = vmatpush2.msra.mxu0 0.0
      %1432 = vmatprep.subr.mxu0 0.0
      %1433 = vmatpush2.msra.mxu0 0.0
      %1434 = vmatprep.subr.mxu0 0.0
      %1435 = vmatpush2.msra.mxu0 0.0
      %1436 = vmatprep.subr.mxu0 0.0
      %1437 = vmatpush2.msra.mxu0 0.0
      %1438 = vmatprep.subr.mxu0 0.0
      %1439 = vmatpush2.msra.mxu0 0.0
      %1440 = vmatprep.subr.mxu0 0.0
      %1441 = vmatpush2.msra.mxu0 0.0
      %1442 = vmatprep.subr.mxu0 0.0
      %1443 = vmatpush2.msra.mxu0 0.0
      %1444 = vmatprep.subr.mxu0 0.0
      %1445 = vmatpush2.msra.mxu0 0.0
      %1446 = vmatprep.subr.mxu0 0.0
      %1447 = vmatpush2.msra.mxu0 0.0
      %1448 = vmatprep.subr.mxu0 0.0
      %1449 = vmatpush2.msra.mxu0 0.0
      %1450 = vmatprep.subr.mxu0 0.0
      %1451 = vmatpush2.msra.mxu0 0.0
      %1452 = vmatprep.subr.mxu0 0.0
      %1453 = vmatpush2.msra.mxu0 0.0
      %1454 = vmatprep.subr.mxu0 0.0
      %1455 = vmatpush2.msra.mxu0 0.0
      %1456 = vmatprep.subr.mxu0 0.0
      %1457 = vmatpush2.msra.mxu0 0.0
      %1458 = vmatprep.mubr.f32.mxu0 0.0
      %1459 = vmatmul.mubr.f32.gmra.mxu0 %v1371
      %v1460 = vpop.f32.mrf.mxu0
      %v1461 = vadd.f32 0.0, %v1460
      %v1462 = vpop.f32.mrf.mxu0
      %1463 = vmatprep.mubr.f32.mxu0 0.0
      %1464 = vmatmul.mubr.f32.gmra.mxu0 %v1374
      %v1465 = vpop.f32.mrf.mxu0
      %v1466 = vadd.f32 0.0, %v1465
      %v1467 = vpop.f32.mrf.mxu0
      %1468 = vmatprep.mubr.f32.mxu0 0.0
      %1469 = vmatmul.mubr.f32.gmra.mxu0 %v1377
      %v1470 = vpop.f32.mrf.mxu0
      %v1471 = vadd.f32 0.0, %v1470
      %v1472 = vpop.f32.mrf.mxu0
      %1473 = vmatprep.mubr.f32.mxu0 0.0
      %1474 = vmatmul.mubr.f32.gmra.mxu0 %v1380
      %v1475 = vpop.f32.mrf.mxu0
      %v1476 = vadd.f32 0.0, %v1475
      %v1477 = vpop.f32.mrf.mxu0
      %1478 = vmatprep.mubr.f32.mxu0 0.0
      %1479 = vmatmul.mubr.f32.gmra.mxu0 %v1383
      %v1480 = vpop.f32.mrf.mxu0
      %v1481 = vadd.f32 0.0, %v1480
      %v1482 = vpop.f32.mrf.mxu0
      %1483 = vmatprep.mubr.f32.mxu0 0.0
      %1484 = vmatmul.mubr.f32.gmra.mxu0 %v1386
      %v1485 = vpop.f32.mrf.mxu0
      %v1486 = vadd.f32 0.0, %v1485
      %v1487 = vpop.f32.mrf.mxu0
      %1488 = vmatprep.mubr.f32.mxu0 0.0
      %1489 = vmatmul.mubr.f32.gmra.mxu0 %v1389
      %v1490 = vpop.f32.mrf.mxu0
      %v1491 = vadd.f32 0.0, %v1490
      %v1492 = vpop.f32.mrf.mxu0
      %1493 = vmatprep.mubr.f32.mxu0 0.0
      %1494 = vmatmul.mubr.f32.gmra.mxu0 %v1392
      %v1495 = vpop.f32.mrf.mxu0
      %v1496 = vadd.f32 0.0, %v1495
      %v1497 = vpop.f32.mrf.mxu0
      %1498 = vdwg.mxu0
      %v1500 = vsel %vm441, %v794, 0
      %v1503 = vsel %vm441, %v795, 0
      %v1506 = vsel %vm441, %v796, 0
      %v1509 = vsel %vm441, %v797, 0
      %v1512 = vsel %vm441, %v798, 0
      %v1515 = vsel %vm441, %v799, 0
      %v1518 = vsel %vm441, %v800, 0
      %v1521 = vsel %vm441, %v801, 0
      %1523 = vmatprep.subr.mxu0 0.0
      %1524 = vmatpush1.msra.mxu0 0.0
      %1525 = vmatprep.subr.mxu0 0.0
      %1526 = vmatpush1.msra.mxu0 0.0
      %1527 = vmatprep.subr.mxu0 0.0
      %1528 = vmatpush1.msra.mxu0 0.0
      %1529 = vmatprep.subr.mxu0 0.0
      %1530 = vmatpush1.msra.mxu0 0.0
      %1531 = vmatprep.subr.mxu0 0.0
      %1532 = vmatpush1.msra.mxu0 0.0
      %1533 = vmatprep.subr.mxu0 0.0
      %1534 = vmatpush1.msra.mxu0 0.0
      %1535 = vmatprep.subr.mxu0 0.0
      %1536 = vmatpush1.msra.mxu0 0.0
      %1537 = vmatprep.subr.mxu0 0.0
      %1538 = vmatpush1.msra.mxu0 0.0
      %1539 = vmatprep.subr.mxu0 0.0
      %1540 = vmatpush1.msra.mxu0 0.0
      %1541 = vmatprep.subr.mxu0 0.0
      %1542 = vmatpush1.msra.mxu0 0.0
      %1543 = vmatprep.subr.mxu0 0.0
      %1544 = vmatpush1.msra.mxu0 0.0
      %1545 = vmatprep.subr.mxu0 0.0
      %1546 = vmatpush1.msra.mxu0 0.0
      %1547 = vmatprep.subr.mxu0 0.0
      %1548 = vmatpush1.msra.mxu0 0.0
      %1549 = vmatprep.subr.mxu0 0.0
      %1550 = vmatpush1.msra.mxu0 %v844
      %1551 = vmatprep.subr.mxu0 0.0
      %1552 = vmatpush1.msra.mxu0 %v843
      %1553 = vmatprep.subr.mxu0 0.0
      %1554 = vmatpush1.msra.mxu0 %v842
      %1555 = vmatprep.subr.mxu0 0.0
      %1556 = vmatpush2.msra.mxu0 0.0
      %1557 = vmatprep.subr.mxu0 0.0
      %1558 = vmatpush2.msra.mxu0 0.0
      %1559 = vmatprep.subr.mxu0 0.0
      %1560 = vmatpush2.msra.mxu0 0.0
      %1561 = vmatprep.subr.mxu0 0.0
      %1562 = vmatpush2.msra.mxu0 0.0
      %1563 = vmatprep.subr.mxu0 0.0
      %1564 = vmatpush2.msra.mxu0 0.0
      %1565 = vmatprep.subr.mxu0 0.0
      %1566 = vmatpush2.msra.mxu0 0.0
      %1567 = vmatprep.subr.mxu0 0.0
      %1568 = vmatpush2.msra.mxu0 0.0
      %1569 = vmatprep.subr.mxu0 0.0
      %1570 = vmatpush2.msra.mxu0 0.0
      %1571 = vmatprep.subr.mxu0 0.0
      %1572 = vmatpush2.msra.mxu0 0.0
      %1573 = vmatprep.subr.mxu0 0.0
      %1574 = vmatpush2.msra.mxu0 0.0
      %1575 = vmatprep.subr.mxu0 0.0
      %1576 = vmatpush2.msra.mxu0 0.0
      %1577 = vmatprep.subr.mxu0 0.0
      %1578 = vmatpush2.msra.mxu0 0.0
      %1579 = vmatprep.subr.mxu0 0.0
      %1580 = vmatpush2.msra.mxu0 0.0
      %1581 = vmatprep.subr.mxu0 0.0
      %1582 = vmatpush2.msra.mxu0 0.0
      %1583 = vmatprep.subr.mxu0 0.0
      %1584 = vmatpush2.msra.mxu0 0.0
      %1585 = vmatprep.subr.mxu0 0.0
      %1586 = vmatpush2.msra.mxu0 0.0
      %1587 = vmatprep.mubr.f32.mxu0 0.0
      %1588 = vmatmul.mubr.f32.gmra.mxu0 %v1500
      %v1589 = vpop.f32.mrf.mxu0
      %v1590 = vadd.f32 0.0, %v1589
      %v1591 = vpop.f32.mrf.mxu0
      %1592 = vmatprep.mubr.f32.mxu0 0.0
      %1593 = vmatmul.mubr.f32.gmra.mxu0 %v1503
      %v1594 = vpop.f32.mrf.mxu0
      %v1595 = vadd.f32 0.0, %v1594
      %v1596 = vpop.f32.mrf.mxu0
      %1597 = vmatprep.mubr.f32.mxu0 0.0
      %1598 = vmatmul.mubr.f32.gmra.mxu0 %v1506
      %v1599 = vpop.f32.mrf.mxu0
      %v1600 = vadd.f32 0.0, %v1599
      %v1601 = vpop.f32.mrf.mxu0
      %1602 = vmatprep.mubr.f32.mxu0 0.0
      %1603 = vmatmul.mubr.f32.gmra.mxu0 %v1509
      %v1604 = vpop.f32.mrf.mxu0
      %v1605 = vadd.f32 0.0, %v1604
      %v1606 = vpop.f32.mrf.mxu0
      %1607 = vmatprep.mubr.f32.mxu0 0.0
      %1608 = vmatmul.mubr.f32.gmra.mxu0 %v1512
      %v1609 = vpop.f32.mrf.mxu0
      %v1610 = vadd.f32 0.0, %v1609
      %v1611 = vpop.f32.mrf.mxu0
      %1612 = vmatprep.mubr.f32.mxu0 0.0
      %1613 = vmatmul.mubr.f32.gmra.mxu0 %v1515
      %v1614 = vpop.f32.mrf.mxu0
      %v1615 = vadd.f32 0.0, %v1614
      %v1616 = vpop.f32.mrf.mxu0
      %1617 = vmatprep.mubr.f32.mxu0 0.0
      %1618 = vmatmul.mubr.f32.gmra.mxu0 %v1518
      %v1619 = vpop.f32.mrf.mxu0
      %v1620 = vadd.f32 0.0, %v1619
      %v1621 = vpop.f32.mrf.mxu0
      %1622 = vmatprep.mubr.f32.mxu0 0.0
      %1623 = vmatmul.mubr.f32.gmra.mxu0 %v1521
      %v1624 = vpop.f32.mrf.mxu0
      %v1625 = vadd.f32 0.0, %v1624
      %v1626 = vpop.f32.mrf.mxu0
      %1627 = vdwg.mxu0
      %v1629 = vsel %vm441, %v803, 0
      %v1632 = vsel %vm441, %v804, 0
      %v1635 = vsel %vm441, %v805, 0
      %v1638 = vsel %vm441, %v806, 0
      %v1641 = vsel %vm441, %v807, 0
      %v1644 = vsel %vm441, %v808, 0
      %v1647 = vsel %vm441, %v809, 0
      %v1650 = vsel %vm441, %v810, 0
      %1652 = vmatprep.subr.mxu0 0.0
      %1653 = vmatpush1.msra.mxu0 0.0
      %1654 = vmatprep.subr.mxu0 0.0
      %1655 = vmatpush1.msra.mxu0 0.0
      %1656 = vmatprep.subr.mxu0 0.0
      %1657 = vmatpush1.msra.mxu0 0.0
      %1658 = vmatprep.subr.mxu0 0.0
      %1659 = vmatpush1.msra.mxu0 0.0
      %1660 = vmatprep.subr.mxu0 0.0
      %1661 = vmatpush1.msra.mxu0 0.0
      %1662 = vmatprep.subr.mxu0 0.0
      %1663 = vmatpush1.msra.mxu0 0.0
      %1664 = vmatprep.subr.mxu0 0.0
      %1665 = vmatpush1.msra.mxu0 0.0
      %1666 = vmatprep.subr.mxu0 0.0
      %1667 = vmatpush1.msra.mxu0 0.0
      %1668 = vmatprep.subr.mxu0 0.0
      %1669 = vmatpush1.msra.mxu0 0.0
      %1670 = vmatprep.subr.mxu0 0.0
      %1671 = vmatpush1.msra.mxu0 0.0
      %1672 = vmatprep.subr.mxu0 0.0
      %1673 = vmatpush1.msra.mxu0 0.0
      %1674 = vmatprep.subr.mxu0 0.0
      %1675 = vmatpush1.msra.mxu0 0.0
      %1676 = vmatprep.subr.mxu0 0.0
      %1677 = vmatpush1.msra.mxu0 0.0
      %1678 = vmatprep.subr.mxu0 0.0
      %1679 = vmatpush1.msra.mxu0 %v847
      %1680 = vmatprep.subr.mxu0 0.0
      %1681 = vmatpush1.msra.mxu0 %v846
      %1682 = vmatprep.subr.mxu0 0.0
      %1683 = vmatpush1.msra.mxu0 %v845
      %1684 = vmatprep.subr.mxu0 0.0
      %1685 = vmatpush2.msra.mxu0 0.0
      %1686 = vmatprep.subr.mxu0 0.0
      %1687 = vmatpush2.msra.mxu0 0.0
      %1688 = vmatprep.subr.mxu0 0.0
      %1689 = vmatpush2.msra.mxu0 0.0
      %1690 = vmatprep.subr.mxu0 0.0
      %1691 = vmatpush2.msra.mxu0 0.0
      %1692 = vmatprep.subr.mxu0 0.0
      %1693 = vmatpush2.msra.mxu0 0.0
      %1694 = vmatprep.subr.mxu0 0.0
      %1695 = vmatpush2.msra.mxu0 0.0
      %1696 = vmatprep.subr.mxu0 0.0
      %1697 = vmatpush2.msra.mxu0 0.0
      %1698 = vmatprep.subr.mxu0 0.0
      %1699 = vmatpush2.msra.mxu0 0.0
      %1700 = vmatprep.subr.mxu0 0.0
      %1701 = vmatpush2.msra.mxu0 0.0
      %1702 = vmatprep.subr.mxu0 0.0
      %1703 = vmatpush2.msra.mxu0 0.0
      %1704 = vmatprep.subr.mxu0 0.0
      %1705 = vmatpush2.msra.mxu0 0.0
      %1706 = vmatprep.subr.mxu0 0.0
      %1707 = vmatpush2.msra.mxu0 0.0
      %1708 = vmatprep.subr.mxu0 0.0
      %1709 = vmatpush2.msra.mxu0 0.0
      %1710 = vmatprep.subr.mxu0 0.0
      %1711 = vmatpush2.msra.mxu0 0.0
      %1712 = vmatprep.subr.mxu0 0.0
      %1713 = vmatpush2.msra.mxu0 0.0
      %1714 = vmatprep.subr.mxu0 0.0
      %1715 = vmatpush2.msra.mxu0 0.0
      %1716 = vmatprep.mubr.f32.mxu0 0.0
      %1717 = vmatmul.mubr.f32.gmra.mxu0 %v1629
      %v1718 = vpop.f32.mrf.mxu0
      %v1719 = vadd.f32 0.0, %v1718
      %v1720 = vpop.f32.mrf.mxu0
      %1721 = vmatprep.mubr.f32.mxu0 0.0
      %1722 = vmatmul.mubr.f32.gmra.mxu0 %v1632
      %v1723 = vpop.f32.mrf.mxu0
      %v1724 = vadd.f32 0.0, %v1723
      %v1725 = vpop.f32.mrf.mxu0
      %1726 = vmatprep.mubr.f32.mxu0 0.0
      %1727 = vmatmul.mubr.f32.gmra.mxu0 %v1635
      %v1728 = vpop.f32.mrf.mxu0
      %v1729 = vadd.f32 0.0, %v1728
      %v1730 = vpop.f32.mrf.mxu0
      %1731 = vmatprep.mubr.f32.mxu0 0.0
      %1732 = vmatmul.mubr.f32.gmra.mxu0 %v1638
      %v1733 = vpop.f32.mrf.mxu0
      %v1734 = vadd.f32 0.0, %v1733
      %v1735 = vpop.f32.mrf.mxu0
      %1736 = vmatprep.mubr.f32.mxu0 0.0
      %1737 = vmatmul.mubr.f32.gmra.mxu0 %v1641
      %v1738 = vpop.f32.mrf.mxu0
      %v1739 = vadd.f32 0.0, %v1738
      %v1740 = vpop.f32.mrf.mxu0
      %1741 = vmatprep.mubr.f32.mxu0 0.0
      %1742 = vmatmul.mubr.f32.gmra.mxu0 %v1644
      %v1743 = vpop.f32.mrf.mxu0
      %v1744 = vadd.f32 0.0, %v1743
      %v1745 = vpop.f32.mrf.mxu0
      %1746 = vmatprep.mubr.f32.mxu0 0.0
      %1747 = vmatmul.mubr.f32.gmra.mxu0 %v1647
      %v1748 = vpop.f32.mrf.mxu0
      %v1749 = vadd.f32 0.0, %v1748
      %v1750 = vpop.f32.mrf.mxu0
      %1751 = vmatprep.mubr.f32.mxu0 0.0
      %1752 = vmatmul.mubr.f32.gmra.mxu0 %v1650
      %v1753 = vpop.f32.mrf.mxu0
      %v1754 = vadd.f32 0.0, %v1753
      %v1755 = vpop.f32.mrf.mxu0
      %1756 = vdwg.mxu0
      %v1758 = vsel %vm441, %v811, 0
      %v1761 = vsel %vm441, %v812, 0
      %v1764 = vsel %vm441, %v813, 0
      %v1767 = vsel %vm441, %v814, 0
      %v1770 = vsel %vm441, %v815, 0
      %v1773 = vsel %vm441, %v816, 0
      %v1776 = vsel %vm441, %v817, 0
      %v1779 = vsel %vm441, %v818, 0
      %1781 = vmatprep.subr.mxu0 0.0
      %1782 = vmatpush1.msra.mxu0 0.0
      %1783 = vmatprep.subr.mxu0 0.0
      %1784 = vmatpush1.msra.mxu0 0.0
      %1785 = vmatprep.subr.mxu0 0.0
      %1786 = vmatpush1.msra.mxu0 0.0
      %1787 = vmatprep.subr.mxu0 0.0
      %1788 = vmatpush1.msra.mxu0 0.0
      %1789 = vmatprep.subr.mxu0 0.0
      %1790 = vmatpush1.msra.mxu0 0.0
      %1791 = vmatprep.subr.mxu0 0.0
      %1792 = vmatpush1.msra.mxu0 0.0
      %1793 = vmatprep.subr.mxu0 0.0
      %1794 = vmatpush1.msra.mxu0 0.0
      %1795 = vmatprep.subr.mxu0 0.0
      %1796 = vmatpush1.msra.mxu0 0.0
      %1797 = vmatprep.subr.mxu0 0.0
      %1798 = vmatpush1.msra.mxu0 0.0
      %1799 = vmatprep.subr.mxu0 0.0
      %1800 = vmatpush1.msra.mxu0 0.0
      %1801 = vmatprep.subr.mxu0 0.0
      %1802 = vmatpush1.msra.mxu0 0.0
      %1803 = vmatprep.subr.mxu0 0.0
      %1804 = vmatpush1.msra.mxu0 0.0
      %1805 = vmatprep.subr.mxu0 0.0
      %1806 = vmatpush1.msra.mxu0 0.0
      %1807 = vmatprep.subr.mxu0 0.0
      %1808 = vmatpush1.msra.mxu0 %v850
      %1809 = vmatprep.subr.mxu0 0.0
      %1810 = vmatpush1.msra.mxu0 %v849
      %1811 = vmatprep.subr.mxu0 0.0
      %1812 = vmatpush1.msra.mxu0 %v848
      %1813 = vmatprep.subr.mxu0 0.0
      %1814 = vmatpush2.msra.mxu0 0.0
      %1815 = vmatprep.subr.mxu0 0.0
      %1816 = vmatpush2.msra.mxu0 0.0
      %1817 = vmatprep.subr.mxu0 0.0
      %1818 = vmatpush2.msra.mxu0 0.0
      %1819 = vmatprep.subr.mxu0 0.0
      %1820 = vmatpush2.msra.mxu0 0.0
      %1821 = vmatprep.subr.mxu0 0.0
      %1822 = vmatpush2.msra.mxu0 0.0
      %1823 = vmatprep.subr.mxu0 0.0
      %1824 = vmatpush2.msra.mxu0 0.0
      %1825 = vmatprep.subr.mxu0 0.0
      %1826 = vmatpush2.msra.mxu0 0.0
      %1827 = vmatprep.subr.mxu0 0.0
      %1828 = vmatpush2.msra.mxu0 0.0
      %1829 = vmatprep.subr.mxu0 0.0
      %1830 = vmatpush2.msra.mxu0 0.0
      %1831 = vmatprep.subr.mxu0 0.0
      %1832 = vmatpush2.msra.mxu0 0.0
      %1833 = vmatprep.subr.mxu0 0.0
      %1834 = vmatpush2.msra.mxu0 0.0
      %1835 = vmatprep.subr.mxu0 0.0
      %1836 = vmatpush2.msra.mxu0 0.0
      %1837 = vmatprep.subr.mxu0 0.0
      %1838 = vmatpush2.msra.mxu0 0.0
      %1839 = vmatprep.subr.mxu0 0.0
      %1840 = vmatpush2.msra.mxu0 0.0
      %1841 = vmatprep.subr.mxu0 0.0
      %1842 = vmatpush2.msra.mxu0 0.0
      %1843 = vmatprep.subr.mxu0 0.0
      %1844 = vmatpush2.msra.mxu0 0.0
      %1845 = vmatprep.mubr.f32.mxu0 0.0
      %1846 = vmatmul.mubr.f32.gmra.mxu0 %v1758
      %v1847 = vpop.f32.mrf.mxu0
      %v1848 = vadd.f32 0.0, %v1847
      %v1849 = vpop.f32.mrf.mxu0
      %1850 = vmatprep.mubr.f32.mxu0 0.0
      %1851 = vmatmul.mubr.f32.gmra.mxu0 %v1761
      %v1852 = vpop.f32.mrf.mxu0
      %v1853 = vadd.f32 0.0, %v1852
      %v1854 = vpop.f32.mrf.mxu0
      %1855 = vmatprep.mubr.f32.mxu0 0.0
      %1856 = vmatmul.mubr.f32.gmra.mxu0 %v1764
      %v1857 = vpop.f32.mrf.mxu0
      %v1858 = vadd.f32 0.0, %v1857
      %v1859 = vpop.f32.mrf.mxu0
      %1860 = vmatprep.mubr.f32.mxu0 0.0
      %1861 = vmatmul.mubr.f32.gmra.mxu0 %v1767
      %v1862 = vpop.f32.mrf.mxu0
      %v1863 = vadd.f32 0.0, %v1862
      %v1864 = vpop.f32.mrf.mxu0
      %1865 = vmatprep.mubr.f32.mxu0 0.0
      %1866 = vmatmul.mubr.f32.gmra.mxu0 %v1770
      %v1867 = vpop.f32.mrf.mxu0
      %v1868 = vadd.f32 0.0, %v1867
      %v1869 = vpop.f32.mrf.mxu0
      %1870 = vmatprep.mubr.f32.mxu0 0.0
      %1871 = vmatmul.mubr.f32.gmra.mxu0 %v1773
      %v1872 = vpop.f32.mrf.mxu0
      %v1873 = vadd.f32 0.0, %v1872
      %v1874 = vpop.f32.mrf.mxu0
      %1875 = vmatprep.mubr.f32.mxu0 0.0
      %1876 = vmatmul.mubr.f32.gmra.mxu0 %v1776
      %v1877 = vpop.f32.mrf.mxu0
      %v1878 = vadd.f32 0.0, %v1877
      %v1879 = vpop.f32.mrf.mxu0
      %1880 = vmatprep.mubr.f32.mxu0 0.0
      %1881 = vmatmul.mubr.f32.gmra.mxu0 %v1779
      %v1882 = vpop.f32.mrf.mxu0
      %v1883 = vadd.f32 0.0, %v1882
      %v1884 = vpop.f32.mrf.mxu0
      %1885 = vdwg.mxu0
      %v1887 = vsel %vm441, %v819, 0
      %v1890 = vsel %vm441, %v820, 0
      %v1893 = vsel %vm441, %v821, 0
      %v1896 = vsel %vm441, %v822, 0
      %v1899 = vsel %vm441, %v823, 0
      %v1902 = vsel %vm441, %v824, 0
      %v1905 = vsel %vm441, %v825, 0
      %v1908 = vsel %vm441, %v826, 0
      %1910 = vmatprep.subr.mxu0 0.0
      %1911 = vmatpush1.msra.mxu0 0.0
      %1912 = vmatprep.subr.mxu0 0.0
      %1913 = vmatpush1.msra.mxu0 0.0
      %1914 = vmatprep.subr.mxu0 0.0
      %1915 = vmatpush1.msra.mxu0 0.0
      %1916 = vmatprep.subr.mxu0 0.0
      %1917 = vmatpush1.msra.mxu0 0.0
      %1918 = vmatprep.subr.mxu0 0.0
      %1919 = vmatpush1.msra.mxu0 0.0
      %1920 = vmatprep.subr.mxu0 0.0
      %1921 = vmatpush1.msra.mxu0 0.0
      %1922 = vmatprep.subr.mxu0 0.0
      %1923 = vmatpush1.msra.mxu0 0.0
      %1924 = vmatprep.subr.mxu0 0.0
      %1925 = vmatpush1.msra.mxu0 0.0
      %1926 = vmatprep.subr.mxu0 0.0
      %1927 = vmatpush1.msra.mxu0 0.0
      %1928 = vmatprep.subr.mxu0 0.0
      %1929 = vmatpush1.msra.mxu0 0.0
      %1930 = vmatprep.subr.mxu0 0.0
      %1931 = vmatpush1.msra.mxu0 0.0
      %1932 = vmatprep.subr.mxu0 0.0
      %1933 = vmatpush1.msra.mxu0 0.0
      %1934 = vmatprep.subr.mxu0 0.0
      %1935 = vmatpush1.msra.mxu0 0.0
      %1936 = vmatprep.subr.mxu0 0.0
      %1937 = vmatpush1.msra.mxu0 %v853
      %1938 = vmatprep.subr.mxu0 0.0
      %1939 = vmatpush1.msra.mxu0 %v852
      %1940 = vmatprep.subr.mxu0 0.0
      %1941 = vmatpush1.msra.mxu0 %v851
      %1942 = vmatprep.subr.mxu0 0.0
      %1943 = vmatpush2.msra.mxu0 0.0
      %1944 = vmatprep.subr.mxu0 0.0
      %1945 = vmatpush2.msra.mxu0 0.0
      %1946 = vmatprep.subr.mxu0 0.0
      %1947 = vmatpush2.msra.mxu0 0.0
      %1948 = vmatprep.subr.mxu0 0.0
      %1949 = vmatpush2.msra.mxu0 0.0
      %1950 = vmatprep.subr.mxu0 0.0
      %1951 = vmatpush2.msra.mxu0 0.0
      %1952 = vmatprep.subr.mxu0 0.0
      %1953 = vmatpush2.msra.mxu0 0.0
      %1954 = vmatprep.subr.mxu0 0.0
      %1955 = vmatpush2.msra.mxu0 0.0
      %1956 = vmatprep.subr.mxu0 0.0
      %1957 = vmatpush2.msra.mxu0 0.0
      %1958 = vmatprep.subr.mxu0 0.0
      %1959 = vmatpush2.msra.mxu0 0.0
      %1960 = vmatprep.subr.mxu0 0.0
      %1961 = vmatpush2.msra.mxu0 0.0
      %1962 = vmatprep.subr.mxu0 0.0
      %1963 = vmatpush2.msra.mxu0 0.0
      %1964 = vmatprep.subr.mxu0 0.0
      %1965 = vmatpush2.msra.mxu0 0.0
      %1966 = vmatprep.subr.mxu0 0.0
      %1967 = vmatpush2.msra.mxu0 0.0
      %1968 = vmatprep.subr.mxu0 0.0
      %1969 = vmatpush2.msra.mxu0 0.0
      %1970 = vmatprep.subr.mxu0 0.0
      %1971 = vmatpush2.msra.mxu0 0.0
      %1972 = vmatprep.subr.mxu0 0.0
      %1973 = vmatpush2.msra.mxu0 0.0
      %1974 = vmatprep.mubr.f32.mxu0 0.0
      %1975 = vmatmul.mubr.f32.gmra.mxu0 %v1887
      %v1976 = vpop.f32.mrf.mxu0
      %v1977 = vadd.f32 0.0, %v1976
      %v1978 = vpop.f32.mrf.mxu0
      %1979 = vmatprep.mubr.f32.mxu0 0.0
      %1980 = vmatmul.mubr.f32.gmra.mxu0 %v1890
      %v1981 = vpop.f32.mrf.mxu0
      %v1982 = vadd.f32 0.0, %v1981
      %v1983 = vpop.f32.mrf.mxu0
      %1984 = vmatprep.mubr.f32.mxu0 0.0
      %1985 = vmatmul.mubr.f32.gmra.mxu0 %v1893
      %v1986 = vpop.f32.mrf.mxu0
      %v1987 = vadd.f32 0.0, %v1986
      %v1988 = vpop.f32.mrf.mxu0
      %1989 = vmatprep.mubr.f32.mxu0 0.0
      %1990 = vmatmul.mubr.f32.gmra.mxu0 %v1896
      %v1991 = vpop.f32.mrf.mxu0
      %v1992 = vadd.f32 0.0, %v1991
      %v1993 = vpop.f32.mrf.mxu0
      %1994 = vmatprep.mubr.f32.mxu0 0.0
      %1995 = vmatmul.mubr.f32.gmra.mxu0 %v1899
      %v1996 = vpop.f32.mrf.mxu0
      %v1997 = vadd.f32 0.0, %v1996
      %v1998 = vpop.f32.mrf.mxu0
      %1999 = vmatprep.mubr.f32.mxu0 0.0
      %2000 = vmatmul.mubr.f32.gmra.mxu0 %v1902
      %v2001 = vpop.f32.mrf.mxu0
      %v2002 = vadd.f32 0.0, %v2001
      %v2003 = vpop.f32.mrf.mxu0
      %2004 = vmatprep.mubr.f32.mxu0 0.0
      %2005 = vmatmul.mubr.f32.gmra.mxu0 %v1905
      %v2006 = vpop.f32.mrf.mxu0
      %v2007 = vadd.f32 0.0, %v2006
      %v2008 = vpop.f32.mrf.mxu0
      %2009 = vmatprep.mubr.f32.mxu0 0.0
      %2010 = vmatmul.mubr.f32.gmra.mxu0 %v1908
      %v2011 = vpop.f32.mrf.mxu0
      %v2012 = vadd.f32 0.0, %v2011
      %v2013 = vpop.f32.mrf.mxu0
      %2014 = vdwg.mxu0
      %vm2015 = vcmask 48128
      %v2016 = vsel %vm2015, %v945, 0.0
      %v2017 = vsel %vm2015, %v1074, 0.0
      %v2018 = vadd.f32 %v2016, %v2017
      %v2019 = vsel %vm2015, %v1203, 0.0
      %v2020 = vadd.f32 %v2018, %v2019
      %v2021 = vsel %vm2015, %v1332, 0.0
      %v2022 = vadd.f32 %v2020, %v2021
      %v2023 = vsel %vm2015, %v1461, 0.0
      %v2024 = vadd.f32 %v2022, %v2023
      %v2025 = vsel %vm2015, %v1590, 0.0
      %v2026 = vadd.f32 %v2024, %v2025
      %v2027 = vsel %vm2015, %v1719, 0.0
      %v2028 = vadd.f32 %v2026, %v2027
      %v2029 = vsel %vm2015, %v1848, 0.0
      %v2030 = vadd.f32 %v2028, %v2029
      %v2031 = vsel %vm2015, %v1977, 0.0
      %v2032 = vadd.f32 %v2030, %v2031
      %v2033 = vsel %vm2015, %v950, 0.0
      %v2034 = vsel %vm2015, %v1079, 0.0
      %v2035 = vadd.f32 %v2033, %v2034
      %v2036 = vsel %vm2015, %v1208, 0.0
      %v2037 = vadd.f32 %v2035, %v2036
      %v2038 = vsel %vm2015, %v1337, 0.0
      %v2039 = vadd.f32 %v2037, %v2038
      %v2040 = vsel %vm2015, %v1466, 0.0
      %v2041 = vadd.f32 %v2039, %v2040
      %v2042 = vsel %vm2015, %v1595, 0.0
      %v2043 = vadd.f32 %v2041, %v2042
      %v2044 = vsel %vm2015, %v1724, 0.0
      %v2045 = vadd.f32 %v2043, %v2044
      %v2046 = vsel %vm2015, %v1853, 0.0
      %v2047 = vadd.f32 %v2045, %v2046
      %v2048 = vsel %vm2015, %v1982, 0.0
      %v2049 = vadd.f32 %v2047, %v2048
      %v2050 = vsel %vm2015, %v955, 0.0
      %v2051 = vsel %vm2015, %v1084, 0.0
      %v2052 = vadd.f32 %v2050, %v2051
      %v2053 = vsel %vm2015, %v1213, 0.0
      %v2054 = vadd.f32 %v2052, %v2053
      %v2055 = vsel %vm2015, %v1342, 0.0
      %v2056 = vadd.f32 %v2054, %v2055
      %v2057 = vsel %vm2015, %v1471, 0.0
      %v2058 = vadd.f32 %v2056, %v2057
      %v2059 = vsel %vm2015, %v1600, 0.0
      %v2060 = vadd.f32 %v2058, %v2059
      %v2061 = vsel %vm2015, %v1729, 0.0
      %v2062 = vadd.f32 %v2060, %v2061
      %v2063 = vsel %vm2015, %v1858, 0.0
      %v2064 = vadd.f32 %v2062, %v2063
      %v2065 = vsel %vm2015, %v1987, 0.0
      %v2066 = vadd.f32 %v2064, %v2065
      %v2067 = vsel %vm2015, %v960, 0.0
      %v2068 = vsel %vm2015, %v1089, 0.0
      %v2069 = vadd.f32 %v2067, %v2068
      %v2070 = vsel %vm2015, %v1218, 0.0
      %v2071 = vadd.f32 %v2069, %v2070
      %v2072 = vsel %vm2015, %v1347, 0.0
      %v2073 = vadd.f32 %v2071, %v2072
      %v2074 = vsel %vm2015, %v1476, 0.0
      %v2075 = vadd.f32 %v2073, %v2074
      %v2076 = vsel %vm2015, %v1605, 0.0
      %v2077 = vadd.f32 %v2075, %v2076
      %v2078 = vsel %vm2015, %v1734, 0.0
      %v2079 = vadd.f32 %v2077, %v2078
      %v2080 = vsel %vm2015, %v1863, 0.0
      %v2081 = vadd.f32 %v2079, %v2080
      %v2082 = vsel %vm2015, %v1992, 0.0
      %v2083 = vadd.f32 %v2081, %v2082
      %v2084 = vsel %vm2015, %v965, 0.0
      %v2085 = vsel %vm2015, %v1094, 0.0
      %v2086 = vadd.f32 %v2084, %v2085
      %v2087 = vsel %vm2015, %v1223, 0.0
      %v2088 = vadd.f32 %v2086, %v2087
      %v2089 = vsel %vm2015, %v1352, 0.0
      %v2090 = vadd.f32 %v2088, %v2089
      %v2091 = vsel %vm2015, %v1481, 0.0
      %v2092 = vadd.f32 %v2090, %v2091
      %v2093 = vsel %vm2015, %v1610, 0.0
      %v2094 = vadd.f32 %v2092, %v2093
      %v2095 = vsel %vm2015, %v1739, 0.0
      %v2096 = vadd.f32 %v2094, %v2095
      %v2097 = vsel %vm2015, %v1868, 0.0
      %v2098 = vadd.f32 %v2096, %v2097
      %v2099 = vsel %vm2015, %v1997, 0.0
      %v2100 = vadd.f32 %v2098, %v2099
      %v2101 = vsel %vm2015, %v970, 0.0
      %v2102 = vsel %vm2015, %v1099, 0.0
      %v2103 = vadd.f32 %v2101, %v2102
      %v2104 = vsel %vm2015, %v1228, 0.0
      %v2105 = vadd.f32 %v2103, %v2104
      %v2106 = vsel %vm2015, %v1357, 0.0
      %v2107 = vadd.f32 %v2105, %v2106
      %v2108 = vsel %vm2015, %v1486, 0.0
      %v2109 = vadd.f32 %v2107, %v2108
      %v2110 = vsel %vm2015, %v1615, 0.0
      %v2111 = vadd.f32 %v2109, %v2110
      %v2112 = vsel %vm2015, %v1744, 0.0
      %v2113 = vadd.f32 %v2111, %v2112
      %v2114 = vsel %vm2015, %v1873, 0.0
      %v2115 = vadd.f32 %v2113, %v2114
      %v2116 = vsel %vm2015, %v2002, 0.0
      %v2117 = vadd.f32 %v2115, %v2116
      %v2118 = vsel %vm2015, %v975, 0.0
      %v2119 = vsel %vm2015, %v1104, 0.0
      %v2120 = vadd.f32 %v2118, %v2119
      %v2121 = vsel %vm2015, %v1233, 0.0
      %v2122 = vadd.f32 %v2120, %v2121
      %v2123 = vsel %vm2015, %v1362, 0.0
      %v2124 = vadd.f32 %v2122, %v2123
      %v2125 = vsel %vm2015, %v1491, 0.0
      %v2126 = vadd.f32 %v2124, %v2125
      %v2127 = vsel %vm2015, %v1620, 0.0
      %v2128 = vadd.f32 %v2126, %v2127
      %v2129 = vsel %vm2015, %v1749, 0.0
      %v2130 = vadd.f32 %v2128, %v2129
      %v2131 = vsel %vm2015, %v1878, 0.0
      %v2132 = vadd.f32 %v2130, %v2131
      %v2133 = vsel %vm2015, %v2007, 0.0
      %v2134 = vadd.f32 %v2132, %v2133
      %v2135 = vsel %vm2015, %v980, 0.0
      %v2136 = vsel %vm2015, %v1109, 0.0
      %v2137 = vadd.f32 %v2135, %v2136
      %v2138 = vsel %vm2015, %v1238, 0.0
      %v2139 = vadd.f32 %v2137, %v2138
      %v2140 = vsel %vm2015, %v1367, 0.0
      %v2141 = vadd.f32 %v2139, %v2140
      %v2142 = vsel %vm2015, %v1496, 0.0
      %v2143 = vadd.f32 %v2141, %v2142
      %v2144 = vsel %vm2015, %v1625, 0.0
      %v2145 = vadd.f32 %v2143, %v2144
      %v2146 = vsel %vm2015, %v1754, 0.0
      %v2147 = vadd.f32 %v2145, %v2146
      %v2148 = vsel %vm2015, %v1883, 0.0
      %v2149 = vadd.f32 %v2147, %v2148
      %v2150 = vsel %vm2015, %v2012, 0.0
      %v2151 = vadd.f32 %v2149, %v2150
      %v2152 = vld [vmem:[%s7] sm:$0x3]
      %v2154 = vlaneseq
      %v2155 = vshrl.u32 %v2154, 7
      %v2156 = vsub.s32 0, %v2155
      %v2157 = vrot.slane %v2152, %v2156
      %v2158 = vlaneseq
      %v2159 = vshrl.u32 %v2158, 7
      %v2160 = vsub.s32 1, %v2159
      %v2161 = vrot.slane %v2152, %v2160
      %v2164 = vmul.f32 %v463, %v2157
      %v2165 = vmul.f32 %v464, %v2161
      %v2166 = vmul.f32 %v465, %v2157
      %v2167 = vmul.f32 %v466, %v2161
      %v2168 = vmul.f32 %v467, %v2157
      %v2169 = vmul.f32 %v468, %v2161
      %v2170 = vmul.f32 %v469, %v2157
      %v2171 = vmul.f32 %v470, %v2161
      %v2172 = vmul.f32 %v471, %v2157
      %v2173 = vmul.f32 %v472, %v2161
      %v2174 = vmul.f32 %v473, %v2157
      %v2175 = vmul.f32 %v474, %v2161
      %v2176 = vmul.f32 %v475, %v2157
      %v2177 = vmul.f32 %v476, %v2161
      %v2178 = vmul.f32 %v477, %v2157
      %v2179 = vmul.f32 %v478, %v2161
      %v2180 = vld [vmem:[%s8] sm:$0x3]
      %v2182 = vlaneseq
      %v2183 = vshrl.u32 %v2182, 7
      %v2184 = vsub.s32 0, %v2183
      %v2185 = vrot.slane %v2180, %v2184
      %v2186 = vlaneseq
      %v2187 = vshrl.u32 %v2186, 7
      %v2188 = vsub.s32 1, %v2187
      %v2189 = vrot.slane %v2180, %v2188
      %v2192 = vadd.f32 %v2164, %v2185
      %v2193 = vadd.f32 %v2165, %v2189
      %v2194 = vadd.f32 %v2166, %v2185
      %v2195 = vadd.f32 %v2167, %v2189
      %v2196 = vadd.f32 %v2168, %v2185
      %v2197 = vadd.f32 %v2169, %v2189
      %v2198 = vadd.f32 %v2170, %v2185
      %v2199 = vadd.f32 %v2171, %v2189
      %v2200 = vadd.f32 %v2172, %v2185
      %v2201 = vadd.f32 %v2173, %v2189
      %v2202 = vadd.f32 %v2174, %v2185
      %v2203 = vadd.f32 %v2175, %v2189
      %v2204 = vadd.f32 %v2176, %v2185
      %v2205 = vadd.f32 %v2177, %v2189
      %v2206 = vadd.f32 %v2178, %v2185
      %v2207 = vadd.f32 %v2179, %v2189
      %v2208 = vmax.f32 %v2192, 0.0
      %v2209 = vmax.f32 %v2193, 0.0
      %v2210 = vmax.f32 %v2194, 0.0
      %v2211 = vmax.f32 %v2195, 0.0
      %v2212 = vmax.f32 %v2196, 0.0
      %v2213 = vmax.f32 %v2197, 0.0
      %v2214 = vmax.f32 %v2198, 0.0
      %v2215 = vmax.f32 %v2199, 0.0
      %v2216 = vmax.f32 %v2200, 0.0
      %v2217 = vmax.f32 %v2201, 0.0
      %v2218 = vmax.f32 %v2202, 0.0
      %v2219 = vmax.f32 %v2203, 0.0
      %v2220 = vmax.f32 %v2204, 0.0
      %v2221 = vmax.f32 %v2205, 0.0
      %v2222 = vmax.f32 %v2206, 0.0
      %v2223 = vmax.f32 %v2207, 0.0
      %v2224 = vld [vmem:[%s9] sm:$0xff]
      %v2225 = vld [vmem:[%s9 + $0x8] sm:$0xff]
      %v2226 = vld [vmem:[%s9 + $0x10] sm:$0xff]
      %v2227 = vld [vmem:[%s9 + $0x18] sm:$0xff]
      %v2228 = vld [vmem:[%s9 + $0x20] sm:$0xff]
      %v2229 = vld [vmem:[%s9 + $0x28] sm:$0xff]
      %v2230 = vld [vmem:[%s9 + $0x30] sm:$0xff]
      %v2231 = vld [vmem:[%s9 + $0x38] sm:$0xff]
      %v2232 = vld [vmem:[%s9 + $0x40] sm:$0xff]
      %v2233 = vld [vmem:[%s9 + $0x48] sm:$0xff]
      %v2234 = vld [vmem:[%s9 + $0x50] sm:$0xff]
      %v2235 = vld [vmem:[%s9 + $0x58] sm:$0xff]
      %v2236 = vld [vmem:[%s9 + $0x60] sm:$0xff]
      %v2237 = vld [vmem:[%s9 + $0x68] sm:$0xff]
      %v2238 = vld [vmem:[%s9 + $0x70] sm:$0xff]
      %v2239 = vld [vmem:[%s9 + $0x78] sm:$0xff]
      %v2240 = vld [vmem:[%s9 + $0x80] sm:$0xff]
      %v2241 = vld [vmem:[%s9 + $0x88] sm:$0xff]
      %v2242 = vld [vmem:[%s9 + $0x90] sm:$0xff]
      %v2243 = vld [vmem:[%s9 + $0x98] sm:$0xff]
      %v2244 = vld [vmem:[%s9 + $0xa0] sm:$0xff]
      %v2245 = vld [vmem:[%s9 + $0xa8] sm:$0xff]
      %v2246 = vld [vmem:[%s9 + $0xb0] sm:$0xff]
      %v2247 = vld [vmem:[%s9 + $0xb8] sm:$0xff]
      %v2248 = vld [vmem:[%s9 + $0xc0] sm:$0xff]
      %v2249 = vld [vmem:[%s9 + $0xc8] sm:$0xff]
      %v2250 = vld [vmem:[%s9 + $0xd0] sm:$0xff]
      %v2251 = vld [vmem:[%s9 + $0xd8] sm:$0xff]
      %v2252 = vld [vmem:[%s9 + $0xe0] sm:$0xff]
      %v2253 = vld [vmem:[%s9 + $0xe8] sm:$0xff]
      %v2254 = vld [vmem:[%s9 + $0xf0] sm:$0xff]
      %v2255 = vld [vmem:[%s9 + $0xf8] sm:$0xff]
      %v2256 = vld [vmem:[%s9 + $0x100] sm:$0xff]
      %v2257 = vld [vmem:[%s9 + $0x108] sm:$0xff]
      %v2258 = vld [vmem:[%s9 + $0x110] sm:$0xff]
      %v2259 = vld [vmem:[%s9 + $0x118] sm:$0xff]
      %v2260 = vld [vmem:[%s9 + $0x120] sm:$0xff]
      %v2261 = vld [vmem:[%s9 + $0x128] sm:$0xff]
      %v2262 = vld [vmem:[%s9 + $0x130] sm:$0xff]
      %v2263 = vld [vmem:[%s9 + $0x138] sm:$0xff]
      %v2264 = vld [vmem:[%s9 + $0x140] sm:$0xff]
      %v2265 = vld [vmem:[%s9 + $0x148] sm:$0xff]
      %v2266 = vld [vmem:[%s9 + $0x150] sm:$0x3f]
      %v2267 = vld [vmem:[%s9 + $0x158] sm:$0x3f]
      %v2268 = vld [vmem:[%s10] sm:$0x1]
      %v2270 = vlaneseq
      %v2271 = vshrl.u32 %v2270, 7
      %v2272 = vsub.s32 0, %v2271
      %v2273 = vrot.slane %v2268, %v2272
      %v2275 = vmul.f32 %v2032, %v2273
      %v2276 = vmul.f32 %v2049, %v2273
      %v2277 = vmul.f32 %v2066, %v2273
      %v2278 = vmul.f32 %v2083, %v2273
      %v2279 = vmul.f32 %v2100, %v2273
      %v2280 = vmul.f32 %v2117, %v2273
      %v2281 = vmul.f32 %v2134, %v2273
      %v2282 = vmul.f32 %v2151, %v2273
      %v2283 = vld [vmem:[%s11] sm:$0x1]
      %v2285 = vlaneseq
      %v2286 = vshrl.u32 %v2285, 7
      %v2287 = vsub.s32 0, %v2286
      %v2288 = vrot.slane %v2283, %v2287
      %v2290 = vadd.f32 %v2275, %v2288
      %v2291 = vadd.f32 %v2276, %v2288
      %v2292 = vadd.f32 %v2277, %v2288
      %v2293 = vadd.f32 %v2278, %v2288
      %v2294 = vadd.f32 %v2279, %v2288
      %v2295 = vadd.f32 %v2280, %v2288
      %v2296 = vadd.f32 %v2281, %v2288
      %v2297 = vadd.f32 %v2282, %v2288
      %v2298 = vmax.f32 %v2290, 0.0
      %v2299 = vmax.f32 %v2291, 0.0
      %v2300 = vmax.f32 %v2292, 0.0
      %v2301 = vmax.f32 %v2293, 0.0
      %v2302 = vmax.f32 %v2294, 0.0
      %v2303 = vmax.f32 %v2295, 0.0
      %v2304 = vmax.f32 %v2296, 0.0
      %v2305 = vmax.f32 %v2297, 0.0
      %v2306 = vld [vmem:[%s12] sm:$0x3f]
      %v2307 = vld [vmem:[%s12 + $0x8] sm:$0x3f]
      %v2309 = vsel %vm2015, %v2298, 0
      %v2312 = vsel %vm2015, %v2299, 0
      %v2315 = vsel %vm2015, %v2300, 0
      %v2318 = vsel %vm2015, %v2301, 0
      %v2321 = vsel %vm2015, %v2302, 0
      %v2324 = vsel %vm2015, %v2303, 0
      %v2327 = vsel %vm2015, %v2304, 0
      %v2330 = vsel %vm2015, %v2305, 0
      %v2333 = vsel %vm598, %v2306, 0
      %v2336 = vsel %vm598, %v2307, 0
      %2338 = vmatprep.subr.mxu0 0.0
      %2339 = vmatpush1.msra.mxu0 0.0
      %2340 = vmatprep.subr.mxu0 0.0
      %2341 = vmatpush1.msra.mxu0 0.0
      %2342 = vmatprep.subr.mxu0 0.0
      %2343 = vmatpush1.msra.mxu0 0.0
      %2344 = vmatprep.subr.mxu0 0.0
      %2345 = vmatpush1.msra.mxu0 0.0
      %2346 = vmatprep.subr.mxu0 0.0
      %2347 = vmatpush1.msra.mxu0 0.0
      %2348 = vmatprep.subr.mxu0 0.0
      %2349 = vmatpush1.msra.mxu0 0.0
      %2350 = vmatprep.subr.mxu0 0.0
      %2351 = vmatpush1.msra.mxu0 0.0
      %2352 = vmatprep.subr.mxu0 0.0
      %2353 = vmatpush1.msra.mxu0 0.0
      %2354 = vmatprep.subr.mxu0 0.0
      %2355 = vmatpush1.msra.mxu0 0.0
      %2356 = vmatprep.subr.mxu0 0.0
      %2357 = vmatpush1.msra.mxu0 0.0
      %2358 = vmatprep.subr.mxu0 0.0
      %2359 = vmatpush1.msra.mxu0 0.0
      %2360 = vmatprep.subr.mxu0 0.0
      %2361 = vmatpush1.msra.mxu0 0.0
      %2362 = vmatprep.subr.mxu0 0.0
      %2363 = vmatpush1.msra.mxu0 0.0
      %2364 = vmatprep.subr.mxu0 0.0
      %2365 = vmatpush1.msra.mxu0 0.0
      %2366 = vmatprep.subr.mxu0 0.0
      %2367 = vmatpush1.msra.mxu0 0.0
      %2368 = vmatprep.subr.mxu0 %v2336
      %2369 = vmatpush1.msra.mxu0 %v2333
      %2370 = vmatprep.subr.mxu0 0.0
      %2371 = vmatpush2.msra.mxu0 0.0
      %2372 = vmatprep.subr.mxu0 0.0
      %2373 = vmatpush2.msra.mxu0 0.0
      %2374 = vmatprep.subr.mxu0 0.0
      %2375 = vmatpush2.msra.mxu0 0.0
      %2376 = vmatprep.subr.mxu0 0.0
      %2377 = vmatpush2.msra.mxu0 0.0
      %2378 = vmatprep.subr.mxu0 0.0
      %2379 = vmatpush2.msra.mxu0 0.0
      %2380 = vmatprep.subr.mxu0 0.0
      %2381 = vmatpush2.msra.mxu0 0.0
      %2382 = vmatprep.subr.mxu0 0.0
      %2383 = vmatpush2.msra.mxu0 0.0
      %2384 = vmatprep.subr.mxu0 0.0
      %2385 = vmatpush2.msra.mxu0 0.0
      %2386 = vmatprep.subr.mxu0 0.0
      %2387 = vmatpush2.msra.mxu0 0.0
      %2388 = vmatprep.subr.mxu0 0.0
      %2389 = vmatpush2.msra.mxu0 0.0
      %2390 = vmatprep.subr.mxu0 0.0
      %2391 = vmatpush2.msra.mxu0 0.0
      %2392 = vmatprep.subr.mxu0 0.0
      %2393 = vmatpush2.msra.mxu0 0.0
      %2394 = vmatprep.subr.mxu0 0.0
      %2395 = vmatpush2.msra.mxu0 0.0
      %2396 = vmatprep.subr.mxu0 0.0
      %2397 = vmatpush2.msra.mxu0 0.0
      %2398 = vmatprep.subr.mxu0 0.0
      %2399 = vmatpush2.msra.mxu0 0.0
      %2400 = vmatprep.subr.mxu0 0.0
      %2401 = vmatpush2.msra.mxu0 0.0
      %2402 = vmatprep.mubr.f32.mxu0 0.0
      %2403 = vmatmul.mubr.f32.gmra.mxu0 %v2309
      %v2404 = vpop.f32.mrf.mxu0
      %v2405 = vadd.f32 0.0, %v2404
      %v2406 = vpop.f32.mrf.mxu0
      %v2407 = vadd.f32 0.0, %v2406
      %2408 = vmatprep.mubr.f32.mxu0 0.0
      %2409 = vmatmul.mubr.f32.gmra.mxu0 %v2312
      %v2410 = vpop.f32.mrf.mxu0
      %v2411 = vadd.f32 0.0, %v2410
      %v2412 = vpop.f32.mrf.mxu0
      %v2413 = vadd.f32 0.0, %v2412
      %2414 = vmatprep.mubr.f32.mxu0 0.0
      %2415 = vmatmul.mubr.f32.gmra.mxu0 %v2315
      %v2416 = vpop.f32.mrf.mxu0
      %v2417 = vadd.f32 0.0, %v2416
      %v2418 = vpop.f32.mrf.mxu0
      %v2419 = vadd.f32 0.0, %v2418
      %2420 = vmatprep.mubr.f32.mxu0 0.0
      %2421 = vmatmul.mubr.f32.gmra.mxu0 %v2318
      %v2422 = vpop.f32.mrf.mxu0
      %v2423 = vadd.f32 0.0, %v2422
      %v2424 = vpop.f32.mrf.mxu0
      %v2425 = vadd.f32 0.0, %v2424
      %2426 = vmatprep.mubr.f32.mxu0 0.0
      %2427 = vmatmul.mubr.f32.gmra.mxu0 %v2321
      %v2428 = vpop.f32.mrf.mxu0
      %v2429 = vadd.f32 0.0, %v2428
      %v2430 = vpop.f32.mrf.mxu0
      %v2431 = vadd.f32 0.0, %v2430
      %2432 = vmatprep.mubr.f32.mxu0 0.0
      %2433 = vmatmul.mubr.f32.gmra.mxu0 %v2324
      %v2434 = vpop.f32.mrf.mxu0
      %v2435 = vadd.f32 0.0, %v2434
      %v2436 = vpop.f32.mrf.mxu0
      %v2437 = vadd.f32 0.0, %v2436
      %2438 = vmatprep.mubr.f32.mxu0 0.0
      %2439 = vmatmul.mubr.f32.gmra.mxu0 %v2327
      %v2440 = vpop.f32.mrf.mxu0
      %v2441 = vadd.f32 0.0, %v2440
      %v2442 = vpop.f32.mrf.mxu0
      %v2443 = vadd.f32 0.0, %v2442
      %2444 = vmatprep.mubr.f32.mxu0 0.0
      %2445 = vmatmul.mubr.f32.gmra.mxu0 %v2330
      %v2446 = vpop.f32.mrf.mxu0
      %v2447 = vadd.f32 0.0, %v2446
      %v2448 = vpop.f32.mrf.mxu0
      %v2449 = vadd.f32 0.0, %v2448
      %2450 = vdwg.mxu0
      %v2452 = vsel %vm573, %v2209, 0
      %v2455 = vsel %vm573, %v2211, 0
      %v2458 = vsel %vm573, %v2213, 0
      %v2461 = vsel %vm573, %v2215, 0
      %v2464 = vsel %vm573, %v2217, 0
      %v2467 = vsel %vm573, %v2219, 0
      %v2470 = vsel %vm573, %v2221, 0
      %v2473 = vsel %vm573, %v2223, 0
      %v2476 = vsel %vm598, %v2266, 0
      %v2479 = vsel %vm598, %v2267, 0
      %2481 = vmatprep.subr.mxu0 %v2255
      %2482 = vmatpush1.msra.mxu0 %v2254
      %2483 = vmatprep.subr.mxu0 %v2253
      %2484 = vmatpush1.msra.mxu0 %v2252
      %2485 = vmatprep.subr.mxu0 %v2251
      %2486 = vmatpush1.msra.mxu0 %v2250
      %2487 = vmatprep.subr.mxu0 %v2249
      %2488 = vmatpush1.msra.mxu0 %v2248
      %2489 = vmatprep.subr.mxu0 %v2247
      %2490 = vmatpush1.msra.mxu0 %v2246
      %2491 = vmatprep.subr.mxu0 %v2245
      %2492 = vmatpush1.msra.mxu0 %v2244
      %2493 = vmatprep.subr.mxu0 %v2243
      %2494 = vmatpush1.msra.mxu0 %v2242
      %2495 = vmatprep.subr.mxu0 %v2241
      %2496 = vmatpush1.msra.mxu0 %v2240
      %2497 = vmatprep.subr.mxu0 %v2239
      %2498 = vmatpush1.msra.mxu0 %v2238
      %2499 = vmatprep.subr.mxu0 %v2237
      %2500 = vmatpush1.msra.mxu0 %v2236
      %2501 = vmatprep.subr.mxu0 %v2235
      %2502 = vmatpush1.msra.mxu0 %v2234
      %2503 = vmatprep.subr.mxu0 %v2233
      %2504 = vmatpush1.msra.mxu0 %v2232
      %2505 = vmatprep.subr.mxu0 %v2231
      %2506 = vmatpush1.msra.mxu0 %v2230
      %2507 = vmatprep.subr.mxu0 %v2229
      %2508 = vmatpush1.msra.mxu0 %v2228
      %2509 = vmatprep.subr.mxu0 %v2227
      %2510 = vmatpush1.msra.mxu0 %v2226
      %2511 = vmatprep.subr.mxu0 %v2225
      %2512 = vmatpush1.msra.mxu0 %v2224
      %2513 = vmatprep.subr.mxu0 0.0
      %2514 = vmatpush2.msra.mxu0 0.0
      %2515 = vmatprep.subr.mxu0 0.0
      %2516 = vmatpush2.msra.mxu0 0.0
      %2517 = vmatprep.subr.mxu0 0.0
      %2518 = vmatpush2.msra.mxu0 0.0
      %2519 = vmatprep.subr.mxu0 0.0
      %2520 = vmatpush2.msra.mxu0 0.0
      %2521 = vmatprep.subr.mxu0 0.0
      %2522 = vmatpush2.msra.mxu0 0.0
      %2523 = vmatprep.subr.mxu0 0.0
      %2524 = vmatpush2.msra.mxu0 0.0
      %2525 = vmatprep.subr.mxu0 0.0
      %2526 = vmatpush2.msra.mxu0 0.0
      %2527 = vmatprep.subr.mxu0 0.0
      %2528 = vmatpush2.msra.mxu0 0.0
      %2529 = vmatprep.subr.mxu0 0.0
      %2530 = vmatpush2.msra.mxu0 0.0
      %2531 = vmatprep.subr.mxu0 0.0
      %2532 = vmatpush2.msra.mxu0 0.0
      %2533 = vmatprep.subr.mxu0 %v2479
      %2534 = vmatpush2.msra.mxu0 %v2476
      %2535 = vmatprep.subr.mxu0 %v2265
      %2536 = vmatpush2.msra.mxu0 %v2264
      %2537 = vmatprep.subr.mxu0 %v2263
      %2538 = vmatpush2.msra.mxu0 %v2262
      %2539 = vmatprep.subr.mxu0 %v2261
      %2540 = vmatpush2.msra.mxu0 %v2260
      %2541 = vmatprep.subr.mxu0 %v2259
      %2542 = vmatpush2.msra.mxu0 %v2258
      %2543 = vmatprep.subr.mxu0 %v2257
      %2544 = vmatpush2.msra.mxu0 %v2256
      %2545 = vmatprep.mubr.f32.mxu0 %v2452
      %2546 = vmatmul.mubr.f32.gmra.mxu0 %v2208
      %v2547 = vpop.f32.mrf.mxu0
      %v2548 = vadd.f32 %v2405, %v2547
      %v2549 = vpop.f32.mrf.mxu0
      %v2550 = vadd.f32 %v2407, %v2549
      %2551 = vmatprep.mubr.f32.mxu0 %v2455
      %2552 = vmatmul.mubr.f32.gmra.mxu0 %v2210
      %v2553 = vpop.f32.mrf.mxu0
      %v2554 = vadd.f32 %v2411, %v2553
      %v2555 = vpop.f32.mrf.mxu0
      %v2556 = vadd.f32 %v2413, %v2555
      %2557 = vmatprep.mubr.f32.mxu0 %v2458
      %2558 = vmatmul.mubr.f32.gmra.mxu0 %v2212
      %v2559 = vpop.f32.mrf.mxu0
      %v2560 = vadd.f32 %v2417, %v2559
      %v2561 = vpop.f32.mrf.mxu0
      %v2562 = vadd.f32 %v2419, %v2561
      %2563 = vmatprep.mubr.f32.mxu0 %v2461
      %2564 = vmatmul.mubr.f32.gmra.mxu0 %v2214
      %v2565 = vpop.f32.mrf.mxu0
      %v2566 = vadd.f32 %v2423, %v2565
      %v2567 = vpop.f32.mrf.mxu0
      %v2568 = vadd.f32 %v2425, %v2567
      %2569 = vmatprep.mubr.f32.mxu0 %v2464
      %2570 = vmatmul.mubr.f32.gmra.mxu0 %v2216
      %v2571 = vpop.f32.mrf.mxu0
      %v2572 = vadd.f32 %v2429, %v2571
      %v2573 = vpop.f32.mrf.mxu0
      %v2574 = vadd.f32 %v2431, %v2573
      %2575 = vmatprep.mubr.f32.mxu0 %v2467
      %2576 = vmatmul.mubr.f32.gmra.mxu0 %v2218
      %v2577 = vpop.f32.mrf.mxu0
      %v2578 = vadd.f32 %v2435, %v2577
      %v2579 = vpop.f32.mrf.mxu0
      %v2580 = vadd.f32 %v2437, %v2579
      %2581 = vmatprep.mubr.f32.mxu0 %v2470
      %2582 = vmatmul.mubr.f32.gmra.mxu0 %v2220
      %v2583 = vpop.f32.mrf.mxu0
      %v2584 = vadd.f32 %v2441, %v2583
      %v2585 = vpop.f32.mrf.mxu0
      %v2586 = vadd.f32 %v2443, %v2585
      %2587 = vmatprep.mubr.f32.mxu0 %v2473
      %2588 = vmatmul.mubr.f32.gmra.mxu0 %v2222
      %v2589 = vpop.f32.mrf.mxu0
      %v2590 = vadd.f32 %v2447, %v2589
      %v2591 = vpop.f32.mrf.mxu0
      %v2592 = vadd.f32 %v2449, %v2591
      %2593 = vdwg.mxu0
      %2594 = vst [vmem:[%s440] sm:$0xff] %v2548
      %vm2595 = vcmask 130048
      %2596 = vst.msk [vmem:[%s440 + $0x8] sm:$0xff] %vm2595, %v2550
      %2597 = vst [vmem:[%s440 + $0x10] sm:$0xff] %v2554
      %2598 = vst.msk [vmem:[%s440 + $0x18] sm:$0xff] %vm2595, %v2556
      %2599 = vst [vmem:[%s440 + $0x20] sm:$0xff] %v2560
      %2600 = vst.msk [vmem:[%s440 + $0x28] sm:$0xff] %vm2595, %v2562
      %2601 = vst [vmem:[%s440 + $0x30] sm:$0xff] %v2566
      %2602 = vst.msk [vmem:[%s440 + $0x38] sm:$0xff] %vm2595, %v2568
      %2603 = vst [vmem:[%s440 + $0x40] sm:$0xff] %v2572
      %2604 = vst.msk [vmem:[%s440 + $0x48] sm:$0xff] %vm2595, %v2574
      %2605 = vst [vmem:[%s440 + $0x50] sm:$0xff] %v2578
      %2606 = vst.msk [vmem:[%s440 + $0x58] sm:$0xff] %vm2595, %v2580
      %2607 = vst [vmem:[%s440 + $0x60] sm:$0xff] %v2584
      %2608 = vst.msk [vmem:[%s440 + $0x68] sm:$0xff] %vm2595, %v2586
      %2609 = vst [vmem:[%s440 + $0x70] sm:$0xff] %v2590
      %2610 = vst.msk [vmem:[%s440 + $0x78] sm:$0xff] %vm2595, %v2592
      %p2611 = scmp.lt.s32.totalorder %s24, 1
      %s2612 = scalar_select %p2611, %s24, 1
      %s2613 = smul.addr %s2612, 16
      %s2614 = smul.addr %s2613, 8
      %s2615 = scalar_lea.vmem %s13, %s2614
      // Predicated region
      $region73: #{_lambda_.6} parent=71 // pred_check
        %p2616 = pneg %p320
      $region74: #{_lambda_.6} parent=71 // pred_check_branch
        %2618 = sbr.rel (%p2616) target = $region76
      $region75: #{_lambda_.6} parent=71 // pred_region
        _
      $region76: #{_lambda_.6} parent=71 // pred_fallthru
        _
    $region72: #{_lambda_.6} parent=5 // pred_fallthru
      _
    %p2619 = scmp.le.s32.totalorder 2, %s19
    // Predicated region
    $region77: #{_lambda_.6} parent=5 // pred_check
      %p2620 = pneg %p2619
    $region78: #{_lambda_.6} parent=5 // pred_check_branch
      %2622 = sbr.rel (%p2620) target = $region80
    $region79: #{_lambda_.6} parent=5 // pred_region
      %s2623 = ssub.s32 %s19, 2
      // Predicated region
      $region81: #{_lambda_.6} parent=79 // pred_check
        %p2624 = pneg %p326
      $region82: #{_lambda_.6} parent=79 // pred_check_branch
        %2626 = sbr.rel (%p2624) target = $region84
      $region83: #{_lambda_.6} parent=79 // pred_region
        %p2627 = scmp.lt.s32.totalorder %s25, 1
        %s2628 = scalar_select %p2627, %s25, 1
        %s2629 = smul.addr %s2628, 16
        %s2630 = smul.addr %s2629, 8
        %s2631 = scalar_lea.vmem %s13, %s2630
      $region84: #{_lambda_.6} parent=79 // pred_fallthru
        _
    $region80: #{_lambda_.6} parent=5 // pred_fallthru
      _
  $region6: #{_lambda_.6} parent=0 // loop_footer
    %s23 = sadd.s32 1, %s19
  $region7: #{_lambda_.6} parent=0 // loop_footer_branch
    %18 = sbr.rel target = $region3
  $region8: #{_lambda_.6} parent=0 // loop_exit
    _

// kernel: _lambda_.5
$region0: #{_lambda_.5}
  #allocation0 [shape = 'u32[]', space=smem, size = 0x4, offset = 0x4, fixed_abs, tag = 'smem constant byte address 0x4 - core index']
  #allocation1 [shape = 'u32[144,128]{1,0:T(1,128)}', space=vmem, size = 0x12000, scoped, tag = 'internal scratch']
  #allocation2 [shape = 'f32[10,10,24]{2,1,0:T(8,128)}', space=vmem, size = 0x14000, scoped, tag = 'scratch operand']
  %s0 = inlined_call_operand.vmem [shape: f32[2,8,8,212], index: 0, kind: input, shape index: {}]
  %s1 = inlined_call_operand.vmem [shape: f32[1,212], index: 1, kind: input, shape index: {}, may-alias: {1,7}]
  %s2 = inlined_call_operand.vmem [shape: f32[1,212], index: 2, kind: input, shape index: {}, may-alias: {2,8}]
  %s3 = inlined_call_operand.vmem [shape: f32[212,24], index: 3, kind: input, shape index: {}]
  %s4 = inlined_call_operand.vmem [shape: f32[1,24], index: 4, kind: input, shape index: {}]
  %s5 = inlined_call_operand.vmem [shape: f32[1,24], index: 5, kind: input, shape index: {}]
  %s6 = inlined_call_operand.vmem [shape: f32[3,3,24,6], index: 6, kind: input, shape index: {}]
  %s7 = inlined_call_operand.vmem [shape: f32[1,212], index: 7, kind: input, shape index: {}, may-alias: {1,7}]
  %s8 = inlined_call_operand.vmem [shape: f32[1,212], index: 8, kind: input, shape index: {}, may-alias: {2,8}]
  %s9 = inlined_call_operand.vmem [shape: f32[212,174], index: 9, kind: input, shape index: {}]
  %s10 = inlined_call_operand.vmem [shape: f32[1,6], index: 10, kind: input, shape index: {}]
  %s11 = inlined_call_operand.vmem [shape: f32[1,6], index: 11, kind: input, shape index: {}]
  %s12 = inlined_call_operand.vmem [shape: f32[6,174], index: 12, kind: input, shape index: {}]
  %s13 = inlined_call_operand.vmem [shape: f32[2,8,8,174], index: 13, kind: output, shape index: {}]
  %s14 = sld [smem:[#allocation0]]
  $region85: #{_lambda_.5} parent=0
    _
  %s16 = ssub.s32 1, %s14
  %s17 = scalar_select 0, %s16, %s14
  loop: start=0, step=1, limit=4
  $region2: #{_lambda_.5} parent=0 // loop_pre_header
    _
  $region3: #{_lambda_.5} parent=0 // loop_header
    %s19 = sphi 0, %s23
    %p20 = scmp.ge.s32.totalorder %s19, 4
    %s29 = sphi 0, %s31
    %s32 = sphi 0, %s29
    %s33 = sphi 0, %s32
    %s49 = sphi 0, %s33
    %s53 = sphi 0, %s53
    %s55 = sphi 0, %s53
    %s56 = sphi 0, %s55
    %s70 = sphi 0, %s56
    %s74 = sphi 0, %s74
    %s76 = sphi 0, %s74
    %s77 = sphi 0, %s76
    %s91 = sphi 0, %s77
    %s95 = sphi 0, %s95
    %s97 = sphi 0, %s95
    %s98 = sphi 0, %s97
    %s112 = sphi 0, %s98
    %s116 = sphi 0, %s116
    %s118 = sphi 0, %s116
    %s119 = sphi 0, %s118
    %s133 = sphi 0, %s119
    %s137 = sphi 0, %s137
    %s139 = sphi 0, %s137
    %s140 = sphi 0, %s139
    %s154 = sphi 0, %s140
    %s158 = sphi 0, %s158
    %s160 = sphi 0, %s158
    %s161 = sphi 0, %s160
    %s175 = sphi 0, %s161
    %s179 = sphi 0, %s179
    %s181 = sphi 0, %s179
    %s182 = sphi 0, %s181
    %s196 = sphi 0, %s182
    %s200 = sphi 0, %s200
    %s202 = sphi 0, %s200
    %s203 = sphi 0, %s202
    %s217 = sphi 0, %s203
    %s221 = sphi 0, %s221
    %s223 = sphi 0, %s221
    %s224 = sphi 0, %s223
    %s238 = sphi 0, %s224
    %s242 = sphi 0, %s242
    %s244 = sphi 0, %s242
    %s245 = sphi 0, %s244
    %s259 = sphi 0, %s245
    %s263 = sphi 0, %s263
    %s265 = sphi 0, %s263
    %s266 = sphi 0, %s265
    %s280 = sphi 0, %s266
    %s284 = sphi 0, %s284
    %s286 = sphi 0, %s284
    %s287 = sphi 0, %s286
    %s301 = sphi 0, %s287
    %s307 = sphi 0, %s309
    %s310 = sphi 0, %s307
    %s311 = sphi 0, %s310
    %s327 = sphi 0, %s311
  $region4: #{_lambda_.5} parent=0 // loop_header_branch
    %22 = sbr.rel (%p20) target = $region8
  $region5: #{_lambda_.5} parent=0 // loop_body
    %s24 = ssub.s32 %s19, 1
    %s25 = ssub.s32 %s19, 2
    %s26 = sadd.s32 %s19, 1
    %s27 = ssub.s32 %s19, %s26
    %p28 = scmp.eq.s32.totalorder %s27, 0
    %s30 = sadd.s32 %s29, 1
    %s31 = scalar_select %p28, %s29, %s30
    %p34 = pneg %p28
    %p35 = scmp.eq.s32.totalorder %s19, 1
    %p36 = por %p34, %p35
    %p37 = scmp.ne.s32.totalorder %s29, %s32
    %p38 = scmp.eq.s32.totalorder %s19, 0
    %p39 = por %p37, %p38
    %p40 = scmp.ne.s32.totalorder %s29, %s32
    %p41 = scmp.eq.s32.totalorder %s24, 1
    %p42 = por %p40, %p41
    %p43 = scmp.ne.s32.totalorder %s32, %s33
    %p44 = scmp.eq.s32.totalorder %s24, 0
    %p45 = por %p43, %p44
    %p46 = scmp.ne.s32.totalorder %s32, %s33
    %p47 = scmp.eq.s32.totalorder %s25, 1
    %p48 = por %p46, %p47
    %p50 = scmp.ne.s32.totalorder %s33, %s49
    %p51 = scmp.eq.s32.totalorder %s25, 0
    %p52 = por %p50, %p51
    %s54 = sadd.s32 %s53, 1
    %p57 = scmp.eq.s32.totalorder %s19, 1
    %p58 = scmp.ne.s32.totalorder %s53, %s55
    %p59 = scmp.eq.s32.totalorder %s19, 0
    %p60 = por %p58, %p59
    %p61 = scmp.ne.s32.totalorder %s53, %s55
    %p62 = scmp.eq.s32.totalorder %s24, 1
    %p63 = por %p61, %p62
    %p64 = scmp.ne.s32.totalorder %s55, %s56
    %p65 = scmp.eq.s32.totalorder %s24, 0
    %p66 = por %p64, %p65
    %p67 = scmp.ne.s32.totalorder %s55, %s56
    %p68 = scmp.eq.s32.totalorder %s25, 1
    %p69 = por %p67, %p68
    %p71 = scmp.ne.s32.totalorder %s56, %s70
    %p72 = scmp.eq.s32.totalorder %s25, 0
    %p73 = por %p71, %p72
    %s75 = sadd.s32 %s74, 1
    %p78 = scmp.eq.s32.totalorder %s19, 1
    %p79 = scmp.ne.s32.totalorder %s74, %s76
    %p80 = scmp.eq.s32.totalorder %s19, 0
    %p81 = por %p79, %p80
    %p82 = scmp.ne.s32.totalorder %s74, %s76
    %p83 = scmp.eq.s32.totalorder %s24, 1
    %p84 = por %p82, %p83
    %p85 = scmp.ne.s32.totalorder %s76, %s77
    %p86 = scmp.eq.s32.totalorder %s24, 0
    %p87 = por %p85, %p86
    %p88 = scmp.ne.s32.totalorder %s76, %s77
    %p89 = scmp.eq.s32.totalorder %s25, 1
    %p90 = por %p88, %p89
    %p92 = scmp.ne.s32.totalorder %s77, %s91
    %p93 = scmp.eq.s32.totalorder %s25, 0
    %p94 = por %p92, %p93
    %s96 = sadd.s32 %s95, 1
    %p99 = scmp.eq.s32.totalorder %s19, 1
    %p100 = scmp.ne.s32.totalorder %s95, %s97
    %p101 = scmp.eq.s32.totalorder %s19, 0
    %p102 = por %p100, %p101
    %p103 = scmp.ne.s32.totalorder %s95, %s97
    %p104 = scmp.eq.s32.totalorder %s24, 1
    %p105 = por %p103, %p104
    %p106 = scmp.ne.s32.totalorder %s97, %s98
    %p107 = scmp.eq.s32.totalorder %s24, 0
    %p108 = por %p106, %p107
    %p109 = scmp.ne.s32.totalorder %s97, %s98
    %p110 = scmp.eq.s32.totalorder %s25, 1
    %p111 = por %p109, %p110
    %p113 = scmp.ne.s32.totalorder %s98, %s112
    %p114 = scmp.eq.s32.totalorder %s25, 0
    %p115 = por %p113, %p114
    %s117 = sadd.s32 %s116, 1
    %p120 = scmp.eq.s32.totalorder %s19, 1
    %p121 = scmp.ne.s32.totalorder %s116, %s118
    %p122 = scmp.eq.s32.totalorder %s19, 0
    %p123 = por %p121, %p122
    %p124 = scmp.ne.s32.totalorder %s116, %s118
    %p125 = scmp.eq.s32.totalorder %s24, 1
    %p126 = por %p124, %p125
    %p127 = scmp.ne.s32.totalorder %s118, %s119
    %p128 = scmp.eq.s32.totalorder %s24, 0
    %p129 = por %p127, %p128
    %p130 = scmp.ne.s32.totalorder %s118, %s119
    %p131 = scmp.eq.s32.totalorder %s25, 1
    %p132 = por %p130, %p131
    %p134 = scmp.ne.s32.totalorder %s119, %s133
    %p135 = scmp.eq.s32.totalorder %s25, 0
    %p136 = por %p134, %p135
    %s138 = sadd.s32 %s137, 1
    %p141 = scmp.eq.s32.totalorder %s19, 1
    %p142 = scmp.ne.s32.totalorder %s137, %s139
    %p143 = scmp.eq.s32.totalorder %s19, 0
    %p144 = por %p142, %p143
    %p145 = scmp.ne.s32.totalorder %s137, %s139
    %p146 = scmp.eq.s32.totalorder %s24, 1
    %p147 = por %p145, %p146
    %p148 = scmp.ne.s32.totalorder %s139, %s140
    %p149 = scmp.eq.s32.totalorder %s24, 0
    %p150 = por %p148, %p149
    %p151 = scmp.ne.s32.totalorder %s139, %s140
    %p152 = scmp.eq.s32.totalorder %s25, 1
    %p153 = por %p151, %p152
    %p155 = scmp.ne.s32.totalorder %s140, %s154
    %p156 = scmp.eq.s32.totalorder %s25, 0
    %p157 = por %p155, %p156
    %s159 = sadd.s32 %s158, 1
    %p162 = scmp.eq.s32.totalorder %s19, 1
    %p163 = scmp.ne.s32.totalorder %s158, %s160
    %p164 = scmp.eq.s32.totalorder %s19, 0
    %p165 = por %p163, %p164
    %p166 = scmp.ne.s32.totalorder %s158, %s160
    %p167 = scmp.eq.s32.totalorder %s24, 1
    %p168 = por %p166, %p167
    %p169 = scmp.ne.s32.totalorder %s160, %s161
    %p170 = scmp.eq.s32.totalorder %s24, 0
    %p171 = por %p169, %p170
    %p172 = scmp.ne.s32.totalorder %s160, %s161
    %p173 = scmp.eq.s32.totalorder %s25, 1
    %p174 = por %p172, %p173
    %p176 = scmp.ne.s32.totalorder %s161, %s175
    %p177 = scmp.eq.s32.totalorder %s25, 0
    %p178 = por %p176, %p177
    %s180 = sadd.s32 %s179, 1
    %p183 = scmp.eq.s32.totalorder %s19, 1
    %p184 = scmp.ne.s32.totalorder %s179, %s181
    %p185 = scmp.eq.s32.totalorder %s19, 0
    %p186 = por %p184, %p185
    %p187 = scmp.ne.s32.totalorder %s179, %s181
    %p188 = scmp.eq.s32.totalorder %s24, 1
    %p189 = por %p187, %p188
    %p190 = scmp.ne.s32.totalorder %s181, %s182
    %p191 = scmp.eq.s32.totalorder %s24, 0
    %p192 = por %p190, %p191
    %p193 = scmp.ne.s32.totalorder %s181, %s182
    %p194 = scmp.eq.s32.totalorder %s25, 1
    %p195 = por %p193, %p194
    %p197 = scmp.ne.s32.totalorder %s182, %s196
    %p198 = scmp.eq.s32.totalorder %s25, 0
    %p199 = por %p197, %p198
    %s201 = sadd.s32 %s200, 1
    %p204 = scmp.eq.s32.totalorder %s19, 1
    %p205 = scmp.ne.s32.totalorder %s200, %s202
    %p206 = scmp.eq.s32.totalorder %s19, 0
    %p207 = por %p205, %p206
    %p208 = scmp.ne.s32.totalorder %s200, %s202
    %p209 = scmp.eq.s32.totalorder %s24, 1
    %p210 = por %p208, %p209
    %p211 = scmp.ne.s32.totalorder %s202, %s203
    %p212 = scmp.eq.s32.totalorder %s24, 0
    %p213 = por %p211, %p212
    %p214 = scmp.ne.s32.totalorder %s202, %s203
    %p215 = scmp.eq.s32.totalorder %s25, 1
    %p216 = por %p214, %p215
    %p218 = scmp.ne.s32.totalorder %s203, %s217
    %p219 = scmp.eq.s32.totalorder %s25, 0
    %p220 = por %p218, %p219
    %s222 = sadd.s32 %s221, 1
    %p225 = scmp.eq.s32.totalorder %s19, 1
    %p226 = scmp.ne.s32.totalorder %s221, %s223
    %p227 = scmp.eq.s32.totalorder %s19, 0
    %p228 = por %p226, %p227
    %p229 = scmp.ne.s32.totalorder %s221, %s223
    %p230 = scmp.eq.s32.totalorder %s24, 1
    %p231 = por %p229, %p230
    %p232 = scmp.ne.s32.totalorder %s223, %s224
    %p233 = scmp.eq.s32.totalorder %s24, 0
    %p234 = por %p232, %p233
    %p235 = scmp.ne.s32.totalorder %s223, %s224
    %p236 = scmp.eq.s32.totalorder %s25, 1
    %p237 = por %p235, %p236
    %p239 = scmp.ne.s32.totalorder %s224, %s238
    %p240 = scmp.eq.s32.totalorder %s25, 0
    %p241 = por %p239, %p240
    %s243 = sadd.s32 %s242, 1
    %p246 = scmp.eq.s32.totalorder %s19, 1
    %p247 = scmp.ne.s32.totalorder %s242, %s244
    %p248 = scmp.eq.s32.totalorder %s19, 0
    %p249 = por %p247, %p248
    %p250 = scmp.ne.s32.totalorder %s242, %s244
    %p251 = scmp.eq.s32.totalorder %s24, 1
    %p252 = por %p250, %p251
    %p253 = scmp.ne.s32.totalorder %s244, %s245
    %p254 = scmp.eq.s32.totalorder %s24, 0
    %p255 = por %p253, %p254
    %p256 = scmp.ne.s32.totalorder %s244, %s245
    %p257 = scmp.eq.s32.totalorder %s25, 1
    %p258 = por %p256, %p257
    %p260 = scmp.ne.s32.totalorder %s245, %s259
    %p261 = scmp.eq.s32.totalorder %s25, 0
    %p262 = por %p260, %p261
    %s264 = sadd.s32 %s263, 1
    %p267 = scmp.eq.s32.totalorder %s19, 1
    %p268 = scmp.ne.s32.totalorder %s263, %s265
    %p269 = scmp.eq.s32.totalorder %s19, 0
    %p270 = por %p268, %p269
    %p271 = scmp.ne.s32.totalorder %s263, %s265
    %p272 = scmp.eq.s32.totalorder %s24, 1
    %p273 = por %p271, %p272
    %p274 = scmp.ne.s32.totalorder %s265, %s266
    %p275 = scmp.eq.s32.totalorder %s24, 0
    %p276 = por %p274, %p275
    %p277 = scmp.ne.s32.totalorder %s265, %s266
    %p278 = scmp.eq.s32.totalorder %s25, 1
    %p279 = por %p277, %p278
    %p281 = scmp.ne.s32.totalorder %s266, %s280
    %p282 = scmp.eq.s32.totalorder %s25, 0
    %p283 = por %p281, %p282
    %s285 = sadd.s32 %s284, 1
    %p288 = scmp.eq.s32.totalorder %s19, 1
    %p289 = scmp.ne.s32.totalorder %s284, %s286
    %p290 = scmp.eq.s32.totalorder %s19, 0
    %p291 = por %p289, %p290
    %p292 = scmp.ne.s32.totalorder %s284, %s286
    %p293 = scmp.eq.s32.totalorder %s24, 1
    %p294 = por %p292, %p293
    %p295 = scmp.ne.s32.totalorder %s286, %s287
    %p296 = scmp.eq.s32.totalorder %s24, 0
    %p297 = por %p295, %p296
    %p298 = scmp.ne.s32.totalorder %s286, %s287
    %p299 = scmp.eq.s32.totalorder %s25, 1
    %p300 = por %p298, %p299
    %p302 = scmp.ne.s32.totalorder %s287, %s301
    %p303 = scmp.eq.s32.totalorder %s25, 0
    %p304 = por %p302, %p303
    %s305 = ssub.s32 %s19, %s26
    %p306 = scmp.eq.s32.totalorder %s305, 0
    %s308 = sadd.s32 %s307, 1
    %s309 = scalar_select %p306, %s307, %s308
    %p312 = pneg %p306
    %p313 = scmp.eq.s32.totalorder %s19, 1
    %p314 = por %p312, %p313
    %p315 = scmp.ne.s32.totalorder %s307, %s310
    %p316 = scmp.eq.s32.totalorder %s19, 0
    %p317 = por %p315, %p316
    %p318 = scmp.ne.s32.totalorder %s307, %s310
    %p319 = scmp.eq.s32.totalorder %s24, 1
    %p320 = por %p318, %p319
    %p321 = scmp.ne.s32.totalorder %s310, %s311
    %p322 = scmp.eq.s32.totalorder %s24, 0
    %p323 = por %p321, %p322
    %p324 = scmp.ne.s32.totalorder %s310, %s311
    %p325 = scmp.eq.s32.totalorder %s25, 1
    %p326 = por %p324, %p325
    %p328 = scmp.ne.s32.totalorder %s311, %s327
    %p329 = scmp.eq.s32.totalorder %s25, 0
    %p330 = por %p328, %p329
    %p331 = scmp.le.s32.totalorder 1, %s19
    %p332 = scmp.lt.s32.totalorder %s19, 3
    %p333 = pnand %p331, %p332
    %p334 = pneg %p333
    // Predicated region
    $region9: #{_lambda_.5} parent=5 // pred_check
      _
    $region10: #{_lambda_.5} parent=5 // pred_check_branch
      %336 = sbr.rel (%p333) target = $region12
    $region11: #{_lambda_.5} parent=5 // pred_region
      %s337 = ssub.s32 %s19, 1
      // Predicated region
      $region13: #{_lambda_.5} parent=11 // pred_check
        %p338 = pneg %p66
      $region14: #{_lambda_.5} parent=11 // pred_check_branch
        %340 = sbr.rel (%p338) target = $region16
      $region15: #{_lambda_.5} parent=11 // pred_region
        _
      $region16: #{_lambda_.5} parent=11 // pred_fallthru
        _
      // Predicated region
      $region17: #{_lambda_.5} parent=11 // pred_check
        %p341 = pneg %p87
      $region18: #{_lambda_.5} parent=11 // pred_check_branch
        %343 = sbr.rel (%p341) target = $region20
      $region19: #{_lambda_.5} parent=11 // pred_region
        _
      $region20: #{_lambda_.5} parent=11 // pred_fallthru
        _
      // Predicated region
      $region21: #{_lambda_.5} parent=11 // pred_check
        %p344 = pneg %p108
      $region22: #{_lambda_.5} parent=11 // pred_check_branch
        %346 = sbr.rel (%p344) target = $region24
      $region23: #{_lambda_.5} parent=11 // pred_region
        _
      $region24: #{_lambda_.5} parent=11 // pred_fallthru
        _
      // Predicated region
      $region25: #{_lambda_.5} parent=11 // pred_check
        %p347 = pneg %p129
      $region26: #{_lambda_.5} parent=11 // pred_check_branch
        %349 = sbr.rel (%p347) target = $region28
      $region27: #{_lambda_.5} parent=11 // pred_region
        _
      $region28: #{_lambda_.5} parent=11 // pred_fallthru
        _
      // Predicated region
      $region29: #{_lambda_.5} parent=11 // pred_check
        %p350 = pneg %p150
      $region30: #{_lambda_.5} parent=11 // pred_check_branch
        %352 = sbr.rel (%p350) target = $region32
      $region31: #{_lambda_.5} parent=11 // pred_region
        _
      $region32: #{_lambda_.5} parent=11 // pred_fallthru
        _
      // Predicated region
      $region33: #{_lambda_.5} parent=11 // pred_check
        %p353 = pneg %p171
      $region34: #{_lambda_.5} parent=11 // pred_check_branch
        %355 = sbr.rel (%p353) target = $region36
      $region35: #{_lambda_.5} parent=11 // pred_region
        _
      $region36: #{_lambda_.5} parent=11 // pred_fallthru
        _
      // Predicated region
      $region37: #{_lambda_.5} parent=11 // pred_check
        %p356 = pneg %p192
      $region38: #{_lambda_.5} parent=11 // pred_check_branch
        %358 = sbr.rel (%p356) target = $region40
      $region39: #{_lambda_.5} parent=11 // pred_region
        _
      $region40: #{_lambda_.5} parent=11 // pred_fallthru
        _
      // Predicated region
      $region41: #{_lambda_.5} parent=11 // pred_check
        %p359 = pneg %p213
      $region42: #{_lambda_.5} parent=11 // pred_check_branch
        %361 = sbr.rel (%p359) target = $region44
      $region43: #{_lambda_.5} parent=11 // pred_region
        _
      $region44: #{_lambda_.5} parent=11 // pred_fallthru
        _
      // Predicated region
      $region45: #{_lambda_.5} parent=11 // pred_check
        %p362 = pneg %p234
      $region46: #{_lambda_.5} parent=11 // pred_check_branch
        %364 = sbr.rel (%p362) target = $region48
      $region47: #{_lambda_.5} parent=11 // pred_region
        _
      $region48: #{_lambda_.5} parent=11 // pred_fallthru
        _
      // Predicated region
      $region49: #{_lambda_.5} parent=11 // pred_check
        %p365 = pneg %p255
      $region50: #{_lambda_.5} parent=11 // pred_check_branch
        %367 = sbr.rel (%p365) target = $region52
      $region51: #{_lambda_.5} parent=11 // pred_region
        _
      $region52: #{_lambda_.5} parent=11 // pred_fallthru
        _
      // Predicated region
      $region53: #{_lambda_.5} parent=11 // pred_check
        %p368 = pneg %p276
      $region54: #{_lambda_.5} parent=11 // pred_check_branch
        %370 = sbr.rel (%p368) target = $region56
      $region55: #{_lambda_.5} parent=11 // pred_region
        _
      $region56: #{_lambda_.5} parent=11 // pred_fallthru
        _
      // Predicated region
      $region57: #{_lambda_.5} parent=11 // pred_check
        %p371 = pneg %p297
      $region58: #{_lambda_.5} parent=11 // pred_check_branch
        %373 = sbr.rel (%p371) target = $region60
      $region59: #{_lambda_.5} parent=11 // pred_region
        _
      $region60: #{_lambda_.5} parent=11 // pred_fallthru
        _
    $region12: #{_lambda_.5} parent=5 // pred_fallthru
      _
    %p374 = scmp.lt.s32.totalorder %s19, 2
    // Predicated region
    $region61: #{_lambda_.5} parent=5 // pred_check
      %p375 = pneg %p374
    $region62: #{_lambda_.5} parent=5 // pred_check_branch
      %377 = sbr.rel (%p375) target = $region64
    $region63: #{_lambda_.5} parent=5 // pred_region
      // Predicated region
      $region65: #{_lambda_.5} parent=63 // pred_check
        %p378 = pneg %p39
      $region66: #{_lambda_.5} parent=63 // pred_check_branch
        %380 = sbr.rel (%p378) target = $region68
      $region67: #{_lambda_.5} parent=63 // pred_region
        %p381 = scmp.lt.s32.totalorder %s19, 1
        %s382 = scalar_select %p381, %s19, 1
        %s383 = smul.addr %s382, 16
        %s384 = smul.addr %s383, 8
        %s385 = scalar_lea.vmem %s0, %s384
      $region68: #{_lambda_.5} parent=63 // pred_fallthru
        _
    $region64: #{_lambda_.5} parent=5 // pred_fallthru
      _
    %p386 = scmp.le.s32.totalorder 1, %s19
    %p387 = scmp.lt.s32.totalorder %s19, 3
    %p388 = pnand %p386, %p387
    %p389 = pneg %p388
    // Predicated region
    $region69: #{_lambda_.5} parent=5 // pred_check
      _
    $region70: #{_lambda_.5} parent=5 // pred_check_branch
      %391 = sbr.rel (%p388) target = $region72
    $region71: #{_lambda_.5} parent=5 // pred_region
      %s392 = ssub.s32 %s19, 1
      %p393 = scmp.lt.s32.totalorder %s24, 1
      %s394 = scalar_select %p393, %s24, 1
      %s395 = smul.addr %s394, 16
      %s396 = smul.addr %s395, 8
      %s397 = scalar_lea.vmem %s0, %s396
      %p398 = pneg %p45
      %p399 = pneg %p42
      %p400 = pneg %p66
      %p401 = pneg %p63
      %p402 = pneg %p87
      %p403 = pneg %p84
      %p404 = pneg %p108
      %p405 = pneg %p105
      %p406 = pneg %p129
      %p407 = pneg %p126
      %p408 = pneg %p150
      %p409 = pneg %p147
      %p410 = pneg %p171
      %p411 = pneg %p168
      %p412 = pneg %p192
      %p413 = pneg %p189
      %p414 = pneg %p213
      %p415 = pneg %p210
      %p416 = pneg %p234
      %p417 = pneg %p231
      %p418 = pneg %p255
      %p419 = pneg %p252
      %p420 = pneg %p276
      %p421 = pneg %p273
      %p422 = pneg %p297
      %p423 = pneg %p294
      %p424 = pneg %p323
      %p425 = pneg %p320
      %p426 = scmp.lt.s32.totalorder %s24, 1
      %s427 = scalar_select %p426, %s24, 1
      %s428 = smul.addr %s427, 16
      %s429 = smul.addr %s428, 8
      %s430 = scalar_lea.vmem %s13, %s429
      %p431 = scmp.lt.s32.totalorder %s24, 1
      %s432 = scalar_select %p431, %s24, 1
      %s433 = smul.addr %s432, 16
      %s434 = smul.addr %s433, 8
      %s435 = scalar_lea.vmem %s0, %s434
      %p436 = scmp.lt.s32.totalorder %s24, 1
      %s437 = scalar_select %p436, %s24, 1
      %s438 = smul.addr %s437, 16
      %s439 = smul.addr %s438, 8
      %s440 = scalar_lea.vmem %s13, %s439
      %vm441 = vcmask 195584
      %442 = vst.msk [vmem:[#allocation2] sm:$0xff] %vm441, 0.0
      %vm443 = vcmask 189440
      %444 = vst.msk [vmem:[#allocation2 + $0x8] sm:$0x3] %vm443, 0.0
      %445 = vst.msk [vmem:[#allocation2 + $0x10] sm:$0xff] %vm441, 0.0
      %446 = vst.msk [vmem:[#allocation2 + $0x18] sm:$0x3] %vm443, 0.0
      %447 = vst.msk [vmem:[#allocation2 + $0x20] sm:$0xff] %vm441, 0.0
      %448 = vst.msk [vmem:[#allocation2 + $0x28] sm:$0x3] %vm443, 0.0
      %449 = vst.msk [vmem:[#allocation2 + $0x30] sm:$0xff] %vm441, 0.0
      %450 = vst.msk [vmem:[#allocation2 + $0x38] sm:$0x3] %vm443, 0.0
      %451 = vst.msk [vmem:[#allocation2 + $0x40] sm:$0xff] %vm441, 0.0
      %452 = vst.msk [vmem:[#allocation2 + $0x48] sm:$0x3] %vm443, 0.0
      %453 = vst.msk [vmem:[#allocation2 + $0x50] sm:$0xff] %vm441, 0.0
      %454 = vst.msk [vmem:[#allocation2 + $0x58] sm:$0x3] %vm443, 0.0
      %455 = vst.msk [vmem:[#allocation2 + $0x60] sm:$0xff] %vm441, 0.0
      %456 = vst.msk [vmem:[#allocation2 + $0x68] sm:$0x3] %vm443, 0.0
      %457 = vst.msk [vmem:[#allocation2 + $0x70] sm:$0xff] %vm441, 0.0
      %458 = vst.msk [vmem:[#allocation2 + $0x78] sm:$0x3] %vm443, 0.0
      %459 = vst.msk [vmem:[#allocation2 + $0x80] sm:$0xff] %vm441, 0.0
      %460 = vst.msk [vmem:[#allocation2 + $0x88] sm:$0x3] %vm443, 0.0
      %461 = vst.msk [vmem:[#allocation2 + $0x90] sm:$0xff] %vm441, 0.0
      %462 = vst.msk [vmem:[#allocation2 + $0x98] sm:$0x3] %vm443, 0.0
      %v463 = vld [vmem:[%s435] sm:$0xff]
      %v464 = vld [vmem:[%s435 + $0x8] sm:$0xff]
      %v465 = vld [vmem:[%s435 + $0x10] sm:$0xff]
      %v466 = vld [vmem:[%s435 + $0x18] sm:$0xff]
      %v467 = vld [vmem:[%s435 + $0x20] sm:$0xff]
      %v468 = vld [vmem:[%s435 + $0x28] sm:$0xff]
      %v469 = vld [vmem:[%s435 + $0x30] sm:$0xff]
      %v470 = vld [vmem:[%s435 + $0x38] sm:$0xff]
      %v471 = vld [vmem:[%s435 + $0x40] sm:$0xff]
      %v472 = vld [vmem:[%s435 + $0x48] sm:$0xff]
      %v473 = vld [vmem:[%s435 + $0x50] sm:$0xff]
      %v474 = vld [vmem:[%s435 + $0x58] sm:$0xff]
      %v475 = vld [vmem:[%s435 + $0x60] sm:$0xff]
      %v476 = vld [vmem:[%s435 + $0x68] sm:$0xff]
      %v477 = vld [vmem:[%s435 + $0x70] sm:$0xff]
      %v478 = vld [vmem:[%s435 + $0x78] sm:$0xff]
      %v479 = vld [vmem:[%s1] sm:$0x3]
      %v481 = vlaneseq
      %v482 = vshrl.u32 %v481, 7
      %v483 = vsub.s32 0, %v482
      %v484 = vrot.slane %v479, %v483
      %v485 = vlaneseq
      %v486 = vshrl.u32 %v485, 7
      %v487 = vsub.s32 1, %v486
      %v488 = vrot.slane %v479, %v487
      %v491 = vmul.f32 %v463, %v484
      %v492 = vmul.f32 %v464, %v488
      %v493 = vmul.f32 %v465, %v484
      %v494 = vmul.f32 %v466, %v488
      %v495 = vmul.f32 %v467, %v484
      %v496 = vmul.f32 %v468, %v488
      %v497 = vmul.f32 %v469, %v484
      %v498 = vmul.f32 %v470, %v488
      %v499 = vmul.f32 %v471, %v484
      %v500 = vmul.f32 %v472, %v488
      %v501 = vmul.f32 %v473, %v484
      %v502 = vmul.f32 %v474, %v488
      %v503 = vmul.f32 %v475, %v484
      %v504 = vmul.f32 %v476, %v488
      %v505 = vmul.f32 %v477, %v484
      %v506 = vmul.f32 %v478, %v488
      %v507 = vld [vmem:[%s2] sm:$0x3]
      %v509 = vlaneseq
      %v510 = vshrl.u32 %v509, 7
      %v511 = vsub.s32 0, %v510
      %v512 = vrot.slane %v507, %v511
      %v513 = vlaneseq
      %v514 = vshrl.u32 %v513, 7
      %v515 = vsub.s32 1, %v514
      %v516 = vrot.slane %v507, %v515
      %v519 = vadd.f32 %v491, %v512
      %v520 = vadd.f32 %v492, %v516
      %v521 = vadd.f32 %v493, %v512
      %v522 = vadd.f32 %v494, %v516
      %v523 = vadd.f32 %v495, %v512
      %v524 = vadd.f32 %v496, %v516
      %v525 = vadd.f32 %v497, %v512
      %v526 = vadd.f32 %v498, %v516
      %v527 = vadd.f32 %v499, %v512
      %v528 = vadd.f32 %v500, %v516
      %v529 = vadd.f32 %v501, %v512
      %v530 = vadd.f32 %v502, %v516
      %v531 = vadd.f32 %v503, %v512
      %v532 = vadd.f32 %v504, %v516
      %v533 = vadd.f32 %v505, %v512
      %v534 = vadd.f32 %v506, %v516
      %v535 = vmax.f32 %v519, 0.0
      %v536 = vmax.f32 %v520, 0.0
      %v537 = vmax.f32 %v521, 0.0
      %v538 = vmax.f32 %v522, 0.0
      %v539 = vmax.f32 %v523, 0.0
      %v540 = vmax.f32 %v524, 0.0
      %v541 = vmax.f32 %v525, 0.0
      %v542 = vmax.f32 %v526, 0.0
      %v543 = vmax.f32 %v527, 0.0
      %v544 = vmax.f32 %v528, 0.0
      %v545 = vmax.f32 %v529, 0.0
      %v546 = vmax.f32 %v530, 0.0
      %v547 = vmax.f32 %v531, 0.0
      %v548 = vmax.f32 %v532, 0.0
      %v549 = vmax.f32 %v533, 0.0
      %v550 = vmax.f32 %v534, 0.0
      %v551 = vld [vmem:[%s3] sm:$0xff]
      %v552 = vld [vmem:[%s3 + $0x8] sm:$0xff]
      %v553 = vld [vmem:[%s3 + $0x10] sm:$0xff]
      %v554 = vld [vmem:[%s3 + $0x18] sm:$0xff]
      %v555 = vld [vmem:[%s3 + $0x20] sm:$0xff]
      %v556 = vld [vmem:[%s3 + $0x28] sm:$0xff]
      %v557 = vld [vmem:[%s3 + $0x30] sm:$0xff]
      %v558 = vld [vmem:[%s3 + $0x38] sm:$0xff]
      %v559 = vld [vmem:[%s3 + $0x40] sm:$0xff]
      %v560 = vld [vmem:[%s3 + $0x48] sm:$0xff]
      %v561 = vld [vmem:[%s3 + $0x50] sm:$0xff]
      %v562 = vld [vmem:[%s3 + $0x58] sm:$0xff]
      %v563 = vld [vmem:[%s3 + $0x60] sm:$0xff]
      %v564 = vld [vmem:[%s3 + $0x68] sm:$0xff]
      %v565 = vld [vmem:[%s3 + $0x70] sm:$0xff]
      %v566 = vld [vmem:[%s3 + $0x78] sm:$0xff]
      %v567 = vld [vmem:[%s3 + $0x80] sm:$0xff]
      %v568 = vld [vmem:[%s3 + $0x88] sm:$0xff]
      %v569 = vld [vmem:[%s3 + $0x90] sm:$0xff]
      %v570 = vld [vmem:[%s3 + $0x98] sm:$0xff]
      %v571 = vld [vmem:[%s3 + $0xa0] sm:$0xff]
      %v572 = vld [vmem:[%s3 + $0xa8] sm:$0xff]
      %v573 = vld [vmem:[%s3 + $0xb0] sm:$0xff]
      %v574 = vld [vmem:[%s3 + $0xb8] sm:$0xff]
      %v575 = vld [vmem:[%s3 + $0xc0] sm:$0xff]
      %v576 = vld [vmem:[%s3 + $0xc8] sm:$0xff]
      %v577 = vld [vmem:[%s3 + $0xd0] sm:$0xf]
      %vm578 = vcmask 687104
      %v580 = vsel %vm578, %v536, 0
      %v583 = vsel %vm578, %v538, 0
      %v586 = vsel %vm578, %v540, 0
      %v589 = vsel %vm578, %v542, 0
      %v592 = vsel %vm578, %v544, 0
      %v595 = vsel %vm578, %v546, 0
      %v598 = vsel %vm578, %v548, 0
      %v601 = vsel %vm578, %v550, 0
      %vm603 = vcmask 1043456
      %v605 = vsel %vm603, %v577, 0
      %607 = vmatprep.subr.mxu0 0.0
      %608 = vmatpush1.msra.mxu0 %v566
      %609 = vmatprep.subr.mxu0 0.0
      %610 = vmatpush1.msra.mxu0 %v565
      %611 = vmatprep.subr.mxu0 0.0
      %612 = vmatpush1.msra.mxu0 %v564
      %613 = vmatprep.subr.mxu0 0.0
      %614 = vmatpush1.msra.mxu0 %v563
      %615 = vmatprep.subr.mxu0 0.0
      %616 = vmatpush1.msra.mxu0 %v562
      %617 = vmatprep.subr.mxu0 0.0
      %618 = vmatpush1.msra.mxu0 %v561
      %619 = vmatprep.subr.mxu0 0.0
      %620 = vmatpush1.msra.mxu0 %v560
      %621 = vmatprep.subr.mxu0 0.0
      %622 = vmatpush1.msra.mxu0 %v559
      %623 = vmatprep.subr.mxu0 0.0
      %624 = vmatpush1.msra.mxu0 %v558
      %625 = vmatprep.subr.mxu0 0.0
      %626 = vmatpush1.msra.mxu0 %v557
      %627 = vmatprep.subr.mxu0 0.0
      %628 = vmatpush1.msra.mxu0 %v556
      %629 = vmatprep.subr.mxu0 0.0
      %630 = vmatpush1.msra.mxu0 %v555
      %631 = vmatprep.subr.mxu0 0.0
      %632 = vmatpush1.msra.mxu0 %v554
      %633 = vmatprep.subr.mxu0 0.0
      %634 = vmatpush1.msra.mxu0 %v553
      %635 = vmatprep.subr.mxu0 0.0
      %636 = vmatpush1.msra.mxu0 %v552
      %637 = vmatprep.subr.mxu0 0.0
      %638 = vmatpush1.msra.mxu0 %v551
      %639 = vmatprep.subr.mxu0 0.0
      %640 = vmatpush2.msra.mxu0 0.0
      %641 = vmatprep.subr.mxu0 0.0
      %642 = vmatpush2.msra.mxu0 0.0
      %643 = vmatprep.subr.mxu0 0.0
      %644 = vmatpush2.msra.mxu0 0.0
      %645 = vmatprep.subr.mxu0 0.0
      %646 = vmatpush2.msra.mxu0 0.0
      %647 = vmatprep.subr.mxu0 0.0
      %648 = vmatpush2.msra.mxu0 0.0
      %649 = vmatprep.subr.mxu0 0.0
      %650 = vmatpush2.msra.mxu0 %v605
      %651 = vmatprep.subr.mxu0 0.0
      %652 = vmatpush2.msra.mxu0 %v576
      %653 = vmatprep.subr.mxu0 0.0
      %654 = vmatpush2.msra.mxu0 %v575
      %655 = vmatprep.subr.mxu0 0.0
      %656 = vmatpush2.msra.mxu0 %v574
      %657 = vmatprep.subr.mxu0 0.0
      %658 = vmatpush2.msra.mxu0 %v573
      %659 = vmatprep.subr.mxu0 0.0
      %660 = vmatpush2.msra.mxu0 %v572
      %661 = vmatprep.subr.mxu0 0.0
      %662 = vmatpush2.msra.mxu0 %v571
      %663 = vmatprep.subr.mxu0 0.0
      %664 = vmatpush2.msra.mxu0 %v570
      %665 = vmatprep.subr.mxu0 0.0
      %666 = vmatpush2.msra.mxu0 %v569
      %667 = vmatprep.subr.mxu0 0.0
      %668 = vmatpush2.msra.mxu0 %v568
      %669 = vmatprep.subr.mxu0 0.0
      %670 = vmatpush2.msra.mxu0 %v567
      %671 = vmatprep.mubr.f32.mxu0 %v580
      %672 = vmatmul.mubr.f32.gmra.mxu0 %v535
      %v673 = vpop.f32.mrf.mxu0
      %v674 = vadd.f32 0.0, %v673
      %v675 = vpop.f32.mrf.mxu0
      %676 = vmatprep.mubr.f32.mxu0 %v583
      %677 = vmatmul.mubr.f32.gmra.mxu0 %v537
      %v678 = vpop.f32.mrf.mxu0
      %v679 = vadd.f32 0.0, %v678
      %v680 = vpop.f32.mrf.mxu0
      %681 = vmatprep.mubr.f32.mxu0 %v586
      %682 = vmatmul.mubr.f32.gmra.mxu0 %v539
      %v683 = vpop.f32.mrf.mxu0
      %v684 = vadd.f32 0.0, %v683
      %v685 = vpop.f32.mrf.mxu0
      %686 = vmatprep.mubr.f32.mxu0 %v589
      %687 = vmatmul.mubr.f32.gmra.mxu0 %v541
      %v688 = vpop.f32.mrf.mxu0
      %v689 = vadd.f32 0.0, %v688
      %v690 = vpop.f32.mrf.mxu0
      %691 = vmatprep.mubr.f32.mxu0 %v592
      %692 = vmatmul.mubr.f32.gmra.mxu0 %v543
      %v693 = vpop.f32.mrf.mxu0
      %v694 = vadd.f32 0.0, %v693
      %v695 = vpop.f32.mrf.mxu0
      %696 = vmatprep.mubr.f32.mxu0 %v595
      %697 = vmatmul.mubr.f32.gmra.mxu0 %v545
      %v698 = vpop.f32.mrf.mxu0
      %v699 = vadd.f32 0.0, %v698
      %v700 = vpop.f32.mrf.mxu0
      %701 = vmatprep.mubr.f32.mxu0 %v598
      %702 = vmatmul.mubr.f32.gmra.mxu0 %v547
      %v703 = vpop.f32.mrf.mxu0
      %v704 = vadd.f32 0.0, %v703
      %v705 = vpop.f32.mrf.mxu0
      %706 = vmatprep.mubr.f32.mxu0 %v601
      %707 = vmatmul.mubr.f32.gmra.mxu0 %v549
      %v708 = vpop.f32.mrf.mxu0
      %v709 = vadd.f32 0.0, %v708
      %v710 = vpop.f32.mrf.mxu0
      %711 = vdwg.mxu0
      %v712 = vld [vmem:[%s4] sm:$0x1]
      %v714 = vlaneseq
      %v715 = vshrl.u32 %v714, 7
      %v716 = vsub.s32 0, %v715
      %v717 = vrot.slane %v712, %v716
      %v719 = vmul.f32 %v674, %v717
      %v720 = vmul.f32 %v679, %v717
      %v721 = vmul.f32 %v684, %v717
      %v722 = vmul.f32 %v689, %v717
      %v723 = vmul.f32 %v694, %v717
      %v724 = vmul.f32 %v699, %v717
      %v725 = vmul.f32 %v704, %v717
      %v726 = vmul.f32 %v709, %v717
      %v727 = vld [vmem:[%s5] sm:$0x1]
      %v729 = vlaneseq
      %v730 = vshrl.u32 %v729, 7
      %v731 = vsub.s32 0, %v730
      %v732 = vrot.slane %v727, %v731
      %v734 = vadd.f32 %v719, %v732
      %v735 = vadd.f32 %v720, %v732
      %v736 = vadd.f32 %v721, %v732
      %v737 = vadd.f32 %v722, %v732
      %v738 = vadd.f32 %v723, %v732
      %v739 = vadd.f32 %v724, %v732
      %v740 = vadd.f32 %v725, %v732
      %v741 = vadd.f32 %v726, %v732
      %v742 = vmax.f32 %v734, 0.0
      %v743 = vmax.f32 %v735, 0.0
      %v744 = vmax.f32 %v736, 0.0
      %v745 = vmax.f32 %v737, 0.0
      %v746 = vmax.f32 %v738, 0.0
      %v747 = vmax.f32 %v739, 0.0
      %v748 = vmax.f32 %v740, 0.0
      %v749 = vmax.f32 %v741, 0.0
      %s750 = scalar_lea.vmem [#allocation2], 16
      %751 = vst.msk [vmem:[%s750 + $0x1] sm:$0xff] %vm441, %v742
      %752 = vst.msk [vmem:[%s750 + $0x11] sm:$0xff] %vm441, %v743
      %753 = vst.msk [vmem:[%s750 + $0x21] sm:$0xff] %vm441, %v744
      %754 = vst.msk [vmem:[%s750 + $0x31] sm:$0xff] %vm441, %v745
      %755 = vst.msk [vmem:[%s750 + $0x41] sm:$0xff] %vm441, %v746
      %756 = vst.msk [vmem:[%s750 + $0x51] sm:$0xff] %vm441, %v747
      %757 = vst.msk [vmem:[%s750 + $0x61] sm:$0xff] %vm441, %v748
      %758 = vst.msk [vmem:[%s750 + $0x71] sm:$0xff] %vm441, %v749
      %v759 = vld [vmem:[#allocation2] sm:$0xff]
      %v760 = vld [vmem:[#allocation2 + $0x10] sm:$0xff]
      %v761 = vld [vmem:[#allocation2 + $0x20] sm:$0xff]
      %v762 = vld [vmem:[#allocation2 + $0x30] sm:$0xff]
      %v763 = vld [vmem:[#allocation2 + $0x40] sm:$0xff]
      %v764 = vld [vmem:[#allocation2 + $0x50] sm:$0xff]
      %v765 = vld [vmem:[#allocation2 + $0x60] sm:$0xff]
      %v766 = vld [vmem:[#allocation2 + $0x70] sm:$0xff]
      %v767 = vld [vmem:[#allocation2 + $0x1] sm:$0xff]
      %v768 = vld [vmem:[#allocation2 + $0x11] sm:$0xff]
      %v769 = vld [vmem:[#allocation2 + $0x21] sm:$0xff]
      %v770 = vld [vmem:[#allocation2 + $0x31] sm:$0xff]
      %v771 = vld [vmem:[#allocation2 + $0x41] sm:$0xff]
      %v772 = vld [vmem:[#allocation2 + $0x51] sm:$0xff]
      %v773 = vld [vmem:[#allocation2 + $0x61] sm:$0xff]
      %v774 = vld [vmem:[#allocation2 + $0x71] sm:$0xff]
      %v775 = vld [vmem:[#allocation2 + $0x2] sm:$0xff]
      %v776 = vld [vmem:[#allocation2 + $0x12] sm:$0xff]
      %v777 = vld [vmem:[#allocation2 + $0x22] sm:$0xff]
      %v778 = vld [vmem:[#allocation2 + $0x32] sm:$0xff]
      %v779 = vld [vmem:[#allocation2 + $0x42] sm:$0xff]
      %v780 = vld [vmem:[#allocation2 + $0x52] sm:$0xff]
      %v781 = vld [vmem:[#allocation2 + $0x62] sm:$0xff]
      %v782 = vld [vmem:[#allocation2 + $0x72] sm:$0xff]
      %v783 = vld [vmem:[%s750] sm:$0xff]
      %v784 = vld [vmem:[%s750 + $0x10] sm:$0xff]
      %v785 = vld [vmem:[%s750 + $0x20] sm:$0xff]
      %v786 = vld [vmem:[%s750 + $0x30] sm:$0xff]
      %v787 = vld [vmem:[%s750 + $0x40] sm:$0xff]
      %v788 = vld [vmem:[%s750 + $0x50] sm:$0xff]
      %v789 = vld [vmem:[%s750 + $0x60] sm:$0xff]
      %v790 = vld [vmem:[%s750 + $0x70] sm:$0xff]
      %v791 = vld [vmem:[%s750 + $0x1] sm:$0xff]
      %v792 = vld [vmem:[%s750 + $0x11] sm:$0xff]
      %v793 = vld [vmem:[%s750 + $0x21] sm:$0xff]
      %v794 = vld [vmem:[%s750 + $0x31] sm:$0xff]
      %v795 = vld [vmem:[%s750 + $0x41] sm:$0xff]
      %v796 = vld [vmem:[%s750 + $0x51] sm:$0xff]
      %v797 = vld [vmem:[%s750 + $0x61] sm:$0xff]
      %v798 = vld [vmem:[%s750 + $0x71] sm:$0xff]
      %v799 = vld [vmem:[%s750 + $0x2] sm:$0xff]
      %v800 = vld [vmem:[%s750 + $0x12] sm:$0xff]
      %v801 = vld [vmem:[%s750 + $0x22] sm:$0xff]
      %v802 = vld [vmem:[%s750 + $0x32] sm:$0xff]
      %v803 = vld [vmem:[%s750 + $0x42] sm:$0xff]
      %v804 = vld [vmem:[%s750 + $0x52] sm:$0xff]
      %v805 = vld [vmem:[%s750 + $0x62] sm:$0xff]
      %v806 = vld [vmem:[%s750 + $0x72] sm:$0xff]
      %s807 = scalar_lea.vmem [#allocation2], 32
      %v808 = vld [vmem:[%s807] sm:$0xff]
      %v809 = vld [vmem:[%s807 + $0x10] sm:$0xff]
      %v810 = vld [vmem:[%s807 + $0x20] sm:$0xff]
      %v811 = vld [vmem:[%s807 + $0x30] sm:$0xff]
      %v812 = vld [vmem:[%s807 + $0x40] sm:$0xff]
      %v813 = vld [vmem:[%s807 + $0x50] sm:$0xff]
      %v814 = vld [vmem:[%s807 + $0x60] sm:$0xff]
      %v815 = vld [vmem:[%s807 + $0x70] sm:$0xff]
      %v816 = vld [vmem:[%s807 + $0x1] sm:$0xff]
      %v817 = vld [vmem:[%s807 + $0x11] sm:$0xff]
      %v818 = vld [vmem:[%s807 + $0x21] sm:$0xff]
      %v819 = vld [vmem:[%s807 + $0x31] sm:$0xff]
      %v820 = vld [vmem:[%s807 + $0x41] sm:$0xff]
      %v821 = vld [vmem:[%s807 + $0x51] sm:$0xff]
      %v822 = vld [vmem:[%s807 + $0x61] sm:$0xff]
      %v823 = vld [vmem:[%s807 + $0x71] sm:$0xff]
      %v824 = vld [vmem:[%s807 + $0x2] sm:$0xff]
      %v825 = vld [vmem:[%s807 + $0x12] sm:$0xff]
      %v826 = vld [vmem:[%s807 + $0x22] sm:$0xff]
      %v827 = vld [vmem:[%s807 + $0x32] sm:$0xff]
      %v828 = vld [vmem:[%s807 + $0x42] sm:$0xff]
      %v829 = vld [vmem:[%s807 + $0x52] sm:$0xff]
      %v830 = vld [vmem:[%s807 + $0x62] sm:$0xff]
      %v831 = vld [vmem:[%s807 + $0x72] sm:$0xff]
      %v832 = vld [vmem:[%s6] sm:$0xff]
      %v833 = vld [vmem:[%s6 + $0x8] sm:$0xff]
      %v834 = vld [vmem:[%s6 + $0x10] sm:$0xff]
      %v835 = vld [vmem:[%s6 + $0x18] sm:$0xff]
      %v836 = vld [vmem:[%s6 + $0x20] sm:$0xff]
      %v837 = vld [vmem:[%s6 + $0x28] sm:$0xff]
      %v838 = vld [vmem:[%s6 + $0x30] sm:$0xff]
      %v839 = vld [vmem:[%s6 + $0x38] sm:$0xff]
      %v840 = vld [vmem:[%s6 + $0x40] sm:$0xff]
      %v841 = vld [vmem:[%s6 + $0x48] sm:$0xff]
      %v842 = vld [vmem:[%s6 + $0x50] sm:$0xff]
      %v843 = vld [vmem:[%s6 + $0x58] sm:$0xff]
      %v844 = vld [vmem:[%s6 + $0x60] sm:$0xff]
      %v845 = vld [vmem:[%s6 + $0x68] sm:$0xff]
      %v846 = vld [vmem:[%s6 + $0x70] sm:$0xff]
      %v847 = vld [vmem:[%s6 + $0x78] sm:$0xff]
      %v848 = vld [vmem:[%s6 + $0x80] sm:$0xff]
      %v849 = vld [vmem:[%s6 + $0x88] sm:$0xff]
      %v850 = vld [vmem:[%s6 + $0x90] sm:$0xff]
      %v851 = vld [vmem:[%s6 + $0x98] sm:$0xff]
      %v852 = vld [vmem:[%s6 + $0xa0] sm:$0xff]
      %v853 = vld [vmem:[%s6 + $0xa8] sm:$0xff]
      %v854 = vld [vmem:[%s6 + $0xb0] sm:$0xff]
      %v855 = vld [vmem:[%s6 + $0xb8] sm:$0xff]
      %v856 = vld [vmem:[%s6 + $0xc0] sm:$0xff]
      %v857 = vld [vmem:[%s6 + $0xc8] sm:$0xff]
      %v858 = vld [vmem:[%s6 + $0xd0] sm:$0xff]
      %v860 = vsel %vm441, %v759, 0
      %v863 = vsel %vm441, %v760, 0
      %v866 = vsel %vm441, %v761, 0
      %v869 = vsel %vm441, %v762, 0
      %v872 = vsel %vm441, %v763, 0
      %v875 = vsel %vm441, %v764, 0
      %v878 = vsel %vm441, %v765, 0
      %v881 = vsel %vm441, %v766, 0
      %883 = vmatprep.subr.mxu0 0.0
      %884 = vmatpush1.msra.mxu0 0.0
      %885 = vmatprep.subr.mxu0 0.0
      %886 = vmatpush1.msra.mxu0 0.0
      %887 = vmatprep.subr.mxu0 0.0
      %888 = vmatpush1.msra.mxu0 0.0
      %889 = vmatprep.subr.mxu0 0.0
      %890 = vmatpush1.msra.mxu0 0.0
      %891 = vmatprep.subr.mxu0 0.0
      %892 = vmatpush1.msra.mxu0 0.0
      %893 = vmatprep.subr.mxu0 0.0
      %894 = vmatpush1.msra.mxu0 0.0
      %895 = vmatprep.subr.mxu0 0.0
      %896 = vmatpush1.msra.mxu0 0.0
      %897 = vmatprep.subr.mxu0 0.0
      %898 = vmatpush1.msra.mxu0 0.0
      %899 = vmatprep.subr.mxu0 0.0
      %900 = vmatpush1.msra.mxu0 0.0
      %901 = vmatprep.subr.mxu0 0.0
      %902 = vmatpush1.msra.mxu0 0.0
      %903 = vmatprep.subr.mxu0 0.0
      %904 = vmatpush1.msra.mxu0 0.0
      %905 = vmatprep.subr.mxu0 0.0
      %906 = vmatpush1.msra.mxu0 0.0
      %907 = vmatprep.subr.mxu0 0.0
      %908 = vmatpush1.msra.mxu0 0.0
      %909 = vmatprep.subr.mxu0 0.0
      %910 = vmatpush1.msra.mxu0 %v834
      %911 = vmatprep.subr.mxu0 0.0
      %912 = vmatpush1.msra.mxu0 %v833
      %913 = vmatprep.subr.mxu0 0.0
      %914 = vmatpush1.msra.mxu0 %v832
      %915 = vmatprep.subr.mxu0 0.0
      %916 = vmatpush2.msra.mxu0 0.0
      %917 = vmatprep.subr.mxu0 0.0
      %918 = vmatpush2.msra.mxu0 0.0
      %919 = vmatprep.subr.mxu0 0.0
      %920 = vmatpush2.msra.mxu0 0.0
      %921 = vmatprep.subr.mxu0 0.0
      %922 = vmatpush2.msra.mxu0 0.0
      %923 = vmatprep.subr.mxu0 0.0
      %924 = vmatpush2.msra.mxu0 0.0
      %925 = vmatprep.subr.mxu0 0.0
      %926 = vmatpush2.msra.mxu0 0.0
      %927 = vmatprep.subr.mxu0 0.0
      %928 = vmatpush2.msra.mxu0 0.0
      %929 = vmatprep.subr.mxu0 0.0
      %930 = vmatpush2.msra.mxu0 0.0
      %931 = vmatprep.subr.mxu0 0.0
      %932 = vmatpush2.msra.mxu0 0.0
      %933 = vmatprep.subr.mxu0 0.0
      %934 = vmatpush2.msra.mxu0 0.0
      %935 = vmatprep.subr.mxu0 0.0
      %936 = vmatpush2.msra.mxu0 0.0
      %937 = vmatprep.subr.mxu0 0.0
      %938 = vmatpush2.msra.mxu0 0.0
      %939 = vmatprep.subr.mxu0 0.0
      %940 = vmatpush2.msra.mxu0 0.0
      %941 = vmatprep.subr.mxu0 0.0
      %942 = vmatpush2.msra.mxu0 0.0
      %943 = vmatprep.subr.mxu0 0.0
      %944 = vmatpush2.msra.mxu0 0.0
      %945 = vmatprep.subr.mxu0 0.0
      %946 = vmatpush2.msra.mxu0 0.0
      %947 = vmatprep.mubr.f32.mxu0 0.0
      %948 = vmatmul.mubr.f32.gmra.mxu0 %v860
      %v949 = vpop.f32.mrf.mxu0
      %v950 = vadd.f32 0.0, %v949
      %v951 = vpop.f32.mrf.mxu0
      %952 = vmatprep.mubr.f32.mxu0 0.0
      %953 = vmatmul.mubr.f32.gmra.mxu0 %v863
      %v954 = vpop.f32.mrf.mxu0
      %v955 = vadd.f32 0.0, %v954
      %v956 = vpop.f32.mrf.mxu0
      %957 = vmatprep.mubr.f32.mxu0 0.0
      %958 = vmatmul.mubr.f32.gmra.mxu0 %v866
      %v959 = vpop.f32.mrf.mxu0
      %v960 = vadd.f32 0.0, %v959
      %v961 = vpop.f32.mrf.mxu0
      %962 = vmatprep.mubr.f32.mxu0 0.0
      %963 = vmatmul.mubr.f32.gmra.mxu0 %v869
      %v964 = vpop.f32.mrf.mxu0
      %v965 = vadd.f32 0.0, %v964
      %v966 = vpop.f32.mrf.mxu0
      %967 = vmatprep.mubr.f32.mxu0 0.0
      %968 = vmatmul.mubr.f32.gmra.mxu0 %v872
      %v969 = vpop.f32.mrf.mxu0
      %v970 = vadd.f32 0.0, %v969
      %v971 = vpop.f32.mrf.mxu0
      %972 = vmatprep.mubr.f32.mxu0 0.0
      %973 = vmatmul.mubr.f32.gmra.mxu0 %v875
      %v974 = vpop.f32.mrf.mxu0
      %v975 = vadd.f32 0.0, %v974
      %v976 = vpop.f32.mrf.mxu0
      %977 = vmatprep.mubr.f32.mxu0 0.0
      %978 = vmatmul.mubr.f32.gmra.mxu0 %v878
      %v979 = vpop.f32.mrf.mxu0
      %v980 = vadd.f32 0.0, %v979
      %v981 = vpop.f32.mrf.mxu0
      %982 = vmatprep.mubr.f32.mxu0 0.0
      %983 = vmatmul.mubr.f32.gmra.mxu0 %v881
      %v984 = vpop.f32.mrf.mxu0
      %v985 = vadd.f32 0.0, %v984
      %v986 = vpop.f32.mrf.mxu0
      %987 = vdwg.mxu0
      %v989 = vsel %vm441, %v767, 0
      %v992 = vsel %vm441, %v768, 0
      %v995 = vsel %vm441, %v769, 0
      %v998 = vsel %vm441, %v770, 0
      %v1001 = vsel %vm441, %v771, 0
      %v1004 = vsel %vm441, %v772, 0
      %v1007 = vsel %vm441, %v773, 0
      %v1010 = vsel %vm441, %v774, 0
      %1012 = vmatprep.subr.mxu0 0.0
      %1013 = vmatpush1.msra.mxu0 0.0
      %1014 = vmatprep.subr.mxu0 0.0
      %1015 = vmatpush1.msra.mxu0 0.0
      %1016 = vmatprep.subr.mxu0 0.0
      %1017 = vmatpush1.msra.mxu0 0.0
      %1018 = vmatprep.subr.mxu0 0.0
      %1019 = vmatpush1.msra.mxu0 0.0
      %1020 = vmatprep.subr.mxu0 0.0
      %1021 = vmatpush1.msra.mxu0 0.0
      %1022 = vmatprep.subr.mxu0 0.0
      %1023 = vmatpush1.msra.mxu0 0.0
      %1024 = vmatprep.subr.mxu0 0.0
      %1025 = vmatpush1.msra.mxu0 0.0
      %1026 = vmatprep.subr.mxu0 0.0
      %1027 = vmatpush1.msra.mxu0 0.0
      %1028 = vmatprep.subr.mxu0 0.0
      %1029 = vmatpush1.msra.mxu0 0.0
      %1030 = vmatprep.subr.mxu0 0.0
      %1031 = vmatpush1.msra.mxu0 0.0
      %1032 = vmatprep.subr.mxu0 0.0
      %1033 = vmatpush1.msra.mxu0 0.0
      %1034 = vmatprep.subr.mxu0 0.0
      %1035 = vmatpush1.msra.mxu0 0.0
      %1036 = vmatprep.subr.mxu0 0.0
      %1037 = vmatpush1.msra.mxu0 0.0
      %1038 = vmatprep.subr.mxu0 0.0
      %1039 = vmatpush1.msra.mxu0 %v837
      %1040 = vmatprep.subr.mxu0 0.0
      %1041 = vmatpush1.msra.mxu0 %v836
      %1042 = vmatprep.subr.mxu0 0.0
      %1043 = vmatpush1.msra.mxu0 %v835
      %1044 = vmatprep.subr.mxu0 0.0
      %1045 = vmatpush2.msra.mxu0 0.0
      %1046 = vmatprep.subr.mxu0 0.0
      %1047 = vmatpush2.msra.mxu0 0.0
      %1048 = vmatprep.subr.mxu0 0.0
      %1049 = vmatpush2.msra.mxu0 0.0
      %1050 = vmatprep.subr.mxu0 0.0
      %1051 = vmatpush2.msra.mxu0 0.0
      %1052 = vmatprep.subr.mxu0 0.0
      %1053 = vmatpush2.msra.mxu0 0.0
      %1054 = vmatprep.subr.mxu0 0.0
      %1055 = vmatpush2.msra.mxu0 0.0
      %1056 = vmatprep.subr.mxu0 0.0
      %1057 = vmatpush2.msra.mxu0 0.0
      %1058 = vmatprep.subr.mxu0 0.0
      %1059 = vmatpush2.msra.mxu0 0.0
      %1060 = vmatprep.subr.mxu0 0.0
      %1061 = vmatpush2.msra.mxu0 0.0
      %1062 = vmatprep.subr.mxu0 0.0
      %1063 = vmatpush2.msra.mxu0 0.0
      %1064 = vmatprep.subr.mxu0 0.0
      %1065 = vmatpush2.msra.mxu0 0.0
      %1066 = vmatprep.subr.mxu0 0.0
      %1067 = vmatpush2.msra.mxu0 0.0
      %1068 = vmatprep.subr.mxu0 0.0
      %1069 = vmatpush2.msra.mxu0 0.0
      %1070 = vmatprep.subr.mxu0 0.0
      %1071 = vmatpush2.msra.mxu0 0.0
      %1072 = vmatprep.subr.mxu0 0.0
      %1073 = vmatpush2.msra.mxu0 0.0
      %1074 = vmatprep.subr.mxu0 0.0
      %1075 = vmatpush2.msra.mxu0 0.0
      %1076 = vmatprep.mubr.f32.mxu0 0.0
      %1077 = vmatmul.mubr.f32.gmra.mxu0 %v989
      %v1078 = vpop.f32.mrf.mxu0
      %v1079 = vadd.f32 0.0, %v1078
      %v1080 = vpop.f32.mrf.mxu0
      %1081 = vmatprep.mubr.f32.mxu0 0.0
      %1082 = vmatmul.mubr.f32.gmra.mxu0 %v992
      %v1083 = vpop.f32.mrf.mxu0
      %v1084 = vadd.f32 0.0, %v1083
      %v1085 = vpop.f32.mrf.mxu0
      %1086 = vmatprep.mubr.f32.mxu0 0.0
      %1087 = vmatmul.mubr.f32.gmra.mxu0 %v995
      %v1088 = vpop.f32.mrf.mxu0
      %v1089 = vadd.f32 0.0, %v1088
      %v1090 = vpop.f32.mrf.mxu0
      %1091 = vmatprep.mubr.f32.mxu0 0.0
      %1092 = vmatmul.mubr.f32.gmra.mxu0 %v998
      %v1093 = vpop.f32.mrf.mxu0
      %v1094 = vadd.f32 0.0, %v1093
      %v1095 = vpop.f32.mrf.mxu0
      %1096 = vmatprep.mubr.f32.mxu0 0.0
      %1097 = vmatmul.mubr.f32.gmra.mxu0 %v1001
      %v1098 = vpop.f32.mrf.mxu0
      %v1099 = vadd.f32 0.0, %v1098
      %v1100 = vpop.f32.mrf.mxu0
      %1101 = vmatprep.mubr.f32.mxu0 0.0
      %1102 = vmatmul.mubr.f32.gmra.mxu0 %v1004
      %v1103 = vpop.f32.mrf.mxu0
      %v1104 = vadd.f32 0.0, %v1103
      %v1105 = vpop.f32.mrf.mxu0
      %1106 = vmatprep.mubr.f32.mxu0 0.0
      %1107 = vmatmul.mubr.f32.gmra.mxu0 %v1007
      %v1108 = vpop.f32.mrf.mxu0
      %v1109 = vadd.f32 0.0, %v1108
      %v1110 = vpop.f32.mrf.mxu0
      %1111 = vmatprep.mubr.f32.mxu0 0.0
      %1112 = vmatmul.mubr.f32.gmra.mxu0 %v1010
      %v1113 = vpop.f32.mrf.mxu0
      %v1114 = vadd.f32 0.0, %v1113
      %v1115 = vpop.f32.mrf.mxu0
      %1116 = vdwg.mxu0
      %v1118 = vsel %vm441, %v775, 0
      %v1121 = vsel %vm441, %v776, 0
      %v1124 = vsel %vm441, %v777, 0
      %v1127 = vsel %vm441, %v778, 0
      %v1130 = vsel %vm441, %v779, 0
      %v1133 = vsel %vm441, %v780, 0
      %v1136 = vsel %vm441, %v781, 0
      %v1139 = vsel %vm441, %v782, 0
      %1141 = vmatprep.subr.mxu0 0.0
      %1142 = vmatpush1.msra.mxu0 0.0
      %1143 = vmatprep.subr.mxu0 0.0
      %1144 = vmatpush1.msra.mxu0 0.0
      %1145 = vmatprep.subr.mxu0 0.0
      %1146 = vmatpush1.msra.mxu0 0.0
      %1147 = vmatprep.subr.mxu0 0.0
      %1148 = vmatpush1.msra.mxu0 0.0
      %1149 = vmatprep.subr.mxu0 0.0
      %1150 = vmatpush1.msra.mxu0 0.0
      %1151 = vmatprep.subr.mxu0 0.0
      %1152 = vmatpush1.msra.mxu0 0.0
      %1153 = vmatprep.subr.mxu0 0.0
      %1154 = vmatpush1.msra.mxu0 0.0
      %1155 = vmatprep.subr.mxu0 0.0
      %1156 = vmatpush1.msra.mxu0 0.0
      %1157 = vmatprep.subr.mxu0 0.0
      %1158 = vmatpush1.msra.mxu0 0.0
      %1159 = vmatprep.subr.mxu0 0.0
      %1160 = vmatpush1.msra.mxu0 0.0
      %1161 = vmatprep.subr.mxu0 0.0
      %1162 = vmatpush1.msra.mxu0 0.0
      %1163 = vmatprep.subr.mxu0 0.0
      %1164 = vmatpush1.msra.mxu0 0.0
      %1165 = vmatprep.subr.mxu0 0.0
      %1166 = vmatpush1.msra.mxu0 0.0
      %1167 = vmatprep.subr.mxu0 0.0
      %1168 = vmatpush1.msra.mxu0 %v840
      %1169 = vmatprep.subr.mxu0 0.0
      %1170 = vmatpush1.msra.mxu0 %v839
      %1171 = vmatprep.subr.mxu0 0.0
      %1172 = vmatpush1.msra.mxu0 %v838
      %1173 = vmatprep.subr.mxu0 0.0
      %1174 = vmatpush2.msra.mxu0 0.0
      %1175 = vmatprep.subr.mxu0 0.0
      %1176 = vmatpush2.msra.mxu0 0.0
      %1177 = vmatprep.subr.mxu0 0.0
      %1178 = vmatpush2.msra.mxu0 0.0
      %1179 = vmatprep.subr.mxu0 0.0
      %1180 = vmatpush2.msra.mxu0 0.0
      %1181 = vmatprep.subr.mxu0 0.0
      %1182 = vmatpush2.msra.mxu0 0.0
      %1183 = vmatprep.subr.mxu0 0.0
      %1184 = vmatpush2.msra.mxu0 0.0
      %1185 = vmatprep.subr.mxu0 0.0
      %1186 = vmatpush2.msra.mxu0 0.0
      %1187 = vmatprep.subr.mxu0 0.0
      %1188 = vmatpush2.msra.mxu0 0.0
      %1189 = vmatprep.subr.mxu0 0.0
      %1190 = vmatpush2.msra.mxu0 0.0
      %1191 = vmatprep.subr.mxu0 0.0
      %1192 = vmatpush2.msra.mxu0 0.0
      %1193 = vmatprep.subr.mxu0 0.0
      %1194 = vmatpush2.msra.mxu0 0.0
      %1195 = vmatprep.subr.mxu0 0.0
      %1196 = vmatpush2.msra.mxu0 0.0
      %1197 = vmatprep.subr.mxu0 0.0
      %1198 = vmatpush2.msra.mxu0 0.0
      %1199 = vmatprep.subr.mxu0 0.0
      %1200 = vmatpush2.msra.mxu0 0.0
      %1201 = vmatprep.subr.mxu0 0.0
      %1202 = vmatpush2.msra.mxu0 0.0
      %1203 = vmatprep.subr.mxu0 0.0
      %1204 = vmatpush2.msra.mxu0 0.0
      %1205 = vmatprep.mubr.f32.mxu0 0.0
      %1206 = vmatmul.mubr.f32.gmra.mxu0 %v1118
      %v1207 = vpop.f32.mrf.mxu0
      %v1208 = vadd.f32 0.0, %v1207
      %v1209 = vpop.f32.mrf.mxu0
      %1210 = vmatprep.mubr.f32.mxu0 0.0
      %1211 = vmatmul.mubr.f32.gmra.mxu0 %v1121
      %v1212 = vpop.f32.mrf.mxu0
      %v1213 = vadd.f32 0.0, %v1212
      %v1214 = vpop.f32.mrf.mxu0
      %1215 = vmatprep.mubr.f32.mxu0 0.0
      %1216 = vmatmul.mubr.f32.gmra.mxu0 %v1124
      %v1217 = vpop.f32.mrf.mxu0
      %v1218 = vadd.f32 0.0, %v1217
      %v1219 = vpop.f32.mrf.mxu0
      %1220 = vmatprep.mubr.f32.mxu0 0.0
      %1221 = vmatmul.mubr.f32.gmra.mxu0 %v1127
      %v1222 = vpop.f32.mrf.mxu0
      %v1223 = vadd.f32 0.0, %v1222
      %v1224 = vpop.f32.mrf.mxu0
      %1225 = vmatprep.mubr.f32.mxu0 0.0
      %1226 = vmatmul.mubr.f32.gmra.mxu0 %v1130
      %v1227 = vpop.f32.mrf.mxu0
      %v1228 = vadd.f32 0.0, %v1227
      %v1229 = vpop.f32.mrf.mxu0
      %1230 = vmatprep.mubr.f32.mxu0 0.0
      %1231 = vmatmul.mubr.f32.gmra.mxu0 %v1133
      %v1232 = vpop.f32.mrf.mxu0
      %v1233 = vadd.f32 0.0, %v1232
      %v1234 = vpop.f32.mrf.mxu0
      %1235 = vmatprep.mubr.f32.mxu0 0.0
      %1236 = vmatmul.mubr.f32.gmra.mxu0 %v1136
      %v1237 = vpop.f32.mrf.mxu0
      %v1238 = vadd.f32 0.0, %v1237
      %v1239 = vpop.f32.mrf.mxu0
      %1240 = vmatprep.mubr.f32.mxu0 0.0
      %1241 = vmatmul.mubr.f32.gmra.mxu0 %v1139
      %v1242 = vpop.f32.mrf.mxu0
      %v1243 = vadd.f32 0.0, %v1242
      %v1244 = vpop.f32.mrf.mxu0
      %1245 = vdwg.mxu0
      %v1247 = vsel %vm441, %v783, 0
      %v1250 = vsel %vm441, %v784, 0
      %v1253 = vsel %vm441, %v785, 0
      %v1256 = vsel %vm441, %v786, 0
      %v1259 = vsel %vm441, %v787, 0
      %v1262 = vsel %vm441, %v788, 0
      %v1265 = vsel %vm441, %v789, 0
      %v1268 = vsel %vm441, %v790, 0
      %1270 = vmatprep.subr.mxu0 0.0
      %1271 = vmatpush1.msra.mxu0 0.0
      %1272 = vmatprep.subr.mxu0 0.0
      %1273 = vmatpush1.msra.mxu0 0.0
      %1274 = vmatprep.subr.mxu0 0.0
      %1275 = vmatpush1.msra.mxu0 0.0
      %1276 = vmatprep.subr.mxu0 0.0
      %1277 = vmatpush1.msra.mxu0 0.0
      %1278 = vmatprep.subr.mxu0 0.0
      %1279 = vmatpush1.msra.mxu0 0.0
      %1280 = vmatprep.subr.mxu0 0.0
      %1281 = vmatpush1.msra.mxu0 0.0
      %1282 = vmatprep.subr.mxu0 0.0
      %1283 = vmatpush1.msra.mxu0 0.0
      %1284 = vmatprep.subr.mxu0 0.0
      %1285 = vmatpush1.msra.mxu0 0.0
      %1286 = vmatprep.subr.mxu0 0.0
      %1287 = vmatpush1.msra.mxu0 0.0
      %1288 = vmatprep.subr.mxu0 0.0
      %1289 = vmatpush1.msra.mxu0 0.0
      %1290 = vmatprep.subr.mxu0 0.0
      %1291 = vmatpush1.msra.mxu0 0.0
      %1292 = vmatprep.subr.mxu0 0.0
      %1293 = vmatpush1.msra.mxu0 0.0
      %1294 = vmatprep.subr.mxu0 0.0
      %1295 = vmatpush1.msra.mxu0 0.0
      %1296 = vmatprep.subr.mxu0 0.0
      %1297 = vmatpush1.msra.mxu0 %v843
      %1298 = vmatprep.subr.mxu0 0.0
      %1299 = vmatpush1.msra.mxu0 %v842
      %1300 = vmatprep.subr.mxu0 0.0
      %1301 = vmatpush1.msra.mxu0 %v841
      %1302 = vmatprep.subr.mxu0 0.0
      %1303 = vmatpush2.msra.mxu0 0.0
      %1304 = vmatprep.subr.mxu0 0.0
      %1305 = vmatpush2.msra.mxu0 0.0
      %1306 = vmatprep.subr.mxu0 0.0
      %1307 = vmatpush2.msra.mxu0 0.0
      %1308 = vmatprep.subr.mxu0 0.0
      %1309 = vmatpush2.msra.mxu0 0.0
      %1310 = vmatprep.subr.mxu0 0.0
      %1311 = vmatpush2.msra.mxu0 0.0
      %1312 = vmatprep.subr.mxu0 0.0
      %1313 = vmatpush2.msra.mxu0 0.0
      %1314 = vmatprep.subr.mxu0 0.0
      %1315 = vmatpush2.msra.mxu0 0.0
      %1316 = vmatprep.subr.mxu0 0.0
      %1317 = vmatpush2.msra.mxu0 0.0
      %1318 = vmatprep.subr.mxu0 0.0
      %1319 = vmatpush2.msra.mxu0 0.0
      %1320 = vmatprep.subr.mxu0 0.0
      %1321 = vmatpush2.msra.mxu0 0.0
      %1322 = vmatprep.subr.mxu0 0.0
      %1323 = vmatpush2.msra.mxu0 0.0
      %1324 = vmatprep.subr.mxu0 0.0
      %1325 = vmatpush2.msra.mxu0 0.0
      %1326 = vmatprep.subr.mxu0 0.0
      %1327 = vmatpush2.msra.mxu0 0.0
      %1328 = vmatprep.subr.mxu0 0.0
      %1329 = vmatpush2.msra.mxu0 0.0
      %1330 = vmatprep.subr.mxu0 0.0
      %1331 = vmatpush2.msra.mxu0 0.0
      %1332 = vmatprep.subr.mxu0 0.0
      %1333 = vmatpush2.msra.mxu0 0.0
      %1334 = vmatprep.mubr.f32.mxu0 0.0
      %1335 = vmatmul.mubr.f32.gmra.mxu0 %v1247
      %v1336 = vpop.f32.mrf.mxu0
      %v1337 = vadd.f32 0.0, %v1336
      %v1338 = vpop.f32.mrf.mxu0
      %1339 = vmatprep.mubr.f32.mxu0 0.0
      %1340 = vmatmul.mubr.f32.gmra.mxu0 %v1250
      %v1341 = vpop.f32.mrf.mxu0
      %v1342 = vadd.f32 0.0, %v1341
      %v1343 = vpop.f32.mrf.mxu0
      %1344 = vmatprep.mubr.f32.mxu0 0.0
      %1345 = vmatmul.mubr.f32.gmra.mxu0 %v1253
      %v1346 = vpop.f32.mrf.mxu0
      %v1347 = vadd.f32 0.0, %v1346
      %v1348 = vpop.f32.mrf.mxu0
      %1349 = vmatprep.mubr.f32.mxu0 0.0
      %1350 = vmatmul.mubr.f32.gmra.mxu0 %v1256
      %v1351 = vpop.f32.mrf.mxu0
      %v1352 = vadd.f32 0.0, %v1351
      %v1353 = vpop.f32.mrf.mxu0
      %1354 = vmatprep.mubr.f32.mxu0 0.0
      %1355 = vmatmul.mubr.f32.gmra.mxu0 %v1259
      %v1356 = vpop.f32.mrf.mxu0
      %v1357 = vadd.f32 0.0, %v1356
      %v1358 = vpop.f32.mrf.mxu0
      %1359 = vmatprep.mubr.f32.mxu0 0.0
      %1360 = vmatmul.mubr.f32.gmra.mxu0 %v1262
      %v1361 = vpop.f32.mrf.mxu0
      %v1362 = vadd.f32 0.0, %v1361
      %v1363 = vpop.f32.mrf.mxu0
      %1364 = vmatprep.mubr.f32.mxu0 0.0
      %1365 = vmatmul.mubr.f32.gmra.mxu0 %v1265
      %v1366 = vpop.f32.mrf.mxu0
      %v1367 = vadd.f32 0.0, %v1366
      %v1368 = vpop.f32.mrf.mxu0
      %1369 = vmatprep.mubr.f32.mxu0 0.0
      %1370 = vmatmul.mubr.f32.gmra.mxu0 %v1268
      %v1371 = vpop.f32.mrf.mxu0
      %v1372 = vadd.f32 0.0, %v1371
      %v1373 = vpop.f32.mrf.mxu0
      %1374 = vdwg.mxu0
      %v1376 = vsel %vm441, %v791, 0
      %v1379 = vsel %vm441, %v792, 0
      %v1382 = vsel %vm441, %v793, 0
      %v1385 = vsel %vm441, %v794, 0
      %v1388 = vsel %vm441, %v795, 0
      %v1391 = vsel %vm441, %v796, 0
      %v1394 = vsel %vm441, %v797, 0
      %v1397 = vsel %vm441, %v798, 0
      %1399 = vmatprep.subr.mxu0 0.0
      %1400 = vmatpush1.msra.mxu0 0.0
      %1401 = vmatprep.subr.mxu0 0.0
      %1402 = vmatpush1.msra.mxu0 0.0
      %1403 = vmatprep.subr.mxu0 0.0
      %1404 = vmatpush1.msra.mxu0 0.0
      %1405 = vmatprep.subr.mxu0 0.0
      %1406 = vmatpush1.msra.mxu0 0.0
      %1407 = vmatprep.subr.mxu0 0.0
      %1408 = vmatpush1.msra.mxu0 0.0
      %1409 = vmatprep.subr.mxu0 0.0
      %1410 = vmatpush1.msra.mxu0 0.0
      %1411 = vmatprep.subr.mxu0 0.0
      %1412 = vmatpush1.msra.mxu0 0.0
      %1413 = vmatprep.subr.mxu0 0.0
      %1414 = vmatpush1.msra.mxu0 0.0
      %1415 = vmatprep.subr.mxu0 0.0
      %1416 = vmatpush1.msra.mxu0 0.0
      %1417 = vmatprep.subr.mxu0 0.0
      %1418 = vmatpush1.msra.mxu0 0.0
      %1419 = vmatprep.subr.mxu0 0.0
      %1420 = vmatpush1.msra.mxu0 0.0
      %1421 = vmatprep.subr.mxu0 0.0
      %1422 = vmatpush1.msra.mxu0 0.0
      %1423 = vmatprep.subr.mxu0 0.0
      %1424 = vmatpush1.msra.mxu0 0.0
      %1425 = vmatprep.subr.mxu0 0.0
      %1426 = vmatpush1.msra.mxu0 %v846
      %1427 = vmatprep.subr.mxu0 0.0
      %1428 = vmatpush1.msra.mxu0 %v845
      %1429 = vmatprep.subr.mxu0 0.0
      %1430 = vmatpush1.msra.mxu0 %v844
      %1431 = vmatprep.subr.mxu0 0.0
      %1432 = vmatpush2.msra.mxu0 0.0
      %1433 = vmatprep.subr.mxu0 0.0
      %1434 = vmatpush2.msra.mxu0 0.0
      %1435 = vmatprep.subr.mxu0 0.0
      %1436 = vmatpush2.msra.mxu0 0.0
      %1437 = vmatprep.subr.mxu0 0.0
      %1438 = vmatpush2.msra.mxu0 0.0
      %1439 = vmatprep.subr.mxu0 0.0
      %1440 = vmatpush2.msra.mxu0 0.0
      %1441 = vmatprep.subr.mxu0 0.0
      %1442 = vmatpush2.msra.mxu0 0.0
      %1443 = vmatprep.subr.mxu0 0.0
      %1444 = vmatpush2.msra.mxu0 0.0
      %1445 = vmatprep.subr.mxu0 0.0
      %1446 = vmatpush2.msra.mxu0 0.0
      %1447 = vmatprep.subr.mxu0 0.0
      %1448 = vmatpush2.msra.mxu0 0.0
      %1449 = vmatprep.subr.mxu0 0.0
      %1450 = vmatpush2.msra.mxu0 0.0
      %1451 = vmatprep.subr.mxu0 0.0
      %1452 = vmatpush2.msra.mxu0 0.0
      %1453 = vmatprep.subr.mxu0 0.0
      %1454 = vmatpush2.msra.mxu0 0.0
      %1455 = vmatprep.subr.mxu0 0.0
      %1456 = vmatpush2.msra.mxu0 0.0
      %1457 = vmatprep.subr.mxu0 0.0
      %1458 = vmatpush2.msra.mxu0 0.0
      %1459 = vmatprep.subr.mxu0 0.0
      %1460 = vmatpush2.msra.mxu0 0.0
      %1461 = vmatprep.subr.mxu0 0.0
      %1462 = vmatpush2.msra.mxu0 0.0
      %1463 = vmatprep.mubr.f32.mxu0 0.0
      %1464 = vmatmul.mubr.f32.gmra.mxu0 %v1376
      %v1465 = vpop.f32.mrf.mxu0
      %v1466 = vadd.f32 0.0, %v1465
      %v1467 = vpop.f32.mrf.mxu0
      %1468 = vmatprep.mubr.f32.mxu0 0.0
      %1469 = vmatmul.mubr.f32.gmra.mxu0 %v1379
      %v1470 = vpop.f32.mrf.mxu0
      %v1471 = vadd.f32 0.0, %v1470
      %v1472 = vpop.f32.mrf.mxu0
      %1473 = vmatprep.mubr.f32.mxu0 0.0
      %1474 = vmatmul.mubr.f32.gmra.mxu0 %v1382
      %v1475 = vpop.f32.mrf.mxu0
      %v1476 = vadd.f32 0.0, %v1475
      %v1477 = vpop.f32.mrf.mxu0
      %1478 = vmatprep.mubr.f32.mxu0 0.0
      %1479 = vmatmul.mubr.f32.gmra.mxu0 %v1385
      %v1480 = vpop.f32.mrf.mxu0
      %v1481 = vadd.f32 0.0, %v1480
      %v1482 = vpop.f32.mrf.mxu0
      %1483 = vmatprep.mubr.f32.mxu0 0.0
      %1484 = vmatmul.mubr.f32.gmra.mxu0 %v1388
      %v1485 = vpop.f32.mrf.mxu0
      %v1486 = vadd.f32 0.0, %v1485
      %v1487 = vpop.f32.mrf.mxu0
      %1488 = vmatprep.mubr.f32.mxu0 0.0
      %1489 = vmatmul.mubr.f32.gmra.mxu0 %v1391
      %v1490 = vpop.f32.mrf.mxu0
      %v1491 = vadd.f32 0.0, %v1490
      %v1492 = vpop.f32.mrf.mxu0
      %1493 = vmatprep.mubr.f32.mxu0 0.0
      %1494 = vmatmul.mubr.f32.gmra.mxu0 %v1394
      %v1495 = vpop.f32.mrf.mxu0
      %v1496 = vadd.f32 0.0, %v1495
      %v1497 = vpop.f32.mrf.mxu0
      %1498 = vmatprep.mubr.f32.mxu0 0.0
      %1499 = vmatmul.mubr.f32.gmra.mxu0 %v1397
      %v1500 = vpop.f32.mrf.mxu0
      %v1501 = vadd.f32 0.0, %v1500
      %v1502 = vpop.f32.mrf.mxu0
      %1503 = vdwg.mxu0
      %v1505 = vsel %vm441, %v799, 0
      %v1508 = vsel %vm441, %v800, 0
      %v1511 = vsel %vm441, %v801, 0
      %v1514 = vsel %vm441, %v802, 0
      %v1517 = vsel %vm441, %v803, 0
      %v1520 = vsel %vm441, %v804, 0
      %v1523 = vsel %vm441, %v805, 0
      %v1526 = vsel %vm441, %v806, 0
      %1528 = vmatprep.subr.mxu0 0.0
      %1529 = vmatpush1.msra.mxu0 0.0
      %1530 = vmatprep.subr.mxu0 0.0
      %1531 = vmatpush1.msra.mxu0 0.0
      %1532 = vmatprep.subr.mxu0 0.0
      %1533 = vmatpush1.msra.mxu0 0.0
      %1534 = vmatprep.subr.mxu0 0.0
      %1535 = vmatpush1.msra.mxu0 0.0
      %1536 = vmatprep.subr.mxu0 0.0
      %1537 = vmatpush1.msra.mxu0 0.0
      %1538 = vmatprep.subr.mxu0 0.0
      %1539 = vmatpush1.msra.mxu0 0.0
      %1540 = vmatprep.subr.mxu0 0.0
      %1541 = vmatpush1.msra.mxu0 0.0
      %1542 = vmatprep.subr.mxu0 0.0
      %1543 = vmatpush1.msra.mxu0 0.0
      %1544 = vmatprep.subr.mxu0 0.0
      %1545 = vmatpush1.msra.mxu0 0.0
      %1546 = vmatprep.subr.mxu0 0.0
      %1547 = vmatpush1.msra.mxu0 0.0
      %1548 = vmatprep.subr.mxu0 0.0
      %1549 = vmatpush1.msra.mxu0 0.0
      %1550 = vmatprep.subr.mxu0 0.0
      %1551 = vmatpush1.msra.mxu0 0.0
      %1552 = vmatprep.subr.mxu0 0.0
      %1553 = vmatpush1.msra.mxu0 0.0
      %1554 = vmatprep.subr.mxu0 0.0
      %1555 = vmatpush1.msra.mxu0 %v849
      %1556 = vmatprep.subr.mxu0 0.0
      %1557 = vmatpush1.msra.mxu0 %v848
      %1558 = vmatprep.subr.mxu0 0.0
      %1559 = vmatpush1.msra.mxu0 %v847
      %1560 = vmatprep.subr.mxu0 0.0
      %1561 = vmatpush2.msra.mxu0 0.0
      %1562 = vmatprep.subr.mxu0 0.0
      %1563 = vmatpush2.msra.mxu0 0.0
      %1564 = vmatprep.subr.mxu0 0.0
      %1565 = vmatpush2.msra.mxu0 0.0
      %1566 = vmatprep.subr.mxu0 0.0
      %1567 = vmatpush2.msra.mxu0 0.0
      %1568 = vmatprep.subr.mxu0 0.0
      %1569 = vmatpush2.msra.mxu0 0.0
      %1570 = vmatprep.subr.mxu0 0.0
      %1571 = vmatpush2.msra.mxu0 0.0
      %1572 = vmatprep.subr.mxu0 0.0
      %1573 = vmatpush2.msra.mxu0 0.0
      %1574 = vmatprep.subr.mxu0 0.0
      %1575 = vmatpush2.msra.mxu0 0.0
      %1576 = vmatprep.subr.mxu0 0.0
      %1577 = vmatpush2.msra.mxu0 0.0
      %1578 = vmatprep.subr.mxu0 0.0
      %1579 = vmatpush2.msra.mxu0 0.0
      %1580 = vmatprep.subr.mxu0 0.0
      %1581 = vmatpush2.msra.mxu0 0.0
      %1582 = vmatprep.subr.mxu0 0.0
      %1583 = vmatpush2.msra.mxu0 0.0
      %1584 = vmatprep.subr.mxu0 0.0
      %1585 = vmatpush2.msra.mxu0 0.0
      %1586 = vmatprep.subr.mxu0 0.0
      %1587 = vmatpush2.msra.mxu0 0.0
      %1588 = vmatprep.subr.mxu0 0.0
      %1589 = vmatpush2.msra.mxu0 0.0
      %1590 = vmatprep.subr.mxu0 0.0
      %1591 = vmatpush2.msra.mxu0 0.0
      %1592 = vmatprep.mubr.f32.mxu0 0.0
      %1593 = vmatmul.mubr.f32.gmra.mxu0 %v1505
      %v1594 = vpop.f32.mrf.mxu0
      %v1595 = vadd.f32 0.0, %v1594
      %v1596 = vpop.f32.mrf.mxu0
      %1597 = vmatprep.mubr.f32.mxu0 0.0
      %1598 = vmatmul.mubr.f32.gmra.mxu0 %v1508
      %v1599 = vpop.f32.mrf.mxu0
      %v1600 = vadd.f32 0.0, %v1599
      %v1601 = vpop.f32.mrf.mxu0
      %1602 = vmatprep.mubr.f32.mxu0 0.0
      %1603 = vmatmul.mubr.f32.gmra.mxu0 %v1511
      %v1604 = vpop.f32.mrf.mxu0
      %v1605 = vadd.f32 0.0, %v1604
      %v1606 = vpop.f32.mrf.mxu0
      %1607 = vmatprep.mubr.f32.mxu0 0.0
      %1608 = vmatmul.mubr.f32.gmra.mxu0 %v1514
      %v1609 = vpop.f32.mrf.mxu0
      %v1610 = vadd.f32 0.0, %v1609
      %v1611 = vpop.f32.mrf.mxu0
      %1612 = vmatprep.mubr.f32.mxu0 0.0
      %1613 = vmatmul.mubr.f32.gmra.mxu0 %v1517
      %v1614 = vpop.f32.mrf.mxu0
      %v1615 = vadd.f32 0.0, %v1614
      %v1616 = vpop.f32.mrf.mxu0
      %1617 = vmatprep.mubr.f32.mxu0 0.0
      %1618 = vmatmul.mubr.f32.gmra.mxu0 %v1520
      %v1619 = vpop.f32.mrf.mxu0
      %v1620 = vadd.f32 0.0, %v1619
      %v1621 = vpop.f32.mrf.mxu0
      %1622 = vmatprep.mubr.f32.mxu0 0.0
      %1623 = vmatmul.mubr.f32.gmra.mxu0 %v1523
      %v1624 = vpop.f32.mrf.mxu0
      %v1625 = vadd.f32 0.0, %v1624
      %v1626 = vpop.f32.mrf.mxu0
      %1627 = vmatprep.mubr.f32.mxu0 0.0
      %1628 = vmatmul.mubr.f32.gmra.mxu0 %v1526
      %v1629 = vpop.f32.mrf.mxu0
      %v1630 = vadd.f32 0.0, %v1629
      %v1631 = vpop.f32.mrf.mxu0
      %1632 = vdwg.mxu0
      %v1634 = vsel %vm441, %v808, 0
      %v1637 = vsel %vm441, %v809, 0
      %v1640 = vsel %vm441, %v810, 0
      %v1643 = vsel %vm441, %v811, 0
      %v1646 = vsel %vm441, %v812, 0
      %v1649 = vsel %vm441, %v813, 0
      %v1652 = vsel %vm441, %v814, 0
      %v1655 = vsel %vm441, %v815, 0
      %1657 = vmatprep.subr.mxu0 0.0
      %1658 = vmatpush1.msra.mxu0 0.0
      %1659 = vmatprep.subr.mxu0 0.0
      %1660 = vmatpush1.msra.mxu0 0.0
      %1661 = vmatprep.subr.mxu0 0.0
      %1662 = vmatpush1.msra.mxu0 0.0
      %1663 = vmatprep.subr.mxu0 0.0
      %1664 = vmatpush1.msra.mxu0 0.0
      %1665 = vmatprep.subr.mxu0 0.0
      %1666 = vmatpush1.msra.mxu0 0.0
      %1667 = vmatprep.subr.mxu0 0.0
      %1668 = vmatpush1.msra.mxu0 0.0
      %1669 = vmatprep.subr.mxu0 0.0
      %1670 = vmatpush1.msra.mxu0 0.0
      %1671 = vmatprep.subr.mxu0 0.0
      %1672 = vmatpush1.msra.mxu0 0.0
      %1673 = vmatprep.subr.mxu0 0.0
      %1674 = vmatpush1.msra.mxu0 0.0
      %1675 = vmatprep.subr.mxu0 0.0
      %1676 = vmatpush1.msra.mxu0 0.0
      %1677 = vmatprep.subr.mxu0 0.0
      %1678 = vmatpush1.msra.mxu0 0.0
      %1679 = vmatprep.subr.mxu0 0.0
      %1680 = vmatpush1.msra.mxu0 0.0
      %1681 = vmatprep.subr.mxu0 0.0
      %1682 = vmatpush1.msra.mxu0 0.0
      %1683 = vmatprep.subr.mxu0 0.0
      %1684 = vmatpush1.msra.mxu0 %v852
      %1685 = vmatprep.subr.mxu0 0.0
      %1686 = vmatpush1.msra.mxu0 %v851
      %1687 = vmatprep.subr.mxu0 0.0
      %1688 = vmatpush1.msra.mxu0 %v850
      %1689 = vmatprep.subr.mxu0 0.0
      %1690 = vmatpush2.msra.mxu0 0.0
      %1691 = vmatprep.subr.mxu0 0.0
      %1692 = vmatpush2.msra.mxu0 0.0
      %1693 = vmatprep.subr.mxu0 0.0
      %1694 = vmatpush2.msra.mxu0 0.0
      %1695 = vmatprep.subr.mxu0 0.0
      %1696 = vmatpush2.msra.mxu0 0.0
      %1697 = vmatprep.subr.mxu0 0.0
      %1698 = vmatpush2.msra.mxu0 0.0
      %1699 = vmatprep.subr.mxu0 0.0
      %1700 = vmatpush2.msra.mxu0 0.0
      %1701 = vmatprep.subr.mxu0 0.0
      %1702 = vmatpush2.msra.mxu0 0.0
      %1703 = vmatprep.subr.mxu0 0.0
      %1704 = vmatpush2.msra.mxu0 0.0
      %1705 = vmatprep.subr.mxu0 0.0
      %1706 = vmatpush2.msra.mxu0 0.0
      %1707 = vmatprep.subr.mxu0 0.0
      %1708 = vmatpush2.msra.mxu0 0.0
      %1709 = vmatprep.subr.mxu0 0.0
      %1710 = vmatpush2.msra.mxu0 0.0
      %1711 = vmatprep.subr.mxu0 0.0
      %1712 = vmatpush2.msra.mxu0 0.0
      %1713 = vmatprep.subr.mxu0 0.0
      %1714 = vmatpush2.msra.mxu0 0.0
      %1715 = vmatprep.subr.mxu0 0.0
      %1716 = vmatpush2.msra.mxu0 0.0
      %1717 = vmatprep.subr.mxu0 0.0
      %1718 = vmatpush2.msra.mxu0 0.0
      %1719 = vmatprep.subr.mxu0 0.0
      %1720 = vmatpush2.msra.mxu0 0.0
      %1721 = vmatprep.mubr.f32.mxu0 0.0
      %1722 = vmatmul.mubr.f32.gmra.mxu0 %v1634
      %v1723 = vpop.f32.mrf.mxu0
      %v1724 = vadd.f32 0.0, %v1723
      %v1725 = vpop.f32.mrf.mxu0
      %1726 = vmatprep.mubr.f32.mxu0 0.0
      %1727 = vmatmul.mubr.f32.gmra.mxu0 %v1637
      %v1728 = vpop.f32.mrf.mxu0
      %v1729 = vadd.f32 0.0, %v1728
      %v1730 = vpop.f32.mrf.mxu0
      %1731 = vmatprep.mubr.f32.mxu0 0.0
      %1732 = vmatmul.mubr.f32.gmra.mxu0 %v1640
      %v1733 = vpop.f32.mrf.mxu0
      %v1734 = vadd.f32 0.0, %v1733
      %v1735 = vpop.f32.mrf.mxu0
      %1736 = vmatprep.mubr.f32.mxu0 0.0
      %1737 = vmatmul.mubr.f32.gmra.mxu0 %v1643
      %v1738 = vpop.f32.mrf.mxu0
      %v1739 = vadd.f32 0.0, %v1738
      %v1740 = vpop.f32.mrf.mxu0
      %1741 = vmatprep.mubr.f32.mxu0 0.0
      %1742 = vmatmul.mubr.f32.gmra.mxu0 %v1646
      %v1743 = vpop.f32.mrf.mxu0
      %v1744 = vadd.f32 0.0, %v1743
      %v1745 = vpop.f32.mrf.mxu0
      %1746 = vmatprep.mubr.f32.mxu0 0.0
      %1747 = vmatmul.mubr.f32.gmra.mxu0 %v1649
      %v1748 = vpop.f32.mrf.mxu0
      %v1749 = vadd.f32 0.0, %v1748
      %v1750 = vpop.f32.mrf.mxu0
      %1751 = vmatprep.mubr.f32.mxu0 0.0
      %1752 = vmatmul.mubr.f32.gmra.mxu0 %v1652
      %v1753 = vpop.f32.mrf.mxu0
      %v1754 = vadd.f32 0.0, %v1753
      %v1755 = vpop.f32.mrf.mxu0
      %1756 = vmatprep.mubr.f32.mxu0 0.0
      %1757 = vmatmul.mubr.f32.gmra.mxu0 %v1655
      %v1758 = vpop.f32.mrf.mxu0
      %v1759 = vadd.f32 0.0, %v1758
      %v1760 = vpop.f32.mrf.mxu0
      %1761 = vdwg.mxu0
      %v1763 = vsel %vm441, %v816, 0
      %v1766 = vsel %vm441, %v817, 0
      %v1769 = vsel %vm441, %v818, 0
      %v1772 = vsel %vm441, %v819, 0
      %v1775 = vsel %vm441, %v820, 0
      %v1778 = vsel %vm441, %v821, 0
      %v1781 = vsel %vm441, %v822, 0
      %v1784 = vsel %vm441, %v823, 0
      %1786 = vmatprep.subr.mxu0 0.0
      %1787 = vmatpush1.msra.mxu0 0.0
      %1788 = vmatprep.subr.mxu0 0.0
      %1789 = vmatpush1.msra.mxu0 0.0
      %1790 = vmatprep.subr.mxu0 0.0
      %1791 = vmatpush1.msra.mxu0 0.0
      %1792 = vmatprep.subr.mxu0 0.0
      %1793 = vmatpush1.msra.mxu0 0.0
      %1794 = vmatprep.subr.mxu0 0.0
      %1795 = vmatpush1.msra.mxu0 0.0
      %1796 = vmatprep.subr.mxu0 0.0
      %1797 = vmatpush1.msra.mxu0 0.0
      %1798 = vmatprep.subr.mxu0 0.0
      %1799 = vmatpush1.msra.mxu0 0.0
      %1800 = vmatprep.subr.mxu0 0.0
      %1801 = vmatpush1.msra.mxu0 0.0
      %1802 = vmatprep.subr.mxu0 0.0
      %1803 = vmatpush1.msra.mxu0 0.0
      %1804 = vmatprep.subr.mxu0 0.0
      %1805 = vmatpush1.msra.mxu0 0.0
      %1806 = vmatprep.subr.mxu0 0.0
      %1807 = vmatpush1.msra.mxu0 0.0
      %1808 = vmatprep.subr.mxu0 0.0
      %1809 = vmatpush1.msra.mxu0 0.0
      %1810 = vmatprep.subr.mxu0 0.0
      %1811 = vmatpush1.msra.mxu0 0.0
      %1812 = vmatprep.subr.mxu0 0.0
      %1813 = vmatpush1.msra.mxu0 %v855
      %1814 = vmatprep.subr.mxu0 0.0
      %1815 = vmatpush1.msra.mxu0 %v854
      %1816 = vmatprep.subr.mxu0 0.0
      %1817 = vmatpush1.msra.mxu0 %v853
      %1818 = vmatprep.subr.mxu0 0.0
      %1819 = vmatpush2.msra.mxu0 0.0
      %1820 = vmatprep.subr.mxu0 0.0
      %1821 = vmatpush2.msra.mxu0 0.0
      %1822 = vmatprep.subr.mxu0 0.0
      %1823 = vmatpush2.msra.mxu0 0.0
      %1824 = vmatprep.subr.mxu0 0.0
      %1825 = vmatpush2.msra.mxu0 0.0
      %1826 = vmatprep.subr.mxu0 0.0
      %1827 = vmatpush2.msra.mxu0 0.0
      %1828 = vmatprep.subr.mxu0 0.0
      %1829 = vmatpush2.msra.mxu0 0.0
      %1830 = vmatprep.subr.mxu0 0.0
      %1831 = vmatpush2.msra.mxu0 0.0
      %1832 = vmatprep.subr.mxu0 0.0
      %1833 = vmatpush2.msra.mxu0 0.0
      %1834 = vmatprep.subr.mxu0 0.0
      %1835 = vmatpush2.msra.mxu0 0.0
      %1836 = vmatprep.subr.mxu0 0.0
      %1837 = vmatpush2.msra.mxu0 0.0
      %1838 = vmatprep.subr.mxu0 0.0
      %1839 = vmatpush2.msra.mxu0 0.0
      %1840 = vmatprep.subr.mxu0 0.0
      %1841 = vmatpush2.msra.mxu0 0.0
      %1842 = vmatprep.subr.mxu0 0.0
      %1843 = vmatpush2.msra.mxu0 0.0
      %1844 = vmatprep.subr.mxu0 0.0
      %1845 = vmatpush2.msra.mxu0 0.0
      %1846 = vmatprep.subr.mxu0 0.0
      %1847 = vmatpush2.msra.mxu0 0.0
      %1848 = vmatprep.subr.mxu0 0.0
      %1849 = vmatpush2.msra.mxu0 0.0
      %1850 = vmatprep.mubr.f32.mxu0 0.0
      %1851 = vmatmul.mubr.f32.gmra.mxu0 %v1763
      %v1852 = vpop.f32.mrf.mxu0
      %v1853 = vadd.f32 0.0, %v1852
      %v1854 = vpop.f32.mrf.mxu0
      %1855 = vmatprep.mubr.f32.mxu0 0.0
      %1856 = vmatmul.mubr.f32.gmra.mxu0 %v1766
      %v1857 = vpop.f32.mrf.mxu0
      %v1858 = vadd.f32 0.0, %v1857
      %v1859 = vpop.f32.mrf.mxu0
      %1860 = vmatprep.mubr.f32.mxu0 0.0
      %1861 = vmatmul.mubr.f32.gmra.mxu0 %v1769
      %v1862 = vpop.f32.mrf.mxu0
      %v1863 = vadd.f32 0.0, %v1862
      %v1864 = vpop.f32.mrf.mxu0
      %1865 = vmatprep.mubr.f32.mxu0 0.0
      %1866 = vmatmul.mubr.f32.gmra.mxu0 %v1772
      %v1867 = vpop.f32.mrf.mxu0
      %v1868 = vadd.f32 0.0, %v1867
      %v1869 = vpop.f32.mrf.mxu0
      %1870 = vmatprep.mubr.f32.mxu0 0.0
      %1871 = vmatmul.mubr.f32.gmra.mxu0 %v1775
      %v1872 = vpop.f32.mrf.mxu0
      %v1873 = vadd.f32 0.0, %v1872
      %v1874 = vpop.f32.mrf.mxu0
      %1875 = vmatprep.mubr.f32.mxu0 0.0
      %1876 = vmatmul.mubr.f32.gmra.mxu0 %v1778
      %v1877 = vpop.f32.mrf.mxu0
      %v1878 = vadd.f32 0.0, %v1877
      %v1879 = vpop.f32.mrf.mxu0
      %1880 = vmatprep.mubr.f32.mxu0 0.0
      %1881 = vmatmul.mubr.f32.gmra.mxu0 %v1781
      %v1882 = vpop.f32.mrf.mxu0
      %v1883 = vadd.f32 0.0, %v1882
      %v1884 = vpop.f32.mrf.mxu0
      %1885 = vmatprep.mubr.f32.mxu0 0.0
      %1886 = vmatmul.mubr.f32.gmra.mxu0 %v1784
      %v1887 = vpop.f32.mrf.mxu0
      %v1888 = vadd.f32 0.0, %v1887
      %v1889 = vpop.f32.mrf.mxu0
      %1890 = vdwg.mxu0
      %v1892 = vsel %vm441, %v824, 0
      %v1895 = vsel %vm441, %v825, 0
      %v1898 = vsel %vm441, %v826, 0
      %v1901 = vsel %vm441, %v827, 0
      %v1904 = vsel %vm441, %v828, 0
      %v1907 = vsel %vm441, %v829, 0
      %v1910 = vsel %vm441, %v830, 0
      %v1913 = vsel %vm441, %v831, 0
      %1915 = vmatprep.subr.mxu0 0.0
      %1916 = vmatpush1.msra.mxu0 0.0
      %1917 = vmatprep.subr.mxu0 0.0
      %1918 = vmatpush1.msra.mxu0 0.0
      %1919 = vmatprep.subr.mxu0 0.0
      %1920 = vmatpush1.msra.mxu0 0.0
      %1921 = vmatprep.subr.mxu0 0.0
      %1922 = vmatpush1.msra.mxu0 0.0
      %1923 = vmatprep.subr.mxu0 0.0
      %1924 = vmatpush1.msra.mxu0 0.0
      %1925 = vmatprep.subr.mxu0 0.0
      %1926 = vmatpush1.msra.mxu0 0.0
      %1927 = vmatprep.subr.mxu0 0.0
      %1928 = vmatpush1.msra.mxu0 0.0
      %1929 = vmatprep.subr.mxu0 0.0
      %1930 = vmatpush1.msra.mxu0 0.0
      %1931 = vmatprep.subr.mxu0 0.0
      %1932 = vmatpush1.msra.mxu0 0.0
      %1933 = vmatprep.subr.mxu0 0.0
      %1934 = vmatpush1.msra.mxu0 0.0
      %1935 = vmatprep.subr.mxu0 0.0
      %1936 = vmatpush1.msra.mxu0 0.0
      %1937 = vmatprep.subr.mxu0 0.0
      %1938 = vmatpush1.msra.mxu0 0.0
      %1939 = vmatprep.subr.mxu0 0.0
      %1940 = vmatpush1.msra.mxu0 0.0
      %1941 = vmatprep.subr.mxu0 0.0
      %1942 = vmatpush1.msra.mxu0 %v858
      %1943 = vmatprep.subr.mxu0 0.0
      %1944 = vmatpush1.msra.mxu0 %v857
      %1945 = vmatprep.subr.mxu0 0.0
      %1946 = vmatpush1.msra.mxu0 %v856
      %1947 = vmatprep.subr.mxu0 0.0
      %1948 = vmatpush2.msra.mxu0 0.0
      %1949 = vmatprep.subr.mxu0 0.0
      %1950 = vmatpush2.msra.mxu0 0.0
      %1951 = vmatprep.subr.mxu0 0.0
      %1952 = vmatpush2.msra.mxu0 0.0
      %1953 = vmatprep.subr.mxu0 0.0
      %1954 = vmatpush2.msra.mxu0 0.0
      %1955 = vmatprep.subr.mxu0 0.0
      %1956 = vmatpush2.msra.mxu0 0.0
      %1957 = vmatprep.subr.mxu0 0.0
      %1958 = vmatpush2.msra.mxu0 0.0
      %1959 = vmatprep.subr.mxu0 0.0
      %1960 = vmatpush2.msra.mxu0 0.0
      %1961 = vmatprep.subr.mxu0 0.0
      %1962 = vmatpush2.msra.mxu0 0.0
      %1963 = vmatprep.subr.mxu0 0.0
      %1964 = vmatpush2.msra.mxu0 0.0
      %1965 = vmatprep.subr.mxu0 0.0
      %1966 = vmatpush2.msra.mxu0 0.0
      %1967 = vmatprep.subr.mxu0 0.0
      %1968 = vmatpush2.msra.mxu0 0.0
      %1969 = vmatprep.subr.mxu0 0.0
      %1970 = vmatpush2.msra.mxu0 0.0
      %1971 = vmatprep.subr.mxu0 0.0
      %1972 = vmatpush2.msra.mxu0 0.0
      %1973 = vmatprep.subr.mxu0 0.0
      %1974 = vmatpush2.msra.mxu0 0.0
      %1975 = vmatprep.subr.mxu0 0.0
      %1976 = vmatpush2.msra.mxu0 0.0
      %1977 = vmatprep.subr.mxu0 0.0
      %1978 = vmatpush2.msra.mxu0 0.0
      %1979 = vmatprep.mubr.f32.mxu0 0.0
      %1980 = vmatmul.mubr.f32.gmra.mxu0 %v1892
      %v1981 = vpop.f32.mrf.mxu0
      %v1982 = vadd.f32 0.0, %v1981
      %v1983 = vpop.f32.mrf.mxu0
      %1984 = vmatprep.mubr.f32.mxu0 0.0
      %1985 = vmatmul.mubr.f32.gmra.mxu0 %v1895
      %v1986 = vpop.f32.mrf.mxu0
      %v1987 = vadd.f32 0.0, %v1986
      %v1988 = vpop.f32.mrf.mxu0
      %1989 = vmatprep.mubr.f32.mxu0 0.0
      %1990 = vmatmul.mubr.f32.gmra.mxu0 %v1898
      %v1991 = vpop.f32.mrf.mxu0
      %v1992 = vadd.f32 0.0, %v1991
      %v1993 = vpop.f32.mrf.mxu0
      %1994 = vmatprep.mubr.f32.mxu0 0.0
      %1995 = vmatmul.mubr.f32.gmra.mxu0 %v1901
      %v1996 = vpop.f32.mrf.mxu0
      %v1997 = vadd.f32 0.0, %v1996
      %v1998 = vpop.f32.mrf.mxu0
      %1999 = vmatprep.mubr.f32.mxu0 0.0
      %2000 = vmatmul.mubr.f32.gmra.mxu0 %v1904
      %v2001 = vpop.f32.mrf.mxu0
      %v2002 = vadd.f32 0.0, %v2001
      %v2003 = vpop.f32.mrf.mxu0
      %2004 = vmatprep.mubr.f32.mxu0 0.0
      %2005 = vmatmul.mubr.f32.gmra.mxu0 %v1907
      %v2006 = vpop.f32.mrf.mxu0
      %v2007 = vadd.f32 0.0, %v2006
      %v2008 = vpop.f32.mrf.mxu0
      %2009 = vmatprep.mubr.f32.mxu0 0.0
      %2010 = vmatmul.mubr.f32.gmra.mxu0 %v1910
      %v2011 = vpop.f32.mrf.mxu0
      %v2012 = vadd.f32 0.0, %v2011
      %v2013 = vpop.f32.mrf.mxu0
      %2014 = vmatprep.mubr.f32.mxu0 0.0
      %2015 = vmatmul.mubr.f32.gmra.mxu0 %v1913
      %v2016 = vpop.f32.mrf.mxu0
      %v2017 = vadd.f32 0.0, %v2016
      %v2018 = vpop.f32.mrf.mxu0
      %2019 = vdwg.mxu0
      %vm2020 = vcmask 48128
      %v2021 = vsel %vm2020, %v950, 0.0
      %v2022 = vsel %vm2020, %v1079, 0.0
      %v2023 = vadd.f32 %v2021, %v2022
      %v2024 = vsel %vm2020, %v1208, 0.0
      %v2025 = vadd.f32 %v2023, %v2024
      %v2026 = vsel %vm2020, %v1337, 0.0
      %v2027 = vadd.f32 %v2025, %v2026
      %v2028 = vsel %vm2020, %v1466, 0.0
      %v2029 = vadd.f32 %v2027, %v2028
      %v2030 = vsel %vm2020, %v1595, 0.0
      %v2031 = vadd.f32 %v2029, %v2030
      %v2032 = vsel %vm2020, %v1724, 0.0
      %v2033 = vadd.f32 %v2031, %v2032
      %v2034 = vsel %vm2020, %v1853, 0.0
      %v2035 = vadd.f32 %v2033, %v2034
      %v2036 = vsel %vm2020, %v1982, 0.0
      %v2037 = vadd.f32 %v2035, %v2036
      %v2038 = vsel %vm2020, %v955, 0.0
      %v2039 = vsel %vm2020, %v1084, 0.0
      %v2040 = vadd.f32 %v2038, %v2039
      %v2041 = vsel %vm2020, %v1213, 0.0
      %v2042 = vadd.f32 %v2040, %v2041
      %v2043 = vsel %vm2020, %v1342, 0.0
      %v2044 = vadd.f32 %v2042, %v2043
      %v2045 = vsel %vm2020, %v1471, 0.0
      %v2046 = vadd.f32 %v2044, %v2045
      %v2047 = vsel %vm2020, %v1600, 0.0
      %v2048 = vadd.f32 %v2046, %v2047
      %v2049 = vsel %vm2020, %v1729, 0.0
      %v2050 = vadd.f32 %v2048, %v2049
      %v2051 = vsel %vm2020, %v1858, 0.0
      %v2052 = vadd.f32 %v2050, %v2051
      %v2053 = vsel %vm2020, %v1987, 0.0
      %v2054 = vadd.f32 %v2052, %v2053
      %v2055 = vsel %vm2020, %v960, 0.0
      %v2056 = vsel %vm2020, %v1089, 0.0
      %v2057 = vadd.f32 %v2055, %v2056
      %v2058 = vsel %vm2020, %v1218, 0.0
      %v2059 = vadd.f32 %v2057, %v2058
      %v2060 = vsel %vm2020, %v1347, 0.0
      %v2061 = vadd.f32 %v2059, %v2060
      %v2062 = vsel %vm2020, %v1476, 0.0
      %v2063 = vadd.f32 %v2061, %v2062
      %v2064 = vsel %vm2020, %v1605, 0.0
      %v2065 = vadd.f32 %v2063, %v2064
      %v2066 = vsel %vm2020, %v1734, 0.0
      %v2067 = vadd.f32 %v2065, %v2066
      %v2068 = vsel %vm2020, %v1863, 0.0
      %v2069 = vadd.f32 %v2067, %v2068
      %v2070 = vsel %vm2020, %v1992, 0.0
      %v2071 = vadd.f32 %v2069, %v2070
      %v2072 = vsel %vm2020, %v965, 0.0
      %v2073 = vsel %vm2020, %v1094, 0.0
      %v2074 = vadd.f32 %v2072, %v2073
      %v2075 = vsel %vm2020, %v1223, 0.0
      %v2076 = vadd.f32 %v2074, %v2075
      %v2077 = vsel %vm2020, %v1352, 0.0
      %v2078 = vadd.f32 %v2076, %v2077
      %v2079 = vsel %vm2020, %v1481, 0.0
      %v2080 = vadd.f32 %v2078, %v2079
      %v2081 = vsel %vm2020, %v1610, 0.0
      %v2082 = vadd.f32 %v2080, %v2081
      %v2083 = vsel %vm2020, %v1739, 0.0
      %v2084 = vadd.f32 %v2082, %v2083
      %v2085 = vsel %vm2020, %v1868, 0.0
      %v2086 = vadd.f32 %v2084, %v2085
      %v2087 = vsel %vm2020, %v1997, 0.0
      %v2088 = vadd.f32 %v2086, %v2087
      %v2089 = vsel %vm2020, %v970, 0.0
      %v2090 = vsel %vm2020, %v1099, 0.0
      %v2091 = vadd.f32 %v2089, %v2090
      %v2092 = vsel %vm2020, %v1228, 0.0
      %v2093 = vadd.f32 %v2091, %v2092
      %v2094 = vsel %vm2020, %v1357, 0.0
      %v2095 = vadd.f32 %v2093, %v2094
      %v2096 = vsel %vm2020, %v1486, 0.0
      %v2097 = vadd.f32 %v2095, %v2096
      %v2098 = vsel %vm2020, %v1615, 0.0
      %v2099 = vadd.f32 %v2097, %v2098
      %v2100 = vsel %vm2020, %v1744, 0.0
      %v2101 = vadd.f32 %v2099, %v2100
      %v2102 = vsel %vm2020, %v1873, 0.0
      %v2103 = vadd.f32 %v2101, %v2102
      %v2104 = vsel %vm2020, %v2002, 0.0
      %v2105 = vadd.f32 %v2103, %v2104
      %v2106 = vsel %vm2020, %v975, 0.0
      %v2107 = vsel %vm2020, %v1104, 0.0
      %v2108 = vadd.f32 %v2106, %v2107
      %v2109 = vsel %vm2020, %v1233, 0.0
      %v2110 = vadd.f32 %v2108, %v2109
      %v2111 = vsel %vm2020, %v1362, 0.0
      %v2112 = vadd.f32 %v2110, %v2111
      %v2113 = vsel %vm2020, %v1491, 0.0
      %v2114 = vadd.f32 %v2112, %v2113
      %v2115 = vsel %vm2020, %v1620, 0.0
      %v2116 = vadd.f32 %v2114, %v2115
      %v2117 = vsel %vm2020, %v1749, 0.0
      %v2118 = vadd.f32 %v2116, %v2117
      %v2119 = vsel %vm2020, %v1878, 0.0
      %v2120 = vadd.f32 %v2118, %v2119
      %v2121 = vsel %vm2020, %v2007, 0.0
      %v2122 = vadd.f32 %v2120, %v2121
      %v2123 = vsel %vm2020, %v980, 0.0
      %v2124 = vsel %vm2020, %v1109, 0.0
      %v2125 = vadd.f32 %v2123, %v2124
      %v2126 = vsel %vm2020, %v1238, 0.0
      %v2127 = vadd.f32 %v2125, %v2126
      %v2128 = vsel %vm2020, %v1367, 0.0
      %v2129 = vadd.f32 %v2127, %v2128
      %v2130 = vsel %vm2020, %v1496, 0.0
      %v2131 = vadd.f32 %v2129, %v2130
      %v2132 = vsel %vm2020, %v1625, 0.0
      %v2133 = vadd.f32 %v2131, %v2132
      %v2134 = vsel %vm2020, %v1754, 0.0
      %v2135 = vadd.f32 %v2133, %v2134
      %v2136 = vsel %vm2020, %v1883, 0.0
      %v2137 = vadd.f32 %v2135, %v2136
      %v2138 = vsel %vm2020, %v2012, 0.0
      %v2139 = vadd.f32 %v2137, %v2138
      %v2140 = vsel %vm2020, %v985, 0.0
      %v2141 = vsel %vm2020, %v1114, 0.0
      %v2142 = vadd.f32 %v2140, %v2141
      %v2143 = vsel %vm2020, %v1243, 0.0
      %v2144 = vadd.f32 %v2142, %v2143
      %v2145 = vsel %vm2020, %v1372, 0.0
      %v2146 = vadd.f32 %v2144, %v2145
      %v2147 = vsel %vm2020, %v1501, 0.0
      %v2148 = vadd.f32 %v2146, %v2147
      %v2149 = vsel %vm2020, %v1630, 0.0
      %v2150 = vadd.f32 %v2148, %v2149
      %v2151 = vsel %vm2020, %v1759, 0.0
      %v2152 = vadd.f32 %v2150, %v2151
      %v2153 = vsel %vm2020, %v1888, 0.0
      %v2154 = vadd.f32 %v2152, %v2153
      %v2155 = vsel %vm2020, %v2017, 0.0
      %v2156 = vadd.f32 %v2154, %v2155
      %v2157 = vld [vmem:[%s7] sm:$0x3]
      %v2159 = vlaneseq
      %v2160 = vshrl.u32 %v2159, 7
      %v2161 = vsub.s32 0, %v2160
      %v2162 = vrot.slane %v2157, %v2161
      %v2163 = vlaneseq
      %v2164 = vshrl.u32 %v2163, 7
      %v2165 = vsub.s32 1, %v2164
      %v2166 = vrot.slane %v2157, %v2165
      %v2169 = vmul.f32 %v463, %v2162
      %v2170 = vmul.f32 %v464, %v2166
      %v2171 = vmul.f32 %v465, %v2162
      %v2172 = vmul.f32 %v466, %v2166
      %v2173 = vmul.f32 %v467, %v2162
      %v2174 = vmul.f32 %v468, %v2166
      %v2175 = vmul.f32 %v469, %v2162
      %v2176 = vmul.f32 %v470, %v2166
      %v2177 = vmul.f32 %v471, %v2162
      %v2178 = vmul.f32 %v472, %v2166
      %v2179 = vmul.f32 %v473, %v2162
      %v2180 = vmul.f32 %v474, %v2166
      %v2181 = vmul.f32 %v475, %v2162
      %v2182 = vmul.f32 %v476, %v2166
      %v2183 = vmul.f32 %v477, %v2162
      %v2184 = vmul.f32 %v478, %v2166
      %v2185 = vld [vmem:[%s8] sm:$0x3]
      %v2187 = vlaneseq
      %v2188 = vshrl.u32 %v2187, 7
      %v2189 = vsub.s32 0, %v2188
      %v2190 = vrot.slane %v2185, %v2189
      %v2191 = vlaneseq
      %v2192 = vshrl.u32 %v2191, 7
      %v2193 = vsub.s32 1, %v2192
      %v2194 = vrot.slane %v2185, %v2193
      %v2197 = vadd.f32 %v2169, %v2190
      %v2198 = vadd.f32 %v2170, %v2194
      %v2199 = vadd.f32 %v2171, %v2190
      %v2200 = vadd.f32 %v2172, %v2194
      %v2201 = vadd.f32 %v2173, %v2190
      %v2202 = vadd.f32 %v2174, %v2194
      %v2203 = vadd.f32 %v2175, %v2190
      %v2204 = vadd.f32 %v2176, %v2194
      %v2205 = vadd.f32 %v2177, %v2190
      %v2206 = vadd.f32 %v2178, %v2194
      %v2207 = vadd.f32 %v2179, %v2190
      %v2208 = vadd.f32 %v2180, %v2194
      %v2209 = vadd.f32 %v2181, %v2190
      %v2210 = vadd.f32 %v2182, %v2194
      %v2211 = vadd.f32 %v2183, %v2190
      %v2212 = vadd.f32 %v2184, %v2194
      %v2213 = vmax.f32 %v2197, 0.0
      %v2214 = vmax.f32 %v2198, 0.0
      %v2215 = vmax.f32 %v2199, 0.0
      %v2216 = vmax.f32 %v2200, 0.0
      %v2217 = vmax.f32 %v2201, 0.0
      %v2218 = vmax.f32 %v2202, 0.0
      %v2219 = vmax.f32 %v2203, 0.0
      %v2220 = vmax.f32 %v2204, 0.0
      %v2221 = vmax.f32 %v2205, 0.0
      %v2222 = vmax.f32 %v2206, 0.0
      %v2223 = vmax.f32 %v2207, 0.0
      %v2224 = vmax.f32 %v2208, 0.0
      %v2225 = vmax.f32 %v2209, 0.0
      %v2226 = vmax.f32 %v2210, 0.0
      %v2227 = vmax.f32 %v2211, 0.0
      %v2228 = vmax.f32 %v2212, 0.0
      %v2229 = vld [vmem:[%s9] sm:$0xff]
      %v2230 = vld [vmem:[%s9 + $0x8] sm:$0xff]
      %v2231 = vld [vmem:[%s9 + $0x10] sm:$0xff]
      %v2232 = vld [vmem:[%s9 + $0x18] sm:$0xff]
      %v2233 = vld [vmem:[%s9 + $0x20] sm:$0xff]
      %v2234 = vld [vmem:[%s9 + $0x28] sm:$0xff]
      %v2235 = vld [vmem:[%s9 + $0x30] sm:$0xff]
      %v2236 = vld [vmem:[%s9 + $0x38] sm:$0xff]
      %v2237 = vld [vmem:[%s9 + $0x40] sm:$0xff]
      %v2238 = vld [vmem:[%s9 + $0x48] sm:$0xff]
      %v2239 = vld [vmem:[%s9 + $0x50] sm:$0xff]
      %v2240 = vld [vmem:[%s9 + $0x58] sm:$0xff]
      %v2241 = vld [vmem:[%s9 + $0x60] sm:$0xff]
      %v2242 = vld [vmem:[%s9 + $0x68] sm:$0xff]
      %v2243 = vld [vmem:[%s9 + $0x70] sm:$0xff]
      %v2244 = vld [vmem:[%s9 + $0x78] sm:$0xff]
      %v2245 = vld [vmem:[%s9 + $0x80] sm:$0xff]
      %v2246 = vld [vmem:[%s9 + $0x88] sm:$0xff]
      %v2247 = vld [vmem:[%s9 + $0x90] sm:$0xff]
      %v2248 = vld [vmem:[%s9 + $0x98] sm:$0xff]
      %v2249 = vld [vmem:[%s9 + $0xa0] sm:$0xff]
      %v2250 = vld [vmem:[%s9 + $0xa8] sm:$0xff]
      %v2251 = vld [vmem:[%s9 + $0xb0] sm:$0xff]
      %v2252 = vld [vmem:[%s9 + $0xb8] sm:$0xff]
      %v2253 = vld [vmem:[%s9 + $0xc0] sm:$0xff]
      %v2254 = vld [vmem:[%s9 + $0xc8] sm:$0xff]
      %v2255 = vld [vmem:[%s9 + $0xd0] sm:$0xff]
      %v2256 = vld [vmem:[%s9 + $0xd8] sm:$0xff]
      %v2257 = vld [vmem:[%s9 + $0xe0] sm:$0xff]
      %v2258 = vld [vmem:[%s9 + $0xe8] sm:$0xff]
      %v2259 = vld [vmem:[%s9 + $0xf0] sm:$0xff]
      %v2260 = vld [vmem:[%s9 + $0xf8] sm:$0xff]
      %v2261 = vld [vmem:[%s9 + $0x100] sm:$0xff]
      %v2262 = vld [vmem:[%s9 + $0x108] sm:$0xff]
      %v2263 = vld [vmem:[%s9 + $0x110] sm:$0xff]
      %v2264 = vld [vmem:[%s9 + $0x118] sm:$0xff]
      %v2265 = vld [vmem:[%s9 + $0x120] sm:$0xff]
      %v2266 = vld [vmem:[%s9 + $0x128] sm:$0xff]
      %v2267 = vld [vmem:[%s9 + $0x130] sm:$0xff]
      %v2268 = vld [vmem:[%s9 + $0x138] sm:$0xff]
      %v2269 = vld [vmem:[%s9 + $0x140] sm:$0xff]
      %v2270 = vld [vmem:[%s9 + $0x148] sm:$0xff]
      %v2271 = vld [vmem:[%s9 + $0x150] sm:$0xff]
      %v2272 = vld [vmem:[%s9 + $0x158] sm:$0xff]
      %v2273 = vld [vmem:[%s9 + $0x160] sm:$0xff]
      %v2274 = vld [vmem:[%s9 + $0x168] sm:$0xff]
      %v2275 = vld [vmem:[%s9 + $0x170] sm:$0xff]
      %v2276 = vld [vmem:[%s9 + $0x178] sm:$0xff]
      %v2277 = vld [vmem:[%s9 + $0x180] sm:$0xff]
      %v2278 = vld [vmem:[%s9 + $0x188] sm:$0xff]
      %v2279 = vld [vmem:[%s9 + $0x190] sm:$0xff]
      %v2280 = vld [vmem:[%s9 + $0x198] sm:$0xff]
      %v2281 = vld [vmem:[%s9 + $0x1a0] sm:$0xf]
      %v2282 = vld [vmem:[%s9 + $0x1a8] sm:$0xf]
      %v2283 = vld [vmem:[%s10] sm:$0x1]
      %v2285 = vlaneseq
      %v2286 = vshrl.u32 %v2285, 7
      %v2287 = vsub.s32 0, %v2286
      %v2288 = vrot.slane %v2283, %v2287
      %v2290 = vmul.f32 %v2037, %v2288
      %v2291 = vmul.f32 %v2054, %v2288
      %v2292 = vmul.f32 %v2071, %v2288
      %v2293 = vmul.f32 %v2088, %v2288
      %v2294 = vmul.f32 %v2105, %v2288
      %v2295 = vmul.f32 %v2122, %v2288
      %v2296 = vmul.f32 %v2139, %v2288
      %v2297 = vmul.f32 %v2156, %v2288
      %v2298 = vld [vmem:[%s11] sm:$0x1]
      %v2300 = vlaneseq
      %v2301 = vshrl.u32 %v2300, 7
      %v2302 = vsub.s32 0, %v2301
      %v2303 = vrot.slane %v2298, %v2302
      %v2305 = vadd.f32 %v2290, %v2303
      %v2306 = vadd.f32 %v2291, %v2303
      %v2307 = vadd.f32 %v2292, %v2303
      %v2308 = vadd.f32 %v2293, %v2303
      %v2309 = vadd.f32 %v2294, %v2303
      %v2310 = vadd.f32 %v2295, %v2303
      %v2311 = vadd.f32 %v2296, %v2303
      %v2312 = vadd.f32 %v2297, %v2303
      %v2313 = vmax.f32 %v2305, 0.0
      %v2314 = vmax.f32 %v2306, 0.0
      %v2315 = vmax.f32 %v2307, 0.0
      %v2316 = vmax.f32 %v2308, 0.0
      %v2317 = vmax.f32 %v2309, 0.0
      %v2318 = vmax.f32 %v2310, 0.0
      %v2319 = vmax.f32 %v2311, 0.0
      %v2320 = vmax.f32 %v2312, 0.0
      %v2321 = vld [vmem:[%s12] sm:$0x3f]
      %v2322 = vld [vmem:[%s12 + $0x8] sm:$0x3f]
      %v2324 = vsel %vm2020, %v2313, 0
      %v2327 = vsel %vm2020, %v2314, 0
      %v2330 = vsel %vm2020, %v2315, 0
      %v2333 = vsel %vm2020, %v2316, 0
      %v2336 = vsel %vm2020, %v2317, 0
      %v2339 = vsel %vm2020, %v2318, 0
      %v2342 = vsel %vm2020, %v2319, 0
      %v2345 = vsel %vm2020, %v2320, 0
      %vm2347 = vcmask 1045504
      %v2349 = vsel %vm2347, %v2321, 0
      %v2352 = vsel %vm2347, %v2322, 0
      %2354 = vmatprep.subr.mxu0 0.0
      %2355 = vmatpush1.msra.mxu0 0.0
      %2356 = vmatprep.subr.mxu0 0.0
      %2357 = vmatpush1.msra.mxu0 0.0
      %2358 = vmatprep.subr.mxu0 0.0
      %2359 = vmatpush1.msra.mxu0 0.0
      %2360 = vmatprep.subr.mxu0 0.0
      %2361 = vmatpush1.msra.mxu0 0.0
      %2362 = vmatprep.subr.mxu0 0.0
      %2363 = vmatpush1.msra.mxu0 0.0
      %2364 = vmatprep.subr.mxu0 0.0
      %2365 = vmatpush1.msra.mxu0 0.0
      %2366 = vmatprep.subr.mxu0 0.0
      %2367 = vmatpush1.msra.mxu0 0.0
      %2368 = vmatprep.subr.mxu0 0.0
      %2369 = vmatpush1.msra.mxu0 0.0
      %2370 = vmatprep.subr.mxu0 0.0
      %2371 = vmatpush1.msra.mxu0 0.0
      %2372 = vmatprep.subr.mxu0 0.0
      %2373 = vmatpush1.msra.mxu0 0.0
      %2374 = vmatprep.subr.mxu0 0.0
      %2375 = vmatpush1.msra.mxu0 0.0
      %2376 = vmatprep.subr.mxu0 0.0
      %2377 = vmatpush1.msra.mxu0 0.0
      %2378 = vmatprep.subr.mxu0 0.0
      %2379 = vmatpush1.msra.mxu0 0.0
      %2380 = vmatprep.subr.mxu0 0.0
      %2381 = vmatpush1.msra.mxu0 0.0
      %2382 = vmatprep.subr.mxu0 0.0
      %2383 = vmatpush1.msra.mxu0 0.0
      %2384 = vmatprep.subr.mxu0 %v2352
      %2385 = vmatpush1.msra.mxu0 %v2349
      %2386 = vmatprep.subr.mxu0 0.0
      %2387 = vmatpush2.msra.mxu0 0.0
      %2388 = vmatprep.subr.mxu0 0.0
      %2389 = vmatpush2.msra.mxu0 0.0
      %2390 = vmatprep.subr.mxu0 0.0
      %2391 = vmatpush2.msra.mxu0 0.0
      %2392 = vmatprep.subr.mxu0 0.0
      %2393 = vmatpush2.msra.mxu0 0.0
      %2394 = vmatprep.subr.mxu0 0.0
      %2395 = vmatpush2.msra.mxu0 0.0
      %2396 = vmatprep.subr.mxu0 0.0
      %2397 = vmatpush2.msra.mxu0 0.0
      %2398 = vmatprep.subr.mxu0 0.0
      %2399 = vmatpush2.msra.mxu0 0.0
      %2400 = vmatprep.subr.mxu0 0.0
      %2401 = vmatpush2.msra.mxu0 0.0
      %2402 = vmatprep.subr.mxu0 0.0
      %2403 = vmatpush2.msra.mxu0 0.0
      %2404 = vmatprep.subr.mxu0 0.0
      %2405 = vmatpush2.msra.mxu0 0.0
      %2406 = vmatprep.subr.mxu0 0.0
      %2407 = vmatpush2.msra.mxu0 0.0
      %2408 = vmatprep.subr.mxu0 0.0
      %2409 = vmatpush2.msra.mxu0 0.0
      %2410 = vmatprep.subr.mxu0 0.0
      %2411 = vmatpush2.msra.mxu0 0.0
      %2412 = vmatprep.subr.mxu0 0.0
      %2413 = vmatpush2.msra.mxu0 0.0
      %2414 = vmatprep.subr.mxu0 0.0
      %2415 = vmatpush2.msra.mxu0 0.0
      %2416 = vmatprep.subr.mxu0 0.0
      %2417 = vmatpush2.msra.mxu0 0.0
      %2418 = vmatprep.mubr.f32.mxu0 0.0
      %2419 = vmatmul.mubr.f32.gmra.mxu0 %v2324
      %v2420 = vpop.f32.mrf.mxu0
      %v2421 = vadd.f32 0.0, %v2420
      %v2422 = vpop.f32.mrf.mxu0
      %v2423 = vadd.f32 0.0, %v2422
      %2424 = vmatprep.mubr.f32.mxu0 0.0
      %2425 = vmatmul.mubr.f32.gmra.mxu0 %v2327
      %v2426 = vpop.f32.mrf.mxu0
      %v2427 = vadd.f32 0.0, %v2426
      %v2428 = vpop.f32.mrf.mxu0
      %v2429 = vadd.f32 0.0, %v2428
      %2430 = vmatprep.mubr.f32.mxu0 0.0
      %2431 = vmatmul.mubr.f32.gmra.mxu0 %v2330
      %v2432 = vpop.f32.mrf.mxu0
      %v2433 = vadd.f32 0.0, %v2432
      %v2434 = vpop.f32.mrf.mxu0
      %v2435 = vadd.f32 0.0, %v2434
      %2436 = vmatprep.mubr.f32.mxu0 0.0
      %2437 = vmatmul.mubr.f32.gmra.mxu0 %v2333
      %v2438 = vpop.f32.mrf.mxu0
      %v2439 = vadd.f32 0.0, %v2438
      %v2440 = vpop.f32.mrf.mxu0
      %v2441 = vadd.f32 0.0, %v2440
      %2442 = vmatprep.mubr.f32.mxu0 0.0
      %2443 = vmatmul.mubr.f32.gmra.mxu0 %v2336
      %v2444 = vpop.f32.mrf.mxu0
      %v2445 = vadd.f32 0.0, %v2444
      %v2446 = vpop.f32.mrf.mxu0
      %v2447 = vadd.f32 0.0, %v2446
      %2448 = vmatprep.mubr.f32.mxu0 0.0
      %2449 = vmatmul.mubr.f32.gmra.mxu0 %v2339
      %v2450 = vpop.f32.mrf.mxu0
      %v2451 = vadd.f32 0.0, %v2450
      %v2452 = vpop.f32.mrf.mxu0
      %v2453 = vadd.f32 0.0, %v2452
      %2454 = vmatprep.mubr.f32.mxu0 0.0
      %2455 = vmatmul.mubr.f32.gmra.mxu0 %v2342
      %v2456 = vpop.f32.mrf.mxu0
      %v2457 = vadd.f32 0.0, %v2456
      %v2458 = vpop.f32.mrf.mxu0
      %v2459 = vadd.f32 0.0, %v2458
      %2460 = vmatprep.mubr.f32.mxu0 0.0
      %2461 = vmatmul.mubr.f32.gmra.mxu0 %v2345
      %v2462 = vpop.f32.mrf.mxu0
      %v2463 = vadd.f32 0.0, %v2462
      %v2464 = vpop.f32.mrf.mxu0
      %v2465 = vadd.f32 0.0, %v2464
      %2466 = vdwg.mxu0
      %v2468 = vsel %vm578, %v2214, 0
      %v2471 = vsel %vm578, %v2216, 0
      %v2474 = vsel %vm578, %v2218, 0
      %v2477 = vsel %vm578, %v2220, 0
      %v2480 = vsel %vm578, %v2222, 0
      %v2483 = vsel %vm578, %v2224, 0
      %v2486 = vsel %vm578, %v2226, 0
      %v2489 = vsel %vm578, %v2228, 0
      %v2492 = vsel %vm603, %v2281, 0
      %v2495 = vsel %vm603, %v2282, 0
      %2497 = vmatprep.subr.mxu0 %v2260
      %2498 = vmatpush1.msra.mxu0 %v2259
      %2499 = vmatprep.subr.mxu0 %v2258
      %2500 = vmatpush1.msra.mxu0 %v2257
      %2501 = vmatprep.subr.mxu0 %v2256
      %2502 = vmatpush1.msra.mxu0 %v2255
      %2503 = vmatprep.subr.mxu0 %v2254
      %2504 = vmatpush1.msra.mxu0 %v2253
      %2505 = vmatprep.subr.mxu0 %v2252
      %2506 = vmatpush1.msra.mxu0 %v2251
      %2507 = vmatprep.subr.mxu0 %v2250
      %2508 = vmatpush1.msra.mxu0 %v2249
      %2509 = vmatprep.subr.mxu0 %v2248
      %2510 = vmatpush1.msra.mxu0 %v2247
      %2511 = vmatprep.subr.mxu0 %v2246
      %2512 = vmatpush1.msra.mxu0 %v2245
      %2513 = vmatprep.subr.mxu0 %v2244
      %2514 = vmatpush1.msra.mxu0 %v2243
      %2515 = vmatprep.subr.mxu0 %v2242
      %2516 = vmatpush1.msra.mxu0 %v2241
      %2517 = vmatprep.subr.mxu0 %v2240
      %2518 = vmatpush1.msra.mxu0 %v2239
      %2519 = vmatprep.subr.mxu0 %v2238
      %2520 = vmatpush1.msra.mxu0 %v2237
      %2521 = vmatprep.subr.mxu0 %v2236
      %2522 = vmatpush1.msra.mxu0 %v2235
      %2523 = vmatprep.subr.mxu0 %v2234
      %2524 = vmatpush1.msra.mxu0 %v2233
      %2525 = vmatprep.subr.mxu0 %v2232
      %2526 = vmatpush1.msra.mxu0 %v2231
      %2527 = vmatprep.subr.mxu0 %v2230
      %2528 = vmatpush1.msra.mxu0 %v2229
      %2529 = vmatprep.subr.mxu0 0.0
      %2530 = vmatpush2.msra.mxu0 0.0
      %2531 = vmatprep.subr.mxu0 0.0
      %2532 = vmatpush2.msra.mxu0 0.0
      %2533 = vmatprep.subr.mxu0 0.0
      %2534 = vmatpush2.msra.mxu0 0.0
      %2535 = vmatprep.subr.mxu0 0.0
      %2536 = vmatpush2.msra.mxu0 0.0
      %2537 = vmatprep.subr.mxu0 0.0
      %2538 = vmatpush2.msra.mxu0 0.0
      %2539 = vmatprep.subr.mxu0 %v2495
      %2540 = vmatpush2.msra.mxu0 %v2492
      %2541 = vmatprep.subr.mxu0 %v2280
      %2542 = vmatpush2.msra.mxu0 %v2279
      %2543 = vmatprep.subr.mxu0 %v2278
      %2544 = vmatpush2.msra.mxu0 %v2277
      %2545 = vmatprep.subr.mxu0 %v2276
      %2546 = vmatpush2.msra.mxu0 %v2275
      %2547 = vmatprep.subr.mxu0 %v2274
      %2548 = vmatpush2.msra.mxu0 %v2273
      %2549 = vmatprep.subr.mxu0 %v2272
      %2550 = vmatpush2.msra.mxu0 %v2271
      %2551 = vmatprep.subr.mxu0 %v2270
      %2552 = vmatpush2.msra.mxu0 %v2269
      %2553 = vmatprep.subr.mxu0 %v2268
      %2554 = vmatpush2.msra.mxu0 %v2267
      %2555 = vmatprep.subr.mxu0 %v2266
      %2556 = vmatpush2.msra.mxu0 %v2265
      %2557 = vmatprep.subr.mxu0 %v2264
      %2558 = vmatpush2.msra.mxu0 %v2263
      %2559 = vmatprep.subr.mxu0 %v2262
      %2560 = vmatpush2.msra.mxu0 %v2261
      %2561 = vmatprep.mubr.f32.mxu0 %v2468
      %2562 = vmatmul.mubr.f32.gmra.mxu0 %v2213
      %v2563 = vpop.f32.mrf.mxu0
      %v2564 = vadd.f32 %v2421, %v2563
      %v2565 = vpop.f32.mrf.mxu0
      %v2566 = vadd.f32 %v2423, %v2565
      %2567 = vmatprep.mubr.f32.mxu0 %v2471
      %2568 = vmatmul.mubr.f32.gmra.mxu0 %v2215
      %v2569 = vpop.f32.mrf.mxu0
      %v2570 = vadd.f32 %v2427, %v2569
      %v2571 = vpop.f32.mrf.mxu0
      %v2572 = vadd.f32 %v2429, %v2571
      %2573 = vmatprep.mubr.f32.mxu0 %v2474
      %2574 = vmatmul.mubr.f32.gmra.mxu0 %v2217
      %v2575 = vpop.f32.mrf.mxu0
      %v2576 = vadd.f32 %v2433, %v2575
      %v2577 = vpop.f32.mrf.mxu0
      %v2578 = vadd.f32 %v2435, %v2577
      %2579 = vmatprep.mubr.f32.mxu0 %v2477
      %2580 = vmatmul.mubr.f32.gmra.mxu0 %v2219
      %v2581 = vpop.f32.mrf.mxu0
      %v2582 = vadd.f32 %v2439, %v2581
      %v2583 = vpop.f32.mrf.mxu0
      %v2584 = vadd.f32 %v2441, %v2583
      %2585 = vmatprep.mubr.f32.mxu0 %v2480
      %2586 = vmatmul.mubr.f32.gmra.mxu0 %v2221
      %v2587 = vpop.f32.mrf.mxu0
      %v2588 = vadd.f32 %v2445, %v2587
      %v2589 = vpop.f32.mrf.mxu0
      %v2590 = vadd.f32 %v2447, %v2589
      %2591 = vmatprep.mubr.f32.mxu0 %v2483
      %2592 = vmatmul.mubr.f32.gmra.mxu0 %v2223
      %v2593 = vpop.f32.mrf.mxu0
      %v2594 = vadd.f32 %v2451, %v2593
      %v2595 = vpop.f32.mrf.mxu0
      %v2596 = vadd.f32 %v2453, %v2595
      %2597 = vmatprep.mubr.f32.mxu0 %v2486
      %2598 = vmatmul.mubr.f32.gmra.mxu0 %v2225
      %v2599 = vpop.f32.mrf.mxu0
      %v2600 = vadd.f32 %v2457, %v2599
      %v2601 = vpop.f32.mrf.mxu0
      %v2602 = vadd.f32 %v2459, %v2601
      %2603 = vmatprep.mubr.f32.mxu0 %v2489
      %2604 = vmatmul.mubr.f32.gmra.mxu0 %v2227
      %v2605 = vpop.f32.mrf.mxu0
      %v2606 = vadd.f32 %v2463, %v2605
      %v2607 = vpop.f32.mrf.mxu0
      %v2608 = vadd.f32 %v2465, %v2607
      %2609 = vdwg.mxu0
      %2610 = vst [vmem:[%s440] sm:$0xff] %v2564
      %vm2611 = vcmask 375808
      %2612 = vst.msk [vmem:[%s440 + $0x8] sm:$0xff] %vm2611, %v2566
      %2613 = vst [vmem:[%s440 + $0x10] sm:$0xff] %v2570
      %2614 = vst.msk [vmem:[%s440 + $0x18] sm:$0xff] %vm2611, %v2572
      %2615 = vst [vmem:[%s440 + $0x20] sm:$0xff] %v2576
      %2616 = vst.msk [vmem:[%s440 + $0x28] sm:$0xff] %vm2611, %v2578
      %2617 = vst [vmem:[%s440 + $0x30] sm:$0xff] %v2582
      %2618 = vst.msk [vmem:[%s440 + $0x38] sm:$0xff] %vm2611, %v2584
      %2619 = vst [vmem:[%s440 + $0x40] sm:$0xff] %v2588
      %2620 = vst.msk [vmem:[%s440 + $0x48] sm:$0xff] %vm2611, %v2590
      %2621 = vst [vmem:[%s440 + $0x50] sm:$0xff] %v2594
      %2622 = vst.msk [vmem:[%s440 + $0x58] sm:$0xff] %vm2611, %v2596
      %2623 = vst [vmem:[%s440 + $0x60] sm:$0xff] %v2600
      %2624 = vst.msk [vmem:[%s440 + $0x68] sm:$0xff] %vm2611, %v2602
      %2625 = vst [vmem:[%s440 + $0x70] sm:$0xff] %v2606
      %2626 = vst.msk [vmem:[%s440 + $0x78] sm:$0xff] %vm2611, %v2608
      %p2627 = scmp.lt.s32.totalorder %s24, 1
      %s2628 = scalar_select %p2627, %s24, 1
      %s2629 = smul.addr %s2628, 16
      %s2630 = smul.addr %s2629, 8
      %s2631 = scalar_lea.vmem %s13, %s2630
      // Predicated region
      $region73: #{_lambda_.5} parent=71 // pred_check
        %p2632 = pneg %p320
      $region74: #{_lambda_.5} parent=71 // pred_check_branch
        %2634 = sbr.rel (%p2632) target = $region76
      $region75: #{_lambda_.5} parent=71 // pred_region
        _
      $region76: #{_lambda_.5} parent=71 // pred_fallthru
        _
    $region72: #{_lambda_.5} parent=5 // pred_fallthru
      _
    %p2635 = scmp.le.s32.totalorder 2, %s19
    // Predicated region
    $region77: #{_lambda_.5} parent=5 // pred_check
      %p2636 = pneg %p2635
    $region78: #{_lambda_.5} parent=5 // pred_check_branch
      %2638 = sbr.rel (%p2636) target = $region80
    $region79: #{_lambda_.5} parent=5 // pred_region
      %s2639 = ssub.s32 %s19, 2
      // Predicated region
      $region81: #{_lambda_.5} parent=79 // pred_check
        %p2640 = pneg %p326
      $region82: #{_lambda_.5} parent=79 // pred_check_branch
        %2642 = sbr.rel (%p2640) target = $region84
      $region83: #{_lambda_.5} parent=79 // pred_region
        %p2643 = scmp.lt.s32.totalorder %s25, 1
        %s2644 = scalar_select %p2643, %s25, 1
        %s2645 = smul.addr %s2644, 16
        %s2646 = smul.addr %s2645, 8
        %s2647 = scalar_lea.vmem %s13, %s2646
      $region84: #{_lambda_.5} parent=79 // pred_fallthru
        _
    $region80: #{_lambda_.5} parent=5 // pred_fallthru
      _
  $region6: #{_lambda_.5} parent=0 // loop_footer
    %s23 = sadd.s32 1, %s19
  $region7: #{_lambda_.5} parent=0 // loop_footer_branch
    %18 = sbr.rel target = $region3
  $region8: #{_lambda_.5} parent=0 // loop_exit
    _

// kernel: _lambda_.4
$region0: #{_lambda_.4}
  #allocation0 [shape = 'u32[]', space=smem, size = 0x4, offset = 0x4, fixed_abs, tag = 'smem constant byte address 0x4 - core index']
  #allocation1 [shape = 'u32[144,128]{1,0:T(1,128)}', space=vmem, size = 0x12000, scoped, tag = 'internal scratch']
  #allocation2 [shape = 'f32[10,10,200]{2,1,0:T(8,128)}', space=vmem, size = 0x28000, scoped, tag = 'scratch operand']
  %s0 = inlined_call_operand.hbm [shape: f32[2,8,8,200], index: 0, kind: input, shape index: {}]
  %s1 = inlined_call_operand.hbm [shape: f32[3,3,200,212], index: 1, kind: input, shape index: {}]
  %s2 = inlined_call_operand.vmem [shape: f32[2,8,8,212], index: 2, kind: output, shape index: {}]
  %s3 = sld [smem:[#allocation0]]
  $region49: #{_lambda_.4} parent=0
    _
  %s5 = ssub.s32 1, %s3
  %s6 = scalar_select 0, %s5, %s3
  $region1: #{_lambda_.4} parent=0
    #allocation3 [shape = 'u8[131072]{0}', space=vmem, size = 0x20000, scoped, tag = 'input window, operand 0']
    #allocation4 [shape = 's32[2]{0}', space=sflag, size = 0x8, scoped, tag = 'scoped memory for _lambda_.4']
    #allocation5 [shape = 'u8[1843200]{0}', space=vmem, size = 0x1c2000, scoped, tag = 'input window, operand 1, single buffered']
    #allocation6 [shape = 's32[1]{0}', space=sflag, size = 0x4, scoped, tag = 'scoped memory for _lambda_.4']
    %7 = vsyncpa [#allocation4], 0
    %s8 = scalar_lea.sflag [#allocation4], 1
    %9 = vsyncpa %s8, 0
    %10 = vsyncpa [#allocation6], 0
    loop: start=0, step=1, limit=4
    $region2: #{_lambda_.4} parent=1 // loop_pre_header
      _
    $region3: #{_lambda_.4} parent=1 // loop_header
      %s12 = sphi 0, %s16
      %p13 = scmp.ge.s32.totalorder %s12, 4
      %s22 = sphi 0, %s24
      %s25 = sphi 0, %s22
      %s26 = sphi 0, %s25
      %s42 = sphi 0, %s26
      %s46 = sphi 0, %s46
      %s48 = sphi 0, %s46
      %s49 = sphi 0, %s48
      %s63 = sphi 0, %s49
      %s69 = sphi 0, %s71
      %s72 = sphi 0, %s69
      %s73 = sphi 0, %s72
      %s89 = sphi 0, %s73
    $region4: #{_lambda_.4} parent=1 // loop_header_branch
      %15 = sbr.rel (%p13) target = $region8
    $region5: #{_lambda_.4} parent=1 // loop_body
      %s17 = ssub.s32 %s12, 1
      %s18 = ssub.s32 %s12, 2
      %s19 = sadd.s32 %s12, 1
      %s20 = ssub.s32 %s12, %s19
      %p21 = scmp.eq.s32.totalorder %s20, 0
      %s23 = sadd.s32 %s22, 1
      %s24 = scalar_select %p21, %s22, %s23
      %p27 = pneg %p21
      %p28 = scmp.eq.s32.totalorder %s12, 1
      %p29 = por %p27, %p28
      %p30 = scmp.ne.s32.totalorder %s22, %s25
      %p31 = scmp.eq.s32.totalorder %s12, 0
      %p32 = por %p30, %p31
      %p33 = scmp.ne.s32.totalorder %s22, %s25
      %p34 = scmp.eq.s32.totalorder %s17, 1
      %p35 = por %p33, %p34
      %p36 = scmp.ne.s32.totalorder %s25, %s26
      %p37 = scmp.eq.s32.totalorder %s17, 0
      %p38 = por %p36, %p37
      %p39 = scmp.ne.s32.totalorder %s25, %s26
      %p40 = scmp.eq.s32.totalorder %s18, 1
      %p41 = por %p39, %p40
      %p43 = scmp.ne.s32.totalorder %s26, %s42
      %p44 = scmp.eq.s32.totalorder %s18, 0
      %p45 = por %p43, %p44
      %s47 = sadd.s32 %s46, 1
      %p50 = scmp.eq.s32.totalorder %s12, 1
      %p51 = scmp.ne.s32.totalorder %s46, %s48
      %p52 = scmp.eq.s32.totalorder %s12, 0
      %p53 = por %p51, %p52
      %p54 = scmp.ne.s32.totalorder %s46, %s48
      %p55 = scmp.eq.s32.totalorder %s17, 1
      %p56 = por %p54, %p55
      %p57 = scmp.ne.s32.totalorder %s48, %s49
      %p58 = scmp.eq.s32.totalorder %s17, 0
      %p59 = por %p57, %p58
      %p60 = scmp.ne.s32.totalorder %s48, %s49
      %p61 = scmp.eq.s32.totalorder %s18, 1
      %p62 = por %p60, %p61
      %p64 = scmp.ne.s32.totalorder %s49, %s63
      %p65 = scmp.eq.s32.totalorder %s18, 0
      %p66 = por %p64, %p65
      %s67 = ssub.s32 %s12, %s19
      %p68 = scmp.eq.s32.totalorder %s67, 0
      %s70 = sadd.s32 %s69, 1
      %s71 = scalar_select %p68, %s69, %s70
      %p74 = pneg %p68
      %p75 = scmp.eq.s32.totalorder %s12, 1
      %p76 = por %p74, %p75
      %p77 = scmp.ne.s32.totalorder %s69, %s72
      %p78 = scmp.eq.s32.totalorder %s12, 0
      %p79 = por %p77, %p78
      %p80 = scmp.ne.s32.totalorder %s69, %s72
      %p81 = scmp.eq.s32.totalorder %s17, 1
      %p82 = por %p80, %p81
      %p83 = scmp.ne.s32.totalorder %s72, %s73
      %p84 = scmp.eq.s32.totalorder %s17, 0
      %p85 = por %p83, %p84
      %p86 = scmp.ne.s32.totalorder %s72, %s73
      %p87 = scmp.eq.s32.totalorder %s18, 1
      %p88 = por %p86, %p87
      %p90 = scmp.ne.s32.totalorder %s73, %s89
      %p91 = scmp.eq.s32.totalorder %s18, 0
      %p92 = por %p90, %p91
      %p93 = scmp.le.s32.totalorder 1, %s12
      %p94 = scmp.lt.s32.totalorder %s12, 3
      %p95 = pnand %p93, %p94
      %p96 = pneg %p95
      // Predicated region
      $region9: #{_lambda_.4} parent=5 // pred_check
        _
      $region10: #{_lambda_.4} parent=5 // pred_check_branch
        %98 = sbr.rel (%p95) target = $region12
      $region11: #{_lambda_.4} parent=5 // pred_region
        %s99 = ssub.s32 %s12, 1
        // Predicated region
        $region13: #{_lambda_.4} parent=11 // pred_check
          %p100 = pneg %p59
        $region14: #{_lambda_.4} parent=11 // pred_check_branch
          %102 = sbr.rel (%p100) target = $region16
        $region15: #{_lambda_.4} parent=11 // pred_region
          %s104 = ssub.s32 57600, 57600
          %105 = vsyncadd [#allocation6], %s104
          %s106 = sshll.u32 [#allocation5], 4
          %s107 = int_to_ptr.vmem [resolvable:$true] %s106
          %112 = dma.hbm_to_vmem [thread:$0]  %s1, 57600, %s107, [#allocation6], 256, 256, 16
        $region16: #{_lambda_.4} parent=11 // pred_fallthru
          _
      $region12: #{_lambda_.4} parent=5 // pred_fallthru
        _
      %p113 = scmp.lt.s32.totalorder %s12, 2
      // Predicated region
      $region17: #{_lambda_.4} parent=5 // pred_check
        %p114 = pneg %p113
      $region18: #{_lambda_.4} parent=5 // pred_check_branch
        %116 = sbr.rel (%p114) target = $region20
      $region19: #{_lambda_.4} parent=5 // pred_region
        // Predicated region
        $region21: #{_lambda_.4} parent=19 // pred_check
          %p117 = pneg %p32
        $region22: #{_lambda_.4} parent=19 // pred_check_branch
          %119 = sbr.rel (%p117) target = $region24
        $region23: #{_lambda_.4} parent=19 // pred_region
          %s120 = sand.u32 %s22, 1
          %s121 = scalar_lea.sflag [#allocation4], %s120
          %s122 = sand.u32 %s22, 1
          %s123 = smul.addr %s122, 128
          %s124 = scalar_lea.vmem [#allocation3], %s123
          %s126 = ssub.s32 2048, 2048
          %127 = vsyncadd %s121, %s126
          %s128 = smul.addr %s12, 16
          %s129 = smul.addr %s128, 128
          %s130 = scalar_lea.hbm %s0, %s129
          %s131 = sshll.u32 %s124, 4
          %s132 = int_to_ptr.vmem [resolvable:$true] %s131
          %137 = dma.hbm_to_vmem [thread:$0]  %s130, 2048, %s132, %s121, 256, 256, 16
        $region24: #{_lambda_.4} parent=19 // pred_fallthru
          _
      $region20: #{_lambda_.4} parent=5 // pred_fallthru
        _
      %p138 = scmp.le.s32.totalorder 1, %s12
      %p139 = scmp.lt.s32.totalorder %s12, 3
      %p140 = pnand %p138, %p139
      %p141 = pneg %p140
      // Predicated region
      $region25: #{_lambda_.4} parent=5 // pred_check
        _
      $region26: #{_lambda_.4} parent=5 // pred_check_branch
        %143 = sbr.rel (%p140) target = $region28
      $region27: #{_lambda_.4} parent=5 // pred_region
        %s144 = ssub.s32 %s12, 1
        %s145 = sand.u32 %s25, 1
        %s146 = scalar_lea.sflag [#allocation4], %s145
        %s147 = sand.u32 %s25, 1
        %s148 = smul.addr %s147, 128
        %s149 = scalar_lea.vmem [#allocation3], %s148
        // Predicated region
        $region29: #{_lambda_.4} parent=27 // pred_check
          %p150 = pneg %p38
        $region30: #{_lambda_.4} parent=27 // pred_check_branch
          %152 = sbr.rel (%p150) target = $region32
        $region31: #{_lambda_.4} parent=27 // pred_region
          %153 = dma.done %s146, 2048
        $region32: #{_lambda_.4} parent=27 // pred_fallthru
          _
        // Predicated region
        $region33: #{_lambda_.4} parent=27 // pred_check
          %p154 = pneg %p59
        $region34: #{_lambda_.4} parent=27 // pred_check_branch
          %156 = sbr.rel (%p154) target = $region36
        $region35: #{_lambda_.4} parent=27 // pred_region
          %157 = dma.done [#allocation6], 57600
        $region36: #{_lambda_.4} parent=27 // pred_fallthru
          _
        %s158 = sand.u32 %s25, 1
        %s159 = scalar_lea.sflag [#allocation4], %s158
        %s160 = sand.u32 %s25, 1
        %s161 = smul.addr %s160, 128
        %s162 = scalar_lea.vmem [#allocation3], %s161
        %p163 = pneg %p38
        %p164 = pneg %p35
        %p165 = pneg %p59
        %p166 = pneg %p56
        %p167 = pneg %p85
        %p168 = pneg %p82
        %p169 = scmp.lt.s32.totalorder %s17, 1
        %s170 = scalar_select %p169, %s17, 1
        %s171 = smul.addr %s170, 16
        %s172 = smul.addr %s171, 8
        %s173 = scalar_lea.vmem %s2, %s172
        %p174 = scmp.lt.s32.totalorder %s17, 1
        %s175 = scalar_select %p174, %s17, 1
        %s176 = smul.addr %s175, 16
        %s177 = smul.addr %s176, 8
        %s178 = scalar_lea.vmem %s2, %s177
        %179 = vst [vmem:[#allocation2] sm:$0xff] 0.0
        %vm180 = vcmask 588800
        %181 = vst.msk [vmem:[#allocation2 + $0x8] sm:$0xff] %vm180, 0.0
        %182 = vst [vmem:[#allocation2 + $0x10] sm:$0x3] 0.0
        %vm183 = vcmask 582656
        %184 = vst.msk [vmem:[#allocation2 + $0x18] sm:$0x3] %vm183, 0.0
        %185 = vst [vmem:[#allocation2 + $0x20] sm:$0xff] 0.0
        %186 = vst.msk [vmem:[#allocation2 + $0x28] sm:$0xff] %vm180, 0.0
        %187 = vst [vmem:[#allocation2 + $0x30] sm:$0x3] 0.0
        %188 = vst.msk [vmem:[#allocation2 + $0x38] sm:$0x3] %vm183, 0.0
        %189 = vst [vmem:[#allocation2 + $0x40] sm:$0xff] 0.0
        %190 = vst.msk [vmem:[#allocation2 + $0x48] sm:$0xff] %vm180, 0.0
        %191 = vst [vmem:[#allocation2 + $0x50] sm:$0x3] 0.0
        %192 = vst.msk [vmem:[#allocation2 + $0x58] sm:$0x3] %vm183, 0.0
        %193 = vst [vmem:[#allocation2 + $0x60] sm:$0xff] 0.0
        %194 = vst.msk [vmem:[#allocation2 + $0x68] sm:$0xff] %vm180, 0.0
        %195 = vst [vmem:[#allocation2 + $0x70] sm:$0x3] 0.0
        %196 = vst.msk [vmem:[#allocation2 + $0x78] sm:$0x3] %vm183, 0.0
        %197 = vst [vmem:[#allocation2 + $0x80] sm:$0xff] 0.0
        %198 = vst.msk [vmem:[#allocation2 + $0x88] sm:$0xff] %vm180, 0.0
        %199 = vst [vmem:[#allocation2 + $0x90] sm:$0x3] 0.0
        %200 = vst.msk [vmem:[#allocation2 + $0x98] sm:$0x3] %vm183, 0.0
        %201 = vst [vmem:[#allocation2 + $0xa0] sm:$0xff] 0.0
        %202 = vst.msk [vmem:[#allocation2 + $0xa8] sm:$0xff] %vm180, 0.0
        %203 = vst [vmem:[#allocation2 + $0xb0] sm:$0x3] 0.0
        %204 = vst.msk [vmem:[#allocation2 + $0xb8] sm:$0x3] %vm183, 0.0
        %205 = vst [vmem:[#allocation2 + $0xc0] sm:$0xff] 0.0
        %206 = vst.msk [vmem:[#allocation2 + $0xc8] sm:$0xff] %vm180, 0.0
        %207 = vst [vmem:[#allocation2 + $0xd0] sm:$0x3] 0.0
        %208 = vst.msk [vmem:[#allocation2 + $0xd8] sm:$0x3] %vm183, 0.0
        %209 = vst [vmem:[#allocation2 + $0xe0] sm:$0xff] 0.0
        %210 = vst.msk [vmem:[#allocation2 + $0xe8] sm:$0xff] %vm180, 0.0
        %211 = vst [vmem:[#allocation2 + $0xf0] sm:$0x3] 0.0
        %212 = vst.msk [vmem:[#allocation2 + $0xf8] sm:$0x3] %vm183, 0.0
        %213 = vst [vmem:[#allocation2 + $0x100] sm:$0xff] 0.0
        %214 = vst.msk [vmem:[#allocation2 + $0x108] sm:$0xff] %vm180, 0.0
        %215 = vst [vmem:[#allocation2 + $0x110] sm:$0x3] 0.0
        %216 = vst.msk [vmem:[#allocation2 + $0x118] sm:$0x3] %vm183, 0.0
        %217 = vst [vmem:[#allocation2 + $0x120] sm:$0xff] 0.0
        %218 = vst.msk [vmem:[#allocation2 + $0x128] sm:$0xff] %vm180, 0.0
        %219 = vst [vmem:[#allocation2 + $0x130] sm:$0x3] 0.0
        %220 = vst.msk [vmem:[#allocation2 + $0x138] sm:$0x3] %vm183, 0.0
        %v221 = vld [vmem:[%s149] sm:$0xff]
        %v222 = vld [vmem:[%s149 + $0x8] sm:$0xff]
        %v223 = vld [vmem:[%s149 + $0x10] sm:$0xff]
        %v224 = vld [vmem:[%s149 + $0x18] sm:$0xff]
        %v225 = vld [vmem:[%s149 + $0x20] sm:$0xff]
        %v226 = vld [vmem:[%s149 + $0x28] sm:$0xff]
        %v227 = vld [vmem:[%s149 + $0x30] sm:$0xff]
        %v228 = vld [vmem:[%s149 + $0x38] sm:$0xff]
        %v229 = vld [vmem:[%s149 + $0x40] sm:$0xff]
        %v230 = vld [vmem:[%s149 + $0x48] sm:$0xff]
        %v231 = vld [vmem:[%s149 + $0x50] sm:$0xff]
        %v232 = vld [vmem:[%s149 + $0x58] sm:$0xff]
        %v233 = vld [vmem:[%s149 + $0x60] sm:$0xff]
        %v234 = vld [vmem:[%s149 + $0x68] sm:$0xff]
        %v235 = vld [vmem:[%s149 + $0x70] sm:$0xff]
        %v236 = vld [vmem:[%s149 + $0x78] sm:$0xff]
        %v253 = vrot.slane %v221, 7
        %v254 = vrot.slane %v222, 7
        %v255 = vrot.slane %v223, 7
        %v256 = vrot.slane %v224, 7
        %v257 = vrot.slane %v225, 7
        %v258 = vrot.slane %v226, 7
        %v259 = vrot.slane %v227, 7
        %v260 = vrot.slane %v228, 7
        %v261 = vrot.slane %v229, 7
        %v262 = vrot.slane %v230, 7
        %v263 = vrot.slane %v231, 7
        %v264 = vrot.slane %v232, 7
        %v265 = vrot.slane %v233, 7
        %v266 = vrot.slane %v234, 7
        %v267 = vrot.slane %v235, 7
        %v268 = vrot.slane %v236, 7
        %s285 = scalar_lea.vmem [#allocation2], 32
        %286 = vst [vmem:[%s285] sm:$0xfe] %v253
        %vm287 = vcmask 588801
        %288 = vst.msk [vmem:[%s285 + $0x8] sm:$0xfe] %vm287, %v254
        %289 = vst [vmem:[%s285 + $0x10] sm:$0x1] %v253
        %vm290 = vcmask 581632
        %291 = vst.msk [vmem:[%s285 + $0x18] sm:$0x1] %vm290, %v254
        %292 = vst [vmem:[%s285 + $0x20] sm:$0xfe] %v255
        %293 = vst.msk [vmem:[%s285 + $0x28] sm:$0xfe] %vm287, %v256
        %294 = vst [vmem:[%s285 + $0x30] sm:$0x1] %v255
        %295 = vst.msk [vmem:[%s285 + $0x38] sm:$0x1] %vm290, %v256
        %296 = vst [vmem:[%s285 + $0x40] sm:$0xfe] %v257
        %297 = vst.msk [vmem:[%s285 + $0x48] sm:$0xfe] %vm287, %v258
        %298 = vst [vmem:[%s285 + $0x50] sm:$0x1] %v257
        %299 = vst.msk [vmem:[%s285 + $0x58] sm:$0x1] %vm290, %v258
        %300 = vst [vmem:[%s285 + $0x60] sm:$0xfe] %v259
        %301 = vst.msk [vmem:[%s285 + $0x68] sm:$0xfe] %vm287, %v260
        %302 = vst [vmem:[%s285 + $0x70] sm:$0x1] %v259
        %303 = vst.msk [vmem:[%s285 + $0x78] sm:$0x1] %vm290, %v260
        %304 = vst [vmem:[%s285 + $0x80] sm:$0xfe] %v261
        %305 = vst.msk [vmem:[%s285 + $0x88] sm:$0xfe] %vm287, %v262
        %306 = vst [vmem:[%s285 + $0x90] sm:$0x1] %v261
        %307 = vst.msk [vmem:[%s285 + $0x98] sm:$0x1] %vm290, %v262
        %308 = vst [vmem:[%s285 + $0xa0] sm:$0xfe] %v263
        %309 = vst.msk [vmem:[%s285 + $0xa8] sm:$0xfe] %vm287, %v264
        %310 = vst [vmem:[%s285 + $0xb0] sm:$0x1] %v263
        %311 = vst.msk [vmem:[%s285 + $0xb8] sm:$0x1] %vm290, %v264
        %312 = vst [vmem:[%s285 + $0xc0] sm:$0xfe] %v265
        %313 = vst.msk [vmem:[%s285 + $0xc8] sm:$0xfe] %vm287, %v266
        %314 = vst [vmem:[%s285 + $0xd0] sm:$0x1] %v265
        %315 = vst.msk [vmem:[%s285 + $0xd8] sm:$0x1] %vm290, %v266
        %316 = vst [vmem:[%s285 + $0xe0] sm:$0xfe] %v267
        %317 = vst.msk [vmem:[%s285 + $0xe8] sm:$0xfe] %vm287, %v268
        %318 = vst [vmem:[%s285 + $0xf0] sm:$0x1] %v267
        %319 = vst.msk [vmem:[%s285 + $0xf8] sm:$0x1] %vm290, %v268
        %v320 = vld [vmem:[#allocation2] sm:$0xff]
        %v321 = vld [vmem:[#allocation2 + $0x8] sm:$0xff]
        %v322 = vld [vmem:[#allocation2 + $0x20] sm:$0xff]
        %v323 = vld [vmem:[#allocation2 + $0x28] sm:$0xff]
        %v324 = vld [vmem:[#allocation2 + $0x40] sm:$0xff]
        %v325 = vld [vmem:[#allocation2 + $0x48] sm:$0xff]
        %v326 = vld [vmem:[#allocation2 + $0x60] sm:$0xff]
        %v327 = vld [vmem:[#allocation2 + $0x68] sm:$0xff]
        %v328 = vld [vmem:[#allocation2 + $0x80] sm:$0xff]
        %v329 = vld [vmem:[#allocation2 + $0x88] sm:$0xff]
        %v330 = vld [vmem:[#allocation2 + $0xa0] sm:$0xff]
        %v331 = vld [vmem:[#allocation2 + $0xa8] sm:$0xff]
        %v332 = vld [vmem:[#allocation2 + $0xc0] sm:$0xff]
        %v333 = vld [vmem:[#allocation2 + $0xc8] sm:$0xff]
        %v334 = vld [vmem:[#allocation2 + $0xe0] sm:$0xff]
        %v335 = vld [vmem:[#allocation2 + $0xe8] sm:$0xff]
        %v336 = vld [vmem:[#allocation2] sm:$0xfe]
        %v337 = vld [vmem:[#allocation2 + $0x8] sm:$0xfe]
        %v338 = vld [vmem:[#allocation2 + $0x10] sm:$0x1]
        %v339 = vld [vmem:[#allocation2 + $0x18] sm:$0x1]
        %v340 = vld [vmem:[#allocation2 + $0x20] sm:$0xfe]
        %v341 = vld [vmem:[#allocation2 + $0x28] sm:$0xfe]
        %v342 = vld [vmem:[#allocation2 + $0x30] sm:$0x1]
        %v343 = vld [vmem:[#allocation2 + $0x38] sm:$0x1]
        %v344 = vld [vmem:[#allocation2 + $0x40] sm:$0xfe]
        %v345 = vld [vmem:[#allocation2 + $0x48] sm:$0xfe]
        %v346 = vld [vmem:[#allocation2 + $0x50] sm:$0x1]
        %v347 = vld [vmem:[#allocation2 + $0x58] sm:$0x1]
        %v348 = vld [vmem:[#allocation2 + $0x60] sm:$0xfe]
        %v349 = vld [vmem:[#allocation2 + $0x68] sm:$0xfe]
        %v350 = vld [vmem:[#allocation2 + $0x70] sm:$0x1]
        %v351 = vld [vmem:[#allocation2 + $0x78] sm:$0x1]
        %v352 = vld [vmem:[#allocation2 + $0x80] sm:$0xfe]
        %v353 = vld [vmem:[#allocation2 + $0x88] sm:$0xfe]
        %v354 = vld [vmem:[#allocation2 + $0x90] sm:$0x1]
        %v355 = vld [vmem:[#allocation2 + $0x98] sm:$0x1]
        %v356 = vld [vmem:[#allocation2 + $0xa0] sm:$0xfe]
        %v357 = vld [vmem:[#allocation2 + $0xa8] sm:$0xfe]
        %v358 = vld [vmem:[#allocation2 + $0xb0] sm:$0x1]
        %v359 = vld [vmem:[#allocation2 + $0xb8] sm:$0x1]
        %v360 = vld [vmem:[#allocation2 + $0xc0] sm:$0xfe]
        %v361 = vld [vmem:[#allocation2 + $0xc8] sm:$0xfe]
        %v362 = vld [vmem:[#allocation2 + $0xd0] sm:$0x1]
        %v363 = vld [vmem:[#allocation2 + $0xd8] sm:$0x1]
        %v364 = vld [vmem:[#allocation2 + $0xe0] sm:$0xfe]
        %v365 = vld [vmem:[#allocation2 + $0xe8] sm:$0xfe]
        %v366 = vld [vmem:[#allocation2 + $0xf0] sm:$0x1]
        %v367 = vld [vmem:[#allocation2 + $0xf8] sm:$0x1]
        %v368 = vld [vmem:[#allocation2] sm:$0xfc]
        %v369 = vld [vmem:[#allocation2 + $0x8] sm:$0xfc]
        %v370 = vld [vmem:[#allocation2 + $0x10] sm:$0x3]
        %v371 = vld [vmem:[#allocation2 + $0x18] sm:$0x3]
        %v372 = vld [vmem:[#allocation2 + $0x20] sm:$0xfc]
        %v373 = vld [vmem:[#allocation2 + $0x28] sm:$0xfc]
        %v374 = vld [vmem:[#allocation2 + $0x30] sm:$0x3]
        %v375 = vld [vmem:[#allocation2 + $0x38] sm:$0x3]
        %v376 = vld [vmem:[#allocation2 + $0x40] sm:$0xfc]
        %v377 = vld [vmem:[#allocation2 + $0x48] sm:$0xfc]
        %v378 = vld [vmem:[#allocation2 + $0x50] sm:$0x3]
        %v379 = vld [vmem:[#allocation2 + $0x58] sm:$0x3]
        %v380 = vld [vmem:[#allocation2 + $0x60] sm:$0xfc]
        %v381 = vld [vmem:[#allocation2 + $0x68] sm:$0xfc]
        %v382 = vld [vmem:[#allocation2 + $0x70] sm:$0x3]
        %v383 = vld [vmem:[#allocation2 + $0x78] sm:$0x3]
        %v384 = vld [vmem:[#allocation2 + $0x80] sm:$0xfc]
        %v385 = vld [vmem:[#allocation2 + $0x88] sm:$0xfc]
        %v386 = vld [vmem:[#allocation2 + $0x90] sm:$0x3]
        %v387 = vld [vmem:[#allocation2 + $0x98] sm:$0x3]
        %v388 = vld [vmem:[#allocation2 + $0xa0] sm:$0xfc]
        %v389 = vld [vmem:[#allocation2 + $0xa8] sm:$0xfc]
        %v390 = vld [vmem:[#allocation2 + $0xb0] sm:$0x3]
        %v391 = vld [vmem:[#allocation2 + $0xb8] sm:$0x3]
        %v392 = vld [vmem:[#allocation2 + $0xc0] sm:$0xfc]
        %v393 = vld [vmem:[#allocation2 + $0xc8] sm:$0xfc]
        %v394 = vld [vmem:[#allocation2 + $0xd0] sm:$0x3]
        %v395 = vld [vmem:[#allocation2 + $0xd8] sm:$0x3]
        %v396 = vld [vmem:[#allocation2 + $0xe0] sm:$0xfc]
        %v397 = vld [vmem:[#allocation2 + $0xe8] sm:$0xfc]
        %v398 = vld [vmem:[#allocation2 + $0xf0] sm:$0x3]
        %v399 = vld [vmem:[#allocation2 + $0xf8] sm:$0x3]
        %v400 = vld [vmem:[%s285] sm:$0xff]
        %v401 = vld [vmem:[%s285 + $0x8] sm:$0xff]
        %v402 = vld [vmem:[%s285 + $0x20] sm:$0xff]
        %v403 = vld [vmem:[%s285 + $0x28] sm:$0xff]
        %v404 = vld [vmem:[%s285 + $0x40] sm:$0xff]
        %v405 = vld [vmem:[%s285 + $0x48] sm:$0xff]
        %v406 = vld [vmem:[%s285 + $0x60] sm:$0xff]
        %v407 = vld [vmem:[%s285 + $0x68] sm:$0xff]
        %v408 = vld [vmem:[%s285 + $0x80] sm:$0xff]
        %v409 = vld [vmem:[%s285 + $0x88] sm:$0xff]
        %v410 = vld [vmem:[%s285 + $0xa0] sm:$0xff]
        %v411 = vld [vmem:[%s285 + $0xa8] sm:$0xff]
        %v412 = vld [vmem:[%s285 + $0xc0] sm:$0xff]
        %v413 = vld [vmem:[%s285 + $0xc8] sm:$0xff]
        %v414 = vld [vmem:[%s285 + $0xe0] sm:$0xff]
        %v415 = vld [vmem:[%s285 + $0xe8] sm:$0xff]
        %v416 = vld [vmem:[%s285] sm:$0xfe]
        %v417 = vld [vmem:[%s285 + $0x8] sm:$0xfe]
        %v418 = vld [vmem:[%s285 + $0x10] sm:$0x1]
        %v419 = vld [vmem:[%s285 + $0x18] sm:$0x1]
        %v420 = vld [vmem:[%s285 + $0x20] sm:$0xfe]
        %v421 = vld [vmem:[%s285 + $0x28] sm:$0xfe]
        %v422 = vld [vmem:[%s285 + $0x30] sm:$0x1]
        %v423 = vld [vmem:[%s285 + $0x38] sm:$0x1]
        %v424 = vld [vmem:[%s285 + $0x40] sm:$0xfe]
        %v425 = vld [vmem:[%s285 + $0x48] sm:$0xfe]
        %v426 = vld [vmem:[%s285 + $0x50] sm:$0x1]
        %v427 = vld [vmem:[%s285 + $0x58] sm:$0x1]
        %v428 = vld [vmem:[%s285 + $0x60] sm:$0xfe]
        %v429 = vld [vmem:[%s285 + $0x68] sm:$0xfe]
        %v430 = vld [vmem:[%s285 + $0x70] sm:$0x1]
        %v431 = vld [vmem:[%s285 + $0x78] sm:$0x1]
        %v432 = vld [vmem:[%s285 + $0x80] sm:$0xfe]
        %v433 = vld [vmem:[%s285 + $0x88] sm:$0xfe]
        %v434 = vld [vmem:[%s285 + $0x90] sm:$0x1]
        %v435 = vld [vmem:[%s285 + $0x98] sm:$0x1]
        %v436 = vld [vmem:[%s285 + $0xa0] sm:$0xfe]
        %v437 = vld [vmem:[%s285 + $0xa8] sm:$0xfe]
        %v438 = vld [vmem:[%s285 + $0xb0] sm:$0x1]
        %v439 = vld [vmem:[%s285 + $0xb8] sm:$0x1]
        %v440 = vld [vmem:[%s285 + $0xc0] sm:$0xfe]
        %v441 = vld [vmem:[%s285 + $0xc8] sm:$0xfe]
        %v442 = vld [vmem:[%s285 + $0xd0] sm:$0x1]
        %v443 = vld [vmem:[%s285 + $0xd8] sm:$0x1]
        %v444 = vld [vmem:[%s285 + $0xe0] sm:$0xfe]
        %v445 = vld [vmem:[%s285 + $0xe8] sm:$0xfe]
        %v446 = vld [vmem:[%s285 + $0xf0] sm:$0x1]
        %v447 = vld [vmem:[%s285 + $0xf8] sm:$0x1]
        %v448 = vld [vmem:[%s285] sm:$0xfc]
        %v449 = vld [vmem:[%s285 + $0x8] sm:$0xfc]
        %v450 = vld [vmem:[%s285 + $0x10] sm:$0x3]
        %v451 = vld [vmem:[%s285 + $0x18] sm:$0x3]
        %v452 = vld [vmem:[%s285 + $0x20] sm:$0xfc]
        %v453 = vld [vmem:[%s285 + $0x28] sm:$0xfc]
        %v454 = vld [vmem:[%s285 + $0x30] sm:$0x3]
        %v455 = vld [vmem:[%s285 + $0x38] sm:$0x3]
        %v456 = vld [vmem:[%s285 + $0x40] sm:$0xfc]
        %v457 = vld [vmem:[%s285 + $0x48] sm:$0xfc]
        %v458 = vld [vmem:[%s285 + $0x50] sm:$0x3]
        %v459 = vld [vmem:[%s285 + $0x58] sm:$0x3]
        %v460 = vld [vmem:[%s285 + $0x60] sm:$0xfc]
        %v461 = vld [vmem:[%s285 + $0x68] sm:$0xfc]
        %v462 = vld [vmem:[%s285 + $0x70] sm:$0x3]
        %v463 = vld [vmem:[%s285 + $0x78] sm:$0x3]
        %v464 = vld [vmem:[%s285 + $0x80] sm:$0xfc]
        %v465 = vld [vmem:[%s285 + $0x88] sm:$0xfc]
        %v466 = vld [vmem:[%s285 + $0x90] sm:$0x3]
        %v467 = vld [vmem:[%s285 + $0x98] sm:$0x3]
        %v468 = vld [vmem:[%s285 + $0xa0] sm:$0xfc]
        %v469 = vld [vmem:[%s285 + $0xa8] sm:$0xfc]
        %v470 = vld [vmem:[%s285 + $0xb0] sm:$0x3]
        %v471 = vld [vmem:[%s285 + $0xb8] sm:$0x3]
        %v472 = vld [vmem:[%s285 + $0xc0] sm:$0xfc]
        %v473 = vld [vmem:[%s285 + $0xc8] sm:$0xfc]
        %v474 = vld [vmem:[%s285 + $0xd0] sm:$0x3]
        %v475 = vld [vmem:[%s285 + $0xd8] sm:$0x3]
        %v476 = vld [vmem:[%s285 + $0xe0] sm:$0xfc]
        %v477 = vld [vmem:[%s285 + $0xe8] sm:$0xfc]
        %v478 = vld [vmem:[%s285 + $0xf0] sm:$0x3]
        %v479 = vld [vmem:[%s285 + $0xf8] sm:$0x3]
        %s480 = scalar_lea.vmem [#allocation2], 64
        %v481 = vld [vmem:[%s480] sm:$0xff]
        %v482 = vld [vmem:[%s480 + $0x8] sm:$0xff]
        %v483 = vld [vmem:[%s480 + $0x20] sm:$0xff]
        %v484 = vld [vmem:[%s480 + $0x28] sm:$0xff]
        %v485 = vld [vmem:[%s480 + $0x40] sm:$0xff]
        %v486 = vld [vmem:[%s480 + $0x48] sm:$0xff]
        %v487 = vld [vmem:[%s480 + $0x60] sm:$0xff]
        %v488 = vld [vmem:[%s480 + $0x68] sm:$0xff]
        %v489 = vld [vmem:[%s480 + $0x80] sm:$0xff]
        %v490 = vld [vmem:[%s480 + $0x88] sm:$0xff]
        %v491 = vld [vmem:[%s480 + $0xa0] sm:$0xff]
        %v492 = vld [vmem:[%s480 + $0xa8] sm:$0xff]
        %v493 = vld [vmem:[%s480 + $0xc0] sm:$0xff]
        %v494 = vld [vmem:[%s480 + $0xc8] sm:$0xff]
        %v495 = vld [vmem:[%s480 + $0xe0] sm:$0xff]
        %v496 = vld [vmem:[%s480 + $0xe8] sm:$0xff]
        %v497 = vld [vmem:[%s480] sm:$0xfe]
        %v498 = vld [vmem:[%s480 + $0x8] sm:$0xfe]
        %v499 = vld [vmem:[%s480 + $0x10] sm:$0x1]
        %v500 = vld [vmem:[%s480 + $0x18] sm:$0x1]
        %v501 = vld [vmem:[%s480 + $0x20] sm:$0xfe]
        %v502 = vld [vmem:[%s480 + $0x28] sm:$0xfe]
        %v503 = vld [vmem:[%s480 + $0x30] sm:$0x1]
        %v504 = vld [vmem:[%s480 + $0x38] sm:$0x1]
        %v505 = vld [vmem:[%s480 + $0x40] sm:$0xfe]
        %v506 = vld [vmem:[%s480 + $0x48] sm:$0xfe]
        %v507 = vld [vmem:[%s480 + $0x50] sm:$0x1]
        %v508 = vld [vmem:[%s480 + $0x58] sm:$0x1]
        %v509 = vld [vmem:[%s480 + $0x60] sm:$0xfe]
        %v510 = vld [vmem:[%s480 + $0x68] sm:$0xfe]
        %v511 = vld [vmem:[%s480 + $0x70] sm:$0x1]
        %v512 = vld [vmem:[%s480 + $0x78] sm:$0x1]
        %v513 = vld [vmem:[%s480 + $0x80] sm:$0xfe]
        %v514 = vld [vmem:[%s480 + $0x88] sm:$0xfe]
        %v515 = vld [vmem:[%s480 + $0x90] sm:$0x1]
        %v516 = vld [vmem:[%s480 + $0x98] sm:$0x1]
        %v517 = vld [vmem:[%s480 + $0xa0] sm:$0xfe]
        %v518 = vld [vmem:[%s480 + $0xa8] sm:$0xfe]
        %v519 = vld [vmem:[%s480 + $0xb0] sm:$0x1]
        %v520 = vld [vmem:[%s480 + $0xb8] sm:$0x1]
        %v521 = vld [vmem:[%s480 + $0xc0] sm:$0xfe]
        %v522 = vld [vmem:[%s480 + $0xc8] sm:$0xfe]
        %v523 = vld [vmem:[%s480 + $0xd0] sm:$0x1]
        %v524 = vld [vmem:[%s480 + $0xd8] sm:$0x1]
        %v525 = vld [vmem:[%s480 + $0xe0] sm:$0xfe]
        %v526 = vld [vmem:[%s480 + $0xe8] sm:$0xfe]
        %v527 = vld [vmem:[%s480 + $0xf0] sm:$0x1]
        %v528 = vld [vmem:[%s480 + $0xf8] sm:$0x1]
        %v529 = vld [vmem:[%s480] sm:$0xfc]
        %v530 = vld [vmem:[%s480 + $0x8] sm:$0xfc]
        %v531 = vld [vmem:[%s480 + $0x10] sm:$0x3]
        %v532 = vld [vmem:[%s480 + $0x18] sm:$0x3]
        %v533 = vld [vmem:[%s480 + $0x20] sm:$0xfc]
        %v534 = vld [vmem:[%s480 + $0x28] sm:$0xfc]
        %v535 = vld [vmem:[%s480 + $0x30] sm:$0x3]
        %v536 = vld [vmem:[%s480 + $0x38] sm:$0x3]
        %v537 = vld [vmem:[%s480 + $0x40] sm:$0xfc]
        %v538 = vld [vmem:[%s480 + $0x48] sm:$0xfc]
        %v539 = vld [vmem:[%s480 + $0x50] sm:$0x3]
        %v540 = vld [vmem:[%s480 + $0x58] sm:$0x3]
        %v541 = vld [vmem:[%s480 + $0x60] sm:$0xfc]
        %v542 = vld [vmem:[%s480 + $0x68] sm:$0xfc]
        %v543 = vld [vmem:[%s480 + $0x70] sm:$0x3]
        %v544 = vld [vmem:[%s480 + $0x78] sm:$0x3]
        %v545 = vld [vmem:[%s480 + $0x80] sm:$0xfc]
        %v546 = vld [vmem:[%s480 + $0x88] sm:$0xfc]
        %v547 = vld [vmem:[%s480 + $0x90] sm:$0x3]
        %v548 = vld [vmem:[%s480 + $0x98] sm:$0x3]
        %v549 = vld [vmem:[%s480 + $0xa0] sm:$0xfc]
        %v550 = vld [vmem:[%s480 + $0xa8] sm:$0xfc]
        %v551 = vld [vmem:[%s480 + $0xb0] sm:$0x3]
        %v552 = vld [vmem:[%s480 + $0xb8] sm:$0x3]
        %v553 = vld [vmem:[%s480 + $0xc0] sm:$0xfc]
        %v554 = vld [vmem:[%s480 + $0xc8] sm:$0xfc]
        %v555 = vld [vmem:[%s480 + $0xd0] sm:$0x3]
        %v556 = vld [vmem:[%s480 + $0xd8] sm:$0x3]
        %v557 = vld [vmem:[%s480 + $0xe0] sm:$0xfc]
        %v558 = vld [vmem:[%s480 + $0xe8] sm:$0xfc]
        %v559 = vld [vmem:[%s480 + $0xf0] sm:$0x3]
        %v560 = vld [vmem:[%s480 + $0xf8] sm:$0x3]
        %vm593 = vcmask 1046528
        %v594 = vrot.slane %v336, 1
        %v595 = vrot.slane %v338, 1
        %v596 = vsel %vm593, %v594, %v595
        %v597 = vrot.slane %v337, 1
        %v598 = vrot.slane %v339, 1
        %v599 = vsel %vm593, %v597, %v598
        %v600 = vrot.slane %v340, 1
        %v601 = vrot.slane %v342, 1
        %v602 = vsel %vm593, %v600, %v601
        %v603 = vrot.slane %v341, 1
        %v604 = vrot.slane %v343, 1
        %v605 = vsel %vm593, %v603, %v604
        %v606 = vrot.slane %v344, 1
        %v607 = vrot.slane %v346, 1
        %v608 = vsel %vm593, %v606, %v607
        %v609 = vrot.slane %v345, 1
        %v610 = vrot.slane %v347, 1
        %v611 = vsel %vm593, %v609, %v610
        %v612 = vrot.slane %v348, 1
        %v613 = vrot.slane %v350, 1
        %v614 = vsel %vm593, %v612, %v613
        %v615 = vrot.slane %v349, 1
        %v616 = vrot.slane %v351, 1
        %v617 = vsel %vm593, %v615, %v616
        %v618 = vrot.slane %v352, 1
        %v619 = vrot.slane %v354, 1
        %v620 = vsel %vm593, %v618, %v619
        %v621 = vrot.slane %v353, 1
        %v622 = vrot.slane %v355, 1
        %v623 = vsel %vm593, %v621, %v622
        %v624 = vrot.slane %v356, 1
        %v625 = vrot.slane %v358, 1
        %v626 = vsel %vm593, %v624, %v625
        %v627 = vrot.slane %v357, 1
        %v628 = vrot.slane %v359, 1
        %v629 = vsel %vm593, %v627, %v628
        %v630 = vrot.slane %v360, 1
        %v631 = vrot.slane %v362, 1
        %v632 = vsel %vm593, %v630, %v631
        %v633 = vrot.slane %v361, 1
        %v634 = vrot.slane %v363, 1
        %v635 = vsel %vm593, %v633, %v634
        %v636 = vrot.slane %v364, 1
        %v637 = vrot.slane %v366, 1
        %v638 = vsel %vm593, %v636, %v637
        %v639 = vrot.slane %v365, 1
        %v640 = vrot.slane %v367, 1
        %v641 = vsel %vm593, %v639, %v640
        %vm682 = vcmask 1045504
        %v683 = vrot.slane %v368, 2
        %v684 = vrot.slane %v370, 2
        %v685 = vsel %vm682, %v683, %v684
        %v686 = vrot.slane %v369, 2
        %v687 = vrot.slane %v371, 2
        %v688 = vsel %vm682, %v686, %v687
        %v689 = vrot.slane %v372, 2
        %v690 = vrot.slane %v374, 2
        %v691 = vsel %vm682, %v689, %v690
        %v692 = vrot.slane %v373, 2
        %v693 = vrot.slane %v375, 2
        %v694 = vsel %vm682, %v692, %v693
        %v695 = vrot.slane %v376, 2
        %v696 = vrot.slane %v378, 2
        %v697 = vsel %vm682, %v695, %v696
        %v698 = vrot.slane %v377, 2
        %v699 = vrot.slane %v379, 2
        %v700 = vsel %vm682, %v698, %v699
        %v701 = vrot.slane %v380, 2
        %v702 = vrot.slane %v382, 2
        %v703 = vsel %vm682, %v701, %v702
        %v704 = vrot.slane %v381, 2
        %v705 = vrot.slane %v383, 2
        %v706 = vsel %vm682, %v704, %v705
        %v707 = vrot.slane %v384, 2
        %v708 = vrot.slane %v386, 2
        %v709 = vsel %vm682, %v707, %v708
        %v710 = vrot.slane %v385, 2
        %v711 = vrot.slane %v387, 2
        %v712 = vsel %vm682, %v710, %v711
        %v713 = vrot.slane %v388, 2
        %v714 = vrot.slane %v390, 2
        %v715 = vsel %vm682, %v713, %v714
        %v716 = vrot.slane %v389, 2
        %v717 = vrot.slane %v391, 2
        %v718 = vsel %vm682, %v716, %v717
        %v719 = vrot.slane %v392, 2
        %v720 = vrot.slane %v394, 2
        %v721 = vsel %vm682, %v719, %v720
        %v722 = vrot.slane %v393, 2
        %v723 = vrot.slane %v395, 2
        %v724 = vsel %vm682, %v722, %v723
        %v725 = vrot.slane %v396, 2
        %v726 = vrot.slane %v398, 2
        %v727 = vsel %vm682, %v725, %v726
        %v728 = vrot.slane %v397, 2
        %v729 = vrot.slane %v399, 2
        %v730 = vsel %vm682, %v728, %v729
        %v771 = vrot.slane %v416, 1
        %v772 = vrot.slane %v418, 1
        %v773 = vsel %vm593, %v771, %v772
        %v774 = vrot.slane %v417, 1
        %v775 = vrot.slane %v419, 1
        %v776 = vsel %vm593, %v774, %v775
        %v777 = vrot.slane %v420, 1
        %v778 = vrot.slane %v422, 1
        %v779 = vsel %vm593, %v777, %v778
        %v780 = vrot.slane %v421, 1
        %v781 = vrot.slane %v423, 1
        %v782 = vsel %vm593, %v780, %v781
        %v783 = vrot.slane %v424, 1
        %v784 = vrot.slane %v426, 1
        %v785 = vsel %vm593, %v783, %v784
        %v786 = vrot.slane %v425, 1
        %v787 = vrot.slane %v427, 1
        %v788 = vsel %vm593, %v786, %v787
        %v789 = vrot.slane %v428, 1
        %v790 = vrot.slane %v430, 1
        %v791 = vsel %vm593, %v789, %v790
        %v792 = vrot.slane %v429, 1
        %v793 = vrot.slane %v431, 1
        %v794 = vsel %vm593, %v792, %v793
        %v795 = vrot.slane %v432, 1
        %v796 = vrot.slane %v434, 1
        %v797 = vsel %vm593, %v795, %v796
        %v798 = vrot.slane %v433, 1
        %v799 = vrot.slane %v435, 1
        %v800 = vsel %vm593, %v798, %v799
        %v801 = vrot.slane %v436, 1
        %v802 = vrot.slane %v438, 1
        %v803 = vsel %vm593, %v801, %v802
        %v804 = vrot.slane %v437, 1
        %v805 = vrot.slane %v439, 1
        %v806 = vsel %vm593, %v804, %v805
        %v807 = vrot.slane %v440, 1
        %v808 = vrot.slane %v442, 1
        %v809 = vsel %vm593, %v807, %v808
        %v810 = vrot.slane %v441, 1
        %v811 = vrot.slane %v443, 1
        %v812 = vsel %vm593, %v810, %v811
        %v813 = vrot.slane %v444, 1
        %v814 = vrot.slane %v446, 1
        %v815 = vsel %vm593, %v813, %v814
        %v816 = vrot.slane %v445, 1
        %v817 = vrot.slane %v447, 1
        %v818 = vsel %vm593, %v816, %v817
        %v859 = vrot.slane %v448, 2
        %v860 = vrot.slane %v450, 2
        %v861 = vsel %vm682, %v859, %v860
        %v862 = vrot.slane %v449, 2
        %v863 = vrot.slane %v451, 2
        %v864 = vsel %vm682, %v862, %v863
        %v865 = vrot.slane %v452, 2
        %v866 = vrot.slane %v454, 2
        %v867 = vsel %vm682, %v865, %v866
        %v868 = vrot.slane %v453, 2
        %v869 = vrot.slane %v455, 2
        %v870 = vsel %vm682, %v868, %v869
        %v871 = vrot.slane %v456, 2
        %v872 = vrot.slane %v458, 2
        %v873 = vsel %vm682, %v871, %v872
        %v874 = vrot.slane %v457, 2
        %v875 = vrot.slane %v459, 2
        %v876 = vsel %vm682, %v874, %v875
        %v877 = vrot.slane %v460, 2
        %v878 = vrot.slane %v462, 2
        %v879 = vsel %vm682, %v877, %v878
        %v880 = vrot.slane %v461, 2
        %v881 = vrot.slane %v463, 2
        %v882 = vsel %vm682, %v880, %v881
        %v883 = vrot.slane %v464, 2
        %v884 = vrot.slane %v466, 2
        %v885 = vsel %vm682, %v883, %v884
        %v886 = vrot.slane %v465, 2
        %v887 = vrot.slane %v467, 2
        %v888 = vsel %vm682, %v886, %v887
        %v889 = vrot.slane %v468, 2
        %v890 = vrot.slane %v470, 2
        %v891 = vsel %vm682, %v889, %v890
        %v892 = vrot.slane %v469, 2
        %v893 = vrot.slane %v471, 2
        %v894 = vsel %vm682, %v892, %v893
        %v895 = vrot.slane %v472, 2
        %v896 = vrot.slane %v474, 2
        %v897 = vsel %vm682, %v895, %v896
        %v898 = vrot.slane %v473, 2
        %v899 = vrot.slane %v475, 2
        %v900 = vsel %vm682, %v898, %v899
        %v901 = vrot.slane %v476, 2
        %v902 = vrot.slane %v478, 2
        %v903 = vsel %vm682, %v901, %v902
        %v904 = vrot.slane %v477, 2
        %v905 = vrot.slane %v479, 2
        %v906 = vsel %vm682, %v904, %v905
        %v947 = vrot.slane %v497, 1
        %v948 = vrot.slane %v499, 1
        %v949 = vsel %vm593, %v947, %v948
        %v950 = vrot.slane %v498, 1
        %v951 = vrot.slane %v500, 1
        %v952 = vsel %vm593, %v950, %v951
        %v953 = vrot.slane %v501, 1
        %v954 = vrot.slane %v503, 1
        %v955 = vsel %vm593, %v953, %v954
        %v956 = vrot.slane %v502, 1
        %v957 = vrot.slane %v504, 1
        %v958 = vsel %vm593, %v956, %v957
        %v959 = vrot.slane %v505, 1
        %v960 = vrot.slane %v507, 1
        %v961 = vsel %vm593, %v959, %v960
        %v962 = vrot.slane %v506, 1
        %v963 = vrot.slane %v508, 1
        %v964 = vsel %vm593, %v962, %v963
        %v965 = vrot.slane %v509, 1
        %v966 = vrot.slane %v511, 1
        %v967 = vsel %vm593, %v965, %v966
        %v968 = vrot.slane %v510, 1
        %v969 = vrot.slane %v512, 1
        %v970 = vsel %vm593, %v968, %v969
        %v971 = vrot.slane %v513, 1
        %v972 = vrot.slane %v515, 1
        %v973 = vsel %vm593, %v971, %v972
        %v974 = vrot.slane %v514, 1
        %v975 = vrot.slane %v516, 1
        %v976 = vsel %vm593, %v974, %v975
        %v977 = vrot.slane %v517, 1
        %v978 = vrot.slane %v519, 1
        %v979 = vsel %vm593, %v977, %v978
        %v980 = vrot.slane %v518, 1
        %v981 = vrot.slane %v520, 1
        %v982 = vsel %vm593, %v980, %v981
        %v983 = vrot.slane %v521, 1
        %v984 = vrot.slane %v523, 1
        %v985 = vsel %vm593, %v983, %v984
        %v986 = vrot.slane %v522, 1
        %v987 = vrot.slane %v524, 1
        %v988 = vsel %vm593, %v986, %v987
        %v989 = vrot.slane %v525, 1
        %v990 = vrot.slane %v527, 1
        %v991 = vsel %vm593, %v989, %v990
        %v992 = vrot.slane %v526, 1
        %v993 = vrot.slane %v528, 1
        %v994 = vsel %vm593, %v992, %v993
        %v1035 = vrot.slane %v529, 2
        %v1036 = vrot.slane %v531, 2
        %v1037 = vsel %vm682, %v1035, %v1036
        %v1038 = vrot.slane %v530, 2
        %v1039 = vrot.slane %v532, 2
        %v1040 = vsel %vm682, %v1038, %v1039
        %v1041 = vrot.slane %v533, 2
        %v1042 = vrot.slane %v535, 2
        %v1043 = vsel %vm682, %v1041, %v1042
        %v1044 = vrot.slane %v534, 2
        %v1045 = vrot.slane %v536, 2
        %v1046 = vsel %vm682, %v1044, %v1045
        %v1047 = vrot.slane %v537, 2
        %v1048 = vrot.slane %v539, 2
        %v1049 = vsel %vm682, %v1047, %v1048
        %v1050 = vrot.slane %v538, 2
        %v1051 = vrot.slane %v540, 2
        %v1052 = vsel %vm682, %v1050, %v1051
        %v1053 = vrot.slane %v541, 2
        %v1054 = vrot.slane %v543, 2
        %v1055 = vsel %vm682, %v1053, %v1054
        %v1056 = vrot.slane %v542, 2
        %v1057 = vrot.slane %v544, 2
        %v1058 = vsel %vm682, %v1056, %v1057
        %v1059 = vrot.slane %v545, 2
        %v1060 = vrot.slane %v547, 2
        %v1061 = vsel %vm682, %v1059, %v1060
        %v1062 = vrot.slane %v546, 2
        %v1063 = vrot.slane %v548, 2
        %v1064 = vsel %vm682, %v1062, %v1063
        %v1065 = vrot.slane %v549, 2
        %v1066 = vrot.slane %v551, 2
        %v1067 = vsel %vm682, %v1065, %v1066
        %v1068 = vrot.slane %v550, 2
        %v1069 = vrot.slane %v552, 2
        %v1070 = vsel %vm682, %v1068, %v1069
        %v1071 = vrot.slane %v553, 2
        %v1072 = vrot.slane %v555, 2
        %v1073 = vsel %vm682, %v1071, %v1072
        %v1074 = vrot.slane %v554, 2
        %v1075 = vrot.slane %v556, 2
        %v1076 = vsel %vm682, %v1074, %v1075
        %v1077 = vrot.slane %v557, 2
        %v1078 = vrot.slane %v559, 2
        %v1079 = vsel %vm682, %v1077, %v1078
        %v1080 = vrot.slane %v558, 2
        %v1081 = vrot.slane %v560, 2
        %v1082 = vsel %vm682, %v1080, %v1081
        %v1091 = vld [vmem:[#allocation5] sm:$0xff]
        %v1092 = vld [vmem:[#allocation5 + $0x8] sm:$0xff]
        %v1093 = vld [vmem:[#allocation5 + $0x10] sm:$0xff]
        %v1094 = vld [vmem:[#allocation5 + $0x18] sm:$0xff]
        %v1095 = vld [vmem:[#allocation5 + $0x20] sm:$0xff]
        %v1096 = vld [vmem:[#allocation5 + $0x28] sm:$0xff]
        %v1097 = vld [vmem:[#allocation5 + $0x30] sm:$0xff]
        %v1098 = vld [vmem:[#allocation5 + $0x38] sm:$0xff]
        %v1099 = vld [vmem:[#allocation5 + $0x40] sm:$0xff]
        %v1100 = vld [vmem:[#allocation5 + $0x48] sm:$0xff]
        %v1101 = vld [vmem:[#allocation5 + $0x50] sm:$0xff]
        %v1102 = vld [vmem:[#allocation5 + $0x58] sm:$0xff]
        %v1103 = vld [vmem:[#allocation5 + $0x60] sm:$0xff]
        %v1104 = vld [vmem:[#allocation5 + $0x68] sm:$0xff]
        %v1105 = vld [vmem:[#allocation5 + $0x70] sm:$0xff]
        %v1106 = vld [vmem:[#allocation5 + $0x78] sm:$0xff]
        %v1107 = vld [vmem:[#allocation5 + $0x80] sm:$0xff]
        %v1108 = vld [vmem:[#allocation5 + $0x88] sm:$0xff]
        %v1109 = vld [vmem:[#allocation5 + $0x90] sm:$0xff]
        %v1110 = vld [vmem:[#allocation5 + $0x98] sm:$0xff]
        %v1111 = vld [vmem:[#allocation5 + $0xa0] sm:$0xff]
        %v1112 = vld [vmem:[#allocation5 + $0xa8] sm:$0xff]
        %v1113 = vld [vmem:[#allocation5 + $0xb0] sm:$0xff]
        %v1114 = vld [vmem:[#allocation5 + $0xb8] sm:$0xff]
        %v1115 = vld [vmem:[#allocation5 + $0xc0] sm:$0xff]
        %v1116 = vld [vmem:[#allocation5 + $0xc8] sm:$0xff]
        %v1117 = vld [vmem:[#allocation5 + $0xd0] sm:$0xff]
        %v1118 = vld [vmem:[#allocation5 + $0xd8] sm:$0xff]
        %v1119 = vld [vmem:[#allocation5 + $0xe0] sm:$0xff]
        %v1120 = vld [vmem:[#allocation5 + $0xe8] sm:$0xff]
        %v1121 = vld [vmem:[#allocation5 + $0xf0] sm:$0xff]
        %v1122 = vld [vmem:[#allocation5 + $0xf8] sm:$0xff]
        %v1123 = vld [vmem:[#allocation5 + $0x100] sm:$0xff]
        %v1124 = vld [vmem:[#allocation5 + $0x108] sm:$0xff]
        %v1125 = vld [vmem:[#allocation5 + $0x110] sm:$0xff]
        %v1126 = vld [vmem:[#allocation5 + $0x118] sm:$0xff]
        %v1127 = vld [vmem:[#allocation5 + $0x120] sm:$0xff]
        %v1128 = vld [vmem:[#allocation5 + $0x128] sm:$0xff]
        %v1129 = vld [vmem:[#allocation5 + $0x130] sm:$0xff]
        %v1130 = vld [vmem:[#allocation5 + $0x138] sm:$0xff]
        %v1131 = vld [vmem:[#allocation5 + $0x140] sm:$0xff]
        %v1132 = vld [vmem:[#allocation5 + $0x148] sm:$0xff]
        %v1133 = vld [vmem:[#allocation5 + $0x150] sm:$0xff]
        %v1134 = vld [vmem:[#allocation5 + $0x158] sm:$0xff]
        %v1135 = vld [vmem:[#allocation5 + $0x160] sm:$0xff]
        %v1136 = vld [vmem:[#allocation5 + $0x168] sm:$0xff]
        %v1137 = vld [vmem:[#allocation5 + $0x170] sm:$0xff]
        %v1138 = vld [vmem:[#allocation5 + $0x178] sm:$0xff]
        %v1139 = vld [vmem:[#allocation5 + $0x180] sm:$0xff]
        %v1140 = vld [vmem:[#allocation5 + $0x188] sm:$0xff]
        %v1141 = vld [vmem:[#allocation5 + $0x190] sm:$0xff]
        %v1142 = vld [vmem:[#allocation5 + $0x198] sm:$0xff]
        %v1143 = vld [vmem:[#allocation5 + $0x1a0] sm:$0xff]
        %v1144 = vld [vmem:[#allocation5 + $0x1a8] sm:$0xff]
        %v1145 = vld [vmem:[#allocation5 + $0x1b0] sm:$0xff]
        %v1146 = vld [vmem:[#allocation5 + $0x1b8] sm:$0xff]
        %v1147 = vld [vmem:[#allocation5 + $0x1c0] sm:$0xff]
        %v1148 = vld [vmem:[#allocation5 + $0x1c8] sm:$0xff]
        %v1149 = vld [vmem:[#allocation5 + $0x1d0] sm:$0xff]
        %v1150 = vld [vmem:[#allocation5 + $0x1d8] sm:$0xff]
        %v1151 = vld [vmem:[#allocation5 + $0x1e0] sm:$0xff]
        %v1152 = vld [vmem:[#allocation5 + $0x1e8] sm:$0xff]
        %v1153 = vld [vmem:[#allocation5 + $0x1f0] sm:$0xff]
        %v1154 = vld [vmem:[#allocation5 + $0x1f8] sm:$0xff]
        %v1155 = vld [vmem:[#allocation5 + $0x200] sm:$0xff]
        %v1156 = vld [vmem:[#allocation5 + $0x208] sm:$0xff]
        %v1157 = vld [vmem:[#allocation5 + $0x210] sm:$0xff]
        %v1158 = vld [vmem:[#allocation5 + $0x218] sm:$0xff]
        %v1159 = vld [vmem:[#allocation5 + $0x220] sm:$0xff]
        %v1160 = vld [vmem:[#allocation5 + $0x228] sm:$0xff]
        %v1161 = vld [vmem:[#allocation5 + $0x230] sm:$0xff]
        %v1162 = vld [vmem:[#allocation5 + $0x238] sm:$0xff]
        %v1163 = vld [vmem:[#allocation5 + $0x240] sm:$0xff]
        %v1164 = vld [vmem:[#allocation5 + $0x248] sm:$0xff]
        %v1165 = vld [vmem:[#allocation5 + $0x250] sm:$0xff]
        %v1166 = vld [vmem:[#allocation5 + $0x258] sm:$0xff]
        %v1167 = vld [vmem:[#allocation5 + $0x260] sm:$0xff]
        %v1168 = vld [vmem:[#allocation5 + $0x268] sm:$0xff]
        %v1169 = vld [vmem:[#allocation5 + $0x270] sm:$0xff]
        %v1170 = vld [vmem:[#allocation5 + $0x278] sm:$0xff]
        %v1171 = vld [vmem:[#allocation5 + $0x280] sm:$0xff]
        %v1172 = vld [vmem:[#allocation5 + $0x288] sm:$0xff]
        %v1173 = vld [vmem:[#allocation5 + $0x290] sm:$0xff]
        %v1174 = vld [vmem:[#allocation5 + $0x298] sm:$0xff]
        %v1175 = vld [vmem:[#allocation5 + $0x2a0] sm:$0xff]
        %v1176 = vld [vmem:[#allocation5 + $0x2a8] sm:$0xff]
        %v1177 = vld [vmem:[#allocation5 + $0x2b0] sm:$0xff]
        %v1178 = vld [vmem:[#allocation5 + $0x2b8] sm:$0xff]
        %v1179 = vld [vmem:[#allocation5 + $0x2c0] sm:$0xff]
        %v1180 = vld [vmem:[#allocation5 + $0x2c8] sm:$0xff]
        %v1181 = vld [vmem:[#allocation5 + $0x2d0] sm:$0xff]
        %v1182 = vld [vmem:[#allocation5 + $0x2d8] sm:$0xff]
        %v1183 = vld [vmem:[#allocation5 + $0x2e0] sm:$0xff]
        %v1184 = vld [vmem:[#allocation5 + $0x2e8] sm:$0xff]
        %v1185 = vld [vmem:[#allocation5 + $0x2f0] sm:$0xff]
        %v1186 = vld [vmem:[#allocation5 + $0x2f8] sm:$0xff]
        %v1187 = vld [vmem:[#allocation5 + $0x300] sm:$0xff]
        %v1188 = vld [vmem:[#allocation5 + $0x308] sm:$0xff]
        %v1189 = vld [vmem:[#allocation5 + $0x310] sm:$0xff]
        %v1190 = vld [vmem:[#allocation5 + $0x318] sm:$0xff]
        %v1191 = vld [vmem:[#allocation5 + $0x320] sm:$0xff]
        %v1192 = vld [vmem:[#allocation5 + $0x328] sm:$0xff]
        %v1193 = vld [vmem:[#allocation5 + $0x330] sm:$0xff]
        %v1194 = vld [vmem:[#allocation5 + $0x338] sm:$0xff]
        %v1195 = vld [vmem:[#allocation5 + $0x340] sm:$0xff]
        %v1196 = vld [vmem:[#allocation5 + $0x348] sm:$0xff]
        %v1197 = vld [vmem:[#allocation5 + $0x350] sm:$0xff]
        %v1198 = vld [vmem:[#allocation5 + $0x358] sm:$0xff]
        %v1199 = vld [vmem:[#allocation5 + $0x360] sm:$0xff]
        %v1200 = vld [vmem:[#allocation5 + $0x368] sm:$0xff]
        %v1201 = vld [vmem:[#allocation5 + $0x370] sm:$0xff]
        %v1202 = vld [vmem:[#allocation5 + $0x378] sm:$0xff]
        %v1203 = vld [vmem:[#allocation5 + $0x380] sm:$0xff]
        %v1204 = vld [vmem:[#allocation5 + $0x388] sm:$0xff]
        %v1205 = vld [vmem:[#allocation5 + $0x390] sm:$0xff]
        %v1206 = vld [vmem:[#allocation5 + $0x398] sm:$0xff]
        %v1207 = vld [vmem:[#allocation5 + $0x3a0] sm:$0xff]
        %v1208 = vld [vmem:[#allocation5 + $0x3a8] sm:$0xff]
        %v1209 = vld [vmem:[#allocation5 + $0x3b0] sm:$0xff]
        %v1210 = vld [vmem:[#allocation5 + $0x3b8] sm:$0xff]
        %v1211 = vld [vmem:[#allocation5 + $0x3c0] sm:$0xff]
        %v1212 = vld [vmem:[#allocation5 + $0x3c8] sm:$0xff]
        %v1213 = vld [vmem:[#allocation5 + $0x3d0] sm:$0xff]
        %v1214 = vld [vmem:[#allocation5 + $0x3d8] sm:$0xff]
        %v1215 = vld [vmem:[#allocation5 + $0x3e0] sm:$0xff]
        %v1216 = vld [vmem:[#allocation5 + $0x3e8] sm:$0xff]
        %v1217 = vld [vmem:[#allocation5 + $0x3f0] sm:$0xff]
        %v1218 = vld [vmem:[#allocation5 + $0x3f8] sm:$0xff]
        %v1219 = vld [vmem:[#allocation5 + $0x400] sm:$0xff]
        %v1220 = vld [vmem:[#allocation5 + $0x408] sm:$0xff]
        %v1221 = vld [vmem:[#allocation5 + $0x410] sm:$0xff]
        %v1222 = vld [vmem:[#allocation5 + $0x418] sm:$0xff]
        %v1223 = vld [vmem:[#allocation5 + $0x420] sm:$0xff]
        %v1224 = vld [vmem:[#allocation5 + $0x428] sm:$0xff]
        %v1225 = vld [vmem:[#allocation5 + $0x430] sm:$0xff]
        %v1226 = vld [vmem:[#allocation5 + $0x438] sm:$0xff]
        %v1227 = vld [vmem:[#allocation5 + $0x440] sm:$0xff]
        %v1228 = vld [vmem:[#allocation5 + $0x448] sm:$0xff]
        %v1229 = vld [vmem:[#allocation5 + $0x450] sm:$0xff]
        %v1230 = vld [vmem:[#allocation5 + $0x458] sm:$0xff]
        %v1231 = vld [vmem:[#allocation5 + $0x460] sm:$0xff]
        %v1232 = vld [vmem:[#allocation5 + $0x468] sm:$0xff]
        %v1233 = vld [vmem:[#allocation5 + $0x470] sm:$0xff]
        %v1234 = vld [vmem:[#allocation5 + $0x478] sm:$0xff]
        %v1235 = vld [vmem:[#allocation5 + $0x480] sm:$0xff]
        %v1236 = vld [vmem:[#allocation5 + $0x488] sm:$0xff]
        %v1237 = vld [vmem:[#allocation5 + $0x490] sm:$0xff]
        %v1238 = vld [vmem:[#allocation5 + $0x498] sm:$0xff]
        %v1239 = vld [vmem:[#allocation5 + $0x4a0] sm:$0xff]
        %v1240 = vld [vmem:[#allocation5 + $0x4a8] sm:$0xff]
        %v1241 = vld [vmem:[#allocation5 + $0x4b0] sm:$0xff]
        %v1242 = vld [vmem:[#allocation5 + $0x4b8] sm:$0xff]
        %v1243 = vld [vmem:[#allocation5 + $0x4c0] sm:$0xff]
        %v1244 = vld [vmem:[#allocation5 + $0x4c8] sm:$0xff]
        %v1245 = vld [vmem:[#allocation5 + $0x4d0] sm:$0xff]
        %v1246 = vld [vmem:[#allocation5 + $0x4d8] sm:$0xff]
        %v1247 = vld [vmem:[#allocation5 + $0x4e0] sm:$0xff]
        %v1248 = vld [vmem:[#allocation5 + $0x4e8] sm:$0xff]
        %v1249 = vld [vmem:[#allocation5 + $0x4f0] sm:$0xff]
        %v1250 = vld [vmem:[#allocation5 + $0x4f8] sm:$0xff]
        %v1251 = vld [vmem:[#allocation5 + $0x500] sm:$0xff]
        %v1252 = vld [vmem:[#allocation5 + $0x508] sm:$0xff]
        %v1253 = vld [vmem:[#allocation5 + $0x510] sm:$0xff]
        %v1254 = vld [vmem:[#allocation5 + $0x518] sm:$0xff]
        %v1255 = vld [vmem:[#allocation5 + $0x520] sm:$0xff]
        %v1256 = vld [vmem:[#allocation5 + $0x528] sm:$0xff]
        %v1257 = vld [vmem:[#allocation5 + $0x530] sm:$0xff]
        %v1258 = vld [vmem:[#allocation5 + $0x538] sm:$0xff]
        %v1259 = vld [vmem:[#allocation5 + $0x540] sm:$0xff]
        %v1260 = vld [vmem:[#allocation5 + $0x548] sm:$0xff]
        %v1261 = vld [vmem:[#allocation5 + $0x550] sm:$0xff]
        %v1262 = vld [vmem:[#allocation5 + $0x558] sm:$0xff]
        %v1263 = vld [vmem:[#allocation5 + $0x560] sm:$0xff]
        %v1264 = vld [vmem:[#allocation5 + $0x568] sm:$0xff]
        %v1265 = vld [vmem:[#allocation5 + $0x570] sm:$0xff]
        %v1266 = vld [vmem:[#allocation5 + $0x578] sm:$0xff]
        %v1267 = vld [vmem:[#allocation5 + $0x580] sm:$0xff]
        %v1268 = vld [vmem:[#allocation5 + $0x588] sm:$0xff]
        %v1269 = vld [vmem:[#allocation5 + $0x590] sm:$0xff]
        %v1270 = vld [vmem:[#allocation5 + $0x598] sm:$0xff]
        %v1271 = vld [vmem:[#allocation5 + $0x5a0] sm:$0xff]
        %v1272 = vld [vmem:[#allocation5 + $0x5a8] sm:$0xff]
        %v1273 = vld [vmem:[#allocation5 + $0x5b0] sm:$0xff]
        %v1274 = vld [vmem:[#allocation5 + $0x5b8] sm:$0xff]
        %v1275 = vld [vmem:[#allocation5 + $0x5c0] sm:$0xff]
        %v1276 = vld [vmem:[#allocation5 + $0x5c8] sm:$0xff]
        %v1277 = vld [vmem:[#allocation5 + $0x5d0] sm:$0xff]
        %v1278 = vld [vmem:[#allocation5 + $0x5d8] sm:$0xff]
        %v1279 = vld [vmem:[#allocation5 + $0x5e0] sm:$0xff]
        %v1280 = vld [vmem:[#allocation5 + $0x5e8] sm:$0xff]
        %v1281 = vld [vmem:[#allocation5 + $0x5f0] sm:$0xff]
        %v1282 = vld [vmem:[#allocation5 + $0x5f8] sm:$0xff]
        %v1283 = vld [vmem:[#allocation5 + $0x600] sm:$0xff]
        %v1284 = vld [vmem:[#allocation5 + $0x608] sm:$0xff]
        %v1285 = vld [vmem:[#allocation5 + $0x610] sm:$0xff]
        %v1286 = vld [vmem:[#allocation5 + $0x618] sm:$0xff]
        %v1287 = vld [vmem:[#allocation5 + $0x620] sm:$0xff]
        %v1288 = vld [vmem:[#allocation5 + $0x628] sm:$0xff]
        %v1289 = vld [vmem:[#allocation5 + $0x630] sm:$0xff]
        %v1290 = vld [vmem:[#allocation5 + $0x638] sm:$0xff]
        %v1291 = vld [vmem:[#allocation5 + $0x640] sm:$0xff]
        %v1292 = vld [vmem:[#allocation5 + $0x648] sm:$0xff]
        %v1293 = vld [vmem:[#allocation5 + $0x650] sm:$0xff]
        %v1294 = vld [vmem:[#allocation5 + $0x658] sm:$0xff]
        %v1295 = vld [vmem:[#allocation5 + $0x660] sm:$0xff]
        %v1296 = vld [vmem:[#allocation5 + $0x668] sm:$0xff]
        %v1297 = vld [vmem:[#allocation5 + $0x670] sm:$0xff]
        %v1298 = vld [vmem:[#allocation5 + $0x678] sm:$0xff]
        %v1299 = vld [vmem:[#allocation5 + $0x680] sm:$0xff]
        %v1300 = vld [vmem:[#allocation5 + $0x688] sm:$0xff]
        %v1301 = vld [vmem:[#allocation5 + $0x690] sm:$0xff]
        %v1302 = vld [vmem:[#allocation5 + $0x698] sm:$0xff]
        %v1303 = vld [vmem:[#allocation5 + $0x6a0] sm:$0xff]
        %v1304 = vld [vmem:[#allocation5 + $0x6a8] sm:$0xff]
        %v1305 = vld [vmem:[#allocation5 + $0x6b0] sm:$0xff]
        %v1306 = vld [vmem:[#allocation5 + $0x6b8] sm:$0xff]
        %v1307 = vld [vmem:[#allocation5 + $0x6c0] sm:$0xff]
        %v1308 = vld [vmem:[#allocation5 + $0x6c8] sm:$0xff]
        %v1309 = vld [vmem:[#allocation5 + $0x6d0] sm:$0xff]
        %v1310 = vld [vmem:[#allocation5 + $0x6d8] sm:$0xff]
        %v1311 = vld [vmem:[#allocation5 + $0x6e0] sm:$0xff]
        %v1312 = vld [vmem:[#allocation5 + $0x6e8] sm:$0xff]
        %v1313 = vld [vmem:[#allocation5 + $0x6f0] sm:$0xff]
        %v1314 = vld [vmem:[#allocation5 + $0x6f8] sm:$0xff]
        %v1315 = vld [vmem:[#allocation5 + $0x700] sm:$0xff]
        %v1316 = vld [vmem:[#allocation5 + $0x708] sm:$0xff]
        %v1317 = vld [vmem:[#allocation5 + $0x710] sm:$0xff]
        %v1318 = vld [vmem:[#allocation5 + $0x718] sm:$0xff]
        %v1319 = vld [vmem:[#allocation5 + $0x720] sm:$0xff]
        %v1320 = vld [vmem:[#allocation5 + $0x728] sm:$0xff]
        %v1321 = vld [vmem:[#allocation5 + $0x730] sm:$0xff]
        %v1322 = vld [vmem:[#allocation5 + $0x738] sm:$0xff]
        %v1323 = vld [vmem:[#allocation5 + $0x740] sm:$0xff]
        %v1324 = vld [vmem:[#allocation5 + $0x748] sm:$0xff]
        %v1325 = vld [vmem:[#allocation5 + $0x750] sm:$0xff]
        %v1326 = vld [vmem:[#allocation5 + $0x758] sm:$0xff]
        %v1327 = vld [vmem:[#allocation5 + $0x760] sm:$0xff]
        %v1328 = vld [vmem:[#allocation5 + $0x768] sm:$0xff]
        %v1329 = vld [vmem:[#allocation5 + $0x770] sm:$0xff]
        %v1330 = vld [vmem:[#allocation5 + $0x778] sm:$0xff]
        %v1331 = vld [vmem:[#allocation5 + $0x780] sm:$0xff]
        %v1332 = vld [vmem:[#allocation5 + $0x788] sm:$0xff]
        %v1333 = vld [vmem:[#allocation5 + $0x790] sm:$0xff]
        %v1334 = vld [vmem:[#allocation5 + $0x798] sm:$0xff]
        %v1335 = vld [vmem:[#allocation5 + $0x7a0] sm:$0xff]
        %v1336 = vld [vmem:[#allocation5 + $0x7a8] sm:$0xff]
        %v1337 = vld [vmem:[#allocation5 + $0x7b0] sm:$0xff]
        %v1338 = vld [vmem:[#allocation5 + $0x7b8] sm:$0xff]
        %v1339 = vld [vmem:[#allocation5 + $0x7c0] sm:$0xff]
        %v1340 = vld [vmem:[#allocation5 + $0x7c8] sm:$0xff]
        %v1341 = vld [vmem:[#allocation5 + $0x7d0] sm:$0xff]
        %v1342 = vld [vmem:[#allocation5 + $0x7d8] sm:$0xff]
        %v1343 = vld [vmem:[#allocation5 + $0x7e0] sm:$0xff]
        %v1344 = vld [vmem:[#allocation5 + $0x7e8] sm:$0xff]
        %v1345 = vld [vmem:[#allocation5 + $0x7f0] sm:$0xff]
        %v1346 = vld [vmem:[#allocation5 + $0x7f8] sm:$0xff]
        %v1347 = vld [vmem:[#allocation5 + $0x800] sm:$0xff]
        %v1348 = vld [vmem:[#allocation5 + $0x808] sm:$0xff]
        %v1349 = vld [vmem:[#allocation5 + $0x810] sm:$0xff]
        %v1350 = vld [vmem:[#allocation5 + $0x818] sm:$0xff]
        %v1351 = vld [vmem:[#allocation5 + $0x820] sm:$0xff]
        %v1352 = vld [vmem:[#allocation5 + $0x828] sm:$0xff]
        %v1353 = vld [vmem:[#allocation5 + $0x830] sm:$0xff]
        %v1354 = vld [vmem:[#allocation5 + $0x838] sm:$0xff]
        %v1355 = vld [vmem:[#allocation5 + $0x840] sm:$0xff]
        %v1356 = vld [vmem:[#allocation5 + $0x848] sm:$0xff]
        %v1357 = vld [vmem:[#allocation5 + $0x850] sm:$0xff]
        %v1358 = vld [vmem:[#allocation5 + $0x858] sm:$0xff]
        %v1359 = vld [vmem:[#allocation5 + $0x860] sm:$0xff]
        %v1360 = vld [vmem:[#allocation5 + $0x868] sm:$0xff]
        %v1361 = vld [vmem:[#allocation5 + $0x870] sm:$0xff]
        %v1362 = vld [vmem:[#allocation5 + $0x878] sm:$0xff]
        %v1363 = vld [vmem:[#allocation5 + $0x880] sm:$0xff]
        %v1364 = vld [vmem:[#allocation5 + $0x888] sm:$0xff]
        %v1365 = vld [vmem:[#allocation5 + $0x890] sm:$0xff]
        %v1366 = vld [vmem:[#allocation5 + $0x898] sm:$0xff]
        %v1367 = vld [vmem:[#allocation5 + $0x8a0] sm:$0xff]
        %v1368 = vld [vmem:[#allocation5 + $0x8a8] sm:$0xff]
        %v1369 = vld [vmem:[#allocation5 + $0x8b0] sm:$0xff]
        %v1370 = vld [vmem:[#allocation5 + $0x8b8] sm:$0xff]
        %v1371 = vld [vmem:[#allocation5 + $0x8c0] sm:$0xff]
        %v1372 = vld [vmem:[#allocation5 + $0x8c8] sm:$0xff]
        %v1373 = vld [vmem:[#allocation5 + $0x8d0] sm:$0xff]
        %v1374 = vld [vmem:[#allocation5 + $0x8d8] sm:$0xff]
        %v1375 = vld [vmem:[#allocation5 + $0x8e0] sm:$0xff]
        %v1376 = vld [vmem:[#allocation5 + $0x8e8] sm:$0xff]
        %v1377 = vld [vmem:[#allocation5 + $0x8f0] sm:$0xff]
        %v1378 = vld [vmem:[#allocation5 + $0x8f8] sm:$0xff]
        %v1379 = vld [vmem:[#allocation5 + $0x900] sm:$0xff]
        %v1380 = vld [vmem:[#allocation5 + $0x908] sm:$0xff]
        %v1381 = vld [vmem:[#allocation5 + $0x910] sm:$0xff]
        %v1382 = vld [vmem:[#allocation5 + $0x918] sm:$0xff]
        %v1383 = vld [vmem:[#allocation5 + $0x920] sm:$0xff]
        %v1384 = vld [vmem:[#allocation5 + $0x928] sm:$0xff]
        %v1385 = vld [vmem:[#allocation5 + $0x930] sm:$0xff]
        %v1386 = vld [vmem:[#allocation5 + $0x938] sm:$0xff]
        %v1387 = vld [vmem:[#allocation5 + $0x940] sm:$0xff]
        %v1388 = vld [vmem:[#allocation5 + $0x948] sm:$0xff]
        %v1389 = vld [vmem:[#allocation5 + $0x950] sm:$0xff]
        %v1390 = vld [vmem:[#allocation5 + $0x958] sm:$0xff]
        %v1391 = vld [vmem:[#allocation5 + $0x960] sm:$0xff]
        %v1392 = vld [vmem:[#allocation5 + $0x968] sm:$0xff]
        %v1393 = vld [vmem:[#allocation5 + $0x970] sm:$0xff]
        %v1394 = vld [vmem:[#allocation5 + $0x978] sm:$0xff]
        %v1395 = vld [vmem:[#allocation5 + $0x980] sm:$0xff]
        %v1396 = vld [vmem:[#allocation5 + $0x988] sm:$0xff]
        %v1397 = vld [vmem:[#allocation5 + $0x990] sm:$0xff]
        %v1398 = vld [vmem:[#allocation5 + $0x998] sm:$0xff]
        %v1399 = vld [vmem:[#allocation5 + $0x9a0] sm:$0xff]
        %v1400 = vld [vmem:[#allocation5 + $0x9a8] sm:$0xff]
        %v1401 = vld [vmem:[#allocation5 + $0x9b0] sm:$0xff]
        %v1402 = vld [vmem:[#allocation5 + $0x9b8] sm:$0xff]
        %v1403 = vld [vmem:[#allocation5 + $0x9c0] sm:$0xff]
        %v1404 = vld [vmem:[#allocation5 + $0x9c8] sm:$0xff]
        %v1405 = vld [vmem:[#allocation5 + $0x9d0] sm:$0xff]
        %v1406 = vld [vmem:[#allocation5 + $0x9d8] sm:$0xff]
        %v1407 = vld [vmem:[#allocation5 + $0x9e0] sm:$0xff]
        %v1408 = vld [vmem:[#allocation5 + $0x9e8] sm:$0xff]
        %v1409 = vld [vmem:[#allocation5 + $0x9f0] sm:$0xff]
        %v1410 = vld [vmem:[#allocation5 + $0x9f8] sm:$0xff]
        %v1411 = vld [vmem:[#allocation5 + $0xa00] sm:$0xff]
        %v1412 = vld [vmem:[#allocation5 + $0xa08] sm:$0xff]
        %v1413 = vld [vmem:[#allocation5 + $0xa10] sm:$0xff]
        %v1414 = vld [vmem:[#allocation5 + $0xa18] sm:$0xff]
        %v1415 = vld [vmem:[#allocation5 + $0xa20] sm:$0xff]
        %v1416 = vld [vmem:[#allocation5 + $0xa28] sm:$0xff]
        %v1417 = vld [vmem:[#allocation5 + $0xa30] sm:$0xff]
        %v1418 = vld [vmem:[#allocation5 + $0xa38] sm:$0xff]
        %v1419 = vld [vmem:[#allocation5 + $0xa40] sm:$0xff]
        %v1420 = vld [vmem:[#allocation5 + $0xa48] sm:$0xff]
        %v1421 = vld [vmem:[#allocation5 + $0xa50] sm:$0xff]
        %v1422 = vld [vmem:[#allocation5 + $0xa58] sm:$0xff]
        %v1423 = vld [vmem:[#allocation5 + $0xa60] sm:$0xff]
        %v1424 = vld [vmem:[#allocation5 + $0xa68] sm:$0xff]
        %v1425 = vld [vmem:[#allocation5 + $0xa70] sm:$0xff]
        %v1426 = vld [vmem:[#allocation5 + $0xa78] sm:$0xff]
        %v1427 = vld [vmem:[#allocation5 + $0xa80] sm:$0xff]
        %v1428 = vld [vmem:[#allocation5 + $0xa88] sm:$0xff]
        %v1429 = vld [vmem:[#allocation5 + $0xa90] sm:$0xff]
        %v1430 = vld [vmem:[#allocation5 + $0xa98] sm:$0xff]
        %v1431 = vld [vmem:[#allocation5 + $0xaa0] sm:$0xff]
        %v1432 = vld [vmem:[#allocation5 + $0xaa8] sm:$0xff]
        %v1433 = vld [vmem:[#allocation5 + $0xab0] sm:$0xff]
        %v1434 = vld [vmem:[#allocation5 + $0xab8] sm:$0xff]
        %v1435 = vld [vmem:[#allocation5 + $0xac0] sm:$0xff]
        %v1436 = vld [vmem:[#allocation5 + $0xac8] sm:$0xff]
        %v1437 = vld [vmem:[#allocation5 + $0xad0] sm:$0xff]
        %v1438 = vld [vmem:[#allocation5 + $0xad8] sm:$0xff]
        %v1439 = vld [vmem:[#allocation5 + $0xae0] sm:$0xff]
        %v1440 = vld [vmem:[#allocation5 + $0xae8] sm:$0xff]
        %v1441 = vld [vmem:[#allocation5 + $0xaf0] sm:$0xff]
        %v1442 = vld [vmem:[#allocation5 + $0xaf8] sm:$0xff]
        %v1443 = vld [vmem:[#allocation5 + $0xb00] sm:$0xff]
        %v1444 = vld [vmem:[#allocation5 + $0xb08] sm:$0xff]
        %v1445 = vld [vmem:[#allocation5 + $0xb10] sm:$0xff]
        %v1446 = vld [vmem:[#allocation5 + $0xb18] sm:$0xff]
        %v1447 = vld [vmem:[#allocation5 + $0xb20] sm:$0xff]
        %v1448 = vld [vmem:[#allocation5 + $0xb28] sm:$0xff]
        %v1449 = vld [vmem:[#allocation5 + $0xb30] sm:$0xff]
        %v1450 = vld [vmem:[#allocation5 + $0xb38] sm:$0xff]
        %v1451 = vld [vmem:[#allocation5 + $0xb40] sm:$0xff]
        %v1452 = vld [vmem:[#allocation5 + $0xb48] sm:$0xff]
        %v1453 = vld [vmem:[#allocation5 + $0xb50] sm:$0xff]
        %v1454 = vld [vmem:[#allocation5 + $0xb58] sm:$0xff]
        %v1455 = vld [vmem:[#allocation5 + $0xb60] sm:$0xff]
        %v1456 = vld [vmem:[#allocation5 + $0xb68] sm:$0xff]
        %v1457 = vld [vmem:[#allocation5 + $0xb70] sm:$0xff]
        %v1458 = vld [vmem:[#allocation5 + $0xb78] sm:$0xff]
        %v1459 = vld [vmem:[#allocation5 + $0xb80] sm:$0xff]
        %v1460 = vld [vmem:[#allocation5 + $0xb88] sm:$0xff]
        %v1461 = vld [vmem:[#allocation5 + $0xb90] sm:$0xff]
        %v1462 = vld [vmem:[#allocation5 + $0xb98] sm:$0xff]
        %v1463 = vld [vmem:[#allocation5 + $0xba0] sm:$0xff]
        %v1464 = vld [vmem:[#allocation5 + $0xba8] sm:$0xff]
        %v1465 = vld [vmem:[#allocation5 + $0xbb0] sm:$0xff]
        %v1466 = vld [vmem:[#allocation5 + $0xbb8] sm:$0xff]
        %v1467 = vld [vmem:[#allocation5 + $0xbc0] sm:$0xff]
        %v1468 = vld [vmem:[#allocation5 + $0xbc8] sm:$0xff]
        %v1469 = vld [vmem:[#allocation5 + $0xbd0] sm:$0xff]
        %v1470 = vld [vmem:[#allocation5 + $0xbd8] sm:$0xff]
        %v1471 = vld [vmem:[#allocation5 + $0xbe0] sm:$0xff]
        %v1472 = vld [vmem:[#allocation5 + $0xbe8] sm:$0xff]
        %v1473 = vld [vmem:[#allocation5 + $0xbf0] sm:$0xff]
        %v1474 = vld [vmem:[#allocation5 + $0xbf8] sm:$0xff]
        %v1475 = vld [vmem:[#allocation5 + $0xc00] sm:$0xff]
        %v1476 = vld [vmem:[#allocation5 + $0xc08] sm:$0xff]
        %v1477 = vld [vmem:[#allocation5 + $0xc10] sm:$0xff]
        %v1478 = vld [vmem:[#allocation5 + $0xc18] sm:$0xff]
        %v1479 = vld [vmem:[#allocation5 + $0xc20] sm:$0xff]
        %v1480 = vld [vmem:[#allocation5 + $0xc28] sm:$0xff]
        %v1481 = vld [vmem:[#allocation5 + $0xc30] sm:$0xff]
        %v1482 = vld [vmem:[#allocation5 + $0xc38] sm:$0xff]
        %v1483 = vld [vmem:[#allocation5 + $0xc40] sm:$0xff]
        %v1484 = vld [vmem:[#allocation5 + $0xc48] sm:$0xff]
        %v1485 = vld [vmem:[#allocation5 + $0xc50] sm:$0xff]
        %v1486 = vld [vmem:[#allocation5 + $0xc58] sm:$0xff]
        %v1487 = vld [vmem:[#allocation5 + $0xc60] sm:$0xff]
        %v1488 = vld [vmem:[#allocation5 + $0xc68] sm:$0xff]
        %v1489 = vld [vmem:[#allocation5 + $0xc70] sm:$0xff]
        %v1490 = vld [vmem:[#allocation5 + $0xc78] sm:$0xff]
        %v1491 = vld [vmem:[#allocation5 + $0xc80] sm:$0xff]
        %v1492 = vld [vmem:[#allocation5 + $0xc88] sm:$0xff]
        %v1493 = vld [vmem:[#allocation5 + $0xc90] sm:$0xff]
        %v1494 = vld [vmem:[#allocation5 + $0xc98] sm:$0xff]
        %v1495 = vld [vmem:[#allocation5 + $0xca0] sm:$0xff]
        %v1496 = vld [vmem:[#allocation5 + $0xca8] sm:$0xff]
        %v1497 = vld [vmem:[#allocation5 + $0xcb0] sm:$0xff]
        %v1498 = vld [vmem:[#allocation5 + $0xcb8] sm:$0xff]
        %v1499 = vld [vmem:[#allocation5 + $0xcc0] sm:$0xff]
        %v1500 = vld [vmem:[#allocation5 + $0xcc8] sm:$0xff]
        %v1501 = vld [vmem:[#allocation5 + $0xcd0] sm:$0xff]
        %v1502 = vld [vmem:[#allocation5 + $0xcd8] sm:$0xff]
        %v1503 = vld [vmem:[#allocation5 + $0xce0] sm:$0xff]
        %v1504 = vld [vmem:[#allocation5 + $0xce8] sm:$0xff]
        %v1505 = vld [vmem:[#allocation5 + $0xcf0] sm:$0xff]
        %v1506 = vld [vmem:[#allocation5 + $0xcf8] sm:$0xff]
        %v1507 = vld [vmem:[#allocation5 + $0xd00] sm:$0xff]
        %v1508 = vld [vmem:[#allocation5 + $0xd08] sm:$0xff]
        %v1509 = vld [vmem:[#allocation5 + $0xd10] sm:$0xff]
        %v1510 = vld [vmem:[#allocation5 + $0xd18] sm:$0xff]
        %v1511 = vld [vmem:[#allocation5 + $0xd20] sm:$0xff]
        %v1512 = vld [vmem:[#allocation5 + $0xd28] sm:$0xff]
        %v1513 = vld [vmem:[#allocation5 + $0xd30] sm:$0xff]
        %v1514 = vld [vmem:[#allocation5 + $0xd38] sm:$0xff]
        %v1515 = vld [vmem:[#allocation5 + $0xd40] sm:$0xff]
        %v1516 = vld [vmem:[#allocation5 + $0xd48] sm:$0xff]
        %v1517 = vld [vmem:[#allocation5 + $0xd50] sm:$0xff]
        %v1518 = vld [vmem:[#allocation5 + $0xd58] sm:$0xff]
        %v1519 = vld [vmem:[#allocation5 + $0xd60] sm:$0xff]
        %v1520 = vld [vmem:[#allocation5 + $0xd68] sm:$0xff]
        %v1521 = vld [vmem:[#allocation5 + $0xd70] sm:$0xff]
        %v1522 = vld [vmem:[#allocation5 + $0xd78] sm:$0xff]
        %v1523 = vld [vmem:[#allocation5 + $0xd80] sm:$0xff]
        %v1524 = vld [vmem:[#allocation5 + $0xd88] sm:$0xff]
        %v1525 = vld [vmem:[#allocation5 + $0xd90] sm:$0xff]
        %v1526 = vld [vmem:[#allocation5 + $0xd98] sm:$0xff]
        %v1527 = vld [vmem:[#allocation5 + $0xda0] sm:$0xff]
        %v1528 = vld [vmem:[#allocation5 + $0xda8] sm:$0xff]
        %v1529 = vld [vmem:[#allocation5 + $0xdb0] sm:$0xff]
        %v1530 = vld [vmem:[#allocation5 + $0xdb8] sm:$0xff]
        %v1531 = vld [vmem:[#allocation5 + $0xdc0] sm:$0xff]
        %v1532 = vld [vmem:[#allocation5 + $0xdc8] sm:$0xff]
        %v1533 = vld [vmem:[#allocation5 + $0xdd0] sm:$0xff]
        %v1534 = vld [vmem:[#allocation5 + $0xdd8] sm:$0xff]
        %v1535 = vld [vmem:[#allocation5 + $0xde0] sm:$0xff]
        %v1536 = vld [vmem:[#allocation5 + $0xde8] sm:$0xff]
        %v1537 = vld [vmem:[#allocation5 + $0xdf0] sm:$0xff]
        %v1538 = vld [vmem:[#allocation5 + $0xdf8] sm:$0xff]
        %v1539 = vld [vmem:[#allocation5 + $0xe00] sm:$0xff]
        %v1540 = vld [vmem:[#allocation5 + $0xe08] sm:$0xff]
        %v1542 = vsel %vm180, %v321, 0
        %v1545 = vsel %vm180, %v323, 0
        %v1548 = vsel %vm180, %v325, 0
        %v1551 = vsel %vm180, %v327, 0
        %v1554 = vsel %vm180, %v329, 0
        %v1557 = vsel %vm180, %v331, 0
        %v1560 = vsel %vm180, %v333, 0
        %v1563 = vsel %vm180, %v335, 0
        %1565 = vmatprep.subr.mxu0 %v1122
        %1566 = vmatpush1.msra.mxu0 %v1121
        %1567 = vmatprep.subr.mxu0 %v1120
        %1568 = vmatpush1.msra.mxu0 %v1119
        %1569 = vmatprep.subr.mxu0 %v1118
        %1570 = vmatpush1.msra.mxu0 %v1117
        %1571 = vmatprep.subr.mxu0 %v1116
        %1572 = vmatpush1.msra.mxu0 %v1115
        %1573 = vmatprep.subr.mxu0 %v1114
        %1574 = vmatpush1.msra.mxu0 %v1113
        %1575 = vmatprep.subr.mxu0 %v1112
        %1576 = vmatpush1.msra.mxu0 %v1111
        %1577 = vmatprep.subr.mxu0 %v1110
        %1578 = vmatpush1.msra.mxu0 %v1109
        %1579 = vmatprep.subr.mxu0 %v1108
        %1580 = vmatpush1.msra.mxu0 %v1107
        %1581 = vmatprep.subr.mxu0 %v1106
        %1582 = vmatpush1.msra.mxu0 %v1105
        %1583 = vmatprep.subr.mxu0 %v1104
        %1584 = vmatpush1.msra.mxu0 %v1103
        %1585 = vmatprep.subr.mxu0 %v1102
        %1586 = vmatpush1.msra.mxu0 %v1101
        %1587 = vmatprep.subr.mxu0 %v1100
        %1588 = vmatpush1.msra.mxu0 %v1099
        %1589 = vmatprep.subr.mxu0 %v1098
        %1590 = vmatpush1.msra.mxu0 %v1097
        %1591 = vmatprep.subr.mxu0 %v1096
        %1592 = vmatpush1.msra.mxu0 %v1095
        %1593 = vmatprep.subr.mxu0 %v1094
        %1594 = vmatpush1.msra.mxu0 %v1093
        %1595 = vmatprep.subr.mxu0 %v1092
        %1596 = vmatpush1.msra.mxu0 %v1091
        %1597 = vmatprep.subr.mxu0 0.0
        %1598 = vmatpush2.msra.mxu0 0.0
        %1599 = vmatprep.subr.mxu0 0.0
        %1600 = vmatpush2.msra.mxu0 0.0
        %1601 = vmatprep.subr.mxu0 0.0
        %1602 = vmatpush2.msra.mxu0 0.0
        %1603 = vmatprep.subr.mxu0 0.0
        %1604 = vmatpush2.msra.mxu0 0.0
        %1605 = vmatprep.subr.mxu0 0.0
        %1606 = vmatpush2.msra.mxu0 0.0
        %1607 = vmatprep.subr.mxu0 0.0
        %1608 = vmatpush2.msra.mxu0 0.0
        %1609 = vmatprep.subr.mxu0 0.0
        %1610 = vmatpush2.msra.mxu0 0.0
        %1611 = vmatprep.subr.mxu0 %v1140
        %1612 = vmatpush2.msra.mxu0 %v1139
        %1613 = vmatprep.subr.mxu0 %v1138
        %1614 = vmatpush2.msra.mxu0 %v1137
        %1615 = vmatprep.subr.mxu0 %v1136
        %1616 = vmatpush2.msra.mxu0 %v1135
        %1617 = vmatprep.subr.mxu0 %v1134
        %1618 = vmatpush2.msra.mxu0 %v1133
        %1619 = vmatprep.subr.mxu0 %v1132
        %1620 = vmatpush2.msra.mxu0 %v1131
        %1621 = vmatprep.subr.mxu0 %v1130
        %1622 = vmatpush2.msra.mxu0 %v1129
        %1623 = vmatprep.subr.mxu0 %v1128
        %1624 = vmatpush2.msra.mxu0 %v1127
        %1625 = vmatprep.subr.mxu0 %v1126
        %1626 = vmatpush2.msra.mxu0 %v1125
        %1627 = vmatprep.subr.mxu0 %v1124
        %1628 = vmatpush2.msra.mxu0 %v1123
        %1629 = vmatprep.mubr.f32.mxu0 %v1542
        %1630 = vmatmul.mubr.f32.gmra.mxu0 %v320
        %v1631 = vpop.f32.mrf.mxu0
        %v1632 = vadd.f32 0.0, %v1631
        %v1633 = vpop.f32.mrf.mxu0
        %v1634 = vadd.f32 0.0, %v1633
        %1635 = vmatprep.mubr.f32.mxu0 %v1545
        %1636 = vmatmul.mubr.f32.gmra.mxu0 %v322
        %v1637 = vpop.f32.mrf.mxu0
        %v1638 = vadd.f32 0.0, %v1637
        %v1639 = vpop.f32.mrf.mxu0
        %v1640 = vadd.f32 0.0, %v1639
        %1641 = vmatprep.mubr.f32.mxu0 %v1548
        %1642 = vmatmul.mubr.f32.gmra.mxu0 %v324
        %v1643 = vpop.f32.mrf.mxu0
        %v1644 = vadd.f32 0.0, %v1643
        %v1645 = vpop.f32.mrf.mxu0
        %v1646 = vadd.f32 0.0, %v1645
        %1647 = vmatprep.mubr.f32.mxu0 %v1551
        %1648 = vmatmul.mubr.f32.gmra.mxu0 %v326
        %v1649 = vpop.f32.mrf.mxu0
        %v1650 = vadd.f32 0.0, %v1649
        %v1651 = vpop.f32.mrf.mxu0
        %v1652 = vadd.f32 0.0, %v1651
        %1653 = vmatprep.mubr.f32.mxu0 %v1554
        %1654 = vmatmul.mubr.f32.gmra.mxu0 %v328
        %v1655 = vpop.f32.mrf.mxu0
        %v1656 = vadd.f32 0.0, %v1655
        %v1657 = vpop.f32.mrf.mxu0
        %v1658 = vadd.f32 0.0, %v1657
        %1659 = vmatprep.mubr.f32.mxu0 %v1557
        %1660 = vmatmul.mubr.f32.gmra.mxu0 %v330
        %v1661 = vpop.f32.mrf.mxu0
        %v1662 = vadd.f32 0.0, %v1661
        %v1663 = vpop.f32.mrf.mxu0
        %v1664 = vadd.f32 0.0, %v1663
        %1665 = vmatprep.mubr.f32.mxu0 %v1560
        %1666 = vmatmul.mubr.f32.gmra.mxu0 %v332
        %v1667 = vpop.f32.mrf.mxu0
        %v1668 = vadd.f32 0.0, %v1667
        %v1669 = vpop.f32.mrf.mxu0
        %v1670 = vadd.f32 0.0, %v1669
        %1671 = vmatprep.mubr.f32.mxu0 %v1563
        %1672 = vmatmul.mubr.f32.gmra.mxu0 %v334
        %v1673 = vpop.f32.mrf.mxu0
        %v1674 = vadd.f32 0.0, %v1673
        %v1675 = vpop.f32.mrf.mxu0
        %v1676 = vadd.f32 0.0, %v1675
        %1677 = vdwg.mxu0
        %v1678 = vsel %vm180, %v599, 0
        %v1680 = vsel %vm180, %v605, 0
        %v1682 = vsel %vm180, %v611, 0
        %v1684 = vsel %vm180, %v617, 0
        %v1686 = vsel %vm180, %v623, 0
        %v1688 = vsel %vm180, %v629, 0
        %v1690 = vsel %vm180, %v635, 0
        %v1692 = vsel %vm180, %v641, 0
        %1694 = vmatprep.subr.mxu0 %v1172
        %1695 = vmatpush1.msra.mxu0 %v1171
        %1696 = vmatprep.subr.mxu0 %v1170
        %1697 = vmatpush1.msra.mxu0 %v1169
        %1698 = vmatprep.subr.mxu0 %v1168
        %1699 = vmatpush1.msra.mxu0 %v1167
        %1700 = vmatprep.subr.mxu0 %v1166
        %1701 = vmatpush1.msra.mxu0 %v1165
        %1702 = vmatprep.subr.mxu0 %v1164
        %1703 = vmatpush1.msra.mxu0 %v1163
        %1704 = vmatprep.subr.mxu0 %v1162
        %1705 = vmatpush1.msra.mxu0 %v1161
        %1706 = vmatprep.subr.mxu0 %v1160
        %1707 = vmatpush1.msra.mxu0 %v1159
        %1708 = vmatprep.subr.mxu0 %v1158
        %1709 = vmatpush1.msra.mxu0 %v1157
        %1710 = vmatprep.subr.mxu0 %v1156
        %1711 = vmatpush1.msra.mxu0 %v1155
        %1712 = vmatprep.subr.mxu0 %v1154
        %1713 = vmatpush1.msra.mxu0 %v1153
        %1714 = vmatprep.subr.mxu0 %v1152
        %1715 = vmatpush1.msra.mxu0 %v1151
        %1716 = vmatprep.subr.mxu0 %v1150
        %1717 = vmatpush1.msra.mxu0 %v1149
        %1718 = vmatprep.subr.mxu0 %v1148
        %1719 = vmatpush1.msra.mxu0 %v1147
        %1720 = vmatprep.subr.mxu0 %v1146
        %1721 = vmatpush1.msra.mxu0 %v1145
        %1722 = vmatprep.subr.mxu0 %v1144
        %1723 = vmatpush1.msra.mxu0 %v1143
        %1724 = vmatprep.subr.mxu0 %v1142
        %1725 = vmatpush1.msra.mxu0 %v1141
        %1726 = vmatprep.subr.mxu0 0.0
        %1727 = vmatpush2.msra.mxu0 0.0
        %1728 = vmatprep.subr.mxu0 0.0
        %1729 = vmatpush2.msra.mxu0 0.0
        %1730 = vmatprep.subr.mxu0 0.0
        %1731 = vmatpush2.msra.mxu0 0.0
        %1732 = vmatprep.subr.mxu0 0.0
        %1733 = vmatpush2.msra.mxu0 0.0
        %1734 = vmatprep.subr.mxu0 0.0
        %1735 = vmatpush2.msra.mxu0 0.0
        %1736 = vmatprep.subr.mxu0 0.0
        %1737 = vmatpush2.msra.mxu0 0.0
        %1738 = vmatprep.subr.mxu0 0.0
        %1739 = vmatpush2.msra.mxu0 0.0
        %1740 = vmatprep.subr.mxu0 %v1190
        %1741 = vmatpush2.msra.mxu0 %v1189
        %1742 = vmatprep.subr.mxu0 %v1188
        %1743 = vmatpush2.msra.mxu0 %v1187
        %1744 = vmatprep.subr.mxu0 %v1186
        %1745 = vmatpush2.msra.mxu0 %v1185
        %1746 = vmatprep.subr.mxu0 %v1184
        %1747 = vmatpush2.msra.mxu0 %v1183
        %1748 = vmatprep.subr.mxu0 %v1182
        %1749 = vmatpush2.msra.mxu0 %v1181
        %1750 = vmatprep.subr.mxu0 %v1180
        %1751 = vmatpush2.msra.mxu0 %v1179
        %1752 = vmatprep.subr.mxu0 %v1178
        %1753 = vmatpush2.msra.mxu0 %v1177
        %1754 = vmatprep.subr.mxu0 %v1176
        %1755 = vmatpush2.msra.mxu0 %v1175
        %1756 = vmatprep.subr.mxu0 %v1174
        %1757 = vmatpush2.msra.mxu0 %v1173
        %1758 = vmatprep.mubr.f32.mxu0 %v1678
        %1759 = vmatmul.mubr.f32.gmra.mxu0 %v596
        %v1760 = vpop.f32.mrf.mxu0
        %v1761 = vadd.f32 0.0, %v1760
        %v1762 = vpop.f32.mrf.mxu0
        %v1763 = vadd.f32 0.0, %v1762
        %1764 = vmatprep.mubr.f32.mxu0 %v1680
        %1765 = vmatmul.mubr.f32.gmra.mxu0 %v602
        %v1766 = vpop.f32.mrf.mxu0
        %v1767 = vadd.f32 0.0, %v1766
        %v1768 = vpop.f32.mrf.mxu0
        %v1769 = vadd.f32 0.0, %v1768
        %1770 = vmatprep.mubr.f32.mxu0 %v1682
        %1771 = vmatmul.mubr.f32.gmra.mxu0 %v608
        %v1772 = vpop.f32.mrf.mxu0
        %v1773 = vadd.f32 0.0, %v1772
        %v1774 = vpop.f32.mrf.mxu0
        %v1775 = vadd.f32 0.0, %v1774
        %1776 = vmatprep.mubr.f32.mxu0 %v1684
        %1777 = vmatmul.mubr.f32.gmra.mxu0 %v614
        %v1778 = vpop.f32.mrf.mxu0
        %v1779 = vadd.f32 0.0, %v1778
        %v1780 = vpop.f32.mrf.mxu0
        %v1781 = vadd.f32 0.0, %v1780
        %1782 = vmatprep.mubr.f32.mxu0 %v1686
        %1783 = vmatmul.mubr.f32.gmra.mxu0 %v620
        %v1784 = vpop.f32.mrf.mxu0
        %v1785 = vadd.f32 0.0, %v1784
        %v1786 = vpop.f32.mrf.mxu0
        %v1787 = vadd.f32 0.0, %v1786
        %1788 = vmatprep.mubr.f32.mxu0 %v1688
        %1789 = vmatmul.mubr.f32.gmra.mxu0 %v626
        %v1790 = vpop.f32.mrf.mxu0
        %v1791 = vadd.f32 0.0, %v1790
        %v1792 = vpop.f32.mrf.mxu0
        %v1793 = vadd.f32 0.0, %v1792
        %1794 = vmatprep.mubr.f32.mxu0 %v1690
        %1795 = vmatmul.mubr.f32.gmra.mxu0 %v632
        %v1796 = vpop.f32.mrf.mxu0
        %v1797 = vadd.f32 0.0, %v1796
        %v1798 = vpop.f32.mrf.mxu0
        %v1799 = vadd.f32 0.0, %v1798
        %1800 = vmatprep.mubr.f32.mxu0 %v1692
        %1801 = vmatmul.mubr.f32.gmra.mxu0 %v638
        %v1802 = vpop.f32.mrf.mxu0
        %v1803 = vadd.f32 0.0, %v1802
        %v1804 = vpop.f32.mrf.mxu0
        %v1805 = vadd.f32 0.0, %v1804
        %1806 = vdwg.mxu0
        %v1807 = vsel %vm180, %v688, 0
        %v1809 = vsel %vm180, %v694, 0
        %v1811 = vsel %vm180, %v700, 0
        %v1813 = vsel %vm180, %v706, 0
        %v1815 = vsel %vm180, %v712, 0
        %v1817 = vsel %vm180, %v718, 0
        %v1819 = vsel %vm180, %v724, 0
        %v1821 = vsel %vm180, %v730, 0
        %1823 = vmatprep.subr.mxu0 %v1222
        %1824 = vmatpush1.msra.mxu0 %v1221
        %1825 = vmatprep.subr.mxu0 %v1220
        %1826 = vmatpush1.msra.mxu0 %v1219
        %1827 = vmatprep.subr.mxu0 %v1218
        %1828 = vmatpush1.msra.mxu0 %v1217
        %1829 = vmatprep.subr.mxu0 %v1216
        %1830 = vmatpush1.msra.mxu0 %v1215
        %1831 = vmatprep.subr.mxu0 %v1214
        %1832 = vmatpush1.msra.mxu0 %v1213
        %1833 = vmatprep.subr.mxu0 %v1212
        %1834 = vmatpush1.msra.mxu0 %v1211
        %1835 = vmatprep.subr.mxu0 %v1210
        %1836 = vmatpush1.msra.mxu0 %v1209
        %1837 = vmatprep.subr.mxu0 %v1208
        %1838 = vmatpush1.msra.mxu0 %v1207
        %1839 = vmatprep.subr.mxu0 %v1206
        %1840 = vmatpush1.msra.mxu0 %v1205
        %1841 = vmatprep.subr.mxu0 %v1204
        %1842 = vmatpush1.msra.mxu0 %v1203
        %1843 = vmatprep.subr.mxu0 %v1202
        %1844 = vmatpush1.msra.mxu0 %v1201
        %1845 = vmatprep.subr.mxu0 %v1200
        %1846 = vmatpush1.msra.mxu0 %v1199
        %1847 = vmatprep.subr.mxu0 %v1198
        %1848 = vmatpush1.msra.mxu0 %v1197
        %1849 = vmatprep.subr.mxu0 %v1196
        %1850 = vmatpush1.msra.mxu0 %v1195
        %1851 = vmatprep.subr.mxu0 %v1194
        %1852 = vmatpush1.msra.mxu0 %v1193
        %1853 = vmatprep.subr.mxu0 %v1192
        %1854 = vmatpush1.msra.mxu0 %v1191
        %1855 = vmatprep.subr.mxu0 0.0
        %1856 = vmatpush2.msra.mxu0 0.0
        %1857 = vmatprep.subr.mxu0 0.0
        %1858 = vmatpush2.msra.mxu0 0.0
        %1859 = vmatprep.subr.mxu0 0.0
        %1860 = vmatpush2.msra.mxu0 0.0
        %1861 = vmatprep.subr.mxu0 0.0
        %1862 = vmatpush2.msra.mxu0 0.0
        %1863 = vmatprep.subr.mxu0 0.0
        %1864 = vmatpush2.msra.mxu0 0.0
        %1865 = vmatprep.subr.mxu0 0.0
        %1866 = vmatpush2.msra.mxu0 0.0
        %1867 = vmatprep.subr.mxu0 0.0
        %1868 = vmatpush2.msra.mxu0 0.0
        %1869 = vmatprep.subr.mxu0 %v1240
        %1870 = vmatpush2.msra.mxu0 %v1239
        %1871 = vmatprep.subr.mxu0 %v1238
        %1872 = vmatpush2.msra.mxu0 %v1237
        %1873 = vmatprep.subr.mxu0 %v1236
        %1874 = vmatpush2.msra.mxu0 %v1235
        %1875 = vmatprep.subr.mxu0 %v1234
        %1876 = vmatpush2.msra.mxu0 %v1233
        %1877 = vmatprep.subr.mxu0 %v1232
        %1878 = vmatpush2.msra.mxu0 %v1231
        %1879 = vmatprep.subr.mxu0 %v1230
        %1880 = vmatpush2.msra.mxu0 %v1229
        %1881 = vmatprep.subr.mxu0 %v1228
        %1882 = vmatpush2.msra.mxu0 %v1227
        %1883 = vmatprep.subr.mxu0 %v1226
        %1884 = vmatpush2.msra.mxu0 %v1225
        %1885 = vmatprep.subr.mxu0 %v1224
        %1886 = vmatpush2.msra.mxu0 %v1223
        %1887 = vmatprep.mubr.f32.mxu0 %v1807
        %1888 = vmatmul.mubr.f32.gmra.mxu0 %v685
        %v1889 = vpop.f32.mrf.mxu0
        %v1890 = vadd.f32 0.0, %v1889
        %v1891 = vpop.f32.mrf.mxu0
        %v1892 = vadd.f32 0.0, %v1891
        %1893 = vmatprep.mubr.f32.mxu0 %v1809
        %1894 = vmatmul.mubr.f32.gmra.mxu0 %v691
        %v1895 = vpop.f32.mrf.mxu0
        %v1896 = vadd.f32 0.0, %v1895
        %v1897 = vpop.f32.mrf.mxu0
        %v1898 = vadd.f32 0.0, %v1897
        %1899 = vmatprep.mubr.f32.mxu0 %v1811
        %1900 = vmatmul.mubr.f32.gmra.mxu0 %v697
        %v1901 = vpop.f32.mrf.mxu0
        %v1902 = vadd.f32 0.0, %v1901
        %v1903 = vpop.f32.mrf.mxu0
        %v1904 = vadd.f32 0.0, %v1903
        %1905 = vmatprep.mubr.f32.mxu0 %v1813
        %1906 = vmatmul.mubr.f32.gmra.mxu0 %v703
        %v1907 = vpop.f32.mrf.mxu0
        %v1908 = vadd.f32 0.0, %v1907
        %v1909 = vpop.f32.mrf.mxu0
        %v1910 = vadd.f32 0.0, %v1909
        %1911 = vmatprep.mubr.f32.mxu0 %v1815
        %1912 = vmatmul.mubr.f32.gmra.mxu0 %v709
        %v1913 = vpop.f32.mrf.mxu0
        %v1914 = vadd.f32 0.0, %v1913
        %v1915 = vpop.f32.mrf.mxu0
        %v1916 = vadd.f32 0.0, %v1915
        %1917 = vmatprep.mubr.f32.mxu0 %v1817
        %1918 = vmatmul.mubr.f32.gmra.mxu0 %v715
        %v1919 = vpop.f32.mrf.mxu0
        %v1920 = vadd.f32 0.0, %v1919
        %v1921 = vpop.f32.mrf.mxu0
        %v1922 = vadd.f32 0.0, %v1921
        %1923 = vmatprep.mubr.f32.mxu0 %v1819
        %1924 = vmatmul.mubr.f32.gmra.mxu0 %v721
        %v1925 = vpop.f32.mrf.mxu0
        %v1926 = vadd.f32 0.0, %v1925
        %v1927 = vpop.f32.mrf.mxu0
        %v1928 = vadd.f32 0.0, %v1927
        %1929 = vmatprep.mubr.f32.mxu0 %v1821
        %1930 = vmatmul.mubr.f32.gmra.mxu0 %v727
        %v1931 = vpop.f32.mrf.mxu0
        %v1932 = vadd.f32 0.0, %v1931
        %v1933 = vpop.f32.mrf.mxu0
        %v1934 = vadd.f32 0.0, %v1933
        %1935 = vdwg.mxu0
        %v1937 = vsel %vm180, %v401, 0
        %v1940 = vsel %vm180, %v403, 0
        %v1943 = vsel %vm180, %v405, 0
        %v1946 = vsel %vm180, %v407, 0
        %v1949 = vsel %vm180, %v409, 0
        %v1952 = vsel %vm180, %v411, 0
        %v1955 = vsel %vm180, %v413, 0
        %v1958 = vsel %vm180, %v415, 0
        %1960 = vmatprep.subr.mxu0 %v1272
        %1961 = vmatpush1.msra.mxu0 %v1271
        %1962 = vmatprep.subr.mxu0 %v1270
        %1963 = vmatpush1.msra.mxu0 %v1269
        %1964 = vmatprep.subr.mxu0 %v1268
        %1965 = vmatpush1.msra.mxu0 %v1267
        %1966 = vmatprep.subr.mxu0 %v1266
        %1967 = vmatpush1.msra.mxu0 %v1265
        %1968 = vmatprep.subr.mxu0 %v1264
        %1969 = vmatpush1.msra.mxu0 %v1263
        %1970 = vmatprep.subr.mxu0 %v1262
        %1971 = vmatpush1.msra.mxu0 %v1261
        %1972 = vmatprep.subr.mxu0 %v1260
        %1973 = vmatpush1.msra.mxu0 %v1259
        %1974 = vmatprep.subr.mxu0 %v1258
        %1975 = vmatpush1.msra.mxu0 %v1257
        %1976 = vmatprep.subr.mxu0 %v1256
        %1977 = vmatpush1.msra.mxu0 %v1255
        %1978 = vmatprep.subr.mxu0 %v1254
        %1979 = vmatpush1.msra.mxu0 %v1253
        %1980 = vmatprep.subr.mxu0 %v1252
        %1981 = vmatpush1.msra.mxu0 %v1251
        %1982 = vmatprep.subr.mxu0 %v1250
        %1983 = vmatpush1.msra.mxu0 %v1249
        %1984 = vmatprep.subr.mxu0 %v1248
        %1985 = vmatpush1.msra.mxu0 %v1247
        %1986 = vmatprep.subr.mxu0 %v1246
        %1987 = vmatpush1.msra.mxu0 %v1245
        %1988 = vmatprep.subr.mxu0 %v1244
        %1989 = vmatpush1.msra.mxu0 %v1243
        %1990 = vmatprep.subr.mxu0 %v1242
        %1991 = vmatpush1.msra.mxu0 %v1241
        %1992 = vmatprep.subr.mxu0 0.0
        %1993 = vmatpush2.msra.mxu0 0.0
        %1994 = vmatprep.subr.mxu0 0.0
        %1995 = vmatpush2.msra.mxu0 0.0
        %1996 = vmatprep.subr.mxu0 0.0
        %1997 = vmatpush2.msra.mxu0 0.0
        %1998 = vmatprep.subr.mxu0 0.0
        %1999 = vmatpush2.msra.mxu0 0.0
        %2000 = vmatprep.subr.mxu0 0.0
        %2001 = vmatpush2.msra.mxu0 0.0
        %2002 = vmatprep.subr.mxu0 0.0
        %2003 = vmatpush2.msra.mxu0 0.0
        %2004 = vmatprep.subr.mxu0 0.0
        %2005 = vmatpush2.msra.mxu0 0.0
        %2006 = vmatprep.subr.mxu0 %v1290
        %2007 = vmatpush2.msra.mxu0 %v1289
        %2008 = vmatprep.subr.mxu0 %v1288
        %2009 = vmatpush2.msra.mxu0 %v1287
        %2010 = vmatprep.subr.mxu0 %v1286
        %2011 = vmatpush2.msra.mxu0 %v1285
        %2012 = vmatprep.subr.mxu0 %v1284
        %2013 = vmatpush2.msra.mxu0 %v1283
        %2014 = vmatprep.subr.mxu0 %v1282
        %2015 = vmatpush2.msra.mxu0 %v1281
        %2016 = vmatprep.subr.mxu0 %v1280
        %2017 = vmatpush2.msra.mxu0 %v1279
        %2018 = vmatprep.subr.mxu0 %v1278
        %2019 = vmatpush2.msra.mxu0 %v1277
        %2020 = vmatprep.subr.mxu0 %v1276
        %2021 = vmatpush2.msra.mxu0 %v1275
        %2022 = vmatprep.subr.mxu0 %v1274
        %2023 = vmatpush2.msra.mxu0 %v1273
        %2024 = vmatprep.mubr.f32.mxu0 %v1937
        %2025 = vmatmul.mubr.f32.gmra.mxu0 %v400
        %v2026 = vpop.f32.mrf.mxu0
        %v2027 = vadd.f32 0.0, %v2026
        %v2028 = vpop.f32.mrf.mxu0
        %v2029 = vadd.f32 0.0, %v2028
        %2030 = vmatprep.mubr.f32.mxu0 %v1940
        %2031 = vmatmul.mubr.f32.gmra.mxu0 %v402
        %v2032 = vpop.f32.mrf.mxu0
        %v2033 = vadd.f32 0.0, %v2032
        %v2034 = vpop.f32.mrf.mxu0
        %v2035 = vadd.f32 0.0, %v2034
        %2036 = vmatprep.mubr.f32.mxu0 %v1943
        %2037 = vmatmul.mubr.f32.gmra.mxu0 %v404
        %v2038 = vpop.f32.mrf.mxu0
        %v2039 = vadd.f32 0.0, %v2038
        %v2040 = vpop.f32.mrf.mxu0
        %v2041 = vadd.f32 0.0, %v2040
        %2042 = vmatprep.mubr.f32.mxu0 %v1946
        %2043 = vmatmul.mubr.f32.gmra.mxu0 %v406
        %v2044 = vpop.f32.mrf.mxu0
        %v2045 = vadd.f32 0.0, %v2044
        %v2046 = vpop.f32.mrf.mxu0
        %v2047 = vadd.f32 0.0, %v2046
        %2048 = vmatprep.mubr.f32.mxu0 %v1949
        %2049 = vmatmul.mubr.f32.gmra.mxu0 %v408
        %v2050 = vpop.f32.mrf.mxu0
        %v2051 = vadd.f32 0.0, %v2050
        %v2052 = vpop.f32.mrf.mxu0
        %v2053 = vadd.f32 0.0, %v2052
        %2054 = vmatprep.mubr.f32.mxu0 %v1952
        %2055 = vmatmul.mubr.f32.gmra.mxu0 %v410
        %v2056 = vpop.f32.mrf.mxu0
        %v2057 = vadd.f32 0.0, %v2056
        %v2058 = vpop.f32.mrf.mxu0
        %v2059 = vadd.f32 0.0, %v2058
        %2060 = vmatprep.mubr.f32.mxu0 %v1955
        %2061 = vmatmul.mubr.f32.gmra.mxu0 %v412
        %v2062 = vpop.f32.mrf.mxu0
        %v2063 = vadd.f32 0.0, %v2062
        %v2064 = vpop.f32.mrf.mxu0
        %v2065 = vadd.f32 0.0, %v2064
        %2066 = vmatprep.mubr.f32.mxu0 %v1958
        %2067 = vmatmul.mubr.f32.gmra.mxu0 %v414
        %v2068 = vpop.f32.mrf.mxu0
        %v2069 = vadd.f32 0.0, %v2068
        %v2070 = vpop.f32.mrf.mxu0
        %v2071 = vadd.f32 0.0, %v2070
        %2072 = vdwg.mxu0
        %v2073 = vsel %vm180, %v776, 0
        %v2075 = vsel %vm180, %v782, 0
        %v2077 = vsel %vm180, %v788, 0
        %v2079 = vsel %vm180, %v794, 0
        %v2081 = vsel %vm180, %v800, 0
        %v2083 = vsel %vm180, %v806, 0
        %v2085 = vsel %vm180, %v812, 0
        %v2087 = vsel %vm180, %v818, 0
        %2089 = vmatprep.subr.mxu0 %v1322
        %2090 = vmatpush1.msra.mxu0 %v1321
        %2091 = vmatprep.subr.mxu0 %v1320
        %2092 = vmatpush1.msra.mxu0 %v1319
        %2093 = vmatprep.subr.mxu0 %v1318
        %2094 = vmatpush1.msra.mxu0 %v1317
        %2095 = vmatprep.subr.mxu0 %v1316
        %2096 = vmatpush1.msra.mxu0 %v1315
        %2097 = vmatprep.subr.mxu0 %v1314
        %2098 = vmatpush1.msra.mxu0 %v1313
        %2099 = vmatprep.subr.mxu0 %v1312
        %2100 = vmatpush1.msra.mxu0 %v1311
        %2101 = vmatprep.subr.mxu0 %v1310
        %2102 = vmatpush1.msra.mxu0 %v1309
        %2103 = vmatprep.subr.mxu0 %v1308
        %2104 = vmatpush1.msra.mxu0 %v1307
        %2105 = vmatprep.subr.mxu0 %v1306
        %2106 = vmatpush1.msra.mxu0 %v1305
        %2107 = vmatprep.subr.mxu0 %v1304
        %2108 = vmatpush1.msra.mxu0 %v1303
        %2109 = vmatprep.subr.mxu0 %v1302
        %2110 = vmatpush1.msra.mxu0 %v1301
        %2111 = vmatprep.subr.mxu0 %v1300
        %2112 = vmatpush1.msra.mxu0 %v1299
        %2113 = vmatprep.subr.mxu0 %v1298
        %2114 = vmatpush1.msra.mxu0 %v1297
        %2115 = vmatprep.subr.mxu0 %v1296
        %2116 = vmatpush1.msra.mxu0 %v1295
        %2117 = vmatprep.subr.mxu0 %v1294
        %2118 = vmatpush1.msra.mxu0 %v1293
        %2119 = vmatprep.subr.mxu0 %v1292
        %2120 = vmatpush1.msra.mxu0 %v1291
        %2121 = vmatprep.subr.mxu0 0.0
        %2122 = vmatpush2.msra.mxu0 0.0
        %2123 = vmatprep.subr.mxu0 0.0
        %2124 = vmatpush2.msra.mxu0 0.0
        %2125 = vmatprep.subr.mxu0 0.0
        %2126 = vmatpush2.msra.mxu0 0.0
        %2127 = vmatprep.subr.mxu0 0.0
        %2128 = vmatpush2.msra.mxu0 0.0
        %2129 = vmatprep.subr.mxu0 0.0
        %2130 = vmatpush2.msra.mxu0 0.0
        %2131 = vmatprep.subr.mxu0 0.0
        %2132 = vmatpush2.msra.mxu0 0.0
        %2133 = vmatprep.subr.mxu0 0.0
        %2134 = vmatpush2.msra.mxu0 0.0
        %2135 = vmatprep.subr.mxu0 %v1340
        %2136 = vmatpush2.msra.mxu0 %v1339
        %2137 = vmatprep.subr.mxu0 %v1338
        %2138 = vmatpush2.msra.mxu0 %v1337
        %2139 = vmatprep.subr.mxu0 %v1336
        %2140 = vmatpush2.msra.mxu0 %v1335
        %2141 = vmatprep.subr.mxu0 %v1334
        %2142 = vmatpush2.msra.mxu0 %v1333
        %2143 = vmatprep.subr.mxu0 %v1332
        %2144 = vmatpush2.msra.mxu0 %v1331
        %2145 = vmatprep.subr.mxu0 %v1330
        %2146 = vmatpush2.msra.mxu0 %v1329
        %2147 = vmatprep.subr.mxu0 %v1328
        %2148 = vmatpush2.msra.mxu0 %v1327
        %2149 = vmatprep.subr.mxu0 %v1326
        %2150 = vmatpush2.msra.mxu0 %v1325
        %2151 = vmatprep.subr.mxu0 %v1324
        %2152 = vmatpush2.msra.mxu0 %v1323
        %2153 = vmatprep.mubr.f32.mxu0 %v2073
        %2154 = vmatmul.mubr.f32.gmra.mxu0 %v773
        %v2155 = vpop.f32.mrf.mxu0
        %v2156 = vadd.f32 0.0, %v2155
        %v2157 = vpop.f32.mrf.mxu0
        %v2158 = vadd.f32 0.0, %v2157
        %2159 = vmatprep.mubr.f32.mxu0 %v2075
        %2160 = vmatmul.mubr.f32.gmra.mxu0 %v779
        %v2161 = vpop.f32.mrf.mxu0
        %v2162 = vadd.f32 0.0, %v2161
        %v2163 = vpop.f32.mrf.mxu0
        %v2164 = vadd.f32 0.0, %v2163
        %2165 = vmatprep.mubr.f32.mxu0 %v2077
        %2166 = vmatmul.mubr.f32.gmra.mxu0 %v785
        %v2167 = vpop.f32.mrf.mxu0
        %v2168 = vadd.f32 0.0, %v2167
        %v2169 = vpop.f32.mrf.mxu0
        %v2170 = vadd.f32 0.0, %v2169
        %2171 = vmatprep.mubr.f32.mxu0 %v2079
        %2172 = vmatmul.mubr.f32.gmra.mxu0 %v791
        %v2173 = vpop.f32.mrf.mxu0
        %v2174 = vadd.f32 0.0, %v2173
        %v2175 = vpop.f32.mrf.mxu0
        %v2176 = vadd.f32 0.0, %v2175
        %2177 = vmatprep.mubr.f32.mxu0 %v2081
        %2178 = vmatmul.mubr.f32.gmra.mxu0 %v797
        %v2179 = vpop.f32.mrf.mxu0
        %v2180 = vadd.f32 0.0, %v2179
        %v2181 = vpop.f32.mrf.mxu0
        %v2182 = vadd.f32 0.0, %v2181
        %2183 = vmatprep.mubr.f32.mxu0 %v2083
        %2184 = vmatmul.mubr.f32.gmra.mxu0 %v803
        %v2185 = vpop.f32.mrf.mxu0
        %v2186 = vadd.f32 0.0, %v2185
        %v2187 = vpop.f32.mrf.mxu0
        %v2188 = vadd.f32 0.0, %v2187
        %2189 = vmatprep.mubr.f32.mxu0 %v2085
        %2190 = vmatmul.mubr.f32.gmra.mxu0 %v809
        %v2191 = vpop.f32.mrf.mxu0
        %v2192 = vadd.f32 0.0, %v2191
        %v2193 = vpop.f32.mrf.mxu0
        %v2194 = vadd.f32 0.0, %v2193
        %2195 = vmatprep.mubr.f32.mxu0 %v2087
        %2196 = vmatmul.mubr.f32.gmra.mxu0 %v815
        %v2197 = vpop.f32.mrf.mxu0
        %v2198 = vadd.f32 0.0, %v2197
        %v2199 = vpop.f32.mrf.mxu0
        %v2200 = vadd.f32 0.0, %v2199
        %2201 = vdwg.mxu0
        %v2202 = vsel %vm180, %v864, 0
        %v2204 = vsel %vm180, %v870, 0
        %v2206 = vsel %vm180, %v876, 0
        %v2208 = vsel %vm180, %v882, 0
        %v2210 = vsel %vm180, %v888, 0
        %v2212 = vsel %vm180, %v894, 0
        %v2214 = vsel %vm180, %v900, 0
        %v2216 = vsel %vm180, %v906, 0
        %2218 = vmatprep.subr.mxu0 %v1372
        %2219 = vmatpush1.msra.mxu0 %v1371
        %2220 = vmatprep.subr.mxu0 %v1370
        %2221 = vmatpush1.msra.mxu0 %v1369
        %2222 = vmatprep.subr.mxu0 %v1368
        %2223 = vmatpush1.msra.mxu0 %v1367
        %2224 = vmatprep.subr.mxu0 %v1366
        %2225 = vmatpush1.msra.mxu0 %v1365
        %2226 = vmatprep.subr.mxu0 %v1364
        %2227 = vmatpush1.msra.mxu0 %v1363
        %2228 = vmatprep.subr.mxu0 %v1362
        %2229 = vmatpush1.msra.mxu0 %v1361
        %2230 = vmatprep.subr.mxu0 %v1360
        %2231 = vmatpush1.msra.mxu0 %v1359
        %2232 = vmatprep.subr.mxu0 %v1358
        %2233 = vmatpush1.msra.mxu0 %v1357
        %2234 = vmatprep.subr.mxu0 %v1356
        %2235 = vmatpush1.msra.mxu0 %v1355
        %2236 = vmatprep.subr.mxu0 %v1354
        %2237 = vmatpush1.msra.mxu0 %v1353
        %2238 = vmatprep.subr.mxu0 %v1352
        %2239 = vmatpush1.msra.mxu0 %v1351
        %2240 = vmatprep.subr.mxu0 %v1350
        %2241 = vmatpush1.msra.mxu0 %v1349
        %2242 = vmatprep.subr.mxu0 %v1348
        %2243 = vmatpush1.msra.mxu0 %v1347
        %2244 = vmatprep.subr.mxu0 %v1346
        %2245 = vmatpush1.msra.mxu0 %v1345
        %2246 = vmatprep.subr.mxu0 %v1344
        %2247 = vmatpush1.msra.mxu0 %v1343
        %2248 = vmatprep.subr.mxu0 %v1342
        %2249 = vmatpush1.msra.mxu0 %v1341
        %2250 = vmatprep.subr.mxu0 0.0
        %2251 = vmatpush2.msra.mxu0 0.0
        %2252 = vmatprep.subr.mxu0 0.0
        %2253 = vmatpush2.msra.mxu0 0.0
        %2254 = vmatprep.subr.mxu0 0.0
        %2255 = vmatpush2.msra.mxu0 0.0
        %2256 = vmatprep.subr.mxu0 0.0
        %2257 = vmatpush2.msra.mxu0 0.0
        %2258 = vmatprep.subr.mxu0 0.0
        %2259 = vmatpush2.msra.mxu0 0.0
        %2260 = vmatprep.subr.mxu0 0.0
        %2261 = vmatpush2.msra.mxu0 0.0
        %2262 = vmatprep.subr.mxu0 0.0
        %2263 = vmatpush2.msra.mxu0 0.0
        %2264 = vmatprep.subr.mxu0 %v1390
        %2265 = vmatpush2.msra.mxu0 %v1389
        %2266 = vmatprep.subr.mxu0 %v1388
        %2267 = vmatpush2.msra.mxu0 %v1387
        %2268 = vmatprep.subr.mxu0 %v1386
        %2269 = vmatpush2.msra.mxu0 %v1385
        %2270 = vmatprep.subr.mxu0 %v1384
        %2271 = vmatpush2.msra.mxu0 %v1383
        %2272 = vmatprep.subr.mxu0 %v1382
        %2273 = vmatpush2.msra.mxu0 %v1381
        %2274 = vmatprep.subr.mxu0 %v1380
        %2275 = vmatpush2.msra.mxu0 %v1379
        %2276 = vmatprep.subr.mxu0 %v1378
        %2277 = vmatpush2.msra.mxu0 %v1377
        %2278 = vmatprep.subr.mxu0 %v1376
        %2279 = vmatpush2.msra.mxu0 %v1375
        %2280 = vmatprep.subr.mxu0 %v1374
        %2281 = vmatpush2.msra.mxu0 %v1373
        %2282 = vmatprep.mubr.f32.mxu0 %v2202
        %2283 = vmatmul.mubr.f32.gmra.mxu0 %v861
        %v2284 = vpop.f32.mrf.mxu0
        %v2285 = vadd.f32 0.0, %v2284
        %v2286 = vpop.f32.mrf.mxu0
        %v2287 = vadd.f32 0.0, %v2286
        %2288 = vmatprep.mubr.f32.mxu0 %v2204
        %2289 = vmatmul.mubr.f32.gmra.mxu0 %v867
        %v2290 = vpop.f32.mrf.mxu0
        %v2291 = vadd.f32 0.0, %v2290
        %v2292 = vpop.f32.mrf.mxu0
        %v2293 = vadd.f32 0.0, %v2292
        %2294 = vmatprep.mubr.f32.mxu0 %v2206
        %2295 = vmatmul.mubr.f32.gmra.mxu0 %v873
        %v2296 = vpop.f32.mrf.mxu0
        %v2297 = vadd.f32 0.0, %v2296
        %v2298 = vpop.f32.mrf.mxu0
        %v2299 = vadd.f32 0.0, %v2298
        %2300 = vmatprep.mubr.f32.mxu0 %v2208
        %2301 = vmatmul.mubr.f32.gmra.mxu0 %v879
        %v2302 = vpop.f32.mrf.mxu0
        %v2303 = vadd.f32 0.0, %v2302
        %v2304 = vpop.f32.mrf.mxu0
        %v2305 = vadd.f32 0.0, %v2304
        %2306 = vmatprep.mubr.f32.mxu0 %v2210
        %2307 = vmatmul.mubr.f32.gmra.mxu0 %v885
        %v2308 = vpop.f32.mrf.mxu0
        %v2309 = vadd.f32 0.0, %v2308
        %v2310 = vpop.f32.mrf.mxu0
        %v2311 = vadd.f32 0.0, %v2310
        %2312 = vmatprep.mubr.f32.mxu0 %v2212
        %2313 = vmatmul.mubr.f32.gmra.mxu0 %v891
        %v2314 = vpop.f32.mrf.mxu0
        %v2315 = vadd.f32 0.0, %v2314
        %v2316 = vpop.f32.mrf.mxu0
        %v2317 = vadd.f32 0.0, %v2316
        %2318 = vmatprep.mubr.f32.mxu0 %v2214
        %2319 = vmatmul.mubr.f32.gmra.mxu0 %v897
        %v2320 = vpop.f32.mrf.mxu0
        %v2321 = vadd.f32 0.0, %v2320
        %v2322 = vpop.f32.mrf.mxu0
        %v2323 = vadd.f32 0.0, %v2322
        %2324 = vmatprep.mubr.f32.mxu0 %v2216
        %2325 = vmatmul.mubr.f32.gmra.mxu0 %v903
        %v2326 = vpop.f32.mrf.mxu0
        %v2327 = vadd.f32 0.0, %v2326
        %v2328 = vpop.f32.mrf.mxu0
        %v2329 = vadd.f32 0.0, %v2328
        %2330 = vdwg.mxu0
        %v2332 = vsel %vm180, %v482, 0
        %v2335 = vsel %vm180, %v484, 0
        %v2338 = vsel %vm180, %v486, 0
        %v2341 = vsel %vm180, %v488, 0
        %v2344 = vsel %vm180, %v490, 0
        %v2347 = vsel %vm180, %v492, 0
        %v2350 = vsel %vm180, %v494, 0
        %v2353 = vsel %vm180, %v496, 0
        %2355 = vmatprep.subr.mxu0 %v1422
        %2356 = vmatpush1.msra.mxu0 %v1421
        %2357 = vmatprep.subr.mxu0 %v1420
        %2358 = vmatpush1.msra.mxu0 %v1419
        %2359 = vmatprep.subr.mxu0 %v1418
        %2360 = vmatpush1.msra.mxu0 %v1417
        %2361 = vmatprep.subr.mxu0 %v1416
        %2362 = vmatpush1.msra.mxu0 %v1415
        %2363 = vmatprep.subr.mxu0 %v1414
        %2364 = vmatpush1.msra.mxu0 %v1413
        %2365 = vmatprep.subr.mxu0 %v1412
        %2366 = vmatpush1.msra.mxu0 %v1411
        %2367 = vmatprep.subr.mxu0 %v1410
        %2368 = vmatpush1.msra.mxu0 %v1409
        %2369 = vmatprep.subr.mxu0 %v1408
        %2370 = vmatpush1.msra.mxu0 %v1407
        %2371 = vmatprep.subr.mxu0 %v1406
        %2372 = vmatpush1.msra.mxu0 %v1405
        %2373 = vmatprep.subr.mxu0 %v1404
        %2374 = vmatpush1.msra.mxu0 %v1403
        %2375 = vmatprep.subr.mxu0 %v1402
        %2376 = vmatpush1.msra.mxu0 %v1401
        %2377 = vmatprep.subr.mxu0 %v1400
        %2378 = vmatpush1.msra.mxu0 %v1399
        %2379 = vmatprep.subr.mxu0 %v1398
        %2380 = vmatpush1.msra.mxu0 %v1397
        %2381 = vmatprep.subr.mxu0 %v1396
        %2382 = vmatpush1.msra.mxu0 %v1395
        %2383 = vmatprep.subr.mxu0 %v1394
        %2384 = vmatpush1.msra.mxu0 %v1393
        %2385 = vmatprep.subr.mxu0 %v1392
        %2386 = vmatpush1.msra.mxu0 %v1391
        %2387 = vmatprep.subr.mxu0 0.0
        %2388 = vmatpush2.msra.mxu0 0.0
        %2389 = vmatprep.subr.mxu0 0.0
        %2390 = vmatpush2.msra.mxu0 0.0
        %2391 = vmatprep.subr.mxu0 0.0
        %2392 = vmatpush2.msra.mxu0 0.0
        %2393 = vmatprep.subr.mxu0 0.0
        %2394 = vmatpush2.msra.mxu0 0.0
        %2395 = vmatprep.subr.mxu0 0.0
        %2396 = vmatpush2.msra.mxu0 0.0
        %2397 = vmatprep.subr.mxu0 0.0
        %2398 = vmatpush2.msra.mxu0 0.0
        %2399 = vmatprep.subr.mxu0 0.0
        %2400 = vmatpush2.msra.mxu0 0.0
        %2401 = vmatprep.subr.mxu0 %v1440
        %2402 = vmatpush2.msra.mxu0 %v1439
        %2403 = vmatprep.subr.mxu0 %v1438
        %2404 = vmatpush2.msra.mxu0 %v1437
        %2405 = vmatprep.subr.mxu0 %v1436
        %2406 = vmatpush2.msra.mxu0 %v1435
        %2407 = vmatprep.subr.mxu0 %v1434
        %2408 = vmatpush2.msra.mxu0 %v1433
        %2409 = vmatprep.subr.mxu0 %v1432
        %2410 = vmatpush2.msra.mxu0 %v1431
        %2411 = vmatprep.subr.mxu0 %v1430
        %2412 = vmatpush2.msra.mxu0 %v1429
        %2413 = vmatprep.subr.mxu0 %v1428
        %2414 = vmatpush2.msra.mxu0 %v1427
        %2415 = vmatprep.subr.mxu0 %v1426
        %2416 = vmatpush2.msra.mxu0 %v1425
        %2417 = vmatprep.subr.mxu0 %v1424
        %2418 = vmatpush2.msra.mxu0 %v1423
        %2419 = vmatprep.mubr.f32.mxu0 %v2332
        %2420 = vmatmul.mubr.f32.gmra.mxu0 %v481
        %v2421 = vpop.f32.mrf.mxu0
        %v2422 = vadd.f32 0.0, %v2421
        %v2423 = vpop.f32.mrf.mxu0
        %v2424 = vadd.f32 0.0, %v2423
        %2425 = vmatprep.mubr.f32.mxu0 %v2335
        %2426 = vmatmul.mubr.f32.gmra.mxu0 %v483
        %v2427 = vpop.f32.mrf.mxu0
        %v2428 = vadd.f32 0.0, %v2427
        %v2429 = vpop.f32.mrf.mxu0
        %v2430 = vadd.f32 0.0, %v2429
        %2431 = vmatprep.mubr.f32.mxu0 %v2338
        %2432 = vmatmul.mubr.f32.gmra.mxu0 %v485
        %v2433 = vpop.f32.mrf.mxu0
        %v2434 = vadd.f32 0.0, %v2433
        %v2435 = vpop.f32.mrf.mxu0
        %v2436 = vadd.f32 0.0, %v2435
        %2437 = vmatprep.mubr.f32.mxu0 %v2341
        %2438 = vmatmul.mubr.f32.gmra.mxu0 %v487
        %v2439 = vpop.f32.mrf.mxu0
        %v2440 = vadd.f32 0.0, %v2439
        %v2441 = vpop.f32.mrf.mxu0
        %v2442 = vadd.f32 0.0, %v2441
        %2443 = vmatprep.mubr.f32.mxu0 %v2344
        %2444 = vmatmul.mubr.f32.gmra.mxu0 %v489
        %v2445 = vpop.f32.mrf.mxu0
        %v2446 = vadd.f32 0.0, %v2445
        %v2447 = vpop.f32.mrf.mxu0
        %v2448 = vadd.f32 0.0, %v2447
        %2449 = vmatprep.mubr.f32.mxu0 %v2347
        %2450 = vmatmul.mubr.f32.gmra.mxu0 %v491
        %v2451 = vpop.f32.mrf.mxu0
        %v2452 = vadd.f32 0.0, %v2451
        %v2453 = vpop.f32.mrf.mxu0
        %v2454 = vadd.f32 0.0, %v2453
        %2455 = vmatprep.mubr.f32.mxu0 %v2350
        %2456 = vmatmul.mubr.f32.gmra.mxu0 %v493
        %v2457 = vpop.f32.mrf.mxu0
        %v2458 = vadd.f32 0.0, %v2457
        %v2459 = vpop.f32.mrf.mxu0
        %v2460 = vadd.f32 0.0, %v2459
        %2461 = vmatprep.mubr.f32.mxu0 %v2353
        %2462 = vmatmul.mubr.f32.gmra.mxu0 %v495
        %v2463 = vpop.f32.mrf.mxu0
        %v2464 = vadd.f32 0.0, %v2463
        %v2465 = vpop.f32.mrf.mxu0
        %v2466 = vadd.f32 0.0, %v2465
        %2467 = vdwg.mxu0
        %v2468 = vsel %vm180, %v952, 0
        %v2470 = vsel %vm180, %v958, 0
        %v2472 = vsel %vm180, %v964, 0
        %v2474 = vsel %vm180, %v970, 0
        %v2476 = vsel %vm180, %v976, 0
        %v2478 = vsel %vm180, %v982, 0
        %v2480 = vsel %vm180, %v988, 0
        %v2482 = vsel %vm180, %v994, 0
        %2484 = vmatprep.subr.mxu0 %v1472
        %2485 = vmatpush1.msra.mxu0 %v1471
        %2486 = vmatprep.subr.mxu0 %v1470
        %2487 = vmatpush1.msra.mxu0 %v1469
        %2488 = vmatprep.subr.mxu0 %v1468
        %2489 = vmatpush1.msra.mxu0 %v1467
        %2490 = vmatprep.subr.mxu0 %v1466
        %2491 = vmatpush1.msra.mxu0 %v1465
        %2492 = vmatprep.subr.mxu0 %v1464
        %2493 = vmatpush1.msra.mxu0 %v1463
        %2494 = vmatprep.subr.mxu0 %v1462
        %2495 = vmatpush1.msra.mxu0 %v1461
        %2496 = vmatprep.subr.mxu0 %v1460
        %2497 = vmatpush1.msra.mxu0 %v1459
        %2498 = vmatprep.subr.mxu0 %v1458
        %2499 = vmatpush1.msra.mxu0 %v1457
        %2500 = vmatprep.subr.mxu0 %v1456
        %2501 = vmatpush1.msra.mxu0 %v1455
        %2502 = vmatprep.subr.mxu0 %v1454
        %2503 = vmatpush1.msra.mxu0 %v1453
        %2504 = vmatprep.subr.mxu0 %v1452
        %2505 = vmatpush1.msra.mxu0 %v1451
        %2506 = vmatprep.subr.mxu0 %v1450
        %2507 = vmatpush1.msra.mxu0 %v1449
        %2508 = vmatprep.subr.mxu0 %v1448
        %2509 = vmatpush1.msra.mxu0 %v1447
        %2510 = vmatprep.subr.mxu0 %v1446
        %2511 = vmatpush1.msra.mxu0 %v1445
        %2512 = vmatprep.subr.mxu0 %v1444
        %2513 = vmatpush1.msra.mxu0 %v1443
        %2514 = vmatprep.subr.mxu0 %v1442
        %2515 = vmatpush1.msra.mxu0 %v1441
        %2516 = vmatprep.subr.mxu0 0.0
        %2517 = vmatpush2.msra.mxu0 0.0
        %2518 = vmatprep.subr.mxu0 0.0
        %2519 = vmatpush2.msra.mxu0 0.0
        %2520 = vmatprep.subr.mxu0 0.0
        %2521 = vmatpush2.msra.mxu0 0.0
        %2522 = vmatprep.subr.mxu0 0.0
        %2523 = vmatpush2.msra.mxu0 0.0
        %2524 = vmatprep.subr.mxu0 0.0
        %2525 = vmatpush2.msra.mxu0 0.0
        %2526 = vmatprep.subr.mxu0 0.0
        %2527 = vmatpush2.msra.mxu0 0.0
        %2528 = vmatprep.subr.mxu0 0.0
        %2529 = vmatpush2.msra.mxu0 0.0
        %2530 = vmatprep.subr.mxu0 %v1490
        %2531 = vmatpush2.msra.mxu0 %v1489
        %2532 = vmatprep.subr.mxu0 %v1488
        %2533 = vmatpush2.msra.mxu0 %v1487
        %2534 = vmatprep.subr.mxu0 %v1486
        %2535 = vmatpush2.msra.mxu0 %v1485
        %2536 = vmatprep.subr.mxu0 %v1484
        %2537 = vmatpush2.msra.mxu0 %v1483
        %2538 = vmatprep.subr.mxu0 %v1482
        %2539 = vmatpush2.msra.mxu0 %v1481
        %2540 = vmatprep.subr.mxu0 %v1480
        %2541 = vmatpush2.msra.mxu0 %v1479
        %2542 = vmatprep.subr.mxu0 %v1478
        %2543 = vmatpush2.msra.mxu0 %v1477
        %2544 = vmatprep.subr.mxu0 %v1476
        %2545 = vmatpush2.msra.mxu0 %v1475
        %2546 = vmatprep.subr.mxu0 %v1474
        %2547 = vmatpush2.msra.mxu0 %v1473
        %2548 = vmatprep.mubr.f32.mxu0 %v2468
        %2549 = vmatmul.mubr.f32.gmra.mxu0 %v949
        %v2550 = vpop.f32.mrf.mxu0
        %v2551 = vadd.f32 0.0, %v2550
        %v2552 = vpop.f32.mrf.mxu0
        %v2553 = vadd.f32 0.0, %v2552
        %2554 = vmatprep.mubr.f32.mxu0 %v2470
        %2555 = vmatmul.mubr.f32.gmra.mxu0 %v955
        %v2556 = vpop.f32.mrf.mxu0
        %v2557 = vadd.f32 0.0, %v2556
        %v2558 = vpop.f32.mrf.mxu0
        %v2559 = vadd.f32 0.0, %v2558
        %2560 = vmatprep.mubr.f32.mxu0 %v2472
        %2561 = vmatmul.mubr.f32.gmra.mxu0 %v961
        %v2562 = vpop.f32.mrf.mxu0
        %v2563 = vadd.f32 0.0, %v2562
        %v2564 = vpop.f32.mrf.mxu0
        %v2565 = vadd.f32 0.0, %v2564
        %2566 = vmatprep.mubr.f32.mxu0 %v2474
        %2567 = vmatmul.mubr.f32.gmra.mxu0 %v967
        %v2568 = vpop.f32.mrf.mxu0
        %v2569 = vadd.f32 0.0, %v2568
        %v2570 = vpop.f32.mrf.mxu0
        %v2571 = vadd.f32 0.0, %v2570
        %2572 = vmatprep.mubr.f32.mxu0 %v2476
        %2573 = vmatmul.mubr.f32.gmra.mxu0 %v973
        %v2574 = vpop.f32.mrf.mxu0
        %v2575 = vadd.f32 0.0, %v2574
        %v2576 = vpop.f32.mrf.mxu0
        %v2577 = vadd.f32 0.0, %v2576
        %2578 = vmatprep.mubr.f32.mxu0 %v2478
        %2579 = vmatmul.mubr.f32.gmra.mxu0 %v979
        %v2580 = vpop.f32.mrf.mxu0
        %v2581 = vadd.f32 0.0, %v2580
        %v2582 = vpop.f32.mrf.mxu0
        %v2583 = vadd.f32 0.0, %v2582
        %2584 = vmatprep.mubr.f32.mxu0 %v2480
        %2585 = vmatmul.mubr.f32.gmra.mxu0 %v985
        %v2586 = vpop.f32.mrf.mxu0
        %v2587 = vadd.f32 0.0, %v2586
        %v2588 = vpop.f32.mrf.mxu0
        %v2589 = vadd.f32 0.0, %v2588
        %2590 = vmatprep.mubr.f32.mxu0 %v2482
        %2591 = vmatmul.mubr.f32.gmra.mxu0 %v991
        %v2592 = vpop.f32.mrf.mxu0
        %v2593 = vadd.f32 0.0, %v2592
        %v2594 = vpop.f32.mrf.mxu0
        %v2595 = vadd.f32 0.0, %v2594
        %2596 = vdwg.mxu0
        %v2597 = vsel %vm180, %v1040, 0
        %v2599 = vsel %vm180, %v1046, 0
        %v2601 = vsel %vm180, %v1052, 0
        %v2603 = vsel %vm180, %v1058, 0
        %v2605 = vsel %vm180, %v1064, 0
        %v2607 = vsel %vm180, %v1070, 0
        %v2609 = vsel %vm180, %v1076, 0
        %v2611 = vsel %vm180, %v1082, 0
        %2613 = vmatprep.subr.mxu0 %v1522
        %2614 = vmatpush1.msra.mxu0 %v1521
        %2615 = vmatprep.subr.mxu0 %v1520
        %2616 = vmatpush1.msra.mxu0 %v1519
        %2617 = vmatprep.subr.mxu0 %v1518
        %2618 = vmatpush1.msra.mxu0 %v1517
        %2619 = vmatprep.subr.mxu0 %v1516
        %2620 = vmatpush1.msra.mxu0 %v1515
        %2621 = vmatprep.subr.mxu0 %v1514
        %2622 = vmatpush1.msra.mxu0 %v1513
        %2623 = vmatprep.subr.mxu0 %v1512
        %2624 = vmatpush1.msra.mxu0 %v1511
        %2625 = vmatprep.subr.mxu0 %v1510
        %2626 = vmatpush1.msra.mxu0 %v1509
        %2627 = vmatprep.subr.mxu0 %v1508
        %2628 = vmatpush1.msra.mxu0 %v1507
        %2629 = vmatprep.subr.mxu0 %v1506
        %2630 = vmatpush1.msra.mxu0 %v1505
        %2631 = vmatprep.subr.mxu0 %v1504
        %2632 = vmatpush1.msra.mxu0 %v1503
        %2633 = vmatprep.subr.mxu0 %v1502
        %2634 = vmatpush1.msra.mxu0 %v1501
        %2635 = vmatprep.subr.mxu0 %v1500
        %2636 = vmatpush1.msra.mxu0 %v1499
        %2637 = vmatprep.subr.mxu0 %v1498
        %2638 = vmatpush1.msra.mxu0 %v1497
        %2639 = vmatprep.subr.mxu0 %v1496
        %2640 = vmatpush1.msra.mxu0 %v1495
        %2641 = vmatprep.subr.mxu0 %v1494
        %2642 = vmatpush1.msra.mxu0 %v1493
        %2643 = vmatprep.subr.mxu0 %v1492
        %2644 = vmatpush1.msra.mxu0 %v1491
        %2645 = vmatprep.subr.mxu0 0.0
        %2646 = vmatpush2.msra.mxu0 0.0
        %2647 = vmatprep.subr.mxu0 0.0
        %2648 = vmatpush2.msra.mxu0 0.0
        %2649 = vmatprep.subr.mxu0 0.0
        %2650 = vmatpush2.msra.mxu0 0.0
        %2651 = vmatprep.subr.mxu0 0.0
        %2652 = vmatpush2.msra.mxu0 0.0
        %2653 = vmatprep.subr.mxu0 0.0
        %2654 = vmatpush2.msra.mxu0 0.0
        %2655 = vmatprep.subr.mxu0 0.0
        %2656 = vmatpush2.msra.mxu0 0.0
        %2657 = vmatprep.subr.mxu0 0.0
        %2658 = vmatpush2.msra.mxu0 0.0
        %2659 = vmatprep.subr.mxu0 %v1540
        %2660 = vmatpush2.msra.mxu0 %v1539
        %2661 = vmatprep.subr.mxu0 %v1538
        %2662 = vmatpush2.msra.mxu0 %v1537
        %2663 = vmatprep.subr.mxu0 %v1536
        %2664 = vmatpush2.msra.mxu0 %v1535
        %2665 = vmatprep.subr.mxu0 %v1534
        %2666 = vmatpush2.msra.mxu0 %v1533
        %2667 = vmatprep.subr.mxu0 %v1532
        %2668 = vmatpush2.msra.mxu0 %v1531
        %2669 = vmatprep.subr.mxu0 %v1530
        %2670 = vmatpush2.msra.mxu0 %v1529
        %2671 = vmatprep.subr.mxu0 %v1528
        %2672 = vmatpush2.msra.mxu0 %v1527
        %2673 = vmatprep.subr.mxu0 %v1526
        %2674 = vmatpush2.msra.mxu0 %v1525
        %2675 = vmatprep.subr.mxu0 %v1524
        %2676 = vmatpush2.msra.mxu0 %v1523
        %2677 = vmatprep.mubr.f32.mxu0 %v2597
        %2678 = vmatmul.mubr.f32.gmra.mxu0 %v1037
        %v2679 = vpop.f32.mrf.mxu0
        %v2680 = vadd.f32 0.0, %v2679
        %v2681 = vpop.f32.mrf.mxu0
        %v2682 = vadd.f32 0.0, %v2681
        %2683 = vmatprep.mubr.f32.mxu0 %v2599
        %2684 = vmatmul.mubr.f32.gmra.mxu0 %v1043
        %v2685 = vpop.f32.mrf.mxu0
        %v2686 = vadd.f32 0.0, %v2685
        %v2687 = vpop.f32.mrf.mxu0
        %v2688 = vadd.f32 0.0, %v2687
        %2689 = vmatprep.mubr.f32.mxu0 %v2601
        %2690 = vmatmul.mubr.f32.gmra.mxu0 %v1049
        %v2691 = vpop.f32.mrf.mxu0
        %v2692 = vadd.f32 0.0, %v2691
        %v2693 = vpop.f32.mrf.mxu0
        %v2694 = vadd.f32 0.0, %v2693
        %2695 = vmatprep.mubr.f32.mxu0 %v2603
        %2696 = vmatmul.mubr.f32.gmra.mxu0 %v1055
        %v2697 = vpop.f32.mrf.mxu0
        %v2698 = vadd.f32 0.0, %v2697
        %v2699 = vpop.f32.mrf.mxu0
        %v2700 = vadd.f32 0.0, %v2699
        %2701 = vmatprep.mubr.f32.mxu0 %v2605
        %2702 = vmatmul.mubr.f32.gmra.mxu0 %v1061
        %v2703 = vpop.f32.mrf.mxu0
        %v2704 = vadd.f32 0.0, %v2703
        %v2705 = vpop.f32.mrf.mxu0
        %v2706 = vadd.f32 0.0, %v2705
        %2707 = vmatprep.mubr.f32.mxu0 %v2607
        %2708 = vmatmul.mubr.f32.gmra.mxu0 %v1067
        %v2709 = vpop.f32.mrf.mxu0
        %v2710 = vadd.f32 0.0, %v2709
        %v2711 = vpop.f32.mrf.mxu0
        %v2712 = vadd.f32 0.0, %v2711
        %2713 = vmatprep.mubr.f32.mxu0 %v2609
        %2714 = vmatmul.mubr.f32.gmra.mxu0 %v1073
        %v2715 = vpop.f32.mrf.mxu0
        %v2716 = vadd.f32 0.0, %v2715
        %v2717 = vpop.f32.mrf.mxu0
        %v2718 = vadd.f32 0.0, %v2717
        %2719 = vmatprep.mubr.f32.mxu0 %v2611
        %2720 = vmatmul.mubr.f32.gmra.mxu0 %v1079
        %v2721 = vpop.f32.mrf.mxu0
        %v2722 = vadd.f32 0.0, %v2721
        %v2723 = vpop.f32.mrf.mxu0
        %v2724 = vadd.f32 0.0, %v2723
        %2725 = vdwg.mxu0
        %v2726 = vadd.f32 %v1632, %v1761
        %v2727 = vadd.f32 %v2726, %v1890
        %v2728 = vadd.f32 %v2727, %v2027
        %v2729 = vadd.f32 %v2728, %v2156
        %v2730 = vadd.f32 %v2729, %v2285
        %v2731 = vadd.f32 %v2730, %v2422
        %v2732 = vadd.f32 %v2731, %v2551
        %v2733 = vadd.f32 %v2732, %v2680
        %vm2734 = vcmask 687104
        %v2735 = vsel %vm2734, %v1634, 0.0
        %v2736 = vsel %vm2734, %v1763, 0.0
        %v2737 = vadd.f32 %v2735, %v2736
        %v2738 = vsel %vm2734, %v1892, 0.0
        %v2739 = vadd.f32 %v2737, %v2738
        %v2740 = vsel %vm2734, %v2029, 0.0
        %v2741 = vadd.f32 %v2739, %v2740
        %v2742 = vsel %vm2734, %v2158, 0.0
        %v2743 = vadd.f32 %v2741, %v2742
        %v2744 = vsel %vm2734, %v2287, 0.0
        %v2745 = vadd.f32 %v2743, %v2744
        %v2746 = vsel %vm2734, %v2424, 0.0
        %v2747 = vadd.f32 %v2745, %v2746
        %v2748 = vsel %vm2734, %v2553, 0.0
        %v2749 = vadd.f32 %v2747, %v2748
        %v2750 = vsel %vm2734, %v2682, 0.0
        %v2751 = vadd.f32 %v2749, %v2750
        %v2752 = vadd.f32 %v1638, %v1767
        %v2753 = vadd.f32 %v2752, %v1896
        %v2754 = vadd.f32 %v2753, %v2033
        %v2755 = vadd.f32 %v2754, %v2162
        %v2756 = vadd.f32 %v2755, %v2291
        %v2757 = vadd.f32 %v2756, %v2428
        %v2758 = vadd.f32 %v2757, %v2557
        %v2759 = vadd.f32 %v2758, %v2686
        %v2760 = vsel %vm2734, %v1640, 0.0
        %v2761 = vsel %vm2734, %v1769, 0.0
        %v2762 = vadd.f32 %v2760, %v2761
        %v2763 = vsel %vm2734, %v1898, 0.0
        %v2764 = vadd.f32 %v2762, %v2763
        %v2765 = vsel %vm2734, %v2035, 0.0
        %v2766 = vadd.f32 %v2764, %v2765
        %v2767 = vsel %vm2734, %v2164, 0.0
        %v2768 = vadd.f32 %v2766, %v2767
        %v2769 = vsel %vm2734, %v2293, 0.0
        %v2770 = vadd.f32 %v2768, %v2769
        %v2771 = vsel %vm2734, %v2430, 0.0
        %v2772 = vadd.f32 %v2770, %v2771
        %v2773 = vsel %vm2734, %v2559, 0.0
        %v2774 = vadd.f32 %v2772, %v2773
        %v2775 = vsel %vm2734, %v2688, 0.0
        %v2776 = vadd.f32 %v2774, %v2775
        %v2777 = vadd.f32 %v1644, %v1773
        %v2778 = vadd.f32 %v2777, %v1902
        %v2779 = vadd.f32 %v2778, %v2039
        %v2780 = vadd.f32 %v2779, %v2168
        %v2781 = vadd.f32 %v2780, %v2297
        %v2782 = vadd.f32 %v2781, %v2434
        %v2783 = vadd.f32 %v2782, %v2563
        %v2784 = vadd.f32 %v2783, %v2692
        %v2785 = vsel %vm2734, %v1646, 0.0
        %v2786 = vsel %vm2734, %v1775, 0.0
        %v2787 = vadd.f32 %v2785, %v2786
        %v2788 = vsel %vm2734, %v1904, 0.0
        %v2789 = vadd.f32 %v2787, %v2788
        %v2790 = vsel %vm2734, %v2041, 0.0
        %v2791 = vadd.f32 %v2789, %v2790
        %v2792 = vsel %vm2734, %v2170, 0.0
        %v2793 = vadd.f32 %v2791, %v2792
        %v2794 = vsel %vm2734, %v2299, 0.0
        %v2795 = vadd.f32 %v2793, %v2794
        %v2796 = vsel %vm2734, %v2436, 0.0
        %v2797 = vadd.f32 %v2795, %v2796
        %v2798 = vsel %vm2734, %v2565, 0.0
        %v2799 = vadd.f32 %v2797, %v2798
        %v2800 = vsel %vm2734, %v2694, 0.0
        %v2801 = vadd.f32 %v2799, %v2800
        %v2802 = vadd.f32 %v1650, %v1779
        %v2803 = vadd.f32 %v2802, %v1908
        %v2804 = vadd.f32 %v2803, %v2045
        %v2805 = vadd.f32 %v2804, %v2174
        %v2806 = vadd.f32 %v2805, %v2303
        %v2807 = vadd.f32 %v2806, %v2440
        %v2808 = vadd.f32 %v2807, %v2569
        %v2809 = vadd.f32 %v2808, %v2698
        %v2810 = vsel %vm2734, %v1652, 0.0
        %v2811 = vsel %vm2734, %v1781, 0.0
        %v2812 = vadd.f32 %v2810, %v2811
        %v2813 = vsel %vm2734, %v1910, 0.0
        %v2814 = vadd.f32 %v2812, %v2813
        %v2815 = vsel %vm2734, %v2047, 0.0
        %v2816 = vadd.f32 %v2814, %v2815
        %v2817 = vsel %vm2734, %v2176, 0.0
        %v2818 = vadd.f32 %v2816, %v2817
        %v2819 = vsel %vm2734, %v2305, 0.0
        %v2820 = vadd.f32 %v2818, %v2819
        %v2821 = vsel %vm2734, %v2442, 0.0
        %v2822 = vadd.f32 %v2820, %v2821
        %v2823 = vsel %vm2734, %v2571, 0.0
        %v2824 = vadd.f32 %v2822, %v2823
        %v2825 = vsel %vm2734, %v2700, 0.0
        %v2826 = vadd.f32 %v2824, %v2825
        %v2827 = vadd.f32 %v1656, %v1785
        %v2828 = vadd.f32 %v2827, %v1914
        %v2829 = vadd.f32 %v2828, %v2051
        %v2830 = vadd.f32 %v2829, %v2180
        %v2831 = vadd.f32 %v2830, %v2309
        %v2832 = vadd.f32 %v2831, %v2446
        %v2833 = vadd.f32 %v2832, %v2575
        %v2834 = vadd.f32 %v2833, %v2704
        %v2835 = vsel %vm2734, %v1658, 0.0
        %v2836 = vsel %vm2734, %v1787, 0.0
        %v2837 = vadd.f32 %v2835, %v2836
        %v2838 = vsel %vm2734, %v1916, 0.0
        %v2839 = vadd.f32 %v2837, %v2838
        %v2840 = vsel %vm2734, %v2053, 0.0
        %v2841 = vadd.f32 %v2839, %v2840
        %v2842 = vsel %vm2734, %v2182, 0.0
        %v2843 = vadd.f32 %v2841, %v2842
        %v2844 = vsel %vm2734, %v2311, 0.0
        %v2845 = vadd.f32 %v2843, %v2844
        %v2846 = vsel %vm2734, %v2448, 0.0
        %v2847 = vadd.f32 %v2845, %v2846
        %v2848 = vsel %vm2734, %v2577, 0.0
        %v2849 = vadd.f32 %v2847, %v2848
        %v2850 = vsel %vm2734, %v2706, 0.0
        %v2851 = vadd.f32 %v2849, %v2850
        %v2852 = vadd.f32 %v1662, %v1791
        %v2853 = vadd.f32 %v2852, %v1920
        %v2854 = vadd.f32 %v2853, %v2057
        %v2855 = vadd.f32 %v2854, %v2186
        %v2856 = vadd.f32 %v2855, %v2315
        %v2857 = vadd.f32 %v2856, %v2452
        %v2858 = vadd.f32 %v2857, %v2581
        %v2859 = vadd.f32 %v2858, %v2710
        %v2860 = vsel %vm2734, %v1664, 0.0
        %v2861 = vsel %vm2734, %v1793, 0.0
        %v2862 = vadd.f32 %v2860, %v2861
        %v2863 = vsel %vm2734, %v1922, 0.0
        %v2864 = vadd.f32 %v2862, %v2863
        %v2865 = vsel %vm2734, %v2059, 0.0
        %v2866 = vadd.f32 %v2864, %v2865
        %v2867 = vsel %vm2734, %v2188, 0.0
        %v2868 = vadd.f32 %v2866, %v2867
        %v2869 = vsel %vm2734, %v2317, 0.0
        %v2870 = vadd.f32 %v2868, %v2869
        %v2871 = vsel %vm2734, %v2454, 0.0
        %v2872 = vadd.f32 %v2870, %v2871
        %v2873 = vsel %vm2734, %v2583, 0.0
        %v2874 = vadd.f32 %v2872, %v2873
        %v2875 = vsel %vm2734, %v2712, 0.0
        %v2876 = vadd.f32 %v2874, %v2875
        %v2877 = vadd.f32 %v1668, %v1797
        %v2878 = vadd.f32 %v2877, %v1926
        %v2879 = vadd.f32 %v2878, %v2063
        %v2880 = vadd.f32 %v2879, %v2192
        %v2881 = vadd.f32 %v2880, %v2321
        %v2882 = vadd.f32 %v2881, %v2458
        %v2883 = vadd.f32 %v2882, %v2587
        %v2884 = vadd.f32 %v2883, %v2716
        %v2885 = vsel %vm2734, %v1670, 0.0
        %v2886 = vsel %vm2734, %v1799, 0.0
        %v2887 = vadd.f32 %v2885, %v2886
        %v2888 = vsel %vm2734, %v1928, 0.0
        %v2889 = vadd.f32 %v2887, %v2888
        %v2890 = vsel %vm2734, %v2065, 0.0
        %v2891 = vadd.f32 %v2889, %v2890
        %v2892 = vsel %vm2734, %v2194, 0.0
        %v2893 = vadd.f32 %v2891, %v2892
        %v2894 = vsel %vm2734, %v2323, 0.0
        %v2895 = vadd.f32 %v2893, %v2894
        %v2896 = vsel %vm2734, %v2460, 0.0
        %v2897 = vadd.f32 %v2895, %v2896
        %v2898 = vsel %vm2734, %v2589, 0.0
        %v2899 = vadd.f32 %v2897, %v2898
        %v2900 = vsel %vm2734, %v2718, 0.0
        %v2901 = vadd.f32 %v2899, %v2900
        %v2902 = vadd.f32 %v1674, %v1803
        %v2903 = vadd.f32 %v2902, %v1932
        %v2904 = vadd.f32 %v2903, %v2069
        %v2905 = vadd.f32 %v2904, %v2198
        %v2906 = vadd.f32 %v2905, %v2327
        %v2907 = vadd.f32 %v2906, %v2464
        %v2908 = vadd.f32 %v2907, %v2593
        %v2909 = vadd.f32 %v2908, %v2722
        %v2910 = vsel %vm2734, %v1676, 0.0
        %v2911 = vsel %vm2734, %v1805, 0.0
        %v2912 = vadd.f32 %v2910, %v2911
        %v2913 = vsel %vm2734, %v1934, 0.0
        %v2914 = vadd.f32 %v2912, %v2913
        %v2915 = vsel %vm2734, %v2071, 0.0
        %v2916 = vadd.f32 %v2914, %v2915
        %v2917 = vsel %vm2734, %v2200, 0.0
        %v2918 = vadd.f32 %v2916, %v2917
        %v2919 = vsel %vm2734, %v2329, 0.0
        %v2920 = vadd.f32 %v2918, %v2919
        %v2921 = vsel %vm2734, %v2466, 0.0
        %v2922 = vadd.f32 %v2920, %v2921
        %v2923 = vsel %vm2734, %v2595, 0.0
        %v2924 = vadd.f32 %v2922, %v2923
        %v2925 = vsel %vm2734, %v2724, 0.0
        %v2926 = vadd.f32 %v2924, %v2925
        %2927 = vst [vmem:[%s178] sm:$0xff] %v2733
        %2928 = vst.msk [vmem:[%s178 + $0x8] sm:$0xff] %vm2734, %v2751
        %2929 = vst [vmem:[%s178 + $0x10] sm:$0xff] %v2759
        %2930 = vst.msk [vmem:[%s178 + $0x18] sm:$0xff] %vm2734, %v2776
        %2931 = vst [vmem:[%s178 + $0x20] sm:$0xff] %v2784
        %2932 = vst.msk [vmem:[%s178 + $0x28] sm:$0xff] %vm2734, %v2801
        %2933 = vst [vmem:[%s178 + $0x30] sm:$0xff] %v2809
        %2934 = vst.msk [vmem:[%s178 + $0x38] sm:$0xff] %vm2734, %v2826
        %2935 = vst [vmem:[%s178 + $0x40] sm:$0xff] %v2834
        %2936 = vst.msk [vmem:[%s178 + $0x48] sm:$0xff] %vm2734, %v2851
        %2937 = vst [vmem:[%s178 + $0x50] sm:$0xff] %v2859
        %2938 = vst.msk [vmem:[%s178 + $0x58] sm:$0xff] %vm2734, %v2876
        %2939 = vst [vmem:[%s178 + $0x60] sm:$0xff] %v2884
        %2940 = vst.msk [vmem:[%s178 + $0x68] sm:$0xff] %vm2734, %v2901
        %2941 = vst [vmem:[%s178 + $0x70] sm:$0xff] %v2909
        %2942 = vst.msk [vmem:[%s178 + $0x78] sm:$0xff] %vm2734, %v2926
        %p2943 = scmp.lt.s32.totalorder %s17, 1
        %s2944 = scalar_select %p2943, %s17, 1
        %s2945 = smul.addr %s2944, 16
        %s2946 = smul.addr %s2945, 8
        %s2947 = scalar_lea.vmem %s2, %s2946
        // Predicated region
        $region37: #{_lambda_.4} parent=27 // pred_check
          %p2948 = pneg %p82
        $region38: #{_lambda_.4} parent=27 // pred_check_branch
          %2950 = sbr.rel (%p2948) target = $region40
        $region39: #{_lambda_.4} parent=27 // pred_region
          _
        $region40: #{_lambda_.4} parent=27 // pred_fallthru
          _
      $region28: #{_lambda_.4} parent=5 // pred_fallthru
        _
      %p2951 = scmp.le.s32.totalorder 2, %s12
      // Predicated region
      $region41: #{_lambda_.4} parent=5 // pred_check
        %p2952 = pneg %p2951
      $region42: #{_lambda_.4} parent=5 // pred_check_branch
        %2954 = sbr.rel (%p2952) target = $region44
      $region43: #{_lambda_.4} parent=5 // pred_region
        %s2955 = ssub.s32 %s12, 2
        // Predicated region
        $region45: #{_lambda_.4} parent=43 // pred_check
          %p2956 = pneg %p88
        $region46: #{_lambda_.4} parent=43 // pred_check_branch
          %2958 = sbr.rel (%p2956) target = $region48
        $region47: #{_lambda_.4} parent=43 // pred_region
          %p2959 = scmp.lt.s32.totalorder %s18, 1
          %s2960 = scalar_select %p2959, %s18, 1
          %s2961 = smul.addr %s2960, 16
          %s2962 = smul.addr %s2961, 8
          %s2963 = scalar_lea.vmem %s2, %s2962
        $region48: #{_lambda_.4} parent=43 // pred_fallthru
          _
      $region44: #{_lambda_.4} parent=5 // pred_fallthru
        _
    $region6: #{_lambda_.4} parent=1 // loop_footer
      %s16 = sadd.s32 1, %s12
    $region7: #{_lambda_.4} parent=1 // loop_footer_branch
      %11 = sbr.rel target = $region3
    $region8: #{_lambda_.4} parent=1 // loop_exit
      _
    %2964 = vsyncpa [#allocation4], 1
    %s2965 = scalar_lea.sflag [#allocation4], 1
    %2966 = vsyncpa %s2965, 1
    %2967 = vsyncpa [#allocation6], 1

</llo_original>
